<compile_context>
chip_gen: v5e
topology: v5e:2x2
jax: 0.10.0
libtpu: 0.0.40
codegen_flags: <defaults>
</compile_context>

<pallas_src>
import functools

import jax
import jax.numpy as jnp
from jax.experimental import pallas as pl
from jax.experimental.pallas import tpu as pltpu

LRELU_SLOPE = 0.01          # nn.LeakyReLU() default
BN_EPS = 1e-5               # nn.BatchNorm default eps
_VMEM_LIMIT = 32 * 1024 * 1024   # safe on v5e (128 MiB phys) .. v7x (64 MiB phys)


def _round_up(x, m):
    return (x + m - 1) // m * m


# ----------------------------------------------------------------------------
# Pallas kernels
# ----------------------------------------------------------------------------

def _mm_bias_lrelu_kernel(p_ref, w_ref, b_ref, o_ref):
    """One M-tile of conv1: bf16 matmul (f32 acc) + bias + LeakyReLU -> bf16."""
    y = jnp.dot(p_ref[...], w_ref[...], preferred_element_type=jnp.float32)
    y = y + b_ref[...]
    o_ref[...] = jnp.where(y > 0, y, LRELU_SLOPE * y).astype(o_ref.dtype)


def _mm_bias_bn_lrelu_kernel(p_ref, w_ref, b_ref, g_ref, beta_ref, o_ref):
    """conv2: bf16 matmul (f32 acc) + bias + BatchNorm2d(batch stats) + LeakyReLU.

    Single block over all rows (rows = B*OH*OW) so the batch statistics are
    exact (not per-tile)."""
    y = jnp.dot(p_ref[...], w_ref[...], preferred_element_type=jnp.float32)
    y = y + b_ref[...]
    mean = jnp.mean(y, axis=0, keepdims=True)
    var = jnp.mean((y - mean) ** 2, axis=0, keepdims=True)
    y = g_ref[...] * (y - mean) * jax.lax.rsqrt(var + BN_EPS) + beta_ref[...]
    o_ref[...] = jnp.where(y > 0, y, LRELU_SLOPE * y).astype(o_ref.dtype)


def _fc_fused_kernel(x_ref, w1_ref, b1_ref, g_ref, beta_ref, w2_ref, b2_ref,
                     o_ref):
    """Fused fc tail: Linear(feat,1024)+BN1d -> Linear(1024,2 padded to 128)+sigmoid.

    The 1024-wide hidden activation stays in VMEM (never touches HBM)."""
    h = jnp.dot(x_ref[...], w1_ref[...], preferred_element_type=jnp.float32)
    h = h + b1_ref[...]
    mean = jnp.mean(h, axis=0, keepdims=True)
    var = jnp.mean((h - mean) ** 2, axis=0, keepdims=True)
    hn = g_ref[...] * (h - mean) * jax.lax.rsqrt(var + BN_EPS) + beta_ref[...]
    y = jnp.dot(hn.astype(jnp.bfloat16), w2_ref[...],
                preferred_element_type=jnp.float32)
    y = y + b2_ref[...]
    o_ref[...] = 1.0 / (1.0 + jnp.exp(-y))


# ----------------------------------------------------------------------------
# Pallas call wrappers
# ----------------------------------------------------------------------------

def _vmem_call(kernel, out_shape, out_dtype, *args):
    """Single-block kernel with all operands resident in VMEM."""
    return pl.pallas_call(
        kernel,
        out_shape=jax.ShapeDtypeStruct(out_shape, out_dtype),
        in_specs=[pl.BlockSpec(memory_space=pltpu.MemorySpace.VMEM)] * len(args),
        out_specs=pl.BlockSpec(memory_space=pltpu.MemorySpace.VMEM),
        compiler_params=pltpu.CompilerParams(vmem_limit_bytes=_VMEM_LIMIT),
    )(*args)


def _conv1_matmul_lrelu(patches, w, b, tm=256):
    """M-tiled (parallel grid) matmul+bias+LeakyReLU for conv1."""
    M, K = patches.shape
    N = w.shape[1]
    tm = min(tm, _round_up(M, 8))
    Mp = _round_up(M, tm)
    if Mp != M:
        patches = jnp.pad(patches, ((0, Mp - M), (0, 0)))
    out = pl.pallas_call(
        _mm_bias_lrelu_kernel,
        out_shape=jax.ShapeDtypeStruct((Mp, N), jnp.bfloat16),
        grid=(Mp // tm,),
        in_specs=[pl.BlockSpec((tm, K), lambda i: (i, 0)),
                  pl.BlockSpec((K, N), lambda i: (0, 0)),
                  pl.BlockSpec((1, N), lambda i: (0, 0))],
        out_specs=pl.BlockSpec((tm, N), lambda i: (i, 0)),
        compiler_params=pltpu.CompilerParams(
            dimension_semantics=("parallel",),
            vmem_limit_bytes=_VMEM_LIMIT),
    )(patches, w, b)
    return out[:M]


# ----------------------------------------------------------------------------
# Glue: im2col via static strided slices (no gather; pure data movement).
# ----------------------------------------------------------------------------

def _im2col(x_nhwc, k, stride, pad):
    """x_nhwc: [B,H,W,C] -> patches [B*OH*OW, K*K*C], K-index ordered (kh,kw,c)."""
    B, H, W, C = x_nhwc.shape
    xp = jnp.pad(x_nhwc, ((0, 0), (pad, pad), (pad, pad), (0, 0)))
    oh = (H + 2 * pad - k) // stride + 1
    ow = (W + 2 * pad - k) // stride + 1
    parts = []
    for kh in range(k):
        for kw in range(k):
            parts.append(xp[:, kh:kh + (oh - 1) * stride + 1:stride,
                            kw:kw + (ow - 1) * stride + 1:stride, :])
    patches = jnp.stack(parts, axis=3)                 # [B, oh, ow, k*k, C]
    return patches.reshape(B * oh * ow, k * k * C), oh, ow


# ----------------------------------------------------------------------------
# Parameters (PyTorch layout) and one-time preparation for the Pallas forward.
# ----------------------------------------------------------------------------

def init_params(key, input_shape):
    H, W = input_shape
    feat = 128 * (H // 4) * (W // 4)
    ks = jax.random.split(key, 10)
    s = 0.05
    return {
        # conv weights in PyTorch layout [Cout, Cin, KH, KW]
        "c1_w": jax.random.normal(ks[0], (64, 1, 4, 4), jnp.float32) * s,
        "c1_b": jax.random.normal(ks[1], (64,), jnp.float32) * s,
        "c2_w": jax.random.normal(ks[2], (128, 64, 4, 4), jnp.float32) * s,
        "c2_b": jax.random.normal(ks[3], (128,), jnp.float32) * s,
        "bn2_g": jnp.ones((128,), jnp.float32),
        "bn2_b": jnp.zeros((128,), jnp.float32),
        # linear weights in PyTorch layout [out, in]
        "fc1_w": jax.random.normal(ks[4], (1024, feat), jnp.float32) * (s / 8),
        "fc1_b": jax.random.normal(ks[5], (1024,), jnp.float32) * s,
        "bn1d_g": jnp.ones((1024,), jnp.float32),
        "bn1d_b": jnp.zeros((1024,), jnp.float32),
        "fc2_w": jax.random.normal(ks[6], (2, 1024), jnp.float32) * s,
        "fc2_b": jax.random.normal(ks[7], (2,), jnp.float32) * s,
    }


def prepare_params(p, input_shape):
    """One-time reorder / cast so the forward pass needs no weight transposes."""
    H, W = input_shape
    oh2, ow2 = H // 4, W // 4
    feat = 128 * oh2 * ow2

    # conv weights [Cout,Cin,KH,KW] -> [KH*KW*Cin, Cout], bf16 (matches im2col order)
    c1_w = jnp.transpose(p["c1_w"], (2, 3, 1, 0)).reshape(16, 64).astype(jnp.bfloat16)
    c2_w = jnp.transpose(p["c2_w"], (2, 3, 1, 0)).reshape(16 * 64, 128).astype(jnp.bfloat16)

    # fc1 weight: PyTorch rows index the NCHW flatten (c, h, w); permute rows to
    # NHWC flatten order (h, w, c) so the forward can flatten NHWC directly.
    w = p["fc1_w"].T.reshape(128, oh2, ow2, 1024)
    fc1_w = jnp.transpose(w, (1, 2, 0, 3)).reshape(feat, 1024).astype(jnp.bfloat16)

    # fc2: [2,1024] -> [1024,128] zero-padded on N for lane-dense output stores.
    fc2_w = jnp.zeros((1024, 128), jnp.float32).at[:, :2].set(p["fc2_w"].T)
    fc2_b = jnp.zeros((1, 128), jnp.float32).at[0, :2].set(p["fc2_b"])

    return {
        "c1_w": c1_w, "c1_b": p["c1_b"].reshape(1, 64),
        "c2_w": c2_w, "c2_b": p["c2_b"].reshape(1, 128),
        "bn2_g": p["bn2_g"].reshape(1, 128), "bn2_b": p["bn2_b"].reshape(1, 128),
        "fc1_w": fc1_w, "fc1_b": p["fc1_b"].reshape(1, 1024),
        "bn1d_g": p["bn1d_g"].reshape(1, 1024), "bn1d_b": p["bn1d_b"].reshape(1, 1024),
        "fc2_w": fc2_w.astype(jnp.bfloat16), "fc2_b": fc2_b,
    }


# ----------------------------------------------------------------------------
# Forward pass.
# ----------------------------------------------------------------------------

@functools.partial(jax.jit, static_argnames=("input_shape",))
def discriminator_forward(x_nchw, prep, input_shape):
    H, W = input_shape
    B = x_nchw.shape[0]

    # NCHW -> NHWC, bf16 for MXU inputs
    x = jnp.transpose(x_nchw, (0, 2, 3, 1)).astype(jnp.bfloat16)

    # ---- conv1: Conv2d(1,64,4,2,1) + LeakyReLU (im2col + tiled Pallas matmul) ----
    p1, oh1, ow1 = _im2col(x, k=4, stride=2, pad=1)          # [B*oh1*ow1, 16] bf16
    a1 = _conv1_matmul_lrelu(p1, prep["c1_w"], prep["c1_b"])  # [B*oh1*ow1, 64] bf16
    a1 = a1.reshape(B, oh1, ow1, 64)

    # ---- conv2: Conv2d(64,128,4,2,1) + BatchNorm2d + LeakyReLU ------------------
    p2, oh2, ow2 = _im2col(a1, k=4, stride=2, pad=1)          # [B*oh2*ow2, 1024] bf16
    a2 = _vmem_call(_mm_bias_bn_lrelu_kernel,
                    (B * oh2 * ow2, 128), jnp.bfloat16,
                    p2, prep["c2_w"], prep["c2_b"], prep["bn2_g"], prep["bn2_b"])

    # ---- flatten: NHWC rows x C is contiguous; fc1 weight rows were pre-permuted
    #      to NHWC order, so this reshape is free and matches PyTorch's NCHW view.
    feat = 128 * (H // 4) * (W // 4)
    flat = a2.reshape(B, feat)

    # ---- fused fc tail: Linear+BN1d+Linear+Sigmoid (one kernel, lane-dense out) -
    out_pad = _vmem_call(_fc_fused_kernel, (B, 128), jnp.float32,
                         flat, prep["fc1_w"], prep["fc1_b"],
                         prep["bn1d_g"], prep["bn1d_b"],
                         prep["fc2_w"], prep["fc2_b"])
    return out_pad[:, :2]


if __name__ == "__main__":
    input_shape = (16, 16)        # (H, W) of the single-channel image
    B = 2
    key = jax.random.PRNGKey(0)
    k_x, k_p = jax.random.split(key)
    x = jax.random.normal(k_x, (B, 1, input_shape[0], input_shape[1]), jnp.float32)

    params = init_params(k_p, input_shape)
    prep = prepare_params(params, input_shape)   # one-time weight reorder / cast

    out = discriminator_forward(x, prep, input_shape)
    out = jax.block_until_ready(out)
    assert out.shape == (B, 2), out.shape
    assert bool(jnp.all(jnp.isfinite(out)))
    print("KERNEL_OK")
</pallas_src>

<mosaic_0001>
module attributes {stable_mosaic.version = 11 : i64} {
  func.func @_mm_bias_lrelu_kernel(%arg0: i32, %arg1: memref<128x16xbf16, #tpu.memory_space<vmem>>, %arg2: memref<16x64xbf16, #tpu.memory_space<vmem>>, %arg3: memref<1x64xf32, #tpu.memory_space<vmem>>, %arg4: memref<128x64xbf16, #tpu.memory_space<vmem>>) attributes {dimension_semantics = [#tpu.dimension_semantics<parallel>], iteration_bounds = array<i64: 1>, scalar_prefetch = 0 : i64, scratch_operands = 0 : i64, tpu.core_type = #tpu.core_type<tc>, window_params = [{transform_indices = @transform_0, window_bounds = array<i64: 128, 16>}, {pipeline_mode = #tpu.pipeline_mode<synchronous>, transform_indices = @transform_1, window_bounds = array<i64: 16, 64>}, {pipeline_mode = #tpu.pipeline_mode<synchronous>, transform_indices = @transform_2, window_bounds = array<i64: 1, 64>}, {transform_indices = @transform_3, window_bounds = array<i64: 128, 64>}]} {
    %c0 = arith.constant 0 : index
    %c0_0 = arith.constant 0 : index
    %0 = vector.load %arg1[%c0, %c0_0] : memref<128x16xbf16, #tpu.memory_space<vmem>>, vector<128x16xbf16>
    %c0_1 = arith.constant 0 : index
    %c0_2 = arith.constant 0 : index
    %1 = vector.load %arg2[%c0_1, %c0_2] : memref<16x64xbf16, #tpu.memory_space<vmem>>, vector<16x64xbf16>
    %cst = arith.constant dense<0.000000e+00> : vector<128x64xf32>
    %2 = tpu.matmul %0, %1, %cst {dimension_numbers = #tpu.dot_dimension_numbers<[1], [0], [0], [1], [0, 0, 1, 1], [], []>} : vector<128x16xbf16>, vector<16x64xbf16>, vector<128x64xf32> -> vector<128x64xf32>
    %c0_3 = arith.constant 0 : index
    %c0_4 = arith.constant 0 : index
    %3 = vector.load %arg3[%c0_3, %c0_4] : memref<1x64xf32, #tpu.memory_space<vmem>>, vector<1x64xf32>
    %4 = vector.broadcast %3 : vector<1x64xf32> to vector<128x64xf32>
    %5 = arith.addf %2, %4 : vector<128x64xf32>
    %cst_5 = arith.constant 0.000000e+00 : f32
    %6 = vector.broadcast %cst_5 : f32 to vector<128x64xf32>
    %7 = arith.cmpf ogt, %5, %6 : vector<128x64xf32>
    %cst_6 = arith.constant 0.00999999977 : f32
    %8 = vector.broadcast %cst_6 : f32 to vector<128x64xf32>
    %9 = arith.mulf %8, %5 : vector<128x64xf32>
    %10 = arith.select %7, %5, %9 : vector<128x64xi1>, vector<128x64xf32>
    %11 = arith.truncf %10 : vector<128x64xf32> to vector<128x64xbf16>
    %c0_7 = arith.constant 0 : index
    %c0_8 = arith.constant 0 : index
    %12 = vector.load %arg4[%c0_7, %c0_8] : memref<128x64xbf16, #tpu.memory_space<vmem>>, vector<128x64xbf16>
    tpu.vector_store %arg4[%c0_7, %c0_8], %11 {strides = array<i32>} : memref<128x64xbf16, #tpu.memory_space<vmem>>, vector<128x64xbf16>,
    return
  }
  func.func @transform_0(%arg0: i32) -> (i32, i32) {
    %c0_i32 = arith.constant 0 : i32
    %c0_i32_0 = arith.constant 0 : i32
    return %arg0, %c0_i32 : i32, i32
  }
  func.func @transform_1(%arg0: i32) -> (i32, i32) {
    %c0_i32 = arith.constant 0 : i32
    %c0_i32_0 = arith.constant 0 : i32
    %c0_i32_1 = arith.constant 0 : i32
    return %c0_i32, %c0_i32_0 : i32, i32
  }
  func.func @transform_2(%arg0: i32) -> (i32, i32) {
    %c0_i32 = arith.constant 0 : i32
    %c0_i32_0 = arith.constant 0 : i32
    %c0_i32_1 = arith.constant 0 : i32
    return %c0_i32, %c0_i32_0 : i32, i32
  }
  func.func @transform_3(%arg0: i32) -> (i32, i32) {
    %c0_i32 = arith.constant 0 : i32
    %c0_i32_0 = arith.constant 0 : i32
    return %arg0, %c0_i32 : i32, i32
  }
}

module attributes {stable_mosaic.version = 11 : i64} {
  func.func @_mm_bias_bn_lrelu_kernel(%arg0: memref<32x1024xbf16, #tpu.memory_space<vmem>>, %arg1: memref<1024x128xbf16, #tpu.memory_space<vmem>>, %arg2: memref<1x128xf32, #tpu.memory_space<vmem>>, %arg3: memref<1x128xf32, #tpu.memory_space<vmem>>, %arg4: memref<1x128xf32, #tpu.memory_space<vmem>>, %arg5: memref<32x128xbf16, #tpu.memory_space<vmem>>) attributes {dimension_semantics = [], scalar_prefetch = 0 : i64, scratch_operands = 0 : i64, tpu.core_type = #tpu.core_type<tc>} {
    %c0 = arith.constant 0 : index
    %c0_0 = arith.constant 0 : index
    %0 = vector.load %arg0[%c0, %c0_0] : memref<32x1024xbf16, #tpu.memory_space<vmem>>, vector<32x1024xbf16>
    %c0_1 = arith.constant 0 : index
    %c0_2 = arith.constant 0 : index
    %1 = vector.load %arg1[%c0_1, %c0_2] : memref<1024x128xbf16, #tpu.memory_space<vmem>>, vector<1024x128xbf16>
    %cst = arith.constant dense<0.000000e+00> : vector<32x128xf32>
    %2 = tpu.matmul %0, %1, %cst {dimension_numbers = #tpu.dot_dimension_numbers<[1], [0], [0], [1], [0, 0, 1, 1], [], []>} : vector<32x1024xbf16>, vector<1024x128xbf16>, vector<32x128xf32> -> vector<32x128xf32>
    %c0_3 = arith.constant 0 : index
    %c0_4 = arith.constant 0 : index
    %3 = vector.load %arg2[%c0_3, %c0_4] : memref<1x128xf32, #tpu.memory_space<vmem>>, vector<1x128xf32>
    %4 = vector.broadcast %3 : vector<1x128xf32> to vector<32x128xf32>
    %5 = arith.addf %2, %4 : vector<32x128xf32>
    %cst_5 = arith.constant dense<0.000000e+00> : vector<128xf32>
    %6 = vector.multi_reduction <add>, %5, %cst_5 [0] : vector<32x128xf32> to vector<128xf32>
    %7 = vector.shape_cast %6 : vector<128xf32> to vector<1x128xf32>
    %cst_6 = arith.constant 3.200000e+01 : f32
    %8 = vector.broadcast %cst_6 : f32 to vector<1x128xf32>
    %9 = arith.divf %7, %8 : vector<1x128xf32>
    %10 = vector.broadcast %9 : vector<1x128xf32> to vector<32x128xf32>
    %11 = arith.subf %5, %10 : vector<32x128xf32>
    %12 = arith.mulf %11, %11 : vector<32x128xf32>
    %cst_7 = arith.constant dense<0.000000e+00> : vector<128xf32>
    %13 = vector.multi_reduction <add>, %12, %cst_7 [0] : vector<32x128xf32> to vector<128xf32>
    %14 = vector.shape_cast %13 : vector<128xf32> to vector<1x128xf32>
    %cst_8 = arith.constant 3.200000e+01 : f32
    %15 = vector.broadcast %cst_8 : f32 to vector<1x128xf32>
    %16 = arith.divf %14, %15 : vector<1x128xf32>
    %c0_9 = arith.constant 0 : index
    %c0_10 = arith.constant 0 : index
    %17 = vector.load %arg3[%c0_9, %c0_10] : memref<1x128xf32, #tpu.memory_space<vmem>>, vector<1x128xf32>
    %18 = vector.broadcast %9 : vector<1x128xf32> to vector<32x128xf32>
    %19 = arith.subf %5, %18 : vector<32x128xf32>
    %20 = vector.broadcast %17 : vector<1x128xf32> to vector<32x128xf32>
    %21 = arith.mulf %20, %19 : vector<32x128xf32>
    %cst_11 = arith.constant 9.99999974E-6 : f32
    %22 = vector.broadcast %cst_11 : f32 to vector<1x128xf32>
    %23 = arith.addf %16, %22 : vector<1x128xf32>
    %24 = math.rsqrt %23 : vector<1x128xf32>
    %25 = vector.broadcast %24 : vector<1x128xf32> to vector<32x128xf32>
    %26 = arith.mulf %21, %25 : vector<32x128xf32>
    %c0_12 = arith.constant 0 : index
    %c0_13 = arith.constant 0 : index
    %27 = vector.load %arg4[%c0_12, %c0_13] : memref<1x128xf32, #tpu.memory_space<vmem>>, vector<1x128xf32>
    %28 = vector.broadcast %27 : vector<1x128xf32> to vector<32x128xf32>
    %29 = arith.addf %26, %28 : vector<32x128xf32>
    %cst_14 = arith.constant 0.000000e+00 : f32
    %30 = vector.broadcast %cst_14 : f32 to vector<32x128xf32>
    %31 = arith.cmpf ogt, %29, %30 : vector<32x128xf32>
    %cst_15 = arith.constant 0.00999999977 : f32
    %32 = vector.broadcast %cst_15 : f32 to vector<32x128xf32>
    %33 = arith.mulf %32, %29 : vector<32x128xf32>
    %34 = arith.select %31, %29, %33 : vector<32x128xi1>, vector<32x128xf32>
    %35 = arith.truncf %34 : vector<32x128xf32> to vector<32x128xbf16>
    %c0_16 = arith.constant 0 : index
    %c0_17 = arith.constant 0 : index
    %36 = vector.load %arg5[%c0_16, %c0_17] : memref<32x128xbf16, #tpu.memory_space<vmem>>, vector<32x128xbf16>
    tpu.vector_store %arg5[%c0_16, %c0_17], %35 {strides = array<i32>} : memref<32x128xbf16, #tpu.memory_space<vmem>>, vector<32x128xbf16>,
    return
  }
}

module attributes {stable_mosaic.version = 11 : i64} {
  func.func @_fc_fused_kernel(%arg0: memref<2x2048xbf16, #tpu.memory_space<vmem>>, %arg1: memref<2048x1024xbf16, #tpu.memory_space<vmem>>, %arg2: memref<1x1024xf32, #tpu.memory_space<vmem>>, %arg3: memref<1x1024xf32, #tpu.memory_space<vmem>>, %arg4: memref<1x1024xf32, #tpu.memory_space<vmem>>, %arg5: memref<1024x128xbf16, #tpu.memory_space<vmem>>, %arg6: memref<1x128xf32, #tpu.memory_space<vmem>>, %arg7: memref<2x128xf32, #tpu.memory_space<vmem>>) attributes {dimension_semantics = [], scalar_prefetch = 0 : i64, scratch_operands = 0 : i64, tpu.core_type = #tpu.core_type<tc>} {
    %c0 = arith.constant 0 : index
    %c0_0 = arith.constant 0 : index
    %0 = vector.load %arg0[%c0, %c0_0] : memref<2x2048xbf16, #tpu.memory_space<vmem>>, vector<2x2048xbf16>
    %c0_1 = arith.constant 0 : index
    %c0_2 = arith.constant 0 : index
    %1 = vector.load %arg1[%c0_1, %c0_2] : memref<2048x1024xbf16, #tpu.memory_space<vmem>>, vector<2048x1024xbf16>
    %cst = arith.constant dense<0.000000e+00> : vector<2x1024xf32>
    %2 = tpu.matmul %0, %1, %cst {dimension_numbers = #tpu.dot_dimension_numbers<[1], [0], [0], [1], [0, 0, 1, 1], [], []>} : vector<2x2048xbf16>, vector<2048x1024xbf16>, vector<2x1024xf32> -> vector<2x1024xf32>
    %c0_3 = arith.constant 0 : index
    %c0_4 = arith.constant 0 : index
    %3 = vector.load %arg2[%c0_3, %c0_4] : memref<1x1024xf32, #tpu.memory_space<vmem>>, vector<1x1024xf32>
    %4 = vector.broadcast %3 : vector<1x1024xf32> to vector<2x1024xf32>
    %5 = arith.addf %2, %4 : vector<2x1024xf32>
    %cst_5 = arith.constant dense<0.000000e+00> : vector<1024xf32>
    %6 = vector.multi_reduction <add>, %5, %cst_5 [0] : vector<2x1024xf32> to vector<1024xf32>
    %7 = vector.shape_cast %6 : vector<1024xf32> to vector<1x1024xf32>
    %cst_6 = arith.constant 2.000000e+00 : f32
    %8 = vector.broadcast %cst_6 : f32 to vector<1x1024xf32>
    %9 = arith.divf %7, %8 : vector<1x1024xf32>
    %10 = vector.broadcast %9 : vector<1x1024xf32> to vector<2x1024xf32>
    %11 = arith.subf %5, %10 : vector<2x1024xf32>
    %12 = arith.mulf %11, %11 : vector<2x1024xf32>
    %cst_7 = arith.constant dense<0.000000e+00> : vector<1024xf32>
    %13 = vector.multi_reduction <add>, %12, %cst_7 [0] : vector<2x1024xf32> to vector<1024xf32>
    %14 = vector.shape_cast %13 : vector<1024xf32> to vector<1x1024xf32>
    %cst_8 = arith.constant 2.000000e+00 : f32
    %15 = vector.broadcast %cst_8 : f32 to vector<1x1024xf32>
    %16 = arith.divf %14, %15 : vector<1x1024xf32>
    %c0_9 = arith.constant 0 : index
    %c0_10 = arith.constant 0 : index
    %17 = vector.load %arg3[%c0_9, %c0_10] : memref<1x1024xf32, #tpu.memory_space<vmem>>, vector<1x1024xf32>
    %18 = vector.broadcast %9 : vector<1x1024xf32> to vector<2x1024xf32>
    %19 = arith.subf %5, %18 : vector<2x1024xf32>
    %20 = vector.broadcast %17 : vector<1x1024xf32> to vector<2x1024xf32>
    %21 = arith.mulf %20, %19 : vector<2x1024xf32>
    %cst_11 = arith.constant 9.99999974E-6 : f32
    %22 = vector.broadcast %cst_11 : f32 to vector<1x1024xf32>
    %23 = arith.addf %16, %22 : vector<1x1024xf32>
    %24 = math.rsqrt %23 : vector<1x1024xf32>
    %25 = vector.broadcast %24 : vector<1x1024xf32> to vector<2x1024xf32>
    %26 = arith.mulf %21, %25 : vector<2x1024xf32>
    %c0_12 = arith.constant 0 : index
    %c0_13 = arith.constant 0 : index
    %27 = vector.load %arg4[%c0_12, %c0_13] : memref<1x1024xf32, #tpu.memory_space<vmem>>, vector<1x1024xf32>
    %28 = vector.broadcast %27 : vector<1x1024xf32> to vector<2x1024xf32>
    %29 = arith.addf %26, %28 : vector<2x1024xf32>
    %30 = arith.truncf %29 : vector<2x1024xf32> to vector<2x1024xbf16>
    %c0_14 = arith.constant 0 : index
    %c0_15 = arith.constant 0 : index
    %31 = vector.load %arg5[%c0_14, %c0_15] : memref<1024x128xbf16, #tpu.memory_space<vmem>>, vector<1024x128xbf16>
    %cst_16 = arith.constant dense<0.000000e+00> : vector<2x128xf32>
    %32 = tpu.matmul %30, %31, %cst_16 {dimension_numbers = #tpu.dot_dimension_numbers<[1], [0], [0], [1], [0, 0, 1, 1], [], []>} : vector<2x1024xbf16>, vector<1024x128xbf16>, vector<2x128xf32> -> vector<2x128xf32>
    %c0_17 = arith.constant 0 : index
    %c0_18 = arith.constant 0 : index
    %33 = vector.load %arg6[%c0_17, %c0_18] : memref<1x128xf32, #tpu.memory_space<vmem>>, vector<1x128xf32>
    %34 = vector.broadcast %33 : vector<1x128xf32> to vector<2x128xf32>
    %35 = arith.addf %32, %34 : vector<2x128xf32>
    %cst_19 = arith.constant 0.000000e+00 : f32
    %36 = vector.broadcast %cst_19 : f32 to vector<2x128xf32>
    %37 = arith.subf %36, %35 : vector<2x128xf32>
    %38 = math.exp %37 : vector<2x128xf32>
    %cst_20 = arith.constant 1.000000e+00 : f32
    %39 = vector.broadcast %cst_20 : f32 to vector<2x128xf32>
    %40 = arith.addf %39, %38 : vector<2x128xf32>
    %cst_21 = arith.constant 1.000000e+00 : f32
    %41 = vector.broadcast %cst_21 : f32 to vector<2x128xf32>
    %42 = arith.divf %41, %40 : vector<2x128xf32>
    %c0_22 = arith.constant 0 : index
    %c0_23 = arith.constant 0 : index
    %43 = vector.load %arg7[%c0_22, %c0_23] : memref<2x128xf32, #tpu.memory_space<vmem>>, vector<2x128xf32>
    tpu.vector_store %arg7[%c0_22, %c0_23], %42 {strides = array<i32>} : memref<2x128xf32, #tpu.memory_space<vmem>>, vector<2x128xf32>,
    return
  }
}

</mosaic_0001>

<llo_original>
// kernel: discriminator_forward.3
$region0: #{discriminator_forward.3}
  #allocation0 [shape = 'u32[]', space=smem, size = 0x4, offset = 0x4, fixed_abs, tag = 'smem constant byte address 0x4 - core index']
  #allocation1 [shape = 'u32[72,128]{1,0:T(1,128)}', space=vmem, size = 0x9000, scoped, tag = 'internal scratch']
  %s0 = inlined_call_operand.vmem [shape: bf16[128,16], index: 0, kind: input, shape index: {}]
  %s1 = inlined_call_operand.hbm [shape: bf16[16,64], index: 1, kind: input, shape index: {}]
  %s2 = inlined_call_operand.hbm [shape: f32[1,64], index: 2, kind: input, shape index: {}]
  %s3 = inlined_call_operand.vmem [shape: bf16[128,64], index: 3, kind: output, shape index: {}]
  %s4 = sld [smem:[#allocation0]]
  $region30: #{discriminator_forward.3} parent=0
    _
  %s6 = ssub.s32 1, %s4
  %s7 = scalar_select 0, %s6, %s4
  $region1: #{discriminator_forward.3} parent=0
    #allocation2 [shape = 'u8[4096]{0}', space=vmem, size = 0x1000, scoped, tag = 'input window, operand 1, single buffered']
    #allocation3 [shape = 's32[1]{0}', space=sflag, size = 0x4, scoped, tag = 'scoped memory for discriminator_forward.3']
    #allocation4 [shape = 'u8[512]{0}', space=vmem, size = 0x400, scoped, tag = 'input window, operand 2, single buffered']
    #allocation5 [shape = 's32[1]{0}', space=sflag, size = 0x4, scoped, tag = 'scoped memory for discriminator_forward.3']
    %8 = vsyncpa [#allocation3], 0
    %9 = vsyncpa [#allocation5], 0
    // Predicated region
    $region2: #{discriminator_forward.3} parent=1 // pred_check
      _
    $region3: #{discriminator_forward.3} parent=1 // pred_check_branch
      %11 = sbr.rel (0) target = $region5
    $region4: #{discriminator_forward.3} parent=1 // pred_region
      _
    $region5: #{discriminator_forward.3} parent=1 // pred_fallthru
      _
    // Predicated region
    $region6: #{discriminator_forward.3} parent=1 // pred_check
      _
    $region7: #{discriminator_forward.3} parent=1 // pred_check_branch
      %13 = sbr.rel (0) target = $region9
    $region8: #{discriminator_forward.3} parent=1 // pred_region
      %15 = vsyncadd [#allocation3], 0
      %s16 = sshll.u32 %s1, 4
      %s17 = int_to_ptr.hbm [resolvable:$true] %s16
      %s18 = sshll.u32 [#allocation2], 4
      %s19 = int_to_ptr.vmem [resolvable:$true] %s18
      %24 = dma.hbm_to_vmem [thread:$0]  %s17, 128, %s19, [#allocation3], 64, 64, 4
    $region9: #{discriminator_forward.3} parent=1 // pred_fallthru
      _
    // Predicated region
    $region10: #{discriminator_forward.3} parent=1 // pred_check
      _
    $region11: #{discriminator_forward.3} parent=1 // pred_check_branch
      %26 = sbr.rel (0) target = $region13
    $region12: #{discriminator_forward.3} parent=1 // pred_region
      %28 = vsyncadd [#allocation5], 0
      %s30 = sshll.u32 %s2, 4
      %s31 = int_to_ptr.hbm [resolvable:$true] %s30
      %s32 = sshll.u32 [#allocation4], 4
      %s33 = int_to_ptr.vmem [resolvable:$true] %s32
      %35 = dma.hbm_to_vmem [thread:$0]  %s31, 16, %s33, [#allocation5]
    $region13: #{discriminator_forward.3} parent=1 // pred_fallthru
      _
    // Predicated region
    $region14: #{discriminator_forward.3} parent=1 // pred_check
      _
    $region15: #{discriminator_forward.3} parent=1 // pred_check_branch
      %37 = sbr.rel (0) target = $region17
    $region16: #{discriminator_forward.3} parent=1 // pred_region
      %39 = dma.done [#allocation3], 128
    $region17: #{discriminator_forward.3} parent=1 // pred_fallthru
      _
    // Predicated region
    $region18: #{discriminator_forward.3} parent=1 // pred_check
      _
    $region19: #{discriminator_forward.3} parent=1 // pred_check_branch
      %41 = sbr.rel (0) target = $region21
    $region20: #{discriminator_forward.3} parent=1 // pred_region
      %43 = dma.done [#allocation5], 16
    $region21: #{discriminator_forward.3} parent=1 // pred_fallthru
      _
    %v45 = vld [vmem:[%s0] sm:$0xf]
    %v46 = vld [vmem:[%s0 + $0x4] sm:$0xf]
    %v47 = vld [vmem:[%s0 + $0x8] sm:$0xf]
    %v48 = vld [vmem:[%s0 + $0xc] sm:$0xf]
    %v49 = vld [vmem:[%s0 + $0x10] sm:$0xf]
    %v50 = vld [vmem:[%s0 + $0x14] sm:$0xf]
    %v51 = vld [vmem:[%s0 + $0x18] sm:$0xf]
    %v52 = vld [vmem:[%s0 + $0x1c] sm:$0xf]
    %v53 = vld [vmem:[%s0 + $0x20] sm:$0xf]
    %v54 = vld [vmem:[%s0 + $0x24] sm:$0xf]
    %v55 = vld [vmem:[%s0 + $0x28] sm:$0xf]
    %v56 = vld [vmem:[%s0 + $0x2c] sm:$0xf]
    %v57 = vld [vmem:[%s0 + $0x30] sm:$0xf]
    %v58 = vld [vmem:[%s0 + $0x34] sm:$0xf]
    %v59 = vld [vmem:[%s0 + $0x38] sm:$0xf]
    %v60 = vld [vmem:[%s0 + $0x3c] sm:$0xf]
    %v61 = vld [vmem:[#allocation2] sm:$0xf]
    %v62 = vld [vmem:[#allocation2 + $0x4] sm:$0xf]
    %v63 = vld [vmem:[#allocation4] sm:$0x1]
    %v65 = vperm.slane %v63, 0
    %v83 = vunpack.c.l.b16 %v45
    %v84 = vunpack.c.l.b16 %v46
    %v85 = vunpack.c.l.b16 %v47
    %v86 = vunpack.c.l.b16 %v48
    %v87 = vunpack.c.l.b16 %v49
    %v88 = vunpack.c.l.b16 %v50
    %v89 = vunpack.c.l.b16 %v51
    %v90 = vunpack.c.l.b16 %v52
    %v91 = vunpack.c.l.b16 %v53
    %v92 = vunpack.c.l.b16 %v54
    %v93 = vunpack.c.l.b16 %v55
    %v94 = vunpack.c.l.b16 %v56
    %v95 = vunpack.c.l.b16 %v57
    %v96 = vunpack.c.l.b16 %v58
    %v97 = vunpack.c.l.b16 %v59
    %v98 = vunpack.c.l.b16 %v60
    %v99 = vpack.c.b16 %v84, %v83
    %v100 = vpack.c.b16 %v86, %v85
    %v101 = vpack.c.b16 %v88, %v87
    %v102 = vpack.c.b16 %v90, %v89
    %v103 = vpack.c.b16 %v92, %v91
    %v104 = vpack.c.b16 %v94, %v93
    %v105 = vpack.c.b16 %v96, %v95
    %v106 = vpack.c.b16 %v98, %v97
    %v109 = vunpack.c.l.b16 %v61
    %v110 = vunpack.c.l.b16 %v62
    %v111 = vpack.c.b16 %v110, %v109
    %vm113 = vcmask 130048
    %v115 = vsel %vm113, %v99, 0
    %v118 = vsel %vm113, %v100, 0
    %v121 = vsel %vm113, %v101, 0
    %v124 = vsel %vm113, %v102, 0
    %v127 = vsel %vm113, %v103, 0
    %v130 = vsel %vm113, %v104, 0
    %v133 = vsel %vm113, %v105, 0
    %v136 = vsel %vm113, %v106, 0
    %138 = vmatpush.bf16.msra.mxu0 0
    %139 = vmatpush.bf16.msra.mxu0 0
    %140 = vmatpush.bf16.msra.mxu0 0
    %141 = vmatpush.bf16.msra.mxu0 0
    %142 = vmatpush.bf16.msra.mxu0 0
    %143 = vmatpush.bf16.msra.mxu0 0
    %144 = vmatpush.bf16.msra.mxu0 0
    %145 = vmatpush.bf16.msra.mxu0 %v111
    %146 = vmatmul.bf16.gmra.mxu0 %v115
    %v147 = vpop.f32.mrf.mxu0
    %v148 = vadd.f32 %v65, %v147
    %v149 = vpop.f32.mrf.mxu0
    %v150 = vadd.f32 %v65, %v149
    %151 = vmatmul.bf16.gmra.mxu0 %v118
    %v152 = vpop.f32.mrf.mxu0
    %v153 = vadd.f32 %v65, %v152
    %v154 = vpop.f32.mrf.mxu0
    %v155 = vadd.f32 %v65, %v154
    %156 = vmatmul.bf16.gmra.mxu0 %v121
    %v157 = vpop.f32.mrf.mxu0
    %v158 = vadd.f32 %v65, %v157
    %v159 = vpop.f32.mrf.mxu0
    %v160 = vadd.f32 %v65, %v159
    %161 = vmatmul.bf16.gmra.mxu0 %v124
    %v162 = vpop.f32.mrf.mxu0
    %v163 = vadd.f32 %v65, %v162
    %v164 = vpop.f32.mrf.mxu0
    %v165 = vadd.f32 %v65, %v164
    %166 = vmatmul.bf16.gmra.mxu0 %v127
    %v167 = vpop.f32.mrf.mxu0
    %v168 = vadd.f32 %v65, %v167
    %v169 = vpop.f32.mrf.mxu0
    %v170 = vadd.f32 %v65, %v169
    %171 = vmatmul.bf16.gmra.mxu0 %v130
    %v172 = vpop.f32.mrf.mxu0
    %v173 = vadd.f32 %v65, %v172
    %v174 = vpop.f32.mrf.mxu0
    %v175 = vadd.f32 %v65, %v174
    %176 = vmatmul.bf16.gmra.mxu0 %v133
    %v177 = vpop.f32.mrf.mxu0
    %v178 = vadd.f32 %v65, %v177
    %v179 = vpop.f32.mrf.mxu0
    %v180 = vadd.f32 %v65, %v179
    %181 = vmatmul.bf16.gmra.mxu0 %v136
    %v182 = vpop.f32.mrf.mxu0
    %v183 = vadd.f32 %v65, %v182
    %v184 = vpop.f32.mrf.mxu0
    %v185 = vadd.f32 %v65, %v184
    %186 = vdwg.mxu0
    %vm187 = vcmp.gt.f32.partialorder %v148, 0.0
    %vm188 = vcmp.gt.f32.partialorder %v150, 0.0
    %vm189 = vcmp.gt.f32.partialorder %v153, 0.0
    %vm190 = vcmp.gt.f32.partialorder %v155, 0.0
    %vm191 = vcmp.gt.f32.partialorder %v158, 0.0
    %vm192 = vcmp.gt.f32.partialorder %v160, 0.0
    %vm193 = vcmp.gt.f32.partialorder %v163, 0.0
    %vm194 = vcmp.gt.f32.partialorder %v165, 0.0
    %vm195 = vcmp.gt.f32.partialorder %v168, 0.0
    %vm196 = vcmp.gt.f32.partialorder %v170, 0.0
    %vm197 = vcmp.gt.f32.partialorder %v173, 0.0
    %vm198 = vcmp.gt.f32.partialorder %v175, 0.0
    %vm199 = vcmp.gt.f32.partialorder %v178, 0.0
    %vm200 = vcmp.gt.f32.partialorder %v180, 0.0
    %vm201 = vcmp.gt.f32.partialorder %v183, 0.0
    %vm202 = vcmp.gt.f32.partialorder %v185, 0.0
    %v203 = vmul.f32 %v148, 0.01
    %v204 = vmul.f32 %v150, 0.01
    %v205 = vmul.f32 %v153, 0.01
    %v206 = vmul.f32 %v155, 0.01
    %v207 = vmul.f32 %v158, 0.01
    %v208 = vmul.f32 %v160, 0.01
    %v209 = vmul.f32 %v163, 0.01
    %v210 = vmul.f32 %v165, 0.01
    %v211 = vmul.f32 %v168, 0.01
    %v212 = vmul.f32 %v170, 0.01
    %v213 = vmul.f32 %v173, 0.01
    %v214 = vmul.f32 %v175, 0.01
    %v215 = vmul.f32 %v178, 0.01
    %v216 = vmul.f32 %v180, 0.01
    %v217 = vmul.f32 %v183, 0.01
    %v218 = vmul.f32 %v185, 0.01
    %v219 = vsel %vm187, %v148, %v203
    %v220 = vsel %vm188, %v150, %v204
    %v221 = vsel %vm189, %v153, %v205
    %v222 = vsel %vm190, %v155, %v206
    %v223 = vsel %vm191, %v158, %v207
    %v224 = vsel %vm192, %v160, %v208
    %v225 = vsel %vm193, %v163, %v209
    %v226 = vsel %vm194, %v165, %v210
    %v227 = vsel %vm195, %v168, %v211
    %v228 = vsel %vm196, %v170, %v212
    %v229 = vsel %vm197, %v173, %v213
    %v230 = vsel %vm198, %v175, %v214
    %v231 = vsel %vm199, %v178, %v215
    %v232 = vsel %vm200, %v180, %v216
    %v233 = vsel %vm201, %v183, %v217
    %v234 = vsel %vm202, %v185, %v218
    %v235 = vpack.c.bf16 %v219, %v219
    %v236 = vpack.c.bf16 %v220, %v220
    %v237 = vpack.c.bf16 %v221, %v221
    %v238 = vpack.c.bf16 %v222, %v222
    %v239 = vpack.c.bf16 %v223, %v223
    %v240 = vpack.c.bf16 %v224, %v224
    %v241 = vpack.c.bf16 %v225, %v225
    %v242 = vpack.c.bf16 %v226, %v226
    %v243 = vpack.c.bf16 %v227, %v227
    %v244 = vpack.c.bf16 %v228, %v228
    %v245 = vpack.c.bf16 %v229, %v229
    %v246 = vpack.c.bf16 %v230, %v230
    %v247 = vpack.c.bf16 %v231, %v231
    %v248 = vpack.c.bf16 %v232, %v232
    %v249 = vpack.c.bf16 %v233, %v233
    %v250 = vpack.c.bf16 %v234, %v234
    %vm251 = vcmask 519168
    %252 = vst.msk [vmem:[%s3] sm:$0xf] %vm251, %v235
    %253 = vst.msk [vmem:[%s3 + $0x4] sm:$0xf] %vm251, %v236
    %254 = vst.msk [vmem:[%s3 + $0x8] sm:$0xf] %vm251, %v237
    %255 = vst.msk [vmem:[%s3 + $0xc] sm:$0xf] %vm251, %v238
    %256 = vst.msk [vmem:[%s3 + $0x10] sm:$0xf] %vm251, %v239
    %257 = vst.msk [vmem:[%s3 + $0x14] sm:$0xf] %vm251, %v240
    %258 = vst.msk [vmem:[%s3 + $0x18] sm:$0xf] %vm251, %v241
    %259 = vst.msk [vmem:[%s3 + $0x1c] sm:$0xf] %vm251, %v242
    %260 = vst.msk [vmem:[%s3 + $0x20] sm:$0xf] %vm251, %v243
    %261 = vst.msk [vmem:[%s3 + $0x24] sm:$0xf] %vm251, %v244
    %262 = vst.msk [vmem:[%s3 + $0x28] sm:$0xf] %vm251, %v245
    %263 = vst.msk [vmem:[%s3 + $0x2c] sm:$0xf] %vm251, %v246
    %264 = vst.msk [vmem:[%s3 + $0x30] sm:$0xf] %vm251, %v247
    %265 = vst.msk [vmem:[%s3 + $0x34] sm:$0xf] %vm251, %v248
    %266 = vst.msk [vmem:[%s3 + $0x38] sm:$0xf] %vm251, %v249
    %267 = vst.msk [vmem:[%s3 + $0x3c] sm:$0xf] %vm251, %v250
    // Predicated region
    $region22: #{discriminator_forward.3} parent=1 // pred_check
      _
    $region23: #{discriminator_forward.3} parent=1 // pred_check_branch
      %269 = sbr.rel (0) target = $region25
    $region24: #{discriminator_forward.3} parent=1 // pred_region
      _
    $region25: #{discriminator_forward.3} parent=1 // pred_fallthru
      _
    // Predicated region
    $region26: #{discriminator_forward.3} parent=1 // pred_check
      _
    $region27: #{discriminator_forward.3} parent=1 // pred_check_branch
      %271 = sbr.rel (0) target = $region29
    $region28: #{discriminator_forward.3} parent=1 // pred_region
      _
    $region29: #{discriminator_forward.3} parent=1 // pred_fallthru
      _
    %272 = vsyncpa [#allocation3], 1
    %273 = vsyncpa [#allocation5], 1

// kernel: discriminator_forward.4
$region0: #{discriminator_forward.4}
  #allocation0 [shape = 'u32[]', space=smem, size = 0x4, offset = 0x4, fixed_abs, tag = 'smem constant byte address 0x4 - core index']
  #allocation1 [shape = 'u32[72,128]{1,0:T(1,128)}', space=vmem, size = 0x9000, scoped, tag = 'internal scratch']
  %s0 = inlined_call_operand.vmem [shape: bf16[32,1024], index: 0, kind: input, shape index: {}]
  %s1 = inlined_call_operand.hbm [shape: bf16[1024,128], index: 1, kind: input, shape index: {}]
  %s2 = inlined_call_operand.hbm [shape: f32[1,128], index: 2, kind: input, shape index: {}]
  %s3 = inlined_call_operand.hbm [shape: f32[1,128], index: 3, kind: input, shape index: {}]
  %s4 = inlined_call_operand.hbm [shape: f32[1,128], index: 4, kind: input, shape index: {}]
  %s5 = inlined_call_operand.vmem [shape: bf16[32,128], index: 5, kind: output, shape index: {}]
  %s6 = sld [smem:[#allocation0]]
  $region46: #{discriminator_forward.4} parent=0
    _
  %s8 = ssub.s32 1, %s6
  %s9 = scalar_select 0, %s8, %s6
  $region1: #{discriminator_forward.4} parent=0
    #allocation2 [shape = 'u8[262144]{0}', space=vmem, size = 0x40000, scoped, tag = 'input window, operand 1, single buffered']
    #allocation3 [shape = 's32[1]{0}', space=sflag, size = 0x4, scoped, tag = 'scoped memory for discriminator_forward.4']
    #allocation4 [shape = 'u8[512]{0}', space=vmem, size = 0x400, scoped, tag = 'input window, operand 2, single buffered']
    #allocation5 [shape = 's32[1]{0}', space=sflag, size = 0x4, scoped, tag = 'scoped memory for discriminator_forward.4']
    #allocation6 [shape = 'u8[512]{0}', space=vmem, size = 0x400, scoped, tag = 'input window, operand 3, single buffered']
    #allocation7 [shape = 'u8[512]{0}', space=vmem, size = 0x400, scoped, tag = 'input window, operand 4, single buffered']
    #allocation8 [shape = 's32[1]{0}', space=sflag, size = 0x4, scoped, tag = 'scoped memory for discriminator_forward.4']
    %10 = vsyncpa [#allocation3], 0
    %11 = vsyncpa [#allocation5], 0
    %12 = vsyncpa [#allocation8], 0
    // Predicated region
    $region2: #{discriminator_forward.4} parent=1 // pred_check
      _
    $region3: #{discriminator_forward.4} parent=1 // pred_check_branch
      %14 = sbr.rel (0) target = $region5
    $region4: #{discriminator_forward.4} parent=1 // pred_region
      _
    $region5: #{discriminator_forward.4} parent=1 // pred_fallthru
      _
    // Predicated region
    $region6: #{discriminator_forward.4} parent=1 // pred_check
      _
    $region7: #{discriminator_forward.4} parent=1 // pred_check_branch
      %16 = sbr.rel (0) target = $region9
    $region8: #{discriminator_forward.4} parent=1 // pred_region
      %18 = vsyncadd [#allocation3], 0
      %s19 = sshll.u32 %s1, 4
      %s20 = int_to_ptr.hbm [resolvable:$true] %s19
      %s21 = sshll.u32 [#allocation2], 4
      %s22 = int_to_ptr.vmem [resolvable:$true] %s21
      %27 = dma.hbm_to_vmem [thread:$0]  %s20, 8192, %s22, [#allocation3], 64, 64, 4
    $region9: #{discriminator_forward.4} parent=1 // pred_fallthru
      _
    // Predicated region
    $region10: #{discriminator_forward.4} parent=1 // pred_check
      _
    $region11: #{discriminator_forward.4} parent=1 // pred_check_branch
      %29 = sbr.rel (0) target = $region13
    $region12: #{discriminator_forward.4} parent=1 // pred_region
      %31 = vsyncadd [#allocation5], 0
      %s33 = sshll.u32 %s2, 4
      %s34 = int_to_ptr.hbm [resolvable:$true] %s33
      %s35 = sshll.u32 [#allocation4], 4
      %s36 = int_to_ptr.vmem [resolvable:$true] %s35
      %38 = dma.hbm_to_vmem [thread:$0]  %s34, 16, %s36, [#allocation5]
    $region13: #{discriminator_forward.4} parent=1 // pred_fallthru
      _
    // Predicated region
    $region14: #{discriminator_forward.4} parent=1 // pred_check
      _
    $region15: #{discriminator_forward.4} parent=1 // pred_check_branch
      %40 = sbr.rel (0) target = $region17
    $region16: #{discriminator_forward.4} parent=1 // pred_region
      %42 = vsyncadd [#allocation5], 0
      %s44 = sshll.u32 %s3, 4
      %s45 = int_to_ptr.hbm [resolvable:$true] %s44
      %s46 = sshll.u32 [#allocation6], 4
      %s47 = int_to_ptr.vmem [resolvable:$true] %s46
      %49 = dma.hbm_to_vmem [thread:$0]  %s45, 16, %s47, [#allocation5]
    $region17: #{discriminator_forward.4} parent=1 // pred_fallthru
      _
    // Predicated region
    $region18: #{discriminator_forward.4} parent=1 // pred_check
      _
    $region19: #{discriminator_forward.4} parent=1 // pred_check_branch
      %51 = sbr.rel (0) target = $region21
    $region20: #{discriminator_forward.4} parent=1 // pred_region
      %53 = vsyncadd [#allocation8], 0
      %s55 = sshll.u32 %s4, 4
      %s56 = int_to_ptr.hbm [resolvable:$true] %s55
      %s57 = sshll.u32 [#allocation7], 4
      %s58 = int_to_ptr.vmem [resolvable:$true] %s57
      %60 = dma.hbm_to_vmem [thread:$0]  %s56, 16, %s58, [#allocation8]
    $region21: #{discriminator_forward.4} parent=1 // pred_fallthru
      _
    // Predicated region
    $region22: #{discriminator_forward.4} parent=1 // pred_check
      _
    $region23: #{discriminator_forward.4} parent=1 // pred_check_branch
      %62 = sbr.rel (0) target = $region25
    $region24: #{discriminator_forward.4} parent=1 // pred_region
      %64 = dma.done [#allocation3], 8192
    $region25: #{discriminator_forward.4} parent=1 // pred_fallthru
      _
    // Predicated region
    $region26: #{discriminator_forward.4} parent=1 // pred_check
      _
    $region27: #{discriminator_forward.4} parent=1 // pred_check_branch
      %66 = sbr.rel (0) target = $region29
    $region28: #{discriminator_forward.4} parent=1 // pred_region
      %68 = dma.done [#allocation5], 16
    $region29: #{discriminator_forward.4} parent=1 // pred_fallthru
      _
    // Predicated region
    $region30: #{discriminator_forward.4} parent=1 // pred_check
      _
    $region31: #{discriminator_forward.4} parent=1 // pred_check_branch
      %70 = sbr.rel (0) target = $region33
    $region32: #{discriminator_forward.4} parent=1 // pred_region
      %72 = dma.done [#allocation5], 16
    $region33: #{discriminator_forward.4} parent=1 // pred_fallthru
      _
    // Predicated region
    $region34: #{discriminator_forward.4} parent=1 // pred_check
      _
    $region35: #{discriminator_forward.4} parent=1 // pred_check_branch
      %74 = sbr.rel (0) target = $region37
    $region36: #{discriminator_forward.4} parent=1 // pred_region
      %76 = dma.done [#allocation8], 16
    $region37: #{discriminator_forward.4} parent=1 // pred_fallthru
      _
    %v77 = vld [vmem:[%s0] sm:$0xff]
    %v78 = vld [vmem:[%s0 + $0x8] sm:$0xff]
    %v79 = vld [vmem:[%s0 + $0x10] sm:$0xff]
    %v80 = vld [vmem:[%s0 + $0x18] sm:$0xff]
    %v81 = vld [vmem:[%s0 + $0x20] sm:$0xff]
    %v82 = vld [vmem:[%s0 + $0x28] sm:$0xff]
    %v83 = vld [vmem:[%s0 + $0x30] sm:$0xff]
    %v84 = vld [vmem:[%s0 + $0x38] sm:$0xff]
    %v85 = vld [vmem:[%s0 + $0x40] sm:$0xff]
    %v86 = vld [vmem:[%s0 + $0x48] sm:$0xff]
    %v87 = vld [vmem:[%s0 + $0x50] sm:$0xff]
    %v88 = vld [vmem:[%s0 + $0x58] sm:$0xff]
    %v89 = vld [vmem:[%s0 + $0x60] sm:$0xff]
    %v90 = vld [vmem:[%s0 + $0x68] sm:$0xff]
    %v91 = vld [vmem:[%s0 + $0x70] sm:$0xff]
    %v92 = vld [vmem:[%s0 + $0x78] sm:$0xff]
    %v93 = vld [vmem:[#allocation2] sm:$0xf]
    %v94 = vld [vmem:[#allocation2 + $0x4] sm:$0xf]
    %v95 = vld [vmem:[#allocation2 + $0x8] sm:$0xf]
    %v96 = vld [vmem:[#allocation2 + $0xc] sm:$0xf]
    %v97 = vld [vmem:[#allocation2 + $0x10] sm:$0xf]
    %v98 = vld [vmem:[#allocation2 + $0x14] sm:$0xf]
    %v99 = vld [vmem:[#allocation2 + $0x18] sm:$0xf]
    %v100 = vld [vmem:[#allocation2 + $0x1c] sm:$0xf]
    %v101 = vld [vmem:[#allocation2 + $0x20] sm:$0xf]
    %v102 = vld [vmem:[#allocation2 + $0x24] sm:$0xf]
    %v103 = vld [vmem:[#allocation2 + $0x28] sm:$0xf]
    %v104 = vld [vmem:[#allocation2 + $0x2c] sm:$0xf]
    %v105 = vld [vmem:[#allocation2 + $0x30] sm:$0xf]
    %v106 = vld [vmem:[#allocation2 + $0x34] sm:$0xf]
    %v107 = vld [vmem:[#allocation2 + $0x38] sm:$0xf]
    %v108 = vld [vmem:[#allocation2 + $0x3c] sm:$0xf]
    %v109 = vld [vmem:[#allocation2 + $0x40] sm:$0xf]
    %v110 = vld [vmem:[#allocation2 + $0x44] sm:$0xf]
    %v111 = vld [vmem:[#allocation2 + $0x48] sm:$0xf]
    %v112 = vld [vmem:[#allocation2 + $0x4c] sm:$0xf]
    %v113 = vld [vmem:[#allocation2 + $0x50] sm:$0xf]
    %v114 = vld [vmem:[#allocation2 + $0x54] sm:$0xf]
    %v115 = vld [vmem:[#allocation2 + $0x58] sm:$0xf]
    %v116 = vld [vmem:[#allocation2 + $0x5c] sm:$0xf]
    %v117 = vld [vmem:[#allocation2 + $0x60] sm:$0xf]
    %v118 = vld [vmem:[#allocation2 + $0x64] sm:$0xf]
    %v119 = vld [vmem:[#allocation2 + $0x68] sm:$0xf]
    %v120 = vld [vmem:[#allocation2 + $0x6c] sm:$0xf]
    %v121 = vld [vmem:[#allocation2 + $0x70] sm:$0xf]
    %v122 = vld [vmem:[#allocation2 + $0x74] sm:$0xf]
    %v123 = vld [vmem:[#allocation2 + $0x78] sm:$0xf]
    %v124 = vld [vmem:[#allocation2 + $0x7c] sm:$0xf]
    %v125 = vld [vmem:[#allocation2 + $0x80] sm:$0xf]
    %v126 = vld [vmem:[#allocation2 + $0x84] sm:$0xf]
    %v127 = vld [vmem:[#allocation2 + $0x88] sm:$0xf]
    %v128 = vld [vmem:[#allocation2 + $0x8c] sm:$0xf]
    %v129 = vld [vmem:[#allocation2 + $0x90] sm:$0xf]
    %v130 = vld [vmem:[#allocation2 + $0x94] sm:$0xf]
    %v131 = vld [vmem:[#allocation2 + $0x98] sm:$0xf]
    %v132 = vld [vmem:[#allocation2 + $0x9c] sm:$0xf]
    %v133 = vld [vmem:[#allocation2 + $0xa0] sm:$0xf]
    %v134 = vld [vmem:[#allocation2 + $0xa4] sm:$0xf]
    %v135 = vld [vmem:[#allocation2 + $0xa8] sm:$0xf]
    %v136 = vld [vmem:[#allocation2 + $0xac] sm:$0xf]
    %v137 = vld [vmem:[#allocation2 + $0xb0] sm:$0xf]
    %v138 = vld [vmem:[#allocation2 + $0xb4] sm:$0xf]
    %v139 = vld [vmem:[#allocation2 + $0xb8] sm:$0xf]
    %v140 = vld [vmem:[#allocation2 + $0xbc] sm:$0xf]
    %v141 = vld [vmem:[#allocation2 + $0xc0] sm:$0xf]
    %v142 = vld [vmem:[#allocation2 + $0xc4] sm:$0xf]
    %v143 = vld [vmem:[#allocation2 + $0xc8] sm:$0xf]
    %v144 = vld [vmem:[#allocation2 + $0xcc] sm:$0xf]
    %v145 = vld [vmem:[#allocation2 + $0xd0] sm:$0xf]
    %v146 = vld [vmem:[#allocation2 + $0xd4] sm:$0xf]
    %v147 = vld [vmem:[#allocation2 + $0xd8] sm:$0xf]
    %v148 = vld [vmem:[#allocation2 + $0xdc] sm:$0xf]
    %v149 = vld [vmem:[#allocation2 + $0xe0] sm:$0xf]
    %v150 = vld [vmem:[#allocation2 + $0xe4] sm:$0xf]
    %v151 = vld [vmem:[#allocation2 + $0xe8] sm:$0xf]
    %v152 = vld [vmem:[#allocation2 + $0xec] sm:$0xf]
    %v153 = vld [vmem:[#allocation2 + $0xf0] sm:$0xf]
    %v154 = vld [vmem:[#allocation2 + $0xf4] sm:$0xf]
    %v155 = vld [vmem:[#allocation2 + $0xf8] sm:$0xf]
    %v156 = vld [vmem:[#allocation2 + $0xfc] sm:$0xf]
    %v157 = vld [vmem:[#allocation2 + $0x100] sm:$0xf]
    %v158 = vld [vmem:[#allocation2 + $0x104] sm:$0xf]
    %v159 = vld [vmem:[#allocation2 + $0x108] sm:$0xf]
    %v160 = vld [vmem:[#allocation2 + $0x10c] sm:$0xf]
    %v161 = vld [vmem:[#allocation2 + $0x110] sm:$0xf]
    %v162 = vld [vmem:[#allocation2 + $0x114] sm:$0xf]
    %v163 = vld [vmem:[#allocation2 + $0x118] sm:$0xf]
    %v164 = vld [vmem:[#allocation2 + $0x11c] sm:$0xf]
    %v165 = vld [vmem:[#allocation2 + $0x120] sm:$0xf]
    %v166 = vld [vmem:[#allocation2 + $0x124] sm:$0xf]
    %v167 = vld [vmem:[#allocation2 + $0x128] sm:$0xf]
    %v168 = vld [vmem:[#allocation2 + $0x12c] sm:$0xf]
    %v169 = vld [vmem:[#allocation2 + $0x130] sm:$0xf]
    %v170 = vld [vmem:[#allocation2 + $0x134] sm:$0xf]
    %v171 = vld [vmem:[#allocation2 + $0x138] sm:$0xf]
    %v172 = vld [vmem:[#allocation2 + $0x13c] sm:$0xf]
    %v173 = vld [vmem:[#allocation2 + $0x140] sm:$0xf]
    %v174 = vld [vmem:[#allocation2 + $0x144] sm:$0xf]
    %v175 = vld [vmem:[#allocation2 + $0x148] sm:$0xf]
    %v176 = vld [vmem:[#allocation2 + $0x14c] sm:$0xf]
    %v177 = vld [vmem:[#allocation2 + $0x150] sm:$0xf]
    %v178 = vld [vmem:[#allocation2 + $0x154] sm:$0xf]
    %v179 = vld [vmem:[#allocation2 + $0x158] sm:$0xf]
    %v180 = vld [vmem:[#allocation2 + $0x15c] sm:$0xf]
    %v181 = vld [vmem:[#allocation2 + $0x160] sm:$0xf]
    %v182 = vld [vmem:[#allocation2 + $0x164] sm:$0xf]
    %v183 = vld [vmem:[#allocation2 + $0x168] sm:$0xf]
    %v184 = vld [vmem:[#allocation2 + $0x16c] sm:$0xf]
    %v185 = vld [vmem:[#allocation2 + $0x170] sm:$0xf]
    %v186 = vld [vmem:[#allocation2 + $0x174] sm:$0xf]
    %v187 = vld [vmem:[#allocation2 + $0x178] sm:$0xf]
    %v188 = vld [vmem:[#allocation2 + $0x17c] sm:$0xf]
    %v189 = vld [vmem:[#allocation2 + $0x180] sm:$0xf]
    %v190 = vld [vmem:[#allocation2 + $0x184] sm:$0xf]
    %v191 = vld [vmem:[#allocation2 + $0x188] sm:$0xf]
    %v192 = vld [vmem:[#allocation2 + $0x18c] sm:$0xf]
    %v193 = vld [vmem:[#allocation2 + $0x190] sm:$0xf]
    %v194 = vld [vmem:[#allocation2 + $0x194] sm:$0xf]
    %v195 = vld [vmem:[#allocation2 + $0x198] sm:$0xf]
    %v196 = vld [vmem:[#allocation2 + $0x19c] sm:$0xf]
    %v197 = vld [vmem:[#allocation2 + $0x1a0] sm:$0xf]
    %v198 = vld [vmem:[#allocation2 + $0x1a4] sm:$0xf]
    %v199 = vld [vmem:[#allocation2 + $0x1a8] sm:$0xf]
    %v200 = vld [vmem:[#allocation2 + $0x1ac] sm:$0xf]
    %v201 = vld [vmem:[#allocation2 + $0x1b0] sm:$0xf]
    %v202 = vld [vmem:[#allocation2 + $0x1b4] sm:$0xf]
    %v203 = vld [vmem:[#allocation2 + $0x1b8] sm:$0xf]
    %v204 = vld [vmem:[#allocation2 + $0x1bc] sm:$0xf]
    %v205 = vld [vmem:[#allocation2 + $0x1c0] sm:$0xf]
    %v206 = vld [vmem:[#allocation2 + $0x1c4] sm:$0xf]
    %v207 = vld [vmem:[#allocation2 + $0x1c8] sm:$0xf]
    %v208 = vld [vmem:[#allocation2 + $0x1cc] sm:$0xf]
    %v209 = vld [vmem:[#allocation2 + $0x1d0] sm:$0xf]
    %v210 = vld [vmem:[#allocation2 + $0x1d4] sm:$0xf]
    %v211 = vld [vmem:[#allocation2 + $0x1d8] sm:$0xf]
    %v212 = vld [vmem:[#allocation2 + $0x1dc] sm:$0xf]
    %v213 = vld [vmem:[#allocation2 + $0x1e0] sm:$0xf]
    %v214 = vld [vmem:[#allocation2 + $0x1e4] sm:$0xf]
    %v215 = vld [vmem:[#allocation2 + $0x1e8] sm:$0xf]
    %v216 = vld [vmem:[#allocation2 + $0x1ec] sm:$0xf]
    %v217 = vld [vmem:[#allocation2 + $0x1f0] sm:$0xf]
    %v218 = vld [vmem:[#allocation2 + $0x1f4] sm:$0xf]
    %v219 = vld [vmem:[#allocation2 + $0x1f8] sm:$0xf]
    %v220 = vld [vmem:[#allocation2 + $0x1fc] sm:$0xf]
    %v221 = vld [vmem:[#allocation4] sm:$0x1]
    %v223 = vperm.slane %v221, 0
    %v241 = vunpack.c.l.b16 %v77
    %v242 = vunpack.c.h.b16 %v77
    %v243 = vunpack.c.l.b16 %v78
    %v244 = vunpack.c.h.b16 %v78
    %v245 = vunpack.c.l.b16 %v79
    %v246 = vunpack.c.h.b16 %v79
    %v247 = vunpack.c.l.b16 %v80
    %v248 = vunpack.c.h.b16 %v80
    %v249 = vunpack.c.l.b16 %v81
    %v250 = vunpack.c.h.b16 %v81
    %v251 = vunpack.c.l.b16 %v82
    %v252 = vunpack.c.h.b16 %v82
    %v253 = vunpack.c.l.b16 %v83
    %v254 = vunpack.c.h.b16 %v83
    %v255 = vunpack.c.l.b16 %v84
    %v256 = vunpack.c.h.b16 %v84
    %v257 = vunpack.c.l.b16 %v85
    %v258 = vunpack.c.h.b16 %v85
    %v259 = vunpack.c.l.b16 %v86
    %v260 = vunpack.c.h.b16 %v86
    %v261 = vunpack.c.l.b16 %v87
    %v262 = vunpack.c.h.b16 %v87
    %v263 = vunpack.c.l.b16 %v88
    %v264 = vunpack.c.h.b16 %v88
    %v265 = vunpack.c.l.b16 %v89
    %v266 = vunpack.c.h.b16 %v89
    %v267 = vunpack.c.l.b16 %v90
    %v268 = vunpack.c.h.b16 %v90
    %v269 = vunpack.c.l.b16 %v91
    %v270 = vunpack.c.h.b16 %v91
    %v271 = vunpack.c.l.b16 %v92
    %v272 = vunpack.c.h.b16 %v92
    %v273 = vpack.c.b16 %v249, %v241
    %v274 = vpack.c.b16 %v250, %v242
    %v275 = vpack.c.b16 %v251, %v243
    %v276 = vpack.c.b16 %v252, %v244
    %v277 = vpack.c.b16 %v253, %v245
    %v278 = vpack.c.b16 %v254, %v246
    %v279 = vpack.c.b16 %v255, %v247
    %v280 = vpack.c.b16 %v256, %v248
    %v281 = vpack.c.b16 %v265, %v257
    %v282 = vpack.c.b16 %v266, %v258
    %v283 = vpack.c.b16 %v267, %v259
    %v284 = vpack.c.b16 %v268, %v260
    %v285 = vpack.c.b16 %v269, %v261
    %v286 = vpack.c.b16 %v270, %v262
    %v287 = vpack.c.b16 %v271, %v263
    %v288 = vpack.c.b16 %v272, %v264
    %v433 = vunpack.c.l.b16 %v93
    %v434 = vunpack.c.l.b16 %v94
    %v435 = vunpack.c.l.b16 %v95
    %v436 = vunpack.c.l.b16 %v96
    %v437 = vunpack.c.l.b16 %v97
    %v438 = vunpack.c.l.b16 %v98
    %v439 = vunpack.c.l.b16 %v99
    %v440 = vunpack.c.l.b16 %v100
    %v441 = vunpack.c.l.b16 %v101
    %v442 = vunpack.c.l.b16 %v102
    %v443 = vunpack.c.l.b16 %v103
    %v444 = vunpack.c.l.b16 %v104
    %v445 = vunpack.c.l.b16 %v105
    %v446 = vunpack.c.l.b16 %v106
    %v447 = vunpack.c.l.b16 %v107
    %v448 = vunpack.c.l.b16 %v108
    %v449 = vunpack.c.l.b16 %v109
    %v450 = vunpack.c.l.b16 %v110
    %v451 = vunpack.c.l.b16 %v111
    %v452 = vunpack.c.l.b16 %v112
    %v453 = vunpack.c.l.b16 %v113
    %v454 = vunpack.c.l.b16 %v114
    %v455 = vunpack.c.l.b16 %v115
    %v456 = vunpack.c.l.b16 %v116
    %v457 = vunpack.c.l.b16 %v117
    %v458 = vunpack.c.l.b16 %v118
    %v459 = vunpack.c.l.b16 %v119
    %v460 = vunpack.c.l.b16 %v120
    %v461 = vunpack.c.l.b16 %v121
    %v462 = vunpack.c.l.b16 %v122
    %v463 = vunpack.c.l.b16 %v123
    %v464 = vunpack.c.l.b16 %v124
    %v465 = vunpack.c.l.b16 %v125
    %v466 = vunpack.c.l.b16 %v126
    %v467 = vunpack.c.l.b16 %v127
    %v468 = vunpack.c.l.b16 %v128
    %v469 = vunpack.c.l.b16 %v129
    %v470 = vunpack.c.l.b16 %v130
    %v471 = vunpack.c.l.b16 %v131
    %v472 = vunpack.c.l.b16 %v132
    %v473 = vunpack.c.l.b16 %v133
    %v474 = vunpack.c.l.b16 %v134
    %v475 = vunpack.c.l.b16 %v135
    %v476 = vunpack.c.l.b16 %v136
    %v477 = vunpack.c.l.b16 %v137
    %v478 = vunpack.c.l.b16 %v138
    %v479 = vunpack.c.l.b16 %v139
    %v480 = vunpack.c.l.b16 %v140
    %v481 = vunpack.c.l.b16 %v141
    %v482 = vunpack.c.l.b16 %v142
    %v483 = vunpack.c.l.b16 %v143
    %v484 = vunpack.c.l.b16 %v144
    %v485 = vunpack.c.l.b16 %v145
    %v486 = vunpack.c.l.b16 %v146
    %v487 = vunpack.c.l.b16 %v147
    %v488 = vunpack.c.l.b16 %v148
    %v489 = vunpack.c.l.b16 %v149
    %v490 = vunpack.c.l.b16 %v150
    %v491 = vunpack.c.l.b16 %v151
    %v492 = vunpack.c.l.b16 %v152
    %v493 = vunpack.c.l.b16 %v153
    %v494 = vunpack.c.l.b16 %v154
    %v495 = vunpack.c.l.b16 %v155
    %v496 = vunpack.c.l.b16 %v156
    %v497 = vunpack.c.l.b16 %v157
    %v498 = vunpack.c.l.b16 %v158
    %v499 = vunpack.c.l.b16 %v159
    %v500 = vunpack.c.l.b16 %v160
    %v501 = vunpack.c.l.b16 %v161
    %v502 = vunpack.c.l.b16 %v162
    %v503 = vunpack.c.l.b16 %v163
    %v504 = vunpack.c.l.b16 %v164
    %v505 = vunpack.c.l.b16 %v165
    %v506 = vunpack.c.l.b16 %v166
    %v507 = vunpack.c.l.b16 %v167
    %v508 = vunpack.c.l.b16 %v168
    %v509 = vunpack.c.l.b16 %v169
    %v510 = vunpack.c.l.b16 %v170
    %v511 = vunpack.c.l.b16 %v171
    %v512 = vunpack.c.l.b16 %v172
    %v513 = vunpack.c.l.b16 %v173
    %v514 = vunpack.c.l.b16 %v174
    %v515 = vunpack.c.l.b16 %v175
    %v516 = vunpack.c.l.b16 %v176
    %v517 = vunpack.c.l.b16 %v177
    %v518 = vunpack.c.l.b16 %v178
    %v519 = vunpack.c.l.b16 %v179
    %v520 = vunpack.c.l.b16 %v180
    %v521 = vunpack.c.l.b16 %v181
    %v522 = vunpack.c.l.b16 %v182
    %v523 = vunpack.c.l.b16 %v183
    %v524 = vunpack.c.l.b16 %v184
    %v525 = vunpack.c.l.b16 %v185
    %v526 = vunpack.c.l.b16 %v186
    %v527 = vunpack.c.l.b16 %v187
    %v528 = vunpack.c.l.b16 %v188
    %v529 = vunpack.c.l.b16 %v189
    %v530 = vunpack.c.l.b16 %v190
    %v531 = vunpack.c.l.b16 %v191
    %v532 = vunpack.c.l.b16 %v192
    %v533 = vunpack.c.l.b16 %v193
    %v534 = vunpack.c.l.b16 %v194
    %v535 = vunpack.c.l.b16 %v195
    %v536 = vunpack.c.l.b16 %v196
    %v537 = vunpack.c.l.b16 %v197
    %v538 = vunpack.c.l.b16 %v198
    %v539 = vunpack.c.l.b16 %v199
    %v540 = vunpack.c.l.b16 %v200
    %v541 = vunpack.c.l.b16 %v201
    %v542 = vunpack.c.l.b16 %v202
    %v543 = vunpack.c.l.b16 %v203
    %v544 = vunpack.c.l.b16 %v204
    %v545 = vunpack.c.l.b16 %v205
    %v546 = vunpack.c.l.b16 %v206
    %v547 = vunpack.c.l.b16 %v207
    %v548 = vunpack.c.l.b16 %v208
    %v549 = vunpack.c.l.b16 %v209
    %v550 = vunpack.c.l.b16 %v210
    %v551 = vunpack.c.l.b16 %v211
    %v552 = vunpack.c.l.b16 %v212
    %v553 = vunpack.c.l.b16 %v213
    %v554 = vunpack.c.l.b16 %v214
    %v555 = vunpack.c.l.b16 %v215
    %v556 = vunpack.c.l.b16 %v216
    %v557 = vunpack.c.l.b16 %v217
    %v558 = vunpack.c.l.b16 %v218
    %v559 = vunpack.c.l.b16 %v219
    %v560 = vunpack.c.l.b16 %v220
    %v561 = vpack.c.b16 %v434, %v433
    %v562 = vpack.c.b16 %v436, %v435
    %v563 = vpack.c.b16 %v438, %v437
    %v564 = vpack.c.b16 %v440, %v439
    %v565 = vpack.c.b16 %v442, %v441
    %v566 = vpack.c.b16 %v444, %v443
    %v567 = vpack.c.b16 %v446, %v445
    %v568 = vpack.c.b16 %v448, %v447
    %v569 = vpack.c.b16 %v450, %v449
    %v570 = vpack.c.b16 %v452, %v451
    %v571 = vpack.c.b16 %v454, %v453
    %v572 = vpack.c.b16 %v456, %v455
    %v573 = vpack.c.b16 %v458, %v457
    %v574 = vpack.c.b16 %v460, %v459
    %v575 = vpack.c.b16 %v462, %v461
    %v576 = vpack.c.b16 %v464, %v463
    %v577 = vpack.c.b16 %v466, %v465
    %v578 = vpack.c.b16 %v468, %v467
    %v579 = vpack.c.b16 %v470, %v469
    %v580 = vpack.c.b16 %v472, %v471
    %v581 = vpack.c.b16 %v474, %v473
    %v582 = vpack.c.b16 %v476, %v475
    %v583 = vpack.c.b16 %v478, %v477
    %v584 = vpack.c.b16 %v480, %v479
    %v585 = vpack.c.b16 %v482, %v481
    %v586 = vpack.c.b16 %v484, %v483
    %v587 = vpack.c.b16 %v486, %v485
    %v588 = vpack.c.b16 %v488, %v487
    %v589 = vpack.c.b16 %v490, %v489
    %v590 = vpack.c.b16 %v492, %v491
    %v591 = vpack.c.b16 %v494, %v493
    %v592 = vpack.c.b16 %v496, %v495
    %v593 = vpack.c.b16 %v498, %v497
    %v594 = vpack.c.b16 %v500, %v499
    %v595 = vpack.c.b16 %v502, %v501
    %v596 = vpack.c.b16 %v504, %v503
    %v597 = vpack.c.b16 %v506, %v505
    %v598 = vpack.c.b16 %v508, %v507
    %v599 = vpack.c.b16 %v510, %v509
    %v600 = vpack.c.b16 %v512, %v511
    %v601 = vpack.c.b16 %v514, %v513
    %v602 = vpack.c.b16 %v516, %v515
    %v603 = vpack.c.b16 %v518, %v517
    %v604 = vpack.c.b16 %v520, %v519
    %v605 = vpack.c.b16 %v522, %v521
    %v606 = vpack.c.b16 %v524, %v523
    %v607 = vpack.c.b16 %v526, %v525
    %v608 = vpack.c.b16 %v528, %v527
    %v609 = vpack.c.b16 %v530, %v529
    %v610 = vpack.c.b16 %v532, %v531
    %v611 = vpack.c.b16 %v534, %v533
    %v612 = vpack.c.b16 %v536, %v535
    %v613 = vpack.c.b16 %v538, %v537
    %v614 = vpack.c.b16 %v540, %v539
    %v615 = vpack.c.b16 %v542, %v541
    %v616 = vpack.c.b16 %v544, %v543
    %v617 = vpack.c.b16 %v546, %v545
    %v618 = vpack.c.b16 %v548, %v547
    %v619 = vpack.c.b16 %v550, %v549
    %v620 = vpack.c.b16 %v552, %v551
    %v621 = vpack.c.b16 %v554, %v553
    %v622 = vpack.c.b16 %v556, %v555
    %v623 = vpack.c.b16 %v558, %v557
    %v624 = vpack.c.b16 %v560, %v559
    %689 = vmatpush.bf16.msra.mxu0 %v568
    %690 = vmatpush.bf16.msra.mxu0 %v567
    %691 = vmatpush.bf16.msra.mxu0 %v566
    %692 = vmatpush.bf16.msra.mxu0 %v565
    %693 = vmatpush.bf16.msra.mxu0 %v564
    %694 = vmatpush.bf16.msra.mxu0 %v563
    %695 = vmatpush.bf16.msra.mxu0 %v562
    %696 = vmatpush.bf16.msra.mxu0 %v561
    %697 = vmatmul.bf16.gmra.mxu0 %v273
    %v698 = vpop.f32.mrf.mxu0
    %v699 = vadd.f32 %v223, %v698
    %v700 = vpop.f32.mrf.mxu0
    %v701 = vadd.f32 %v223, %v700
    %702 = vmatmul.bf16.gmra.mxu0 %v281
    %v703 = vpop.f32.mrf.mxu0
    %v704 = vadd.f32 %v223, %v703
    %v705 = vpop.f32.mrf.mxu0
    %v706 = vadd.f32 %v223, %v705
    %707 = vdwg.mxu0
    %708 = vmatpush.bf16.msra.mxu0 %v576
    %709 = vmatpush.bf16.msra.mxu0 %v575
    %710 = vmatpush.bf16.msra.mxu0 %v574
    %711 = vmatpush.bf16.msra.mxu0 %v573
    %712 = vmatpush.bf16.msra.mxu0 %v572
    %713 = vmatpush.bf16.msra.mxu0 %v571
    %714 = vmatpush.bf16.msra.mxu0 %v570
    %715 = vmatpush.bf16.msra.mxu0 %v569
    %716 = vmatmul.bf16.gmra.mxu0 %v274
    %v717 = vpop.f32.mrf.mxu0
    %v718 = vadd.f32 %v699, %v717
    %v719 = vpop.f32.mrf.mxu0
    %v720 = vadd.f32 %v701, %v719
    %721 = vmatmul.bf16.gmra.mxu0 %v282
    %v722 = vpop.f32.mrf.mxu0
    %v723 = vadd.f32 %v704, %v722
    %v724 = vpop.f32.mrf.mxu0
    %v725 = vadd.f32 %v706, %v724
    %726 = vdwg.mxu0
    %727 = vmatpush.bf16.msra.mxu0 %v584
    %728 = vmatpush.bf16.msra.mxu0 %v583
    %729 = vmatpush.bf16.msra.mxu0 %v582
    %730 = vmatpush.bf16.msra.mxu0 %v581
    %731 = vmatpush.bf16.msra.mxu0 %v580
    %732 = vmatpush.bf16.msra.mxu0 %v579
    %733 = vmatpush.bf16.msra.mxu0 %v578
    %734 = vmatpush.bf16.msra.mxu0 %v577
    %735 = vmatmul.bf16.gmra.mxu0 %v275
    %v736 = vpop.f32.mrf.mxu0
    %v737 = vadd.f32 %v718, %v736
    %v738 = vpop.f32.mrf.mxu0
    %v739 = vadd.f32 %v720, %v738
    %740 = vmatmul.bf16.gmra.mxu0 %v283
    %v741 = vpop.f32.mrf.mxu0
    %v742 = vadd.f32 %v723, %v741
    %v743 = vpop.f32.mrf.mxu0
    %v744 = vadd.f32 %v725, %v743
    %745 = vdwg.mxu0
    %746 = vmatpush.bf16.msra.mxu0 %v592
    %747 = vmatpush.bf16.msra.mxu0 %v591
    %748 = vmatpush.bf16.msra.mxu0 %v590
    %749 = vmatpush.bf16.msra.mxu0 %v589
    %750 = vmatpush.bf16.msra.mxu0 %v588
    %751 = vmatpush.bf16.msra.mxu0 %v587
    %752 = vmatpush.bf16.msra.mxu0 %v586
    %753 = vmatpush.bf16.msra.mxu0 %v585
    %754 = vmatmul.bf16.gmra.mxu0 %v276
    %v755 = vpop.f32.mrf.mxu0
    %v756 = vadd.f32 %v737, %v755
    %v757 = vpop.f32.mrf.mxu0
    %v758 = vadd.f32 %v739, %v757
    %759 = vmatmul.bf16.gmra.mxu0 %v284
    %v760 = vpop.f32.mrf.mxu0
    %v761 = vadd.f32 %v742, %v760
    %v762 = vpop.f32.mrf.mxu0
    %v763 = vadd.f32 %v744, %v762
    %764 = vdwg.mxu0
    %765 = vmatpush.bf16.msra.mxu0 %v600
    %766 = vmatpush.bf16.msra.mxu0 %v599
    %767 = vmatpush.bf16.msra.mxu0 %v598
    %768 = vmatpush.bf16.msra.mxu0 %v597
    %769 = vmatpush.bf16.msra.mxu0 %v596
    %770 = vmatpush.bf16.msra.mxu0 %v595
    %771 = vmatpush.bf16.msra.mxu0 %v594
    %772 = vmatpush.bf16.msra.mxu0 %v593
    %773 = vmatmul.bf16.gmra.mxu0 %v277
    %v774 = vpop.f32.mrf.mxu0
    %v775 = vadd.f32 %v756, %v774
    %v776 = vpop.f32.mrf.mxu0
    %v777 = vadd.f32 %v758, %v776
    %778 = vmatmul.bf16.gmra.mxu0 %v285
    %v779 = vpop.f32.mrf.mxu0
    %v780 = vadd.f32 %v761, %v779
    %v781 = vpop.f32.mrf.mxu0
    %v782 = vadd.f32 %v763, %v781
    %783 = vdwg.mxu0
    %784 = vmatpush.bf16.msra.mxu0 %v608
    %785 = vmatpush.bf16.msra.mxu0 %v607
    %786 = vmatpush.bf16.msra.mxu0 %v606
    %787 = vmatpush.bf16.msra.mxu0 %v605
    %788 = vmatpush.bf16.msra.mxu0 %v604
    %789 = vmatpush.bf16.msra.mxu0 %v603
    %790 = vmatpush.bf16.msra.mxu0 %v602
    %791 = vmatpush.bf16.msra.mxu0 %v601
    %792 = vmatmul.bf16.gmra.mxu0 %v278
    %v793 = vpop.f32.mrf.mxu0
    %v794 = vadd.f32 %v775, %v793
    %v795 = vpop.f32.mrf.mxu0
    %v796 = vadd.f32 %v777, %v795
    %797 = vmatmul.bf16.gmra.mxu0 %v286
    %v798 = vpop.f32.mrf.mxu0
    %v799 = vadd.f32 %v780, %v798
    %v800 = vpop.f32.mrf.mxu0
    %v801 = vadd.f32 %v782, %v800
    %802 = vdwg.mxu0
    %803 = vmatpush.bf16.msra.mxu0 %v616
    %804 = vmatpush.bf16.msra.mxu0 %v615
    %805 = vmatpush.bf16.msra.mxu0 %v614
    %806 = vmatpush.bf16.msra.mxu0 %v613
    %807 = vmatpush.bf16.msra.mxu0 %v612
    %808 = vmatpush.bf16.msra.mxu0 %v611
    %809 = vmatpush.bf16.msra.mxu0 %v610
    %810 = vmatpush.bf16.msra.mxu0 %v609
    %811 = vmatmul.bf16.gmra.mxu0 %v279
    %v812 = vpop.f32.mrf.mxu0
    %v813 = vadd.f32 %v794, %v812
    %v814 = vpop.f32.mrf.mxu0
    %v815 = vadd.f32 %v796, %v814
    %816 = vmatmul.bf16.gmra.mxu0 %v287
    %v817 = vpop.f32.mrf.mxu0
    %v818 = vadd.f32 %v799, %v817
    %v819 = vpop.f32.mrf.mxu0
    %v820 = vadd.f32 %v801, %v819
    %821 = vdwg.mxu0
    %822 = vmatpush.bf16.msra.mxu0 %v624
    %823 = vmatpush.bf16.msra.mxu0 %v623
    %824 = vmatpush.bf16.msra.mxu0 %v622
    %825 = vmatpush.bf16.msra.mxu0 %v621
    %826 = vmatpush.bf16.msra.mxu0 %v620
    %827 = vmatpush.bf16.msra.mxu0 %v619
    %828 = vmatpush.bf16.msra.mxu0 %v618
    %829 = vmatpush.bf16.msra.mxu0 %v617
    %830 = vmatmul.bf16.gmra.mxu0 %v280
    %v831 = vpop.f32.mrf.mxu0
    %v832 = vadd.f32 %v813, %v831
    %v833 = vpop.f32.mrf.mxu0
    %v834 = vadd.f32 %v815, %v833
    %835 = vmatmul.bf16.gmra.mxu0 %v288
    %v836 = vpop.f32.mrf.mxu0
    %v837 = vadd.f32 %v818, %v836
    %v838 = vpop.f32.mrf.mxu0
    %v839 = vadd.f32 %v820, %v838
    %840 = vdwg.mxu0
    %v841 = vadd.f32 %v832, %v834
    %v842 = vadd.f32 %v841, %v837
    %v843 = vadd.f32 %v842, %v839
    %v844 = vrot.slane %v843, 4
    %v845 = vadd.f32 %v843, %v844
    %v846 = vrot.slane %v845, 2
    %v847 = vadd.f32 %v845, %v846
    %v848 = vrot.slane %v847, 1
    %v849 = vadd.f32 %v847, %v848
    %v850 = vrcp.pop 32.0
    %v851 = vmul.f32 32.0, %v850
    %v852 = vsub.f32 1.0, %v851
    %v853 = vmul.f32 %v850, %v852
    %v854 = vadd.f32 %v850, %v853
    %vm855 = vweird.f32 %v850
    %v856 = vsel %vm855, %v850, %v854
    %v857 = vmul.f32 %v849, %v856
    %v858 = vsub.f32 %v832, %v857
    %v859 = vsub.f32 %v834, %v857
    %v860 = vsub.f32 %v837, %v857
    %v861 = vsub.f32 %v839, %v857
    %v862 = vmul.f32 %v858, %v858
    %v863 = vmul.f32 %v859, %v859
    %v864 = vmul.f32 %v860, %v860
    %v865 = vmul.f32 %v861, %v861
    %v866 = vadd.f32 %v862, %v863
    %v867 = vadd.f32 %v866, %v864
    %v868 = vadd.f32 %v867, %v865
    %v869 = vrot.slane %v868, 4
    %v870 = vadd.f32 %v868, %v869
    %v871 = vrot.slane %v870, 2
    %v872 = vadd.f32 %v870, %v871
    %v873 = vrot.slane %v872, 1
    %v874 = vadd.f32 %v872, %v873
    %v875 = vmul.f32 %v874, %v856
    %v876 = vld [vmem:[#allocation6] sm:$0x1]
    %v878 = vperm.slane %v876, 0
    %v880 = vmul.f32 %v878, %v858
    %v881 = vmul.f32 %v878, %v859
    %v882 = vmul.f32 %v878, %v860
    %v883 = vmul.f32 %v878, %v861
    %v884 = vadd.f32 %v875, 1e-05
    %v885 = vrsqrt.pop %v884
    %v886 = vmul.f32 %v885, %v884
    %v887 = vmul.f32 %v886, %v885
    %v888 = vmul.f32 0.5, %v887
    %v889 = vsub.f32 1.5, %v888
    %v890 = vmul.f32 %v885, %v889
    %vm891 = vweird.f32 %v884
    %vm892 = vweird.f32 %v885
    %vm893 = vmor %vm891, %vm892
    %v894 = vsel %vm893, %v885, %v890
    %v895 = vmul.f32 %v880, %v894
    %v896 = vmul.f32 %v881, %v894
    %v897 = vmul.f32 %v882, %v894
    %v898 = vmul.f32 %v883, %v894
    %v899 = vld [vmem:[#allocation7] sm:$0x1]
    %v901 = vperm.slane %v899, 0
    %v903 = vadd.f32 %v895, %v901
    %v904 = vadd.f32 %v896, %v901
    %v905 = vadd.f32 %v897, %v901
    %v906 = vadd.f32 %v898, %v901
    %vm907 = vcmp.gt.f32.partialorder %v903, 0.0
    %vm908 = vcmp.gt.f32.partialorder %v904, 0.0
    %vm909 = vcmp.gt.f32.partialorder %v905, 0.0
    %vm910 = vcmp.gt.f32.partialorder %v906, 0.0
    %v911 = vmul.f32 %v903, 0.01
    %v912 = vmul.f32 %v904, 0.01
    %v913 = vmul.f32 %v905, 0.01
    %v914 = vmul.f32 %v906, 0.01
    %v915 = vsel %vm907, %v903, %v911
    %v916 = vsel %vm908, %v904, %v912
    %v917 = vsel %vm909, %v905, %v913
    %v918 = vsel %vm910, %v906, %v914
    %v919 = vpack.c.bf16 %v915, %v915
    %v920 = vpack.c.bf16 %v916, %v916
    %v921 = vpack.c.bf16 %v917, %v917
    %v922 = vpack.c.bf16 %v918, %v918
    %923 = vst [vmem:[%s5] sm:$0xf] %v919
    %924 = vst [vmem:[%s5 + $0x4] sm:$0xf] %v920
    %925 = vst [vmem:[%s5 + $0x8] sm:$0xf] %v921
    %926 = vst [vmem:[%s5 + $0xc] sm:$0xf] %v922
    // Predicated region
    $region38: #{discriminator_forward.4} parent=1 // pred_check
      _
    $region39: #{discriminator_forward.4} parent=1 // pred_check_branch
      %928 = sbr.rel (0) target = $region41
    $region40: #{discriminator_forward.4} parent=1 // pred_region
      _
    $region41: #{discriminator_forward.4} parent=1 // pred_fallthru
      _
    // Predicated region
    $region42: #{discriminator_forward.4} parent=1 // pred_check
      _
    $region43: #{discriminator_forward.4} parent=1 // pred_check_branch
      %930 = sbr.rel (0) target = $region45
    $region44: #{discriminator_forward.4} parent=1 // pred_region
      _
    $region45: #{discriminator_forward.4} parent=1 // pred_fallthru
      _
    %931 = vsyncpa [#allocation3], 1
    %932 = vsyncpa [#allocation5], 1
    %933 = vsyncpa [#allocation8], 1

// kernel: discriminator_forward.5
$region0: #{discriminator_forward.5}
  #allocation0 [shape = 'u32[]', space=smem, size = 0x4, offset = 0x4, fixed_abs, tag = 'smem constant byte address 0x4 - core index']
  #allocation1 [shape = 'u32[72,128]{1,0:T(1,128)}', space=vmem, size = 0x9000, scoped, tag = 'internal scratch']
  %s0 = inlined_call_operand.vmem [shape: bf16[2,2048], index: 0, kind: input, shape index: {}]
  %s1 = inlined_call_operand.hbm [shape: bf16[2048,1024], index: 1, kind: input, shape index: {}]
  %s2 = inlined_call_operand.hbm [shape: f32[1,1024], index: 2, kind: input, shape index: {}]
  %s3 = inlined_call_operand.hbm [shape: f32[1,1024], index: 3, kind: input, shape index: {}]
  %s4 = inlined_call_operand.hbm [shape: f32[1,1024], index: 4, kind: input, shape index: {}]
  %s5 = inlined_call_operand.hbm [shape: bf16[1024,128], index: 5, kind: input, shape index: {}]
  %s6 = inlined_call_operand.hbm [shape: f32[1,128], index: 6, kind: input, shape index: {}]
  %s7 = inlined_call_operand.hbm [shape: f32[2,128], index: 7, kind: output, shape index: {}]
  %s8 = sld [smem:[#allocation0]]
  $region62: #{discriminator_forward.5} parent=0
    _
  %s10 = ssub.s32 1, %s8
  %s11 = scalar_select 0, %s10, %s8
  $region1: #{discriminator_forward.5} parent=0
    #allocation2 [shape = 'u8[4194304]{0}', space=vmem, size = 0x400000, scoped, tag = 'input window, operand 1, single buffered']
    #allocation3 [shape = 's32[1]{0}', space=sflag, size = 0x4, scoped, tag = 'scoped memory for discriminator_forward.5']
    #allocation4 [shape = 's32[1]{0}', space=sflag, size = 0x4, scoped, tag = 'scoped memory for discriminator_forward.5']
    #allocation5 [shape = 'u8[4096]{0}', space=vmem, size = 0x1000, scoped, tag = 'input window, operand 2, single buffered']
    #allocation6 [shape = 's32[1]{0}', space=sflag, size = 0x4, scoped, tag = 'scoped memory for discriminator_forward.5']
    #allocation7 [shape = 'u8[4096]{0}', space=vmem, size = 0x1000, scoped, tag = 'input window, operand 3, single buffered']
    #allocation8 [shape = 'u8[4096]{0}', space=vmem, size = 0x1000, scoped, tag = 'input window, operand 4, single buffered']
    #allocation9 [shape = 's32[1]{0}', space=sflag, size = 0x4, scoped, tag = 'scoped memory for discriminator_forward.5']
    #allocation10 [shape = 'u8[262144]{0}', space=vmem, size = 0x40000, scoped, tag = 'input window, operand 5, single buffered']
    #allocation11 [shape = 'u8[512]{0}', space=vmem, size = 0x400, scoped, tag = 'input window, operand 6, single buffered']
    #allocation12 [shape = 's32[1]{0}', space=sflag, size = 0x4, scoped, tag = 'scoped memory for discriminator_forward.5']
    #allocation13 [shape = 'u8[1024]{0}', space=vmem, size = 0x400, scoped, tag = 'output window, operand 0, single buffered']
    %12 = vsyncpa [#allocation3], 0
    %13 = vsyncpa [#allocation6], 0
    %14 = vsyncpa [#allocation9], 0
    %15 = vsyncpa [#allocation12], 0
    %16 = vsyncpa [#allocation4], 0
    // Predicated region
    $region2: #{discriminator_forward.5} parent=1 // pred_check
      _
    $region3: #{discriminator_forward.5} parent=1 // pred_check_branch
      %18 = sbr.rel (0) target = $region5
    $region4: #{discriminator_forward.5} parent=1 // pred_region
      _
    $region5: #{discriminator_forward.5} parent=1 // pred_fallthru
      _
    // Predicated region
    $region6: #{discriminator_forward.5} parent=1 // pred_check
      _
    $region7: #{discriminator_forward.5} parent=1 // pred_check_branch
      %20 = sbr.rel (0) target = $region9
    $region8: #{discriminator_forward.5} parent=1 // pred_region
      %22 = vsyncadd [#allocation3], 0
      %s23 = sshll.u32 %s1, 4
      %s24 = int_to_ptr.hbm [resolvable:$true] %s23
      %s25 = sshll.u32 [#allocation2], 4
      %s26 = int_to_ptr.vmem [resolvable:$true] %s25
      %31 = dma.hbm_to_vmem [thread:$0]  %s24, 131072, %s26, [#allocation3], 512, 512, 32
    $region9: #{discriminator_forward.5} parent=1 // pred_fallthru
      _
    // Predicated region
    $region10: #{discriminator_forward.5} parent=1 // pred_check
      _
    $region11: #{discriminator_forward.5} parent=1 // pred_check_branch
      %33 = sbr.rel (0) target = $region13
    $region12: #{discriminator_forward.5} parent=1 // pred_region
      %35 = vsyncadd [#allocation6], 0
      %s37 = sshll.u32 %s2, 4
      %s38 = int_to_ptr.hbm [resolvable:$true] %s37
      %s39 = sshll.u32 [#allocation5], 4
      %s40 = int_to_ptr.vmem [resolvable:$true] %s39
      %42 = dma.hbm_to_vmem [thread:$0]  %s38, 128, %s40, [#allocation6]
    $region13: #{discriminator_forward.5} parent=1 // pred_fallthru
      _
    // Predicated region
    $region14: #{discriminator_forward.5} parent=1 // pred_check
      _
    $region15: #{discriminator_forward.5} parent=1 // pred_check_branch
      %44 = sbr.rel (0) target = $region17
    $region16: #{discriminator_forward.5} parent=1 // pred_region
      %46 = vsyncadd [#allocation6], 0
      %s48 = sshll.u32 %s3, 4
      %s49 = int_to_ptr.hbm [resolvable:$true] %s48
      %s50 = sshll.u32 [#allocation7], 4
      %s51 = int_to_ptr.vmem [resolvable:$true] %s50
      %53 = dma.hbm_to_vmem [thread:$0]  %s49, 128, %s51, [#allocation6]
    $region17: #{discriminator_forward.5} parent=1 // pred_fallthru
      _
    // Predicated region
    $region18: #{discriminator_forward.5} parent=1 // pred_check
      _
    $region19: #{discriminator_forward.5} parent=1 // pred_check_branch
      %55 = sbr.rel (0) target = $region21
    $region20: #{discriminator_forward.5} parent=1 // pred_region
      %57 = vsyncadd [#allocation9], 0
      %s59 = sshll.u32 %s4, 4
      %s60 = int_to_ptr.hbm [resolvable:$true] %s59
      %s61 = sshll.u32 [#allocation8], 4
      %s62 = int_to_ptr.vmem [resolvable:$true] %s61
      %64 = dma.hbm_to_vmem [thread:$0]  %s60, 128, %s62, [#allocation9]
    $region21: #{discriminator_forward.5} parent=1 // pred_fallthru
      _
    // Predicated region
    $region22: #{discriminator_forward.5} parent=1 // pred_check
      _
    $region23: #{discriminator_forward.5} parent=1 // pred_check_branch
      %66 = sbr.rel (0) target = $region25
    $region24: #{discriminator_forward.5} parent=1 // pred_region
      %68 = vsyncadd [#allocation9], 0
      %s69 = sshll.u32 %s5, 4
      %s70 = int_to_ptr.hbm [resolvable:$true] %s69
      %s71 = sshll.u32 [#allocation10], 4
      %s72 = int_to_ptr.vmem [resolvable:$true] %s71
      %77 = dma.hbm_to_vmem [thread:$0]  %s70, 8192, %s72, [#allocation9], 64, 64, 4
    $region25: #{discriminator_forward.5} parent=1 // pred_fallthru
      _
    // Predicated region
    $region26: #{discriminator_forward.5} parent=1 // pred_check
      _
    $region27: #{discriminator_forward.5} parent=1 // pred_check_branch
      %79 = sbr.rel (0) target = $region29
    $region28: #{discriminator_forward.5} parent=1 // pred_region
      %81 = vsyncadd [#allocation12], 0
      %s83 = sshll.u32 %s6, 4
      %s84 = int_to_ptr.hbm [resolvable:$true] %s83
      %s85 = sshll.u32 [#allocation11], 4
      %s86 = int_to_ptr.vmem [resolvable:$true] %s85
      %88 = dma.hbm_to_vmem [thread:$0]  %s84, 16, %s86, [#allocation12]
    $region29: #{discriminator_forward.5} parent=1 // pred_fallthru
      _
    // Predicated region
    $region30: #{discriminator_forward.5} parent=1 // pred_check
      _
    $region31: #{discriminator_forward.5} parent=1 // pred_check_branch
      %90 = sbr.rel (0) target = $region33
    $region32: #{discriminator_forward.5} parent=1 // pred_region
      %92 = dma.done [#allocation3], 131072
    $region33: #{discriminator_forward.5} parent=1 // pred_fallthru
      _
    // Predicated region
    $region34: #{discriminator_forward.5} parent=1 // pred_check
      _
    $region35: #{discriminator_forward.5} parent=1 // pred_check_branch
      %94 = sbr.rel (0) target = $region37
    $region36: #{discriminator_forward.5} parent=1 // pred_region
      %96 = dma.done [#allocation6], 128
    $region37: #{discriminator_forward.5} parent=1 // pred_fallthru
      _
    // Predicated region
    $region38: #{discriminator_forward.5} parent=1 // pred_check
      _
    $region39: #{discriminator_forward.5} parent=1 // pred_check_branch
      %98 = sbr.rel (0) target = $region41
    $region40: #{discriminator_forward.5} parent=1 // pred_region
      %100 = dma.done [#allocation6], 128
    $region41: #{discriminator_forward.5} parent=1 // pred_fallthru
      _
    // Predicated region
    $region42: #{discriminator_forward.5} parent=1 // pred_check
      _
    $region43: #{discriminator_forward.5} parent=1 // pred_check_branch
      %102 = sbr.rel (0) target = $region45
    $region44: #{discriminator_forward.5} parent=1 // pred_region
      %104 = dma.done [#allocation9], 128
    $region45: #{discriminator_forward.5} parent=1 // pred_fallthru
      _
    // Predicated region
    $region46: #{discriminator_forward.5} parent=1 // pred_check
      _
    $region47: #{discriminator_forward.5} parent=1 // pred_check_branch
      %106 = sbr.rel (0) target = $region49
    $region48: #{discriminator_forward.5} parent=1 // pred_region
      %108 = dma.done [#allocation9], 8192
    $region49: #{discriminator_forward.5} parent=1 // pred_fallthru
      _
    // Predicated region
    $region50: #{discriminator_forward.5} parent=1 // pred_check
      _
    $region51: #{discriminator_forward.5} parent=1 // pred_check_branch
      %110 = sbr.rel (0) target = $region53
    $region52: #{discriminator_forward.5} parent=1 // pred_region
      %112 = dma.done [#allocation12], 16
    $region53: #{discriminator_forward.5} parent=1 // pred_fallthru
      _
    %v113 = vld [vmem:[%s0] sm:$0xff]
    %v114 = vld [vmem:[%s0 + $0x8] sm:$0xff]
    %v115 = vld [vmem:[#allocation2] sm:$0xff]
    %v116 = vld [vmem:[#allocation2 + $0x8] sm:$0xff]
    %v117 = vld [vmem:[#allocation2 + $0x10] sm:$0xff]
    %v118 = vld [vmem:[#allocation2 + $0x18] sm:$0xff]
    %v119 = vld [vmem:[#allocation2 + $0x20] sm:$0xff]
    %v120 = vld [vmem:[#allocation2 + $0x28] sm:$0xff]
    %v121 = vld [vmem:[#allocation2 + $0x30] sm:$0xff]
    %v122 = vld [vmem:[#allocation2 + $0x38] sm:$0xff]
    %v123 = vld [vmem:[#allocation2 + $0x40] sm:$0xff]
    %v124 = vld [vmem:[#allocation2 + $0x48] sm:$0xff]
    %v125 = vld [vmem:[#allocation2 + $0x50] sm:$0xff]
    %v126 = vld [vmem:[#allocation2 + $0x58] sm:$0xff]
    %v127 = vld [vmem:[#allocation2 + $0x60] sm:$0xff]
    %v128 = vld [vmem:[#allocation2 + $0x68] sm:$0xff]
    %v129 = vld [vmem:[#allocation2 + $0x70] sm:$0xff]
    %v130 = vld [vmem:[#allocation2 + $0x78] sm:$0xff]
    %v131 = vld [vmem:[#allocation2 + $0x80] sm:$0xff]
    %v132 = vld [vmem:[#allocation2 + $0x88] sm:$0xff]
    %v133 = vld [vmem:[#allocation2 + $0x90] sm:$0xff]
    %v134 = vld [vmem:[#allocation2 + $0x98] sm:$0xff]
    %v135 = vld [vmem:[#allocation2 + $0xa0] sm:$0xff]
    %v136 = vld [vmem:[#allocation2 + $0xa8] sm:$0xff]
    %v137 = vld [vmem:[#allocation2 + $0xb0] sm:$0xff]
    %v138 = vld [vmem:[#allocation2 + $0xb8] sm:$0xff]
    %v139 = vld [vmem:[#allocation2 + $0xc0] sm:$0xff]
    %v140 = vld [vmem:[#allocation2 + $0xc8] sm:$0xff]
    %v141 = vld [vmem:[#allocation2 + $0xd0] sm:$0xff]
    %v142 = vld [vmem:[#allocation2 + $0xd8] sm:$0xff]
    %v143 = vld [vmem:[#allocation2 + $0xe0] sm:$0xff]
    %v144 = vld [vmem:[#allocation2 + $0xe8] sm:$0xff]
    %v145 = vld [vmem:[#allocation2 + $0xf0] sm:$0xff]
    %v146 = vld [vmem:[#allocation2 + $0xf8] sm:$0xff]
    %v147 = vld [vmem:[#allocation2 + $0x100] sm:$0xff]
    %v148 = vld [vmem:[#allocation2 + $0x108] sm:$0xff]
    %v149 = vld [vmem:[#allocation2 + $0x110] sm:$0xff]
    %v150 = vld [vmem:[#allocation2 + $0x118] sm:$0xff]
    %v151 = vld [vmem:[#allocation2 + $0x120] sm:$0xff]
    %v152 = vld [vmem:[#allocation2 + $0x128] sm:$0xff]
    %v153 = vld [vmem:[#allocation2 + $0x130] sm:$0xff]
    %v154 = vld [vmem:[#allocation2 + $0x138] sm:$0xff]
    %v155 = vld [vmem:[#allocation2 + $0x140] sm:$0xff]
    %v156 = vld [vmem:[#allocation2 + $0x148] sm:$0xff]
    %v157 = vld [vmem:[#allocation2 + $0x150] sm:$0xff]
    %v158 = vld [vmem:[#allocation2 + $0x158] sm:$0xff]
    %v159 = vld [vmem:[#allocation2 + $0x160] sm:$0xff]
    %v160 = vld [vmem:[#allocation2 + $0x168] sm:$0xff]
    %v161 = vld [vmem:[#allocation2 + $0x170] sm:$0xff]
    %v162 = vld [vmem:[#allocation2 + $0x178] sm:$0xff]
    %v163 = vld [vmem:[#allocation2 + $0x180] sm:$0xff]
    %v164 = vld [vmem:[#allocation2 + $0x188] sm:$0xff]
    %v165 = vld [vmem:[#allocation2 + $0x190] sm:$0xff]
    %v166 = vld [vmem:[#allocation2 + $0x198] sm:$0xff]
    %v167 = vld [vmem:[#allocation2 + $0x1a0] sm:$0xff]
    %v168 = vld [vmem:[#allocation2 + $0x1a8] sm:$0xff]
    %v169 = vld [vmem:[#allocation2 + $0x1b0] sm:$0xff]
    %v170 = vld [vmem:[#allocation2 + $0x1b8] sm:$0xff]
    %v171 = vld [vmem:[#allocation2 + $0x1c0] sm:$0xff]
    %v172 = vld [vmem:[#allocation2 + $0x1c8] sm:$0xff]
    %v173 = vld [vmem:[#allocation2 + $0x1d0] sm:$0xff]
    %v174 = vld [vmem:[#allocation2 + $0x1d8] sm:$0xff]
    %v175 = vld [vmem:[#allocation2 + $0x1e0] sm:$0xff]
    %v176 = vld [vmem:[#allocation2 + $0x1e8] sm:$0xff]
    %v177 = vld [vmem:[#allocation2 + $0x1f0] sm:$0xff]
    %v178 = vld [vmem:[#allocation2 + $0x1f8] sm:$0xff]
    %v179 = vld [vmem:[#allocation2 + $0x200] sm:$0xff]
    %v180 = vld [vmem:[#allocation2 + $0x208] sm:$0xff]
    %v181 = vld [vmem:[#allocation2 + $0x210] sm:$0xff]
    %v182 = vld [vmem:[#allocation2 + $0x218] sm:$0xff]
    %v183 = vld [vmem:[#allocation2 + $0x220] sm:$0xff]
    %v184 = vld [vmem:[#allocation2 + $0x228] sm:$0xff]
    %v185 = vld [vmem:[#allocation2 + $0x230] sm:$0xff]
    %v186 = vld [vmem:[#allocation2 + $0x238] sm:$0xff]
    %v187 = vld [vmem:[#allocation2 + $0x240] sm:$0xff]
    %v188 = vld [vmem:[#allocation2 + $0x248] sm:$0xff]
    %v189 = vld [vmem:[#allocation2 + $0x250] sm:$0xff]
    %v190 = vld [vmem:[#allocation2 + $0x258] sm:$0xff]
    %v191 = vld [vmem:[#allocation2 + $0x260] sm:$0xff]
    %v192 = vld [vmem:[#allocation2 + $0x268] sm:$0xff]
    %v193 = vld [vmem:[#allocation2 + $0x270] sm:$0xff]
    %v194 = vld [vmem:[#allocation2 + $0x278] sm:$0xff]
    %v195 = vld [vmem:[#allocation2 + $0x280] sm:$0xff]
    %v196 = vld [vmem:[#allocation2 + $0x288] sm:$0xff]
    %v197 = vld [vmem:[#allocation2 + $0x290] sm:$0xff]
    %v198 = vld [vmem:[#allocation2 + $0x298] sm:$0xff]
    %v199 = vld [vmem:[#allocation2 + $0x2a0] sm:$0xff]
    %v200 = vld [vmem:[#allocation2 + $0x2a8] sm:$0xff]
    %v201 = vld [vmem:[#allocation2 + $0x2b0] sm:$0xff]
    %v202 = vld [vmem:[#allocation2 + $0x2b8] sm:$0xff]
    %v203 = vld [vmem:[#allocation2 + $0x2c0] sm:$0xff]
    %v204 = vld [vmem:[#allocation2 + $0x2c8] sm:$0xff]
    %v205 = vld [vmem:[#allocation2 + $0x2d0] sm:$0xff]
    %v206 = vld [vmem:[#allocation2 + $0x2d8] sm:$0xff]
    %v207 = vld [vmem:[#allocation2 + $0x2e0] sm:$0xff]
    %v208 = vld [vmem:[#allocation2 + $0x2e8] sm:$0xff]
    %v209 = vld [vmem:[#allocation2 + $0x2f0] sm:$0xff]
    %v210 = vld [vmem:[#allocation2 + $0x2f8] sm:$0xff]
    %v211 = vld [vmem:[#allocation2 + $0x300] sm:$0xff]
    %v212 = vld [vmem:[#allocation2 + $0x308] sm:$0xff]
    %v213 = vld [vmem:[#allocation2 + $0x310] sm:$0xff]
    %v214 = vld [vmem:[#allocation2 + $0x318] sm:$0xff]
    %v215 = vld [vmem:[#allocation2 + $0x320] sm:$0xff]
    %v216 = vld [vmem:[#allocation2 + $0x328] sm:$0xff]
    %v217 = vld [vmem:[#allocation2 + $0x330] sm:$0xff]
    %v218 = vld [vmem:[#allocation2 + $0x338] sm:$0xff]
    %v219 = vld [vmem:[#allocation2 + $0x340] sm:$0xff]
    %v220 = vld [vmem:[#allocation2 + $0x348] sm:$0xff]
    %v221 = vld [vmem:[#allocation2 + $0x350] sm:$0xff]
    %v222 = vld [vmem:[#allocation2 + $0x358] sm:$0xff]
    %v223 = vld [vmem:[#allocation2 + $0x360] sm:$0xff]
    %v224 = vld [vmem:[#allocation2 + $0x368] sm:$0xff]
    %v225 = vld [vmem:[#allocation2 + $0x370] sm:$0xff]
    %v226 = vld [vmem:[#allocation2 + $0x378] sm:$0xff]
    %v227 = vld [vmem:[#allocation2 + $0x380] sm:$0xff]
    %v228 = vld [vmem:[#allocation2 + $0x388] sm:$0xff]
    %v229 = vld [vmem:[#allocation2 + $0x390] sm:$0xff]
    %v230 = vld [vmem:[#allocation2 + $0x398] sm:$0xff]
    %v231 = vld [vmem:[#allocation2 + $0x3a0] sm:$0xff]
    %v232 = vld [vmem:[#allocation2 + $0x3a8] sm:$0xff]
    %v233 = vld [vmem:[#allocation2 + $0x3b0] sm:$0xff]
    %v234 = vld [vmem:[#allocation2 + $0x3b8] sm:$0xff]
    %v235 = vld [vmem:[#allocation2 + $0x3c0] sm:$0xff]
    %v236 = vld [vmem:[#allocation2 + $0x3c8] sm:$0xff]
    %v237 = vld [vmem:[#allocation2 + $0x3d0] sm:$0xff]
    %v238 = vld [vmem:[#allocation2 + $0x3d8] sm:$0xff]
    %v239 = vld [vmem:[#allocation2 + $0x3e0] sm:$0xff]
    %v240 = vld [vmem:[#allocation2 + $0x3e8] sm:$0xff]
    %v241 = vld [vmem:[#allocation2 + $0x3f0] sm:$0xff]
    %v242 = vld [vmem:[#allocation2 + $0x3f8] sm:$0xff]
    %v243 = vld [vmem:[#allocation2 + $0x400] sm:$0xff]
    %v244 = vld [vmem:[#allocation2 + $0x408] sm:$0xff]
    %v245 = vld [vmem:[#allocation2 + $0x410] sm:$0xff]
    %v246 = vld [vmem:[#allocation2 + $0x418] sm:$0xff]
    %v247 = vld [vmem:[#allocation2 + $0x420] sm:$0xff]
    %v248 = vld [vmem:[#allocation2 + $0x428] sm:$0xff]
    %v249 = vld [vmem:[#allocation2 + $0x430] sm:$0xff]
    %v250 = vld [vmem:[#allocation2 + $0x438] sm:$0xff]
    %v251 = vld [vmem:[#allocation2 + $0x440] sm:$0xff]
    %v252 = vld [vmem:[#allocation2 + $0x448] sm:$0xff]
    %v253 = vld [vmem:[#allocation2 + $0x450] sm:$0xff]
    %v254 = vld [vmem:[#allocation2 + $0x458] sm:$0xff]
    %v255 = vld [vmem:[#allocation2 + $0x460] sm:$0xff]
    %v256 = vld [vmem:[#allocation2 + $0x468] sm:$0xff]
    %v257 = vld [vmem:[#allocation2 + $0x470] sm:$0xff]
    %v258 = vld [vmem:[#allocation2 + $0x478] sm:$0xff]
    %v259 = vld [vmem:[#allocation2 + $0x480] sm:$0xff]
    %v260 = vld [vmem:[#allocation2 + $0x488] sm:$0xff]
    %v261 = vld [vmem:[#allocation2 + $0x490] sm:$0xff]
    %v262 = vld [vmem:[#allocation2 + $0x498] sm:$0xff]
    %v263 = vld [vmem:[#allocation2 + $0x4a0] sm:$0xff]
    %v264 = vld [vmem:[#allocation2 + $0x4a8] sm:$0xff]
    %v265 = vld [vmem:[#allocation2 + $0x4b0] sm:$0xff]
    %v266 = vld [vmem:[#allocation2 + $0x4b8] sm:$0xff]
    %v267 = vld [vmem:[#allocation2 + $0x4c0] sm:$0xff]
    %v268 = vld [vmem:[#allocation2 + $0x4c8] sm:$0xff]
    %v269 = vld [vmem:[#allocation2 + $0x4d0] sm:$0xff]
    %v270 = vld [vmem:[#allocation2 + $0x4d8] sm:$0xff]
    %v271 = vld [vmem:[#allocation2 + $0x4e0] sm:$0xff]
    %v272 = vld [vmem:[#allocation2 + $0x4e8] sm:$0xff]
    %v273 = vld [vmem:[#allocation2 + $0x4f0] sm:$0xff]
    %v274 = vld [vmem:[#allocation2 + $0x4f8] sm:$0xff]
    %v275 = vld [vmem:[#allocation2 + $0x500] sm:$0xff]
    %v276 = vld [vmem:[#allocation2 + $0x508] sm:$0xff]
    %v277 = vld [vmem:[#allocation2 + $0x510] sm:$0xff]
    %v278 = vld [vmem:[#allocation2 + $0x518] sm:$0xff]
    %v279 = vld [vmem:[#allocation2 + $0x520] sm:$0xff]
    %v280 = vld [vmem:[#allocation2 + $0x528] sm:$0xff]
    %v281 = vld [vmem:[#allocation2 + $0x530] sm:$0xff]
    %v282 = vld [vmem:[#allocation2 + $0x538] sm:$0xff]
    %v283 = vld [vmem:[#allocation2 + $0x540] sm:$0xff]
    %v284 = vld [vmem:[#allocation2 + $0x548] sm:$0xff]
    %v285 = vld [vmem:[#allocation2 + $0x550] sm:$0xff]
    %v286 = vld [vmem:[#allocation2 + $0x558] sm:$0xff]
    %v287 = vld [vmem:[#allocation2 + $0x560] sm:$0xff]
    %v288 = vld [vmem:[#allocation2 + $0x568] sm:$0xff]
    %v289 = vld [vmem:[#allocation2 + $0x570] sm:$0xff]
    %v290 = vld [vmem:[#allocation2 + $0x578] sm:$0xff]
    %v291 = vld [vmem:[#allocation2 + $0x580] sm:$0xff]
    %v292 = vld [vmem:[#allocation2 + $0x588] sm:$0xff]
    %v293 = vld [vmem:[#allocation2 + $0x590] sm:$0xff]
    %v294 = vld [vmem:[#allocation2 + $0x598] sm:$0xff]
    %v295 = vld [vmem:[#allocation2 + $0x5a0] sm:$0xff]
    %v296 = vld [vmem:[#allocation2 + $0x5a8] sm:$0xff]
    %v297 = vld [vmem:[#allocation2 + $0x5b0] sm:$0xff]
    %v298 = vld [vmem:[#allocation2 + $0x5b8] sm:$0xff]
    %v299 = vld [vmem:[#allocation2 + $0x5c0] sm:$0xff]
    %v300 = vld [vmem:[#allocation2 + $0x5c8] sm:$0xff]
    %v301 = vld [vmem:[#allocation2 + $0x5d0] sm:$0xff]
    %v302 = vld [vmem:[#allocation2 + $0x5d8] sm:$0xff]
    %v303 = vld [vmem:[#allocation2 + $0x5e0] sm:$0xff]
    %v304 = vld [vmem:[#allocation2 + $0x5e8] sm:$0xff]
    %v305 = vld [vmem:[#allocation2 + $0x5f0] sm:$0xff]
    %v306 = vld [vmem:[#allocation2 + $0x5f8] sm:$0xff]
    %v307 = vld [vmem:[#allocation2 + $0x600] sm:$0xff]
    %v308 = vld [vmem:[#allocation2 + $0x608] sm:$0xff]
    %v309 = vld [vmem:[#allocation2 + $0x610] sm:$0xff]
    %v310 = vld [vmem:[#allocation2 + $0x618] sm:$0xff]
    %v311 = vld [vmem:[#allocation2 + $0x620] sm:$0xff]
    %v312 = vld [vmem:[#allocation2 + $0x628] sm:$0xff]
    %v313 = vld [vmem:[#allocation2 + $0x630] sm:$0xff]
    %v314 = vld [vmem:[#allocation2 + $0x638] sm:$0xff]
    %v315 = vld [vmem:[#allocation2 + $0x640] sm:$0xff]
    %v316 = vld [vmem:[#allocation2 + $0x648] sm:$0xff]
    %v317 = vld [vmem:[#allocation2 + $0x650] sm:$0xff]
    %v318 = vld [vmem:[#allocation2 + $0x658] sm:$0xff]
    %v319 = vld [vmem:[#allocation2 + $0x660] sm:$0xff]
    %v320 = vld [vmem:[#allocation2 + $0x668] sm:$0xff]
    %v321 = vld [vmem:[#allocation2 + $0x670] sm:$0xff]
    %v322 = vld [vmem:[#allocation2 + $0x678] sm:$0xff]
    %v323 = vld [vmem:[#allocation2 + $0x680] sm:$0xff]
    %v324 = vld [vmem:[#allocation2 + $0x688] sm:$0xff]
    %v325 = vld [vmem:[#allocation2 + $0x690] sm:$0xff]
    %v326 = vld [vmem:[#allocation2 + $0x698] sm:$0xff]
    %v327 = vld [vmem:[#allocation2 + $0x6a0] sm:$0xff]
    %v328 = vld [vmem:[#allocation2 + $0x6a8] sm:$0xff]
    %v329 = vld [vmem:[#allocation2 + $0x6b0] sm:$0xff]
    %v330 = vld [vmem:[#allocation2 + $0x6b8] sm:$0xff]
    %v331 = vld [vmem:[#allocation2 + $0x6c0] sm:$0xff]
    %v332 = vld [vmem:[#allocation2 + $0x6c8] sm:$0xff]
    %v333 = vld [vmem:[#allocation2 + $0x6d0] sm:$0xff]
    %v334 = vld [vmem:[#allocation2 + $0x6d8] sm:$0xff]
    %v335 = vld [vmem:[#allocation2 + $0x6e0] sm:$0xff]
    %v336 = vld [vmem:[#allocation2 + $0x6e8] sm:$0xff]
    %v337 = vld [vmem:[#allocation2 + $0x6f0] sm:$0xff]
    %v338 = vld [vmem:[#allocation2 + $0x6f8] sm:$0xff]
    %v339 = vld [vmem:[#allocation2 + $0x700] sm:$0xff]
    %v340 = vld [vmem:[#allocation2 + $0x708] sm:$0xff]
    %v341 = vld [vmem:[#allocation2 + $0x710] sm:$0xff]
    %v342 = vld [vmem:[#allocation2 + $0x718] sm:$0xff]
    %v343 = vld [vmem:[#allocation2 + $0x720] sm:$0xff]
    %v344 = vld [vmem:[#allocation2 + $0x728] sm:$0xff]
    %v345 = vld [vmem:[#allocation2 + $0x730] sm:$0xff]
    %v346 = vld [vmem:[#allocation2 + $0x738] sm:$0xff]
    %v347 = vld [vmem:[#allocation2 + $0x740] sm:$0xff]
    %v348 = vld [vmem:[#allocation2 + $0x748] sm:$0xff]
    %v349 = vld [vmem:[#allocation2 + $0x750] sm:$0xff]
    %v350 = vld [vmem:[#allocation2 + $0x758] sm:$0xff]
    %v351 = vld [vmem:[#allocation2 + $0x760] sm:$0xff]
    %v352 = vld [vmem:[#allocation2 + $0x768] sm:$0xff]
    %v353 = vld [vmem:[#allocation2 + $0x770] sm:$0xff]
    %v354 = vld [vmem:[#allocation2 + $0x778] sm:$0xff]
    %v355 = vld [vmem:[#allocation2 + $0x780] sm:$0xff]
    %v356 = vld [vmem:[#allocation2 + $0x788] sm:$0xff]
    %v357 = vld [vmem:[#allocation2 + $0x790] sm:$0xff]
    %v358 = vld [vmem:[#allocation2 + $0x798] sm:$0xff]
    %v359 = vld [vmem:[#allocation2 + $0x7a0] sm:$0xff]
    %v360 = vld [vmem:[#allocation2 + $0x7a8] sm:$0xff]
    %v361 = vld [vmem:[#allocation2 + $0x7b0] sm:$0xff]
    %v362 = vld [vmem:[#allocation2 + $0x7b8] sm:$0xff]
    %v363 = vld [vmem:[#allocation2 + $0x7c0] sm:$0xff]
    %v364 = vld [vmem:[#allocation2 + $0x7c8] sm:$0xff]
    %v365 = vld [vmem:[#allocation2 + $0x7d0] sm:$0xff]
    %v366 = vld [vmem:[#allocation2 + $0x7d8] sm:$0xff]
    %v367 = vld [vmem:[#allocation2 + $0x7e0] sm:$0xff]
    %v368 = vld [vmem:[#allocation2 + $0x7e8] sm:$0xff]
    %v369 = vld [vmem:[#allocation2 + $0x7f0] sm:$0xff]
    %v370 = vld [vmem:[#allocation2 + $0x7f8] sm:$0xff]
    %v371 = vld [vmem:[#allocation2 + $0x800] sm:$0xff]
    %v372 = vld [vmem:[#allocation2 + $0x808] sm:$0xff]
    %v373 = vld [vmem:[#allocation2 + $0x810] sm:$0xff]
    %v374 = vld [vmem:[#allocation2 + $0x818] sm:$0xff]
    %v375 = vld [vmem:[#allocation2 + $0x820] sm:$0xff]
    %v376 = vld [vmem:[#allocation2 + $0x828] sm:$0xff]
    %v377 = vld [vmem:[#allocation2 + $0x830] sm:$0xff]
    %v378 = vld [vmem:[#allocation2 + $0x838] sm:$0xff]
    %v379 = vld [vmem:[#allocation2 + $0x840] sm:$0xff]
    %v380 = vld [vmem:[#allocation2 + $0x848] sm:$0xff]
    %v381 = vld [vmem:[#allocation2 + $0x850] sm:$0xff]
    %v382 = vld [vmem:[#allocation2 + $0x858] sm:$0xff]
    %v383 = vld [vmem:[#allocation2 + $0x860] sm:$0xff]
    %v384 = vld [vmem:[#allocation2 + $0x868] sm:$0xff]
    %v385 = vld [vmem:[#allocation2 + $0x870] sm:$0xff]
    %v386 = vld [vmem:[#allocation2 + $0x878] sm:$0xff]
    %v387 = vld [vmem:[#allocation2 + $0x880] sm:$0xff]
    %v388 = vld [vmem:[#allocation2 + $0x888] sm:$0xff]
    %v389 = vld [vmem:[#allocation2 + $0x890] sm:$0xff]
    %v390 = vld [vmem:[#allocation2 + $0x898] sm:$0xff]
    %v391 = vld [vmem:[#allocation2 + $0x8a0] sm:$0xff]
    %v392 = vld [vmem:[#allocation2 + $0x8a8] sm:$0xff]
    %v393 = vld [vmem:[#allocation2 + $0x8b0] sm:$0xff]
    %v394 = vld [vmem:[#allocation2 + $0x8b8] sm:$0xff]
    %v395 = vld [vmem:[#allocation2 + $0x8c0] sm:$0xff]
    %v396 = vld [vmem:[#allocation2 + $0x8c8] sm:$0xff]
    %v397 = vld [vmem:[#allocation2 + $0x8d0] sm:$0xff]
    %v398 = vld [vmem:[#allocation2 + $0x8d8] sm:$0xff]
    %v399 = vld [vmem:[#allocation2 + $0x8e0] sm:$0xff]
    %v400 = vld [vmem:[#allocation2 + $0x8e8] sm:$0xff]
    %v401 = vld [vmem:[#allocation2 + $0x8f0] sm:$0xff]
    %v402 = vld [vmem:[#allocation2 + $0x8f8] sm:$0xff]
    %v403 = vld [vmem:[#allocation2 + $0x900] sm:$0xff]
    %v404 = vld [vmem:[#allocation2 + $0x908] sm:$0xff]
    %v405 = vld [vmem:[#allocation2 + $0x910] sm:$0xff]
    %v406 = vld [vmem:[#allocation2 + $0x918] sm:$0xff]
    %v407 = vld [vmem:[#allocation2 + $0x920] sm:$0xff]
    %v408 = vld [vmem:[#allocation2 + $0x928] sm:$0xff]
    %v409 = vld [vmem:[#allocation2 + $0x930] sm:$0xff]
    %v410 = vld [vmem:[#allocation2 + $0x938] sm:$0xff]
    %v411 = vld [vmem:[#allocation2 + $0x940] sm:$0xff]
    %v412 = vld [vmem:[#allocation2 + $0x948] sm:$0xff]
    %v413 = vld [vmem:[#allocation2 + $0x950] sm:$0xff]
    %v414 = vld [vmem:[#allocation2 + $0x958] sm:$0xff]
    %v415 = vld [vmem:[#allocation2 + $0x960] sm:$0xff]
    %v416 = vld [vmem:[#allocation2 + $0x968] sm:$0xff]
    %v417 = vld [vmem:[#allocation2 + $0x970] sm:$0xff]
    %v418 = vld [vmem:[#allocation2 + $0x978] sm:$0xff]
    %v419 = vld [vmem:[#allocation2 + $0x980] sm:$0xff]
    %v420 = vld [vmem:[#allocation2 + $0x988] sm:$0xff]
    %v421 = vld [vmem:[#allocation2 + $0x990] sm:$0xff]
    %v422 = vld [vmem:[#allocation2 + $0x998] sm:$0xff]
    %v423 = vld [vmem:[#allocation2 + $0x9a0] sm:$0xff]
    %v424 = vld [vmem:[#allocation2 + $0x9a8] sm:$0xff]
    %v425 = vld [vmem:[#allocation2 + $0x9b0] sm:$0xff]
    %v426 = vld [vmem:[#allocation2 + $0x9b8] sm:$0xff]
    %v427 = vld [vmem:[#allocation2 + $0x9c0] sm:$0xff]
    %v428 = vld [vmem:[#allocation2 + $0x9c8] sm:$0xff]
    %v429 = vld [vmem:[#allocation2 + $0x9d0] sm:$0xff]
    %v430 = vld [vmem:[#allocation2 + $0x9d8] sm:$0xff]
    %v431 = vld [vmem:[#allocation2 + $0x9e0] sm:$0xff]
    %v432 = vld [vmem:[#allocation2 + $0x9e8] sm:$0xff]
    %v433 = vld [vmem:[#allocation2 + $0x9f0] sm:$0xff]
    %v434 = vld [vmem:[#allocation2 + $0x9f8] sm:$0xff]
    %v435 = vld [vmem:[#allocation2 + $0xa00] sm:$0xff]
    %v436 = vld [vmem:[#allocation2 + $0xa08] sm:$0xff]
    %v437 = vld [vmem:[#allocation2 + $0xa10] sm:$0xff]
    %v438 = vld [vmem:[#allocation2 + $0xa18] sm:$0xff]
    %v439 = vld [vmem:[#allocation2 + $0xa20] sm:$0xff]
    %v440 = vld [vmem:[#allocation2 + $0xa28] sm:$0xff]
    %v441 = vld [vmem:[#allocation2 + $0xa30] sm:$0xff]
    %v442 = vld [vmem:[#allocation2 + $0xa38] sm:$0xff]
    %v443 = vld [vmem:[#allocation2 + $0xa40] sm:$0xff]
    %v444 = vld [vmem:[#allocation2 + $0xa48] sm:$0xff]
    %v445 = vld [vmem:[#allocation2 + $0xa50] sm:$0xff]
    %v446 = vld [vmem:[#allocation2 + $0xa58] sm:$0xff]
    %v447 = vld [vmem:[#allocation2 + $0xa60] sm:$0xff]
    %v448 = vld [vmem:[#allocation2 + $0xa68] sm:$0xff]
    %v449 = vld [vmem:[#allocation2 + $0xa70] sm:$0xff]
    %v450 = vld [vmem:[#allocation2 + $0xa78] sm:$0xff]
    %v451 = vld [vmem:[#allocation2 + $0xa80] sm:$0xff]
    %v452 = vld [vmem:[#allocation2 + $0xa88] sm:$0xff]
    %v453 = vld [vmem:[#allocation2 + $0xa90] sm:$0xff]
    %v454 = vld [vmem:[#allocation2 + $0xa98] sm:$0xff]
    %v455 = vld [vmem:[#allocation2 + $0xaa0] sm:$0xff]
    %v456 = vld [vmem:[#allocation2 + $0xaa8] sm:$0xff]
    %v457 = vld [vmem:[#allocation2 + $0xab0] sm:$0xff]
    %v458 = vld [vmem:[#allocation2 + $0xab8] sm:$0xff]
    %v459 = vld [vmem:[#allocation2 + $0xac0] sm:$0xff]
    %v460 = vld [vmem:[#allocation2 + $0xac8] sm:$0xff]
    %v461 = vld [vmem:[#allocation2 + $0xad0] sm:$0xff]
    %v462 = vld [vmem:[#allocation2 + $0xad8] sm:$0xff]
    %v463 = vld [vmem:[#allocation2 + $0xae0] sm:$0xff]
    %v464 = vld [vmem:[#allocation2 + $0xae8] sm:$0xff]
    %v465 = vld [vmem:[#allocation2 + $0xaf0] sm:$0xff]
    %v466 = vld [vmem:[#allocation2 + $0xaf8] sm:$0xff]
    %v467 = vld [vmem:[#allocation2 + $0xb00] sm:$0xff]
    %v468 = vld [vmem:[#allocation2 + $0xb08] sm:$0xff]
    %v469 = vld [vmem:[#allocation2 + $0xb10] sm:$0xff]
    %v470 = vld [vmem:[#allocation2 + $0xb18] sm:$0xff]
    %v471 = vld [vmem:[#allocation2 + $0xb20] sm:$0xff]
    %v472 = vld [vmem:[#allocation2 + $0xb28] sm:$0xff]
    %v473 = vld [vmem:[#allocation2 + $0xb30] sm:$0xff]
    %v474 = vld [vmem:[#allocation2 + $0xb38] sm:$0xff]
    %v475 = vld [vmem:[#allocation2 + $0xb40] sm:$0xff]
    %v476 = vld [vmem:[#allocation2 + $0xb48] sm:$0xff]
    %v477 = vld [vmem:[#allocation2 + $0xb50] sm:$0xff]
    %v478 = vld [vmem:[#allocation2 + $0xb58] sm:$0xff]
    %v479 = vld [vmem:[#allocation2 + $0xb60] sm:$0xff]
    %v480 = vld [vmem:[#allocation2 + $0xb68] sm:$0xff]
    %v481 = vld [vmem:[#allocation2 + $0xb70] sm:$0xff]
    %v482 = vld [vmem:[#allocation2 + $0xb78] sm:$0xff]
    %v483 = vld [vmem:[#allocation2 + $0xb80] sm:$0xff]
    %v484 = vld [vmem:[#allocation2 + $0xb88] sm:$0xff]
    %v485 = vld [vmem:[#allocation2 + $0xb90] sm:$0xff]
    %v486 = vld [vmem:[#allocation2 + $0xb98] sm:$0xff]
    %v487 = vld [vmem:[#allocation2 + $0xba0] sm:$0xff]
    %v488 = vld [vmem:[#allocation2 + $0xba8] sm:$0xff]
    %v489 = vld [vmem:[#allocation2 + $0xbb0] sm:$0xff]
    %v490 = vld [vmem:[#allocation2 + $0xbb8] sm:$0xff]
    %v491 = vld [vmem:[#allocation2 + $0xbc0] sm:$0xff]
    %v492 = vld [vmem:[#allocation2 + $0xbc8] sm:$0xff]
    %v493 = vld [vmem:[#allocation2 + $0xbd0] sm:$0xff]
    %v494 = vld [vmem:[#allocation2 + $0xbd8] sm:$0xff]
    %v495 = vld [vmem:[#allocation2 + $0xbe0] sm:$0xff]
    %v496 = vld [vmem:[#allocation2 + $0xbe8] sm:$0xff]
    %v497 = vld [vmem:[#allocation2 + $0xbf0] sm:$0xff]
    %v498 = vld [vmem:[#allocation2 + $0xbf8] sm:$0xff]
    %v499 = vld [vmem:[#allocation2 + $0xc00] sm:$0xff]
    %v500 = vld [vmem:[#allocation2 + $0xc08] sm:$0xff]
    %v501 = vld [vmem:[#allocation2 + $0xc10] sm:$0xff]
    %v502 = vld [vmem:[#allocation2 + $0xc18] sm:$0xff]
    %v503 = vld [vmem:[#allocation2 + $0xc20] sm:$0xff]
    %v504 = vld [vmem:[#allocation2 + $0xc28] sm:$0xff]
    %v505 = vld [vmem:[#allocation2 + $0xc30] sm:$0xff]
    %v506 = vld [vmem:[#allocation2 + $0xc38] sm:$0xff]
    %v507 = vld [vmem:[#allocation2 + $0xc40] sm:$0xff]
    %v508 = vld [vmem:[#allocation2 + $0xc48] sm:$0xff]
    %v509 = vld [vmem:[#allocation2 + $0xc50] sm:$0xff]
    %v510 = vld [vmem:[#allocation2 + $0xc58] sm:$0xff]
    %v511 = vld [vmem:[#allocation2 + $0xc60] sm:$0xff]
    %v512 = vld [vmem:[#allocation2 + $0xc68] sm:$0xff]
    %v513 = vld [vmem:[#allocation2 + $0xc70] sm:$0xff]
    %v514 = vld [vmem:[#allocation2 + $0xc78] sm:$0xff]
    %v515 = vld [vmem:[#allocation2 + $0xc80] sm:$0xff]
    %v516 = vld [vmem:[#allocation2 + $0xc88] sm:$0xff]
    %v517 = vld [vmem:[#allocation2 + $0xc90] sm:$0xff]
    %v518 = vld [vmem:[#allocation2 + $0xc98] sm:$0xff]
    %v519 = vld [vmem:[#allocation2 + $0xca0] sm:$0xff]
    %v520 = vld [vmem:[#allocation2 + $0xca8] sm:$0xff]
    %v521 = vld [vmem:[#allocation2 + $0xcb0] sm:$0xff]
    %v522 = vld [vmem:[#allocation2 + $0xcb8] sm:$0xff]
    %v523 = vld [vmem:[#allocation2 + $0xcc0] sm:$0xff]
    %v524 = vld [vmem:[#allocation2 + $0xcc8] sm:$0xff]
    %v525 = vld [vmem:[#allocation2 + $0xcd0] sm:$0xff]
    %v526 = vld [vmem:[#allocation2 + $0xcd8] sm:$0xff]
    %v527 = vld [vmem:[#allocation2 + $0xce0] sm:$0xff]
    %v528 = vld [vmem:[#allocation2 + $0xce8] sm:$0xff]
    %v529 = vld [vmem:[#allocation2 + $0xcf0] sm:$0xff]
    %v530 = vld [vmem:[#allocation2 + $0xcf8] sm:$0xff]
    %v531 = vld [vmem:[#allocation2 + $0xd00] sm:$0xff]
    %v532 = vld [vmem:[#allocation2 + $0xd08] sm:$0xff]
    %v533 = vld [vmem:[#allocation2 + $0xd10] sm:$0xff]
    %v534 = vld [vmem:[#allocation2 + $0xd18] sm:$0xff]
    %v535 = vld [vmem:[#allocation2 + $0xd20] sm:$0xff]
    %v536 = vld [vmem:[#allocation2 + $0xd28] sm:$0xff]
    %v537 = vld [vmem:[#allocation2 + $0xd30] sm:$0xff]
    %v538 = vld [vmem:[#allocation2 + $0xd38] sm:$0xff]
    %v539 = vld [vmem:[#allocation2 + $0xd40] sm:$0xff]
    %v540 = vld [vmem:[#allocation2 + $0xd48] sm:$0xff]
    %v541 = vld [vmem:[#allocation2 + $0xd50] sm:$0xff]
    %v542 = vld [vmem:[#allocation2 + $0xd58] sm:$0xff]
    %v543 = vld [vmem:[#allocation2 + $0xd60] sm:$0xff]
    %v544 = vld [vmem:[#allocation2 + $0xd68] sm:$0xff]
    %v545 = vld [vmem:[#allocation2 + $0xd70] sm:$0xff]
    %v546 = vld [vmem:[#allocation2 + $0xd78] sm:$0xff]
    %v547 = vld [vmem:[#allocation2 + $0xd80] sm:$0xff]
    %v548 = vld [vmem:[#allocation2 + $0xd88] sm:$0xff]
    %v549 = vld [vmem:[#allocation2 + $0xd90] sm:$0xff]
    %v550 = vld [vmem:[#allocation2 + $0xd98] sm:$0xff]
    %v551 = vld [vmem:[#allocation2 + $0xda0] sm:$0xff]
    %v552 = vld [vmem:[#allocation2 + $0xda8] sm:$0xff]
    %v553 = vld [vmem:[#allocation2 + $0xdb0] sm:$0xff]
    %v554 = vld [vmem:[#allocation2 + $0xdb8] sm:$0xff]
    %v555 = vld [vmem:[#allocation2 + $0xdc0] sm:$0xff]
    %v556 = vld [vmem:[#allocation2 + $0xdc8] sm:$0xff]
    %v557 = vld [vmem:[#allocation2 + $0xdd0] sm:$0xff]
    %v558 = vld [vmem:[#allocation2 + $0xdd8] sm:$0xff]
    %v559 = vld [vmem:[#allocation2 + $0xde0] sm:$0xff]
    %v560 = vld [vmem:[#allocation2 + $0xde8] sm:$0xff]
    %v561 = vld [vmem:[#allocation2 + $0xdf0] sm:$0xff]
    %v562 = vld [vmem:[#allocation2 + $0xdf8] sm:$0xff]
    %v563 = vld [vmem:[#allocation2 + $0xe00] sm:$0xff]
    %v564 = vld [vmem:[#allocation2 + $0xe08] sm:$0xff]
    %v565 = vld [vmem:[#allocation2 + $0xe10] sm:$0xff]
    %v566 = vld [vmem:[#allocation2 + $0xe18] sm:$0xff]
    %v567 = vld [vmem:[#allocation2 + $0xe20] sm:$0xff]
    %v568 = vld [vmem:[#allocation2 + $0xe28] sm:$0xff]
    %v569 = vld [vmem:[#allocation2 + $0xe30] sm:$0xff]
    %v570 = vld [vmem:[#allocation2 + $0xe38] sm:$0xff]
    %v571 = vld [vmem:[#allocation2 + $0xe40] sm:$0xff]
    %v572 = vld [vmem:[#allocation2 + $0xe48] sm:$0xff]
    %v573 = vld [vmem:[#allocation2 + $0xe50] sm:$0xff]
    %v574 = vld [vmem:[#allocation2 + $0xe58] sm:$0xff]
    %v575 = vld [vmem:[#allocation2 + $0xe60] sm:$0xff]
    %v576 = vld [vmem:[#allocation2 + $0xe68] sm:$0xff]
    %v577 = vld [vmem:[#allocation2 + $0xe70] sm:$0xff]
    %v578 = vld [vmem:[#allocation2 + $0xe78] sm:$0xff]
    %v579 = vld [vmem:[#allocation2 + $0xe80] sm:$0xff]
    %v580 = vld [vmem:[#allocation2 + $0xe88] sm:$0xff]
    %v581 = vld [vmem:[#allocation2 + $0xe90] sm:$0xff]
    %v582 = vld [vmem:[#allocation2 + $0xe98] sm:$0xff]
    %v583 = vld [vmem:[#allocation2 + $0xea0] sm:$0xff]
    %v584 = vld [vmem:[#allocation2 + $0xea8] sm:$0xff]
    %v585 = vld [vmem:[#allocation2 + $0xeb0] sm:$0xff]
    %v586 = vld [vmem:[#allocation2 + $0xeb8] sm:$0xff]
    %v587 = vld [vmem:[#allocation2 + $0xec0] sm:$0xff]
    %v588 = vld [vmem:[#allocation2 + $0xec8] sm:$0xff]
    %v589 = vld [vmem:[#allocation2 + $0xed0] sm:$0xff]
    %v590 = vld [vmem:[#allocation2 + $0xed8] sm:$0xff]
    %v591 = vld [vmem:[#allocation2 + $0xee0] sm:$0xff]
    %v592 = vld [vmem:[#allocation2 + $0xee8] sm:$0xff]
    %v593 = vld [vmem:[#allocation2 + $0xef0] sm:$0xff]
    %v594 = vld [vmem:[#allocation2 + $0xef8] sm:$0xff]
    %v595 = vld [vmem:[#allocation2 + $0xf00] sm:$0xff]
    %v596 = vld [vmem:[#allocation2 + $0xf08] sm:$0xff]
    %v597 = vld [vmem:[#allocation2 + $0xf10] sm:$0xff]
    %v598 = vld [vmem:[#allocation2 + $0xf18] sm:$0xff]
    %v599 = vld [vmem:[#allocation2 + $0xf20] sm:$0xff]
    %v600 = vld [vmem:[#allocation2 + $0xf28] sm:$0xff]
    %v601 = vld [vmem:[#allocation2 + $0xf30] sm:$0xff]
    %v602 = vld [vmem:[#allocation2 + $0xf38] sm:$0xff]
    %v603 = vld [vmem:[#allocation2 + $0xf40] sm:$0xff]
    %v604 = vld [vmem:[#allocation2 + $0xf48] sm:$0xff]
    %v605 = vld [vmem:[#allocation2 + $0xf50] sm:$0xff]
    %v606 = vld [vmem:[#allocation2 + $0xf58] sm:$0xff]
    %v607 = vld [vmem:[#allocation2 + $0xf60] sm:$0xff]
    %v608 = vld [vmem:[#allocation2 + $0xf68] sm:$0xff]
    %v609 = vld [vmem:[#allocation2 + $0xf70] sm:$0xff]
    %v610 = vld [vmem:[#allocation2 + $0xf78] sm:$0xff]
    %v611 = vld [vmem:[#allocation2 + $0xf80] sm:$0xff]
    %v612 = vld [vmem:[#allocation2 + $0xf88] sm:$0xff]
    %v613 = vld [vmem:[#allocation2 + $0xf90] sm:$0xff]
    %v614 = vld [vmem:[#allocation2 + $0xf98] sm:$0xff]
    %v615 = vld [vmem:[#allocation2 + $0xfa0] sm:$0xff]
    %v616 = vld [vmem:[#allocation2 + $0xfa8] sm:$0xff]
    %v617 = vld [vmem:[#allocation2 + $0xfb0] sm:$0xff]
    %v618 = vld [vmem:[#allocation2 + $0xfb8] sm:$0xff]
    %v619 = vld [vmem:[#allocation2 + $0xfc0] sm:$0xff]
    %v620 = vld [vmem:[#allocation2 + $0xfc8] sm:$0xff]
    %v621 = vld [vmem:[#allocation2 + $0xfd0] sm:$0xff]
    %v622 = vld [vmem:[#allocation2 + $0xfd8] sm:$0xff]
    %v623 = vld [vmem:[#allocation2 + $0xfe0] sm:$0xff]
    %v624 = vld [vmem:[#allocation2 + $0xfe8] sm:$0xff]
    %v625 = vld [vmem:[#allocation2 + $0xff0] sm:$0xff]
    %v626 = vld [vmem:[#allocation2 + $0xff8] sm:$0xff]
    %v627 = vld [vmem:[#allocation2 + $0x1000] sm:$0xff]
    %v628 = vld [vmem:[#allocation2 + $0x1008] sm:$0xff]
    %v629 = vld [vmem:[#allocation2 + $0x1010] sm:$0xff]
    %v630 = vld [vmem:[#allocation2 + $0x1018] sm:$0xff]
    %v631 = vld [vmem:[#allocation2 + $0x1020] sm:$0xff]
    %v632 = vld [vmem:[#allocation2 + $0x1028] sm:$0xff]
    %v633 = vld [vmem:[#allocation2 + $0x1030] sm:$0xff]
    %v634 = vld [vmem:[#allocation2 + $0x1038] sm:$0xff]
    %v635 = vld [vmem:[#allocation2 + $0x1040] sm:$0xff]
    %v636 = vld [vmem:[#allocation2 + $0x1048] sm:$0xff]
    %v637 = vld [vmem:[#allocation2 + $0x1050] sm:$0xff]
    %v638 = vld [vmem:[#allocation2 + $0x1058] sm:$0xff]
    %v639 = vld [vmem:[#allocation2 + $0x1060] sm:$0xff]
    %v640 = vld [vmem:[#allocation2 + $0x1068] sm:$0xff]
    %v641 = vld [vmem:[#allocation2 + $0x1070] sm:$0xff]
    %v642 = vld [vmem:[#allocation2 + $0x1078] sm:$0xff]
    %v643 = vld [vmem:[#allocation2 + $0x1080] sm:$0xff]
    %v644 = vld [vmem:[#allocation2 + $0x1088] sm:$0xff]
    %v645 = vld [vmem:[#allocation2 + $0x1090] sm:$0xff]
    %v646 = vld [vmem:[#allocation2 + $0x1098] sm:$0xff]
    %v647 = vld [vmem:[#allocation2 + $0x10a0] sm:$0xff]
    %v648 = vld [vmem:[#allocation2 + $0x10a8] sm:$0xff]
    %v649 = vld [vmem:[#allocation2 + $0x10b0] sm:$0xff]
    %v650 = vld [vmem:[#allocation2 + $0x10b8] sm:$0xff]
    %v651 = vld [vmem:[#allocation2 + $0x10c0] sm:$0xff]
    %v652 = vld [vmem:[#allocation2 + $0x10c8] sm:$0xff]
    %v653 = vld [vmem:[#allocation2 + $0x10d0] sm:$0xff]
    %v654 = vld [vmem:[#allocation2 + $0x10d8] sm:$0xff]
    %v655 = vld [vmem:[#allocation2 + $0x10e0] sm:$0xff]
    %v656 = vld [vmem:[#allocation2 + $0x10e8] sm:$0xff]
    %v657 = vld [vmem:[#allocation2 + $0x10f0] sm:$0xff]
    %v658 = vld [vmem:[#allocation2 + $0x10f8] sm:$0xff]
    %v659 = vld [vmem:[#allocation2 + $0x1100] sm:$0xff]
    %v660 = vld [vmem:[#allocation2 + $0x1108] sm:$0xff]
    %v661 = vld [vmem:[#allocation2 + $0x1110] sm:$0xff]
    %v662 = vld [vmem:[#allocation2 + $0x1118] sm:$0xff]
    %v663 = vld [vmem:[#allocation2 + $0x1120] sm:$0xff]
    %v664 = vld [vmem:[#allocation2 + $0x1128] sm:$0xff]
    %v665 = vld [vmem:[#allocation2 + $0x1130] sm:$0xff]
    %v666 = vld [vmem:[#allocation2 + $0x1138] sm:$0xff]
    %v667 = vld [vmem:[#allocation2 + $0x1140] sm:$0xff]
    %v668 = vld [vmem:[#allocation2 + $0x1148] sm:$0xff]
    %v669 = vld [vmem:[#allocation2 + $0x1150] sm:$0xff]
    %v670 = vld [vmem:[#allocation2 + $0x1158] sm:$0xff]
    %v671 = vld [vmem:[#allocation2 + $0x1160] sm:$0xff]
    %v672 = vld [vmem:[#allocation2 + $0x1168] sm:$0xff]
    %v673 = vld [vmem:[#allocation2 + $0x1170] sm:$0xff]
    %v674 = vld [vmem:[#allocation2 + $0x1178] sm:$0xff]
    %v675 = vld [vmem:[#allocation2 + $0x1180] sm:$0xff]
    %v676 = vld [vmem:[#allocation2 + $0x1188] sm:$0xff]
    %v677 = vld [vmem:[#allocation2 + $0x1190] sm:$0xff]
    %v678 = vld [vmem:[#allocation2 + $0x1198] sm:$0xff]
    %v679 = vld [vmem:[#allocation2 + $0x11a0] sm:$0xff]
    %v680 = vld [vmem:[#allocation2 + $0x11a8] sm:$0xff]
    %v681 = vld [vmem:[#allocation2 + $0x11b0] sm:$0xff]
    %v682 = vld [vmem:[#allocation2 + $0x11b8] sm:$0xff]
    %v683 = vld [vmem:[#allocation2 + $0x11c0] sm:$0xff]
    %v684 = vld [vmem:[#allocation2 + $0x11c8] sm:$0xff]
    %v685 = vld [vmem:[#allocation2 + $0x11d0] sm:$0xff]
    %v686 = vld [vmem:[#allocation2 + $0x11d8] sm:$0xff]
    %v687 = vld [vmem:[#allocation2 + $0x11e0] sm:$0xff]
    %v688 = vld [vmem:[#allocation2 + $0x11e8] sm:$0xff]
    %v689 = vld [vmem:[#allocation2 + $0x11f0] sm:$0xff]
    %v690 = vld [vmem:[#allocation2 + $0x11f8] sm:$0xff]
    %v691 = vld [vmem:[#allocation2 + $0x1200] sm:$0xff]
    %v692 = vld [vmem:[#allocation2 + $0x1208] sm:$0xff]
    %v693 = vld [vmem:[#allocation2 + $0x1210] sm:$0xff]
    %v694 = vld [vmem:[#allocation2 + $0x1218] sm:$0xff]
    %v695 = vld [vmem:[#allocation2 + $0x1220] sm:$0xff]
    %v696 = vld [vmem:[#allocation2 + $0x1228] sm:$0xff]
    %v697 = vld [vmem:[#allocation2 + $0x1230] sm:$0xff]
    %v698 = vld [vmem:[#allocation2 + $0x1238] sm:$0xff]
    %v699 = vld [vmem:[#allocation2 + $0x1240] sm:$0xff]
    %v700 = vld [vmem:[#allocation2 + $0x1248] sm:$0xff]
    %v701 = vld [vmem:[#allocation2 + $0x1250] sm:$0xff]
    %v702 = vld [vmem:[#allocation2 + $0x1258] sm:$0xff]
    %v703 = vld [vmem:[#allocation2 + $0x1260] sm:$0xff]
    %v704 = vld [vmem:[#allocation2 + $0x1268] sm:$0xff]
    %v705 = vld [vmem:[#allocation2 + $0x1270] sm:$0xff]
    %v706 = vld [vmem:[#allocation2 + $0x1278] sm:$0xff]
    %v707 = vld [vmem:[#allocation2 + $0x1280] sm:$0xff]
    %v708 = vld [vmem:[#allocation2 + $0x1288] sm:$0xff]
    %v709 = vld [vmem:[#allocation2 + $0x1290] sm:$0xff]
    %v710 = vld [vmem:[#allocation2 + $0x1298] sm:$0xff]
    %v711 = vld [vmem:[#allocation2 + $0x12a0] sm:$0xff]
    %v712 = vld [vmem:[#allocation2 + $0x12a8] sm:$0xff]
    %v713 = vld [vmem:[#allocation2 + $0x12b0] sm:$0xff]
    %v714 = vld [vmem:[#allocation2 + $0x12b8] sm:$0xff]
    %v715 = vld [vmem:[#allocation2 + $0x12c0] sm:$0xff]
    %v716 = vld [vmem:[#allocation2 + $0x12c8] sm:$0xff]
    %v717 = vld [vmem:[#allocation2 + $0x12d0] sm:$0xff]
    %v718 = vld [vmem:[#allocation2 + $0x12d8] sm:$0xff]
    %v719 = vld [vmem:[#allocation2 + $0x12e0] sm:$0xff]
    %v720 = vld [vmem:[#allocation2 + $0x12e8] sm:$0xff]
    %v721 = vld [vmem:[#allocation2 + $0x12f0] sm:$0xff]
    %v722 = vld [vmem:[#allocation2 + $0x12f8] sm:$0xff]
    %v723 = vld [vmem:[#allocation2 + $0x1300] sm:$0xff]
    %v724 = vld [vmem:[#allocation2 + $0x1308] sm:$0xff]
    %v725 = vld [vmem:[#allocation2 + $0x1310] sm:$0xff]
    %v726 = vld [vmem:[#allocation2 + $0x1318] sm:$0xff]
    %v727 = vld [vmem:[#allocation2 + $0x1320] sm:$0xff]
    %v728 = vld [vmem:[#allocation2 + $0x1328] sm:$0xff]
    %v729 = vld [vmem:[#allocation2 + $0x1330] sm:$0xff]
    %v730 = vld [vmem:[#allocation2 + $0x1338] sm:$0xff]
    %v731 = vld [vmem:[#allocation2 + $0x1340] sm:$0xff]
    %v732 = vld [vmem:[#allocation2 + $0x1348] sm:$0xff]
    %v733 = vld [vmem:[#allocation2 + $0x1350] sm:$0xff]
    %v734 = vld [vmem:[#allocation2 + $0x1358] sm:$0xff]
    %v735 = vld [vmem:[#allocation2 + $0x1360] sm:$0xff]
    %v736 = vld [vmem:[#allocation2 + $0x1368] sm:$0xff]
    %v737 = vld [vmem:[#allocation2 + $0x1370] sm:$0xff]
    %v738 = vld [vmem:[#allocation2 + $0x1378] sm:$0xff]
    %v739 = vld [vmem:[#allocation2 + $0x1380] sm:$0xff]
    %v740 = vld [vmem:[#allocation2 + $0x1388] sm:$0xff]
    %v741 = vld [vmem:[#allocation2 + $0x1390] sm:$0xff]
    %v742 = vld [vmem:[#allocation2 + $0x1398] sm:$0xff]
    %v743 = vld [vmem:[#allocation2 + $0x13a0] sm:$0xff]
    %v744 = vld [vmem:[#allocation2 + $0x13a8] sm:$0xff]
    %v745 = vld [vmem:[#allocation2 + $0x13b0] sm:$0xff]
    %v746 = vld [vmem:[#allocation2 + $0x13b8] sm:$0xff]
    %v747 = vld [vmem:[#allocation2 + $0x13c0] sm:$0xff]
    %v748 = vld [vmem:[#allocation2 + $0x13c8] sm:$0xff]
    %v749 = vld [vmem:[#allocation2 + $0x13d0] sm:$0xff]
    %v750 = vld [vmem:[#allocation2 + $0x13d8] sm:$0xff]
    %v751 = vld [vmem:[#allocation2 + $0x13e0] sm:$0xff]
    %v752 = vld [vmem:[#allocation2 + $0x13e8] sm:$0xff]
    %v753 = vld [vmem:[#allocation2 + $0x13f0] sm:$0xff]
    %v754 = vld [vmem:[#allocation2 + $0x13f8] sm:$0xff]
    %v755 = vld [vmem:[#allocation2 + $0x1400] sm:$0xff]
    %v756 = vld [vmem:[#allocation2 + $0x1408] sm:$0xff]
    %v757 = vld [vmem:[#allocation2 + $0x1410] sm:$0xff]
    %v758 = vld [vmem:[#allocation2 + $0x1418] sm:$0xff]
    %v759 = vld [vmem:[#allocation2 + $0x1420] sm:$0xff]
    %v760 = vld [vmem:[#allocation2 + $0x1428] sm:$0xff]
    %v761 = vld [vmem:[#allocation2 + $0x1430] sm:$0xff]
    %v762 = vld [vmem:[#allocation2 + $0x1438] sm:$0xff]
    %v763 = vld [vmem:[#allocation2 + $0x1440] sm:$0xff]
    %v764 = vld [vmem:[#allocation2 + $0x1448] sm:$0xff]
    %v765 = vld [vmem:[#allocation2 + $0x1450] sm:$0xff]
    %v766 = vld [vmem:[#allocation2 + $0x1458] sm:$0xff]
    %v767 = vld [vmem:[#allocation2 + $0x1460] sm:$0xff]
    %v768 = vld [vmem:[#allocation2 + $0x1468] sm:$0xff]
    %v769 = vld [vmem:[#allocation2 + $0x1470] sm:$0xff]
    %v770 = vld [vmem:[#allocation2 + $0x1478] sm:$0xff]
    %v771 = vld [vmem:[#allocation2 + $0x1480] sm:$0xff]
    %v772 = vld [vmem:[#allocation2 + $0x1488] sm:$0xff]
    %v773 = vld [vmem:[#allocation2 + $0x1490] sm:$0xff]
    %v774 = vld [vmem:[#allocation2 + $0x1498] sm:$0xff]
    %v775 = vld [vmem:[#allocation2 + $0x14a0] sm:$0xff]
    %v776 = vld [vmem:[#allocation2 + $0x14a8] sm:$0xff]
    %v777 = vld [vmem:[#allocation2 + $0x14b0] sm:$0xff]
    %v778 = vld [vmem:[#allocation2 + $0x14b8] sm:$0xff]
    %v779 = vld [vmem:[#allocation2 + $0x14c0] sm:$0xff]
    %v780 = vld [vmem:[#allocation2 + $0x14c8] sm:$0xff]
    %v781 = vld [vmem:[#allocation2 + $0x14d0] sm:$0xff]
    %v782 = vld [vmem:[#allocation2 + $0x14d8] sm:$0xff]
    %v783 = vld [vmem:[#allocation2 + $0x14e0] sm:$0xff]
    %v784 = vld [vmem:[#allocation2 + $0x14e8] sm:$0xff]
    %v785 = vld [vmem:[#allocation2 + $0x14f0] sm:$0xff]
    %v786 = vld [vmem:[#allocation2 + $0x14f8] sm:$0xff]
    %v787 = vld [vmem:[#allocation2 + $0x1500] sm:$0xff]
    %v788 = vld [vmem:[#allocation2 + $0x1508] sm:$0xff]
    %v789 = vld [vmem:[#allocation2 + $0x1510] sm:$0xff]
    %v790 = vld [vmem:[#allocation2 + $0x1518] sm:$0xff]
    %v791 = vld [vmem:[#allocation2 + $0x1520] sm:$0xff]
    %v792 = vld [vmem:[#allocation2 + $0x1528] sm:$0xff]
    %v793 = vld [vmem:[#allocation2 + $0x1530] sm:$0xff]
    %v794 = vld [vmem:[#allocation2 + $0x1538] sm:$0xff]
    %v795 = vld [vmem:[#allocation2 + $0x1540] sm:$0xff]
    %v796 = vld [vmem:[#allocation2 + $0x1548] sm:$0xff]
    %v797 = vld [vmem:[#allocation2 + $0x1550] sm:$0xff]
    %v798 = vld [vmem:[#allocation2 + $0x1558] sm:$0xff]
    %v799 = vld [vmem:[#allocation2 + $0x1560] sm:$0xff]
    %v800 = vld [vmem:[#allocation2 + $0x1568] sm:$0xff]
    %v801 = vld [vmem:[#allocation2 + $0x1570] sm:$0xff]
    %v802 = vld [vmem:[#allocation2 + $0x1578] sm:$0xff]
    %v803 = vld [vmem:[#allocation2 + $0x1580] sm:$0xff]
    %v804 = vld [vmem:[#allocation2 + $0x1588] sm:$0xff]
    %v805 = vld [vmem:[#allocation2 + $0x1590] sm:$0xff]
    %v806 = vld [vmem:[#allocation2 + $0x1598] sm:$0xff]
    %v807 = vld [vmem:[#allocation2 + $0x15a0] sm:$0xff]
    %v808 = vld [vmem:[#allocation2 + $0x15a8] sm:$0xff]
    %v809 = vld [vmem:[#allocation2 + $0x15b0] sm:$0xff]
    %v810 = vld [vmem:[#allocation2 + $0x15b8] sm:$0xff]
    %v811 = vld [vmem:[#allocation2 + $0x15c0] sm:$0xff]
    %v812 = vld [vmem:[#allocation2 + $0x15c8] sm:$0xff]
    %v813 = vld [vmem:[#allocation2 + $0x15d0] sm:$0xff]
    %v814 = vld [vmem:[#allocation2 + $0x15d8] sm:$0xff]
    %v815 = vld [vmem:[#allocation2 + $0x15e0] sm:$0xff]
    %v816 = vld [vmem:[#allocation2 + $0x15e8] sm:$0xff]
    %v817 = vld [vmem:[#allocation2 + $0x15f0] sm:$0xff]
    %v818 = vld [vmem:[#allocation2 + $0x15f8] sm:$0xff]
    %v819 = vld [vmem:[#allocation2 + $0x1600] sm:$0xff]
    %v820 = vld [vmem:[#allocation2 + $0x1608] sm:$0xff]
    %v821 = vld [vmem:[#allocation2 + $0x1610] sm:$0xff]
    %v822 = vld [vmem:[#allocation2 + $0x1618] sm:$0xff]
    %v823 = vld [vmem:[#allocation2 + $0x1620] sm:$0xff]
    %v824 = vld [vmem:[#allocation2 + $0x1628] sm:$0xff]
    %v825 = vld [vmem:[#allocation2 + $0x1630] sm:$0xff]
    %v826 = vld [vmem:[#allocation2 + $0x1638] sm:$0xff]
    %v827 = vld [vmem:[#allocation2 + $0x1640] sm:$0xff]
    %v828 = vld [vmem:[#allocation2 + $0x1648] sm:$0xff]
    %v829 = vld [vmem:[#allocation2 + $0x1650] sm:$0xff]
    %v830 = vld [vmem:[#allocation2 + $0x1658] sm:$0xff]
    %v831 = vld [vmem:[#allocation2 + $0x1660] sm:$0xff]
    %v832 = vld [vmem:[#allocation2 + $0x1668] sm:$0xff]
    %v833 = vld [vmem:[#allocation2 + $0x1670] sm:$0xff]
    %v834 = vld [vmem:[#allocation2 + $0x1678] sm:$0xff]
    %v835 = vld [vmem:[#allocation2 + $0x1680] sm:$0xff]
    %v836 = vld [vmem:[#allocation2 + $0x1688] sm:$0xff]
    %v837 = vld [vmem:[#allocation2 + $0x1690] sm:$0xff]
    %v838 = vld [vmem:[#allocation2 + $0x1698] sm:$0xff]
    %v839 = vld [vmem:[#allocation2 + $0x16a0] sm:$0xff]
    %v840 = vld [vmem:[#allocation2 + $0x16a8] sm:$0xff]
    %v841 = vld [vmem:[#allocation2 + $0x16b0] sm:$0xff]
    %v842 = vld [vmem:[#allocation2 + $0x16b8] sm:$0xff]
    %v843 = vld [vmem:[#allocation2 + $0x16c0] sm:$0xff]
    %v844 = vld [vmem:[#allocation2 + $0x16c8] sm:$0xff]
    %v845 = vld [vmem:[#allocation2 + $0x16d0] sm:$0xff]
    %v846 = vld [vmem:[#allocation2 + $0x16d8] sm:$0xff]
    %v847 = vld [vmem:[#allocation2 + $0x16e0] sm:$0xff]
    %v848 = vld [vmem:[#allocation2 + $0x16e8] sm:$0xff]
    %v849 = vld [vmem:[#allocation2 + $0x16f0] sm:$0xff]
    %v850 = vld [vmem:[#allocation2 + $0x16f8] sm:$0xff]
    %v851 = vld [vmem:[#allocation2 + $0x1700] sm:$0xff]
    %v852 = vld [vmem:[#allocation2 + $0x1708] sm:$0xff]
    %v853 = vld [vmem:[#allocation2 + $0x1710] sm:$0xff]
    %v854 = vld [vmem:[#allocation2 + $0x1718] sm:$0xff]
    %v855 = vld [vmem:[#allocation2 + $0x1720] sm:$0xff]
    %v856 = vld [vmem:[#allocation2 + $0x1728] sm:$0xff]
    %v857 = vld [vmem:[#allocation2 + $0x1730] sm:$0xff]
    %v858 = vld [vmem:[#allocation2 + $0x1738] sm:$0xff]
    %v859 = vld [vmem:[#allocation2 + $0x1740] sm:$0xff]
    %v860 = vld [vmem:[#allocation2 + $0x1748] sm:$0xff]
    %v861 = vld [vmem:[#allocation2 + $0x1750] sm:$0xff]
    %v862 = vld [vmem:[#allocation2 + $0x1758] sm:$0xff]
    %v863 = vld [vmem:[#allocation2 + $0x1760] sm:$0xff]
    %v864 = vld [vmem:[#allocation2 + $0x1768] sm:$0xff]
    %v865 = vld [vmem:[#allocation2 + $0x1770] sm:$0xff]
    %v866 = vld [vmem:[#allocation2 + $0x1778] sm:$0xff]
    %v867 = vld [vmem:[#allocation2 + $0x1780] sm:$0xff]
    %v868 = vld [vmem:[#allocation2 + $0x1788] sm:$0xff]
    %v869 = vld [vmem:[#allocation2 + $0x1790] sm:$0xff]
    %v870 = vld [vmem:[#allocation2 + $0x1798] sm:$0xff]
    %v871 = vld [vmem:[#allocation2 + $0x17a0] sm:$0xff]
    %v872 = vld [vmem:[#allocation2 + $0x17a8] sm:$0xff]
    %v873 = vld [vmem:[#allocation2 + $0x17b0] sm:$0xff]
    %v874 = vld [vmem:[#allocation2 + $0x17b8] sm:$0xff]
    %v875 = vld [vmem:[#allocation2 + $0x17c0] sm:$0xff]
    %v876 = vld [vmem:[#allocation2 + $0x17c8] sm:$0xff]
    %v877 = vld [vmem:[#allocation2 + $0x17d0] sm:$0xff]
    %v878 = vld [vmem:[#allocation2 + $0x17d8] sm:$0xff]
    %v879 = vld [vmem:[#allocation2 + $0x17e0] sm:$0xff]
    %v880 = vld [vmem:[#allocation2 + $0x17e8] sm:$0xff]
    %v881 = vld [vmem:[#allocation2 + $0x17f0] sm:$0xff]
    %v882 = vld [vmem:[#allocation2 + $0x17f8] sm:$0xff]
    %v883 = vld [vmem:[#allocation2 + $0x1800] sm:$0xff]
    %v884 = vld [vmem:[#allocation2 + $0x1808] sm:$0xff]
    %v885 = vld [vmem:[#allocation2 + $0x1810] sm:$0xff]
    %v886 = vld [vmem:[#allocation2 + $0x1818] sm:$0xff]
    %v887 = vld [vmem:[#allocation2 + $0x1820] sm:$0xff]
    %v888 = vld [vmem:[#allocation2 + $0x1828] sm:$0xff]
    %v889 = vld [vmem:[#allocation2 + $0x1830] sm:$0xff]
    %v890 = vld [vmem:[#allocation2 + $0x1838] sm:$0xff]
    %v891 = vld [vmem:[#allocation2 + $0x1840] sm:$0xff]
    %v892 = vld [vmem:[#allocation2 + $0x1848] sm:$0xff]
    %v893 = vld [vmem:[#allocation2 + $0x1850] sm:$0xff]
    %v894 = vld [vmem:[#allocation2 + $0x1858] sm:$0xff]
    %v895 = vld [vmem:[#allocation2 + $0x1860] sm:$0xff]
    %v896 = vld [vmem:[#allocation2 + $0x1868] sm:$0xff]
    %v897 = vld [vmem:[#allocation2 + $0x1870] sm:$0xff]
    %v898 = vld [vmem:[#allocation2 + $0x1878] sm:$0xff]
    %v899 = vld [vmem:[#allocation2 + $0x1880] sm:$0xff]
    %v900 = vld [vmem:[#allocation2 + $0x1888] sm:$0xff]
    %v901 = vld [vmem:[#allocation2 + $0x1890] sm:$0xff]
    %v902 = vld [vmem:[#allocation2 + $0x1898] sm:$0xff]
    %v903 = vld [vmem:[#allocation2 + $0x18a0] sm:$0xff]
    %v904 = vld [vmem:[#allocation2 + $0x18a8] sm:$0xff]
    %v905 = vld [vmem:[#allocation2 + $0x18b0] sm:$0xff]
    %v906 = vld [vmem:[#allocation2 + $0x18b8] sm:$0xff]
    %v907 = vld [vmem:[#allocation2 + $0x18c0] sm:$0xff]
    %v908 = vld [vmem:[#allocation2 + $0x18c8] sm:$0xff]
    %v909 = vld [vmem:[#allocation2 + $0x18d0] sm:$0xff]
    %v910 = vld [vmem:[#allocation2 + $0x18d8] sm:$0xff]
    %v911 = vld [vmem:[#allocation2 + $0x18e0] sm:$0xff]
    %v912 = vld [vmem:[#allocation2 + $0x18e8] sm:$0xff]
    %v913 = vld [vmem:[#allocation2 + $0x18f0] sm:$0xff]
    %v914 = vld [vmem:[#allocation2 + $0x18f8] sm:$0xff]
    %v915 = vld [vmem:[#allocation2 + $0x1900] sm:$0xff]
    %v916 = vld [vmem:[#allocation2 + $0x1908] sm:$0xff]
    %v917 = vld [vmem:[#allocation2 + $0x1910] sm:$0xff]
    %v918 = vld [vmem:[#allocation2 + $0x1918] sm:$0xff]
    %v919 = vld [vmem:[#allocation2 + $0x1920] sm:$0xff]
    %v920 = vld [vmem:[#allocation2 + $0x1928] sm:$0xff]
    %v921 = vld [vmem:[#allocation2 + $0x1930] sm:$0xff]
    %v922 = vld [vmem:[#allocation2 + $0x1938] sm:$0xff]
    %v923 = vld [vmem:[#allocation2 + $0x1940] sm:$0xff]
    %v924 = vld [vmem:[#allocation2 + $0x1948] sm:$0xff]
    %v925 = vld [vmem:[#allocation2 + $0x1950] sm:$0xff]
    %v926 = vld [vmem:[#allocation2 + $0x1958] sm:$0xff]
    %v927 = vld [vmem:[#allocation2 + $0x1960] sm:$0xff]
    %v928 = vld [vmem:[#allocation2 + $0x1968] sm:$0xff]
    %v929 = vld [vmem:[#allocation2 + $0x1970] sm:$0xff]
    %v930 = vld [vmem:[#allocation2 + $0x1978] sm:$0xff]
    %v931 = vld [vmem:[#allocation2 + $0x1980] sm:$0xff]
    %v932 = vld [vmem:[#allocation2 + $0x1988] sm:$0xff]
    %v933 = vld [vmem:[#allocation2 + $0x1990] sm:$0xff]
    %v934 = vld [vmem:[#allocation2 + $0x1998] sm:$0xff]
    %v935 = vld [vmem:[#allocation2 + $0x19a0] sm:$0xff]
    %v936 = vld [vmem:[#allocation2 + $0x19a8] sm:$0xff]
    %v937 = vld [vmem:[#allocation2 + $0x19b0] sm:$0xff]
    %v938 = vld [vmem:[#allocation2 + $0x19b8] sm:$0xff]
    %v939 = vld [vmem:[#allocation2 + $0x19c0] sm:$0xff]
    %v940 = vld [vmem:[#allocation2 + $0x19c8] sm:$0xff]
    %v941 = vld [vmem:[#allocation2 + $0x19d0] sm:$0xff]
    %v942 = vld [vmem:[#allocation2 + $0x19d8] sm:$0xff]
    %v943 = vld [vmem:[#allocation2 + $0x19e0] sm:$0xff]
    %v944 = vld [vmem:[#allocation2 + $0x19e8] sm:$0xff]
    %v945 = vld [vmem:[#allocation2 + $0x19f0] sm:$0xff]
    %v946 = vld [vmem:[#allocation2 + $0x19f8] sm:$0xff]
    %v947 = vld [vmem:[#allocation2 + $0x1a00] sm:$0xff]
    %v948 = vld [vmem:[#allocation2 + $0x1a08] sm:$0xff]
    %v949 = vld [vmem:[#allocation2 + $0x1a10] sm:$0xff]
    %v950 = vld [vmem:[#allocation2 + $0x1a18] sm:$0xff]
    %v951 = vld [vmem:[#allocation2 + $0x1a20] sm:$0xff]
    %v952 = vld [vmem:[#allocation2 + $0x1a28] sm:$0xff]
    %v953 = vld [vmem:[#allocation2 + $0x1a30] sm:$0xff]
    %v954 = vld [vmem:[#allocation2 + $0x1a38] sm:$0xff]
    %v955 = vld [vmem:[#allocation2 + $0x1a40] sm:$0xff]
    %v956 = vld [vmem:[#allocation2 + $0x1a48] sm:$0xff]
    %v957 = vld [vmem:[#allocation2 + $0x1a50] sm:$0xff]
    %v958 = vld [vmem:[#allocation2 + $0x1a58] sm:$0xff]
    %v959 = vld [vmem:[#allocation2 + $0x1a60] sm:$0xff]
    %v960 = vld [vmem:[#allocation2 + $0x1a68] sm:$0xff]
    %v961 = vld [vmem:[#allocation2 + $0x1a70] sm:$0xff]
    %v962 = vld [vmem:[#allocation2 + $0x1a78] sm:$0xff]
    %v963 = vld [vmem:[#allocation2 + $0x1a80] sm:$0xff]
    %v964 = vld [vmem:[#allocation2 + $0x1a88] sm:$0xff]
    %v965 = vld [vmem:[#allocation2 + $0x1a90] sm:$0xff]
    %v966 = vld [vmem:[#allocation2 + $0x1a98] sm:$0xff]
    %v967 = vld [vmem:[#allocation2 + $0x1aa0] sm:$0xff]
    %v968 = vld [vmem:[#allocation2 + $0x1aa8] sm:$0xff]
    %v969 = vld [vmem:[#allocation2 + $0x1ab0] sm:$0xff]
    %v970 = vld [vmem:[#allocation2 + $0x1ab8] sm:$0xff]
    %v971 = vld [vmem:[#allocation2 + $0x1ac0] sm:$0xff]
    %v972 = vld [vmem:[#allocation2 + $0x1ac8] sm:$0xff]
    %v973 = vld [vmem:[#allocation2 + $0x1ad0] sm:$0xff]
    %v974 = vld [vmem:[#allocation2 + $0x1ad8] sm:$0xff]
    %v975 = vld [vmem:[#allocation2 + $0x1ae0] sm:$0xff]
    %v976 = vld [vmem:[#allocation2 + $0x1ae8] sm:$0xff]
    %v977 = vld [vmem:[#allocation2 + $0x1af0] sm:$0xff]
    %v978 = vld [vmem:[#allocation2 + $0x1af8] sm:$0xff]
    %v979 = vld [vmem:[#allocation2 + $0x1b00] sm:$0xff]
    %v980 = vld [vmem:[#allocation2 + $0x1b08] sm:$0xff]
    %v981 = vld [vmem:[#allocation2 + $0x1b10] sm:$0xff]
    %v982 = vld [vmem:[#allocation2 + $0x1b18] sm:$0xff]
    %v983 = vld [vmem:[#allocation2 + $0x1b20] sm:$0xff]
    %v984 = vld [vmem:[#allocation2 + $0x1b28] sm:$0xff]
    %v985 = vld [vmem:[#allocation2 + $0x1b30] sm:$0xff]
    %v986 = vld [vmem:[#allocation2 + $0x1b38] sm:$0xff]
    %v987 = vld [vmem:[#allocation2 + $0x1b40] sm:$0xff]
    %v988 = vld [vmem:[#allocation2 + $0x1b48] sm:$0xff]
    %v989 = vld [vmem:[#allocation2 + $0x1b50] sm:$0xff]
    %v990 = vld [vmem:[#allocation2 + $0x1b58] sm:$0xff]
    %v991 = vld [vmem:[#allocation2 + $0x1b60] sm:$0xff]
    %v992 = vld [vmem:[#allocation2 + $0x1b68] sm:$0xff]
    %v993 = vld [vmem:[#allocation2 + $0x1b70] sm:$0xff]
    %v994 = vld [vmem:[#allocation2 + $0x1b78] sm:$0xff]
    %v995 = vld [vmem:[#allocation2 + $0x1b80] sm:$0xff]
    %v996 = vld [vmem:[#allocation2 + $0x1b88] sm:$0xff]
    %v997 = vld [vmem:[#allocation2 + $0x1b90] sm:$0xff]
    %v998 = vld [vmem:[#allocation2 + $0x1b98] sm:$0xff]
    %v999 = vld [vmem:[#allocation2 + $0x1ba0] sm:$0xff]
    %v1000 = vld [vmem:[#allocation2 + $0x1ba8] sm:$0xff]
    %v1001 = vld [vmem:[#allocation2 + $0x1bb0] sm:$0xff]
    %v1002 = vld [vmem:[#allocation2 + $0x1bb8] sm:$0xff]
    %v1003 = vld [vmem:[#allocation2 + $0x1bc0] sm:$0xff]
    %v1004 = vld [vmem:[#allocation2 + $0x1bc8] sm:$0xff]
    %v1005 = vld [vmem:[#allocation2 + $0x1bd0] sm:$0xff]
    %v1006 = vld [vmem:[#allocation2 + $0x1bd8] sm:$0xff]
    %v1007 = vld [vmem:[#allocation2 + $0x1be0] sm:$0xff]
    %v1008 = vld [vmem:[#allocation2 + $0x1be8] sm:$0xff]
    %v1009 = vld [vmem:[#allocation2 + $0x1bf0] sm:$0xff]
    %v1010 = vld [vmem:[#allocation2 + $0x1bf8] sm:$0xff]
    %v1011 = vld [vmem:[#allocation2 + $0x1c00] sm:$0xff]
    %v1012 = vld [vmem:[#allocation2 + $0x1c08] sm:$0xff]
    %v1013 = vld [vmem:[#allocation2 + $0x1c10] sm:$0xff]
    %v1014 = vld [vmem:[#allocation2 + $0x1c18] sm:$0xff]
    %v1015 = vld [vmem:[#allocation2 + $0x1c20] sm:$0xff]
    %v1016 = vld [vmem:[#allocation2 + $0x1c28] sm:$0xff]
    %v1017 = vld [vmem:[#allocation2 + $0x1c30] sm:$0xff]
    %v1018 = vld [vmem:[#allocation2 + $0x1c38] sm:$0xff]
    %v1019 = vld [vmem:[#allocation2 + $0x1c40] sm:$0xff]
    %v1020 = vld [vmem:[#allocation2 + $0x1c48] sm:$0xff]
    %v1021 = vld [vmem:[#allocation2 + $0x1c50] sm:$0xff]
    %v1022 = vld [vmem:[#allocation2 + $0x1c58] sm:$0xff]
    %v1023 = vld [vmem:[#allocation2 + $0x1c60] sm:$0xff]
    %v1024 = vld [vmem:[#allocation2 + $0x1c68] sm:$0xff]
    %v1025 = vld [vmem:[#allocation2 + $0x1c70] sm:$0xff]
    %v1026 = vld [vmem:[#allocation2 + $0x1c78] sm:$0xff]
    %v1027 = vld [vmem:[#allocation2 + $0x1c80] sm:$0xff]
    %v1028 = vld [vmem:[#allocation2 + $0x1c88] sm:$0xff]
    %v1029 = vld [vmem:[#allocation2 + $0x1c90] sm:$0xff]
    %v1030 = vld [vmem:[#allocation2 + $0x1c98] sm:$0xff]
    %v1031 = vld [vmem:[#allocation2 + $0x1ca0] sm:$0xff]
    %v1032 = vld [vmem:[#allocation2 + $0x1ca8] sm:$0xff]
    %v1033 = vld [vmem:[#allocation2 + $0x1cb0] sm:$0xff]
    %v1034 = vld [vmem:[#allocation2 + $0x1cb8] sm:$0xff]
    %v1035 = vld [vmem:[#allocation2 + $0x1cc0] sm:$0xff]
    %v1036 = vld [vmem:[#allocation2 + $0x1cc8] sm:$0xff]
    %v1037 = vld [vmem:[#allocation2 + $0x1cd0] sm:$0xff]
    %v1038 = vld [vmem:[#allocation2 + $0x1cd8] sm:$0xff]
    %v1039 = vld [vmem:[#allocation2 + $0x1ce0] sm:$0xff]
    %v1040 = vld [vmem:[#allocation2 + $0x1ce8] sm:$0xff]
    %v1041 = vld [vmem:[#allocation2 + $0x1cf0] sm:$0xff]
    %v1042 = vld [vmem:[#allocation2 + $0x1cf8] sm:$0xff]
    %v1043 = vld [vmem:[#allocation2 + $0x1d00] sm:$0xff]
    %v1044 = vld [vmem:[#allocation2 + $0x1d08] sm:$0xff]
    %v1045 = vld [vmem:[#allocation2 + $0x1d10] sm:$0xff]
    %v1046 = vld [vmem:[#allocation2 + $0x1d18] sm:$0xff]
    %v1047 = vld [vmem:[#allocation2 + $0x1d20] sm:$0xff]
    %v1048 = vld [vmem:[#allocation2 + $0x1d28] sm:$0xff]
    %v1049 = vld [vmem:[#allocation2 + $0x1d30] sm:$0xff]
    %v1050 = vld [vmem:[#allocation2 + $0x1d38] sm:$0xff]
    %v1051 = vld [vmem:[#allocation2 + $0x1d40] sm:$0xff]
    %v1052 = vld [vmem:[#allocation2 + $0x1d48] sm:$0xff]
    %v1053 = vld [vmem:[#allocation2 + $0x1d50] sm:$0xff]
    %v1054 = vld [vmem:[#allocation2 + $0x1d58] sm:$0xff]
    %v1055 = vld [vmem:[#allocation2 + $0x1d60] sm:$0xff]
    %v1056 = vld [vmem:[#allocation2 + $0x1d68] sm:$0xff]
    %v1057 = vld [vmem:[#allocation2 + $0x1d70] sm:$0xff]
    %v1058 = vld [vmem:[#allocation2 + $0x1d78] sm:$0xff]
    %v1059 = vld [vmem:[#allocation2 + $0x1d80] sm:$0xff]
    %v1060 = vld [vmem:[#allocation2 + $0x1d88] sm:$0xff]
    %v1061 = vld [vmem:[#allocation2 + $0x1d90] sm:$0xff]
    %v1062 = vld [vmem:[#allocation2 + $0x1d98] sm:$0xff]
    %v1063 = vld [vmem:[#allocation2 + $0x1da0] sm:$0xff]
    %v1064 = vld [vmem:[#allocation2 + $0x1da8] sm:$0xff]
    %v1065 = vld [vmem:[#allocation2 + $0x1db0] sm:$0xff]
    %v1066 = vld [vmem:[#allocation2 + $0x1db8] sm:$0xff]
    %v1067 = vld [vmem:[#allocation2 + $0x1dc0] sm:$0xff]
    %v1068 = vld [vmem:[#allocation2 + $0x1dc8] sm:$0xff]
    %v1069 = vld [vmem:[#allocation2 + $0x1dd0] sm:$0xff]
    %v1070 = vld [vmem:[#allocation2 + $0x1dd8] sm:$0xff]
    %v1071 = vld [vmem:[#allocation2 + $0x1de0] sm:$0xff]
    %v1072 = vld [vmem:[#allocation2 + $0x1de8] sm:$0xff]
    %v1073 = vld [vmem:[#allocation2 + $0x1df0] sm:$0xff]
    %v1074 = vld [vmem:[#allocation2 + $0x1df8] sm:$0xff]
    %v1075 = vld [vmem:[#allocation2 + $0x1e00] sm:$0xff]
    %v1076 = vld [vmem:[#allocation2 + $0x1e08] sm:$0xff]
    %v1077 = vld [vmem:[#allocation2 + $0x1e10] sm:$0xff]
    %v1078 = vld [vmem:[#allocation2 + $0x1e18] sm:$0xff]
    %v1079 = vld [vmem:[#allocation2 + $0x1e20] sm:$0xff]
    %v1080 = vld [vmem:[#allocation2 + $0x1e28] sm:$0xff]
    %v1081 = vld [vmem:[#allocation2 + $0x1e30] sm:$0xff]
    %v1082 = vld [vmem:[#allocation2 + $0x1e38] sm:$0xff]
    %v1083 = vld [vmem:[#allocation2 + $0x1e40] sm:$0xff]
    %v1084 = vld [vmem:[#allocation2 + $0x1e48] sm:$0xff]
    %v1085 = vld [vmem:[#allocation2 + $0x1e50] sm:$0xff]
    %v1086 = vld [vmem:[#allocation2 + $0x1e58] sm:$0xff]
    %v1087 = vld [vmem:[#allocation2 + $0x1e60] sm:$0xff]
    %v1088 = vld [vmem:[#allocation2 + $0x1e68] sm:$0xff]
    %v1089 = vld [vmem:[#allocation2 + $0x1e70] sm:$0xff]
    %v1090 = vld [vmem:[#allocation2 + $0x1e78] sm:$0xff]
    %v1091 = vld [vmem:[#allocation2 + $0x1e80] sm:$0xff]
    %v1092 = vld [vmem:[#allocation2 + $0x1e88] sm:$0xff]
    %v1093 = vld [vmem:[#allocation2 + $0x1e90] sm:$0xff]
    %v1094 = vld [vmem:[#allocation2 + $0x1e98] sm:$0xff]
    %v1095 = vld [vmem:[#allocation2 + $0x1ea0] sm:$0xff]
    %v1096 = vld [vmem:[#allocation2 + $0x1ea8] sm:$0xff]
    %v1097 = vld [vmem:[#allocation2 + $0x1eb0] sm:$0xff]
    %v1098 = vld [vmem:[#allocation2 + $0x1eb8] sm:$0xff]
    %v1099 = vld [vmem:[#allocation2 + $0x1ec0] sm:$0xff]
    %v1100 = vld [vmem:[#allocation2 + $0x1ec8] sm:$0xff]
    %v1101 = vld [vmem:[#allocation2 + $0x1ed0] sm:$0xff]
    %v1102 = vld [vmem:[#allocation2 + $0x1ed8] sm:$0xff]
    %v1103 = vld [vmem:[#allocation2 + $0x1ee0] sm:$0xff]
    %v1104 = vld [vmem:[#allocation2 + $0x1ee8] sm:$0xff]
    %v1105 = vld [vmem:[#allocation2 + $0x1ef0] sm:$0xff]
    %v1106 = vld [vmem:[#allocation2 + $0x1ef8] sm:$0xff]
    %v1107 = vld [vmem:[#allocation2 + $0x1f00] sm:$0xff]
    %v1108 = vld [vmem:[#allocation2 + $0x1f08] sm:$0xff]
    %v1109 = vld [vmem:[#allocation2 + $0x1f10] sm:$0xff]
    %v1110 = vld [vmem:[#allocation2 + $0x1f18] sm:$0xff]
    %v1111 = vld [vmem:[#allocation2 + $0x1f20] sm:$0xff]
    %v1112 = vld [vmem:[#allocation2 + $0x1f28] sm:$0xff]
    %v1113 = vld [vmem:[#allocation2 + $0x1f30] sm:$0xff]
    %v1114 = vld [vmem:[#allocation2 + $0x1f38] sm:$0xff]
    %v1115 = vld [vmem:[#allocation2 + $0x1f40] sm:$0xff]
    %v1116 = vld [vmem:[#allocation2 + $0x1f48] sm:$0xff]
    %v1117 = vld [vmem:[#allocation2 + $0x1f50] sm:$0xff]
    %v1118 = vld [vmem:[#allocation2 + $0x1f58] sm:$0xff]
    %v1119 = vld [vmem:[#allocation2 + $0x1f60] sm:$0xff]
    %v1120 = vld [vmem:[#allocation2 + $0x1f68] sm:$0xff]
    %v1121 = vld [vmem:[#allocation2 + $0x1f70] sm:$0xff]
    %v1122 = vld [vmem:[#allocation2 + $0x1f78] sm:$0xff]
    %v1123 = vld [vmem:[#allocation2 + $0x1f80] sm:$0xff]
    %v1124 = vld [vmem:[#allocation2 + $0x1f88] sm:$0xff]
    %v1125 = vld [vmem:[#allocation2 + $0x1f90] sm:$0xff]
    %v1126 = vld [vmem:[#allocation2 + $0x1f98] sm:$0xff]
    %v1127 = vld [vmem:[#allocation2 + $0x1fa0] sm:$0xff]
    %v1128 = vld [vmem:[#allocation2 + $0x1fa8] sm:$0xff]
    %v1129 = vld [vmem:[#allocation2 + $0x1fb0] sm:$0xff]
    %v1130 = vld [vmem:[#allocation2 + $0x1fb8] sm:$0xff]
    %v1131 = vld [vmem:[#allocation2 + $0x1fc0] sm:$0xff]
    %v1132 = vld [vmem:[#allocation2 + $0x1fc8] sm:$0xff]
    %v1133 = vld [vmem:[#allocation2 + $0x1fd0] sm:$0xff]
    %v1134 = vld [vmem:[#allocation2 + $0x1fd8] sm:$0xff]
    %v1135 = vld [vmem:[#allocation2 + $0x1fe0] sm:$0xff]
    %v1136 = vld [vmem:[#allocation2 + $0x1fe8] sm:$0xff]
    %v1137 = vld [vmem:[#allocation2 + $0x1ff0] sm:$0xff]
    %v1138 = vld [vmem:[#allocation2 + $0x1ff8] sm:$0xff]
    %v1139 = vld [vmem:[#allocation5] sm:$0xff]
    %v1141 = vperm.slane %v1139, 0
    %v1142 = vperm.slane %v1139, 1
    %v1143 = vperm.slane %v1139, 2
    %v1144 = vperm.slane %v1139, 3
    %v1145 = vperm.slane %v1139, 4
    %v1146 = vperm.slane %v1139, 5
    %v1147 = vperm.slane %v1139, 6
    %v1148 = vperm.slane %v1139, 7
    %1158 = vst [vmem:[#allocation1] ss:$9 sm:$0xff] %v113
    %v1159 = vld [vmem:[#allocation1] sm:$0xff]
    %v1160 = vld [vmem:[#allocation1 + $0x9] sm:$0xff]
    %v1161 = vld [vmem:[#allocation1 + $0x12] sm:$0xff]
    %v1162 = vld [vmem:[#allocation1 + $0x1b] sm:$0xff]
    %v1163 = vld [vmem:[#allocation1 + $0x24] sm:$0xff]
    %v1164 = vld [vmem:[#allocation1 + $0x2d] sm:$0xff]
    %v1165 = vld [vmem:[#allocation1 + $0x36] sm:$0xff]
    %v1166 = vld [vmem:[#allocation1 + $0x3f] sm:$0xff]
    %1168 = vst [vmem:[#allocation1] ss:$9 sm:$0xff] %v114
    %v1169 = vld [vmem:[#allocation1] sm:$0xff]
    %v1170 = vld [vmem:[#allocation1 + $0x9] sm:$0xff]
    %v1171 = vld [vmem:[#allocation1 + $0x12] sm:$0xff]
    %v1172 = vld [vmem:[#allocation1 + $0x1b] sm:$0xff]
    %v1173 = vld [vmem:[#allocation1 + $0x24] sm:$0xff]
    %v1174 = vld [vmem:[#allocation1 + $0x2d] sm:$0xff]
    %v1175 = vld [vmem:[#allocation1 + $0x36] sm:$0xff]
    %v1176 = vld [vmem:[#allocation1 + $0x3f] sm:$0xff]
    %v2217 = vunpack.c.l.b16 %v115
    %v2218 = vunpack.c.h.b16 %v115
    %v2219 = vunpack.c.l.b16 %v116
    %v2220 = vunpack.c.h.b16 %v116
    %v2221 = vunpack.c.l.b16 %v117
    %v2222 = vunpack.c.h.b16 %v117
    %v2223 = vunpack.c.l.b16 %v118
    %v2224 = vunpack.c.h.b16 %v118
    %v2225 = vunpack.c.l.b16 %v119
    %v2226 = vunpack.c.h.b16 %v119
    %v2227 = vunpack.c.l.b16 %v120
    %v2228 = vunpack.c.h.b16 %v120
    %v2229 = vunpack.c.l.b16 %v121
    %v2230 = vunpack.c.h.b16 %v121
    %v2231 = vunpack.c.l.b16 %v122
    %v2232 = vunpack.c.h.b16 %v122
    %v2233 = vunpack.c.l.b16 %v123
    %v2234 = vunpack.c.h.b16 %v123
    %v2235 = vunpack.c.l.b16 %v124
    %v2236 = vunpack.c.h.b16 %v124
    %v2237 = vunpack.c.l.b16 %v125
    %v2238 = vunpack.c.h.b16 %v125
    %v2239 = vunpack.c.l.b16 %v126
    %v2240 = vunpack.c.h.b16 %v126
    %v2241 = vunpack.c.l.b16 %v127
    %v2242 = vunpack.c.h.b16 %v127
    %v2243 = vunpack.c.l.b16 %v128
    %v2244 = vunpack.c.h.b16 %v128
    %v2245 = vunpack.c.l.b16 %v129
    %v2246 = vunpack.c.h.b16 %v129
    %v2247 = vunpack.c.l.b16 %v130
    %v2248 = vunpack.c.h.b16 %v130
    %v2249 = vunpack.c.l.b16 %v131
    %v2250 = vunpack.c.h.b16 %v131
    %v2251 = vunpack.c.l.b16 %v132
    %v2252 = vunpack.c.h.b16 %v132
    %v2253 = vunpack.c.l.b16 %v133
    %v2254 = vunpack.c.h.b16 %v133
    %v2255 = vunpack.c.l.b16 %v134
    %v2256 = vunpack.c.h.b16 %v134
    %v2257 = vunpack.c.l.b16 %v135
    %v2258 = vunpack.c.h.b16 %v135
    %v2259 = vunpack.c.l.b16 %v136
    %v2260 = vunpack.c.h.b16 %v136
    %v2261 = vunpack.c.l.b16 %v137
    %v2262 = vunpack.c.h.b16 %v137
    %v2263 = vunpack.c.l.b16 %v138
    %v2264 = vunpack.c.h.b16 %v138
    %v2265 = vunpack.c.l.b16 %v139
    %v2266 = vunpack.c.h.b16 %v139
    %v2267 = vunpack.c.l.b16 %v140
    %v2268 = vunpack.c.h.b16 %v140
    %v2269 = vunpack.c.l.b16 %v141
    %v2270 = vunpack.c.h.b16 %v141
    %v2271 = vunpack.c.l.b16 %v142
    %v2272 = vunpack.c.h.b16 %v142
    %v2273 = vunpack.c.l.b16 %v143
    %v2274 = vunpack.c.h.b16 %v143
    %v2275 = vunpack.c.l.b16 %v144
    %v2276 = vunpack.c.h.b16 %v144
    %v2277 = vunpack.c.l.b16 %v145
    %v2278 = vunpack.c.h.b16 %v145
    %v2279 = vunpack.c.l.b16 %v146
    %v2280 = vunpack.c.h.b16 %v146
    %v2281 = vunpack.c.l.b16 %v147
    %v2282 = vunpack.c.h.b16 %v147
    %v2283 = vunpack.c.l.b16 %v148
    %v2284 = vunpack.c.h.b16 %v148
    %v2285 = vunpack.c.l.b16 %v149
    %v2286 = vunpack.c.h.b16 %v149
    %v2287 = vunpack.c.l.b16 %v150
    %v2288 = vunpack.c.h.b16 %v150
    %v2289 = vunpack.c.l.b16 %v151
    %v2290 = vunpack.c.h.b16 %v151
    %v2291 = vunpack.c.l.b16 %v152
    %v2292 = vunpack.c.h.b16 %v152
    %v2293 = vunpack.c.l.b16 %v153
    %v2294 = vunpack.c.h.b16 %v153
    %v2295 = vunpack.c.l.b16 %v154
    %v2296 = vunpack.c.h.b16 %v154
    %v2297 = vunpack.c.l.b16 %v155
    %v2298 = vunpack.c.h.b16 %v155
    %v2299 = vunpack.c.l.b16 %v156
    %v2300 = vunpack.c.h.b16 %v156
    %v2301 = vunpack.c.l.b16 %v157
    %v2302 = vunpack.c.h.b16 %v157
    %v2303 = vunpack.c.l.b16 %v158
    %v2304 = vunpack.c.h.b16 %v158
    %v2305 = vunpack.c.l.b16 %v159
    %v2306 = vunpack.c.h.b16 %v159
    %v2307 = vunpack.c.l.b16 %v160
    %v2308 = vunpack.c.h.b16 %v160
    %v2309 = vunpack.c.l.b16 %v161
    %v2310 = vunpack.c.h.b16 %v161
    %v2311 = vunpack.c.l.b16 %v162
    %v2312 = vunpack.c.h.b16 %v162
    %v2313 = vunpack.c.l.b16 %v163
    %v2314 = vunpack.c.h.b16 %v163
    %v2315 = vunpack.c.l.b16 %v164
    %v2316 = vunpack.c.h.b16 %v164
    %v2317 = vunpack.c.l.b16 %v165
    %v2318 = vunpack.c.h.b16 %v165
    %v2319 = vunpack.c.l.b16 %v166
    %v2320 = vunpack.c.h.b16 %v166
    %v2321 = vunpack.c.l.b16 %v167
    %v2322 = vunpack.c.h.b16 %v167
    %v2323 = vunpack.c.l.b16 %v168
    %v2324 = vunpack.c.h.b16 %v168
    %v2325 = vunpack.c.l.b16 %v169
    %v2326 = vunpack.c.h.b16 %v169
    %v2327 = vunpack.c.l.b16 %v170
    %v2328 = vunpack.c.h.b16 %v170
    %v2329 = vunpack.c.l.b16 %v171
    %v2330 = vunpack.c.h.b16 %v171
    %v2331 = vunpack.c.l.b16 %v172
    %v2332 = vunpack.c.h.b16 %v172
    %v2333 = vunpack.c.l.b16 %v173
    %v2334 = vunpack.c.h.b16 %v173
    %v2335 = vunpack.c.l.b16 %v174
    %v2336 = vunpack.c.h.b16 %v174
    %v2337 = vunpack.c.l.b16 %v175
    %v2338 = vunpack.c.h.b16 %v175
    %v2339 = vunpack.c.l.b16 %v176
    %v2340 = vunpack.c.h.b16 %v176
    %v2341 = vunpack.c.l.b16 %v177
    %v2342 = vunpack.c.h.b16 %v177
    %v2343 = vunpack.c.l.b16 %v178
    %v2344 = vunpack.c.h.b16 %v178
    %v2345 = vunpack.c.l.b16 %v179
    %v2346 = vunpack.c.h.b16 %v179
    %v2347 = vunpack.c.l.b16 %v180
    %v2348 = vunpack.c.h.b16 %v180
    %v2349 = vunpack.c.l.b16 %v181
    %v2350 = vunpack.c.h.b16 %v181
    %v2351 = vunpack.c.l.b16 %v182
    %v2352 = vunpack.c.h.b16 %v182
    %v2353 = vunpack.c.l.b16 %v183
    %v2354 = vunpack.c.h.b16 %v183
    %v2355 = vunpack.c.l.b16 %v184
    %v2356 = vunpack.c.h.b16 %v184
    %v2357 = vunpack.c.l.b16 %v185
    %v2358 = vunpack.c.h.b16 %v185
    %v2359 = vunpack.c.l.b16 %v186
    %v2360 = vunpack.c.h.b16 %v186
    %v2361 = vunpack.c.l.b16 %v187
    %v2362 = vunpack.c.h.b16 %v187
    %v2363 = vunpack.c.l.b16 %v188
    %v2364 = vunpack.c.h.b16 %v188
    %v2365 = vunpack.c.l.b16 %v189
    %v2366 = vunpack.c.h.b16 %v189
    %v2367 = vunpack.c.l.b16 %v190
    %v2368 = vunpack.c.h.b16 %v190
    %v2369 = vunpack.c.l.b16 %v191
    %v2370 = vunpack.c.h.b16 %v191
    %v2371 = vunpack.c.l.b16 %v192
    %v2372 = vunpack.c.h.b16 %v192
    %v2373 = vunpack.c.l.b16 %v193
    %v2374 = vunpack.c.h.b16 %v193
    %v2375 = vunpack.c.l.b16 %v194
    %v2376 = vunpack.c.h.b16 %v194
    %v2377 = vunpack.c.l.b16 %v195
    %v2378 = vunpack.c.h.b16 %v195
    %v2379 = vunpack.c.l.b16 %v196
    %v2380 = vunpack.c.h.b16 %v196
    %v2381 = vunpack.c.l.b16 %v197
    %v2382 = vunpack.c.h.b16 %v197
    %v2383 = vunpack.c.l.b16 %v198
    %v2384 = vunpack.c.h.b16 %v198
    %v2385 = vunpack.c.l.b16 %v199
    %v2386 = vunpack.c.h.b16 %v199
    %v2387 = vunpack.c.l.b16 %v200
    %v2388 = vunpack.c.h.b16 %v200
    %v2389 = vunpack.c.l.b16 %v201
    %v2390 = vunpack.c.h.b16 %v201
    %v2391 = vunpack.c.l.b16 %v202
    %v2392 = vunpack.c.h.b16 %v202
    %v2393 = vunpack.c.l.b16 %v203
    %v2394 = vunpack.c.h.b16 %v203
    %v2395 = vunpack.c.l.b16 %v204
    %v2396 = vunpack.c.h.b16 %v204
    %v2397 = vunpack.c.l.b16 %v205
    %v2398 = vunpack.c.h.b16 %v205
    %v2399 = vunpack.c.l.b16 %v206
    %v2400 = vunpack.c.h.b16 %v206
    %v2401 = vunpack.c.l.b16 %v207
    %v2402 = vunpack.c.h.b16 %v207
    %v2403 = vunpack.c.l.b16 %v208
    %v2404 = vunpack.c.h.b16 %v208
    %v2405 = vunpack.c.l.b16 %v209
    %v2406 = vunpack.c.h.b16 %v209
    %v2407 = vunpack.c.l.b16 %v210
    %v2408 = vunpack.c.h.b16 %v210
    %v2409 = vunpack.c.l.b16 %v211
    %v2410 = vunpack.c.h.b16 %v211
    %v2411 = vunpack.c.l.b16 %v212
    %v2412 = vunpack.c.h.b16 %v212
    %v2413 = vunpack.c.l.b16 %v213
    %v2414 = vunpack.c.h.b16 %v213
    %v2415 = vunpack.c.l.b16 %v214
    %v2416 = vunpack.c.h.b16 %v214
    %v2417 = vunpack.c.l.b16 %v215
    %v2418 = vunpack.c.h.b16 %v215
    %v2419 = vunpack.c.l.b16 %v216
    %v2420 = vunpack.c.h.b16 %v216
    %v2421 = vunpack.c.l.b16 %v217
    %v2422 = vunpack.c.h.b16 %v217
    %v2423 = vunpack.c.l.b16 %v218
    %v2424 = vunpack.c.h.b16 %v218
    %v2425 = vunpack.c.l.b16 %v219
    %v2426 = vunpack.c.h.b16 %v219
    %v2427 = vunpack.c.l.b16 %v220
    %v2428 = vunpack.c.h.b16 %v220
    %v2429 = vunpack.c.l.b16 %v221
    %v2430 = vunpack.c.h.b16 %v221
    %v2431 = vunpack.c.l.b16 %v222
    %v2432 = vunpack.c.h.b16 %v222
    %v2433 = vunpack.c.l.b16 %v223
    %v2434 = vunpack.c.h.b16 %v223
    %v2435 = vunpack.c.l.b16 %v224
    %v2436 = vunpack.c.h.b16 %v224
    %v2437 = vunpack.c.l.b16 %v225
    %v2438 = vunpack.c.h.b16 %v225
    %v2439 = vunpack.c.l.b16 %v226
    %v2440 = vunpack.c.h.b16 %v226
    %v2441 = vunpack.c.l.b16 %v227
    %v2442 = vunpack.c.h.b16 %v227
    %v2443 = vunpack.c.l.b16 %v228
    %v2444 = vunpack.c.h.b16 %v228
    %v2445 = vunpack.c.l.b16 %v229
    %v2446 = vunpack.c.h.b16 %v229
    %v2447 = vunpack.c.l.b16 %v230
    %v2448 = vunpack.c.h.b16 %v230
    %v2449 = vunpack.c.l.b16 %v231
    %v2450 = vunpack.c.h.b16 %v231
    %v2451 = vunpack.c.l.b16 %v232
    %v2452 = vunpack.c.h.b16 %v232
    %v2453 = vunpack.c.l.b16 %v233
    %v2454 = vunpack.c.h.b16 %v233
    %v2455 = vunpack.c.l.b16 %v234
    %v2456 = vunpack.c.h.b16 %v234
    %v2457 = vunpack.c.l.b16 %v235
    %v2458 = vunpack.c.h.b16 %v235
    %v2459 = vunpack.c.l.b16 %v236
    %v2460 = vunpack.c.h.b16 %v236
    %v2461 = vunpack.c.l.b16 %v237
    %v2462 = vunpack.c.h.b16 %v237
    %v2463 = vunpack.c.l.b16 %v238
    %v2464 = vunpack.c.h.b16 %v238
    %v2465 = vunpack.c.l.b16 %v239
    %v2466 = vunpack.c.h.b16 %v239
    %v2467 = vunpack.c.l.b16 %v240
    %v2468 = vunpack.c.h.b16 %v240
    %v2469 = vunpack.c.l.b16 %v241
    %v2470 = vunpack.c.h.b16 %v241
    %v2471 = vunpack.c.l.b16 %v242
    %v2472 = vunpack.c.h.b16 %v242
    %v2473 = vunpack.c.l.b16 %v243
    %v2474 = vunpack.c.h.b16 %v243
    %v2475 = vunpack.c.l.b16 %v244
    %v2476 = vunpack.c.h.b16 %v244
    %v2477 = vunpack.c.l.b16 %v245
    %v2478 = vunpack.c.h.b16 %v245
    %v2479 = vunpack.c.l.b16 %v246
    %v2480 = vunpack.c.h.b16 %v246
    %v2481 = vunpack.c.l.b16 %v247
    %v2482 = vunpack.c.h.b16 %v247
    %v2483 = vunpack.c.l.b16 %v248
    %v2484 = vunpack.c.h.b16 %v248
    %v2485 = vunpack.c.l.b16 %v249
    %v2486 = vunpack.c.h.b16 %v249
    %v2487 = vunpack.c.l.b16 %v250
    %v2488 = vunpack.c.h.b16 %v250
    %v2489 = vunpack.c.l.b16 %v251
    %v2490 = vunpack.c.h.b16 %v251
    %v2491 = vunpack.c.l.b16 %v252
    %v2492 = vunpack.c.h.b16 %v252
    %v2493 = vunpack.c.l.b16 %v253
    %v2494 = vunpack.c.h.b16 %v253
    %v2495 = vunpack.c.l.b16 %v254
    %v2496 = vunpack.c.h.b16 %v254
    %v2497 = vunpack.c.l.b16 %v255
    %v2498 = vunpack.c.h.b16 %v255
    %v2499 = vunpack.c.l.b16 %v256
    %v2500 = vunpack.c.h.b16 %v256
    %v2501 = vunpack.c.l.b16 %v257
    %v2502 = vunpack.c.h.b16 %v257
    %v2503 = vunpack.c.l.b16 %v258
    %v2504 = vunpack.c.h.b16 %v258
    %v2505 = vunpack.c.l.b16 %v259
    %v2506 = vunpack.c.h.b16 %v259
    %v2507 = vunpack.c.l.b16 %v260
    %v2508 = vunpack.c.h.b16 %v260
    %v2509 = vunpack.c.l.b16 %v261
    %v2510 = vunpack.c.h.b16 %v261
    %v2511 = vunpack.c.l.b16 %v262
    %v2512 = vunpack.c.h.b16 %v262
    %v2513 = vunpack.c.l.b16 %v263
    %v2514 = vunpack.c.h.b16 %v263
    %v2515 = vunpack.c.l.b16 %v264
    %v2516 = vunpack.c.h.b16 %v264
    %v2517 = vunpack.c.l.b16 %v265
    %v2518 = vunpack.c.h.b16 %v265
    %v2519 = vunpack.c.l.b16 %v266
    %v2520 = vunpack.c.h.b16 %v266
    %v2521 = vunpack.c.l.b16 %v267
    %v2522 = vunpack.c.h.b16 %v267
    %v2523 = vunpack.c.l.b16 %v268
    %v2524 = vunpack.c.h.b16 %v268
    %v2525 = vunpack.c.l.b16 %v269
    %v2526 = vunpack.c.h.b16 %v269
    %v2527 = vunpack.c.l.b16 %v270
    %v2528 = vunpack.c.h.b16 %v270
    %v2529 = vunpack.c.l.b16 %v271
    %v2530 = vunpack.c.h.b16 %v271
    %v2531 = vunpack.c.l.b16 %v272
    %v2532 = vunpack.c.h.b16 %v272
    %v2533 = vunpack.c.l.b16 %v273
    %v2534 = vunpack.c.h.b16 %v273
    %v2535 = vunpack.c.l.b16 %v274
    %v2536 = vunpack.c.h.b16 %v274
    %v2537 = vunpack.c.l.b16 %v275
    %v2538 = vunpack.c.h.b16 %v275
    %v2539 = vunpack.c.l.b16 %v276
    %v2540 = vunpack.c.h.b16 %v276
    %v2541 = vunpack.c.l.b16 %v277
    %v2542 = vunpack.c.h.b16 %v277
    %v2543 = vunpack.c.l.b16 %v278
    %v2544 = vunpack.c.h.b16 %v278
    %v2545 = vunpack.c.l.b16 %v279
    %v2546 = vunpack.c.h.b16 %v279
    %v2547 = vunpack.c.l.b16 %v280
    %v2548 = vunpack.c.h.b16 %v280
    %v2549 = vunpack.c.l.b16 %v281
    %v2550 = vunpack.c.h.b16 %v281
    %v2551 = vunpack.c.l.b16 %v282
    %v2552 = vunpack.c.h.b16 %v282
    %v2553 = vunpack.c.l.b16 %v283
    %v2554 = vunpack.c.h.b16 %v283
    %v2555 = vunpack.c.l.b16 %v284
    %v2556 = vunpack.c.h.b16 %v284
    %v2557 = vunpack.c.l.b16 %v285
    %v2558 = vunpack.c.h.b16 %v285
    %v2559 = vunpack.c.l.b16 %v286
    %v2560 = vunpack.c.h.b16 %v286
    %v2561 = vunpack.c.l.b16 %v287
    %v2562 = vunpack.c.h.b16 %v287
    %v2563 = vunpack.c.l.b16 %v288
    %v2564 = vunpack.c.h.b16 %v288
    %v2565 = vunpack.c.l.b16 %v289
    %v2566 = vunpack.c.h.b16 %v289
    %v2567 = vunpack.c.l.b16 %v290
    %v2568 = vunpack.c.h.b16 %v290
    %v2569 = vunpack.c.l.b16 %v291
    %v2570 = vunpack.c.h.b16 %v291
    %v2571 = vunpack.c.l.b16 %v292
    %v2572 = vunpack.c.h.b16 %v292
    %v2573 = vunpack.c.l.b16 %v293
    %v2574 = vunpack.c.h.b16 %v293
    %v2575 = vunpack.c.l.b16 %v294
    %v2576 = vunpack.c.h.b16 %v294
    %v2577 = vunpack.c.l.b16 %v295
    %v2578 = vunpack.c.h.b16 %v295
    %v2579 = vunpack.c.l.b16 %v296
    %v2580 = vunpack.c.h.b16 %v296
    %v2581 = vunpack.c.l.b16 %v297
    %v2582 = vunpack.c.h.b16 %v297
    %v2583 = vunpack.c.l.b16 %v298
    %v2584 = vunpack.c.h.b16 %v298
    %v2585 = vunpack.c.l.b16 %v299
    %v2586 = vunpack.c.h.b16 %v299
    %v2587 = vunpack.c.l.b16 %v300
    %v2588 = vunpack.c.h.b16 %v300
    %v2589 = vunpack.c.l.b16 %v301
    %v2590 = vunpack.c.h.b16 %v301
    %v2591 = vunpack.c.l.b16 %v302
    %v2592 = vunpack.c.h.b16 %v302
    %v2593 = vunpack.c.l.b16 %v303
    %v2594 = vunpack.c.h.b16 %v303
    %v2595 = vunpack.c.l.b16 %v304
    %v2596 = vunpack.c.h.b16 %v304
    %v2597 = vunpack.c.l.b16 %v305
    %v2598 = vunpack.c.h.b16 %v305
    %v2599 = vunpack.c.l.b16 %v306
    %v2600 = vunpack.c.h.b16 %v306
    %v2601 = vunpack.c.l.b16 %v307
    %v2602 = vunpack.c.h.b16 %v307
    %v2603 = vunpack.c.l.b16 %v308
    %v2604 = vunpack.c.h.b16 %v308
    %v2605 = vunpack.c.l.b16 %v309
    %v2606 = vunpack.c.h.b16 %v309
    %v2607 = vunpack.c.l.b16 %v310
    %v2608 = vunpack.c.h.b16 %v310
    %v2609 = vunpack.c.l.b16 %v311
    %v2610 = vunpack.c.h.b16 %v311
    %v2611 = vunpack.c.l.b16 %v312
    %v2612 = vunpack.c.h.b16 %v312
    %v2613 = vunpack.c.l.b16 %v313
    %v2614 = vunpack.c.h.b16 %v313
    %v2615 = vunpack.c.l.b16 %v314
    %v2616 = vunpack.c.h.b16 %v314
    %v2617 = vunpack.c.l.b16 %v315
    %v2618 = vunpack.c.h.b16 %v315
    %v2619 = vunpack.c.l.b16 %v316
    %v2620 = vunpack.c.h.b16 %v316
    %v2621 = vunpack.c.l.b16 %v317
    %v2622 = vunpack.c.h.b16 %v317
    %v2623 = vunpack.c.l.b16 %v318
    %v2624 = vunpack.c.h.b16 %v318
    %v2625 = vunpack.c.l.b16 %v319
    %v2626 = vunpack.c.h.b16 %v319
    %v2627 = vunpack.c.l.b16 %v320
    %v2628 = vunpack.c.h.b16 %v320
    %v2629 = vunpack.c.l.b16 %v321
    %v2630 = vunpack.c.h.b16 %v321
    %v2631 = vunpack.c.l.b16 %v322
    %v2632 = vunpack.c.h.b16 %v322
    %v2633 = vunpack.c.l.b16 %v323
    %v2634 = vunpack.c.h.b16 %v323
    %v2635 = vunpack.c.l.b16 %v324
    %v2636 = vunpack.c.h.b16 %v324
    %v2637 = vunpack.c.l.b16 %v325
    %v2638 = vunpack.c.h.b16 %v325
    %v2639 = vunpack.c.l.b16 %v326
    %v2640 = vunpack.c.h.b16 %v326
    %v2641 = vunpack.c.l.b16 %v327
    %v2642 = vunpack.c.h.b16 %v327
    %v2643 = vunpack.c.l.b16 %v328
    %v2644 = vunpack.c.h.b16 %v328
    %v2645 = vunpack.c.l.b16 %v329
    %v2646 = vunpack.c.h.b16 %v329
    %v2647 = vunpack.c.l.b16 %v330
    %v2648 = vunpack.c.h.b16 %v330
    %v2649 = vunpack.c.l.b16 %v331
    %v2650 = vunpack.c.h.b16 %v331
    %v2651 = vunpack.c.l.b16 %v332
    %v2652 = vunpack.c.h.b16 %v332
    %v2653 = vunpack.c.l.b16 %v333
    %v2654 = vunpack.c.h.b16 %v333
    %v2655 = vunpack.c.l.b16 %v334
    %v2656 = vunpack.c.h.b16 %v334
    %v2657 = vunpack.c.l.b16 %v335
    %v2658 = vunpack.c.h.b16 %v335
    %v2659 = vunpack.c.l.b16 %v336
    %v2660 = vunpack.c.h.b16 %v336
    %v2661 = vunpack.c.l.b16 %v337
    %v2662 = vunpack.c.h.b16 %v337
    %v2663 = vunpack.c.l.b16 %v338
    %v2664 = vunpack.c.h.b16 %v338
    %v2665 = vunpack.c.l.b16 %v339
    %v2666 = vunpack.c.h.b16 %v339
    %v2667 = vunpack.c.l.b16 %v340
    %v2668 = vunpack.c.h.b16 %v340
    %v2669 = vunpack.c.l.b16 %v341
    %v2670 = vunpack.c.h.b16 %v341
    %v2671 = vunpack.c.l.b16 %v342
    %v2672 = vunpack.c.h.b16 %v342
    %v2673 = vunpack.c.l.b16 %v343
    %v2674 = vunpack.c.h.b16 %v343
    %v2675 = vunpack.c.l.b16 %v344
    %v2676 = vunpack.c.h.b16 %v344
    %v2677 = vunpack.c.l.b16 %v345
    %v2678 = vunpack.c.h.b16 %v345
    %v2679 = vunpack.c.l.b16 %v346
    %v2680 = vunpack.c.h.b16 %v346
    %v2681 = vunpack.c.l.b16 %v347
    %v2682 = vunpack.c.h.b16 %v347
    %v2683 = vunpack.c.l.b16 %v348
    %v2684 = vunpack.c.h.b16 %v348
    %v2685 = vunpack.c.l.b16 %v349
    %v2686 = vunpack.c.h.b16 %v349
    %v2687 = vunpack.c.l.b16 %v350
    %v2688 = vunpack.c.h.b16 %v350
    %v2689 = vunpack.c.l.b16 %v351
    %v2690 = vunpack.c.h.b16 %v351
    %v2691 = vunpack.c.l.b16 %v352
    %v2692 = vunpack.c.h.b16 %v352
    %v2693 = vunpack.c.l.b16 %v353
    %v2694 = vunpack.c.h.b16 %v353
    %v2695 = vunpack.c.l.b16 %v354
    %v2696 = vunpack.c.h.b16 %v354
    %v2697 = vunpack.c.l.b16 %v355
    %v2698 = vunpack.c.h.b16 %v355
    %v2699 = vunpack.c.l.b16 %v356
    %v2700 = vunpack.c.h.b16 %v356
    %v2701 = vunpack.c.l.b16 %v357
    %v2702 = vunpack.c.h.b16 %v357
    %v2703 = vunpack.c.l.b16 %v358
    %v2704 = vunpack.c.h.b16 %v358
    %v2705 = vunpack.c.l.b16 %v359
    %v2706 = vunpack.c.h.b16 %v359
    %v2707 = vunpack.c.l.b16 %v360
    %v2708 = vunpack.c.h.b16 %v360
    %v2709 = vunpack.c.l.b16 %v361
    %v2710 = vunpack.c.h.b16 %v361
    %v2711 = vunpack.c.l.b16 %v362
    %v2712 = vunpack.c.h.b16 %v362
    %v2713 = vunpack.c.l.b16 %v363
    %v2714 = vunpack.c.h.b16 %v363
    %v2715 = vunpack.c.l.b16 %v364
    %v2716 = vunpack.c.h.b16 %v364
    %v2717 = vunpack.c.l.b16 %v365
    %v2718 = vunpack.c.h.b16 %v365
    %v2719 = vunpack.c.l.b16 %v366
    %v2720 = vunpack.c.h.b16 %v366
    %v2721 = vunpack.c.l.b16 %v367
    %v2722 = vunpack.c.h.b16 %v367
    %v2723 = vunpack.c.l.b16 %v368
    %v2724 = vunpack.c.h.b16 %v368
    %v2725 = vunpack.c.l.b16 %v369
    %v2726 = vunpack.c.h.b16 %v369
    %v2727 = vunpack.c.l.b16 %v370
    %v2728 = vunpack.c.h.b16 %v370
    %v2729 = vunpack.c.l.b16 %v371
    %v2730 = vunpack.c.h.b16 %v371
    %v2731 = vunpack.c.l.b16 %v372
    %v2732 = vunpack.c.h.b16 %v372
    %v2733 = vunpack.c.l.b16 %v373
    %v2734 = vunpack.c.h.b16 %v373
    %v2735 = vunpack.c.l.b16 %v374
    %v2736 = vunpack.c.h.b16 %v374
    %v2737 = vunpack.c.l.b16 %v375
    %v2738 = vunpack.c.h.b16 %v375
    %v2739 = vunpack.c.l.b16 %v376
    %v2740 = vunpack.c.h.b16 %v376
    %v2741 = vunpack.c.l.b16 %v377
    %v2742 = vunpack.c.h.b16 %v377
    %v2743 = vunpack.c.l.b16 %v378
    %v2744 = vunpack.c.h.b16 %v378
    %v2745 = vunpack.c.l.b16 %v379
    %v2746 = vunpack.c.h.b16 %v379
    %v2747 = vunpack.c.l.b16 %v380
    %v2748 = vunpack.c.h.b16 %v380
    %v2749 = vunpack.c.l.b16 %v381
    %v2750 = vunpack.c.h.b16 %v381
    %v2751 = vunpack.c.l.b16 %v382
    %v2752 = vunpack.c.h.b16 %v382
    %v2753 = vunpack.c.l.b16 %v383
    %v2754 = vunpack.c.h.b16 %v383
    %v2755 = vunpack.c.l.b16 %v384
    %v2756 = vunpack.c.h.b16 %v384
    %v2757 = vunpack.c.l.b16 %v385
    %v2758 = vunpack.c.h.b16 %v385
    %v2759 = vunpack.c.l.b16 %v386
    %v2760 = vunpack.c.h.b16 %v386
    %v2761 = vunpack.c.l.b16 %v387
    %v2762 = vunpack.c.h.b16 %v387
    %v2763 = vunpack.c.l.b16 %v388
    %v2764 = vunpack.c.h.b16 %v388
    %v2765 = vunpack.c.l.b16 %v389
    %v2766 = vunpack.c.h.b16 %v389
    %v2767 = vunpack.c.l.b16 %v390
    %v2768 = vunpack.c.h.b16 %v390
    %v2769 = vunpack.c.l.b16 %v391
    %v2770 = vunpack.c.h.b16 %v391
    %v2771 = vunpack.c.l.b16 %v392
    %v2772 = vunpack.c.h.b16 %v392
    %v2773 = vunpack.c.l.b16 %v393
    %v2774 = vunpack.c.h.b16 %v393
    %v2775 = vunpack.c.l.b16 %v394
    %v2776 = vunpack.c.h.b16 %v394
    %v2777 = vunpack.c.l.b16 %v395
    %v2778 = vunpack.c.h.b16 %v395
    %v2779 = vunpack.c.l.b16 %v396
    %v2780 = vunpack.c.h.b16 %v396
    %v2781 = vunpack.c.l.b16 %v397
    %v2782 = vunpack.c.h.b16 %v397
    %v2783 = vunpack.c.l.b16 %v398
    %v2784 = vunpack.c.h.b16 %v398
    %v2785 = vunpack.c.l.b16 %v399
    %v2786 = vunpack.c.h.b16 %v399
    %v2787 = vunpack.c.l.b16 %v400
    %v2788 = vunpack.c.h.b16 %v400
    %v2789 = vunpack.c.l.b16 %v401
    %v2790 = vunpack.c.h.b16 %v401
    %v2791 = vunpack.c.l.b16 %v402
    %v2792 = vunpack.c.h.b16 %v402
    %v2793 = vunpack.c.l.b16 %v403
    %v2794 = vunpack.c.h.b16 %v403
    %v2795 = vunpack.c.l.b16 %v404
    %v2796 = vunpack.c.h.b16 %v404
    %v2797 = vunpack.c.l.b16 %v405
    %v2798 = vunpack.c.h.b16 %v405
    %v2799 = vunpack.c.l.b16 %v406
    %v2800 = vunpack.c.h.b16 %v406
    %v2801 = vunpack.c.l.b16 %v407
    %v2802 = vunpack.c.h.b16 %v407
    %v2803 = vunpack.c.l.b16 %v408
    %v2804 = vunpack.c.h.b16 %v408
    %v2805 = vunpack.c.l.b16 %v409
    %v2806 = vunpack.c.h.b16 %v409
    %v2807 = vunpack.c.l.b16 %v410
    %v2808 = vunpack.c.h.b16 %v410
    %v2809 = vunpack.c.l.b16 %v411
    %v2810 = vunpack.c.h.b16 %v411
    %v2811 = vunpack.c.l.b16 %v412
    %v2812 = vunpack.c.h.b16 %v412
    %v2813 = vunpack.c.l.b16 %v413
    %v2814 = vunpack.c.h.b16 %v413
    %v2815 = vunpack.c.l.b16 %v414
    %v2816 = vunpack.c.h.b16 %v414
    %v2817 = vunpack.c.l.b16 %v415
    %v2818 = vunpack.c.h.b16 %v415
    %v2819 = vunpack.c.l.b16 %v416
    %v2820 = vunpack.c.h.b16 %v416
    %v2821 = vunpack.c.l.b16 %v417
    %v2822 = vunpack.c.h.b16 %v417
    %v2823 = vunpack.c.l.b16 %v418
    %v2824 = vunpack.c.h.b16 %v418
    %v2825 = vunpack.c.l.b16 %v419
    %v2826 = vunpack.c.h.b16 %v419
    %v2827 = vunpack.c.l.b16 %v420
    %v2828 = vunpack.c.h.b16 %v420
    %v2829 = vunpack.c.l.b16 %v421
    %v2830 = vunpack.c.h.b16 %v421
    %v2831 = vunpack.c.l.b16 %v422
    %v2832 = vunpack.c.h.b16 %v422
    %v2833 = vunpack.c.l.b16 %v423
    %v2834 = vunpack.c.h.b16 %v423
    %v2835 = vunpack.c.l.b16 %v424
    %v2836 = vunpack.c.h.b16 %v424
    %v2837 = vunpack.c.l.b16 %v425
    %v2838 = vunpack.c.h.b16 %v425
    %v2839 = vunpack.c.l.b16 %v426
    %v2840 = vunpack.c.h.b16 %v426
    %v2841 = vunpack.c.l.b16 %v427
    %v2842 = vunpack.c.h.b16 %v427
    %v2843 = vunpack.c.l.b16 %v428
    %v2844 = vunpack.c.h.b16 %v428
    %v2845 = vunpack.c.l.b16 %v429
    %v2846 = vunpack.c.h.b16 %v429
    %v2847 = vunpack.c.l.b16 %v430
    %v2848 = vunpack.c.h.b16 %v430
    %v2849 = vunpack.c.l.b16 %v431
    %v2850 = vunpack.c.h.b16 %v431
    %v2851 = vunpack.c.l.b16 %v432
    %v2852 = vunpack.c.h.b16 %v432
    %v2853 = vunpack.c.l.b16 %v433
    %v2854 = vunpack.c.h.b16 %v433
    %v2855 = vunpack.c.l.b16 %v434
    %v2856 = vunpack.c.h.b16 %v434
    %v2857 = vunpack.c.l.b16 %v435
    %v2858 = vunpack.c.h.b16 %v435
    %v2859 = vunpack.c.l.b16 %v436
    %v2860 = vunpack.c.h.b16 %v436
    %v2861 = vunpack.c.l.b16 %v437
    %v2862 = vunpack.c.h.b16 %v437
    %v2863 = vunpack.c.l.b16 %v438
    %v2864 = vunpack.c.h.b16 %v438
    %v2865 = vunpack.c.l.b16 %v439
    %v2866 = vunpack.c.h.b16 %v439
    %v2867 = vunpack.c.l.b16 %v440
    %v2868 = vunpack.c.h.b16 %v440
    %v2869 = vunpack.c.l.b16 %v441
    %v2870 = vunpack.c.h.b16 %v441
    %v2871 = vunpack.c.l.b16 %v442
    %v2872 = vunpack.c.h.b16 %v442
    %v2873 = vunpack.c.l.b16 %v443
    %v2874 = vunpack.c.h.b16 %v443
    %v2875 = vunpack.c.l.b16 %v444
    %v2876 = vunpack.c.h.b16 %v444
    %v2877 = vunpack.c.l.b16 %v445
    %v2878 = vunpack.c.h.b16 %v445
    %v2879 = vunpack.c.l.b16 %v446
    %v2880 = vunpack.c.h.b16 %v446
    %v2881 = vunpack.c.l.b16 %v447
    %v2882 = vunpack.c.h.b16 %v447
    %v2883 = vunpack.c.l.b16 %v448
    %v2884 = vunpack.c.h.b16 %v448
    %v2885 = vunpack.c.l.b16 %v449
    %v2886 = vunpack.c.h.b16 %v449
    %v2887 = vunpack.c.l.b16 %v450
    %v2888 = vunpack.c.h.b16 %v450
    %v2889 = vunpack.c.l.b16 %v451
    %v2890 = vunpack.c.h.b16 %v451
    %v2891 = vunpack.c.l.b16 %v452
    %v2892 = vunpack.c.h.b16 %v452
    %v2893 = vunpack.c.l.b16 %v453
    %v2894 = vunpack.c.h.b16 %v453
    %v2895 = vunpack.c.l.b16 %v454
    %v2896 = vunpack.c.h.b16 %v454
    %v2897 = vunpack.c.l.b16 %v455
    %v2898 = vunpack.c.h.b16 %v455
    %v2899 = vunpack.c.l.b16 %v456
    %v2900 = vunpack.c.h.b16 %v456
    %v2901 = vunpack.c.l.b16 %v457
    %v2902 = vunpack.c.h.b16 %v457
    %v2903 = vunpack.c.l.b16 %v458
    %v2904 = vunpack.c.h.b16 %v458
    %v2905 = vunpack.c.l.b16 %v459
    %v2906 = vunpack.c.h.b16 %v459
    %v2907 = vunpack.c.l.b16 %v460
    %v2908 = vunpack.c.h.b16 %v460
    %v2909 = vunpack.c.l.b16 %v461
    %v2910 = vunpack.c.h.b16 %v461
    %v2911 = vunpack.c.l.b16 %v462
    %v2912 = vunpack.c.h.b16 %v462
    %v2913 = vunpack.c.l.b16 %v463
    %v2914 = vunpack.c.h.b16 %v463
    %v2915 = vunpack.c.l.b16 %v464
    %v2916 = vunpack.c.h.b16 %v464
    %v2917 = vunpack.c.l.b16 %v465
    %v2918 = vunpack.c.h.b16 %v465
    %v2919 = vunpack.c.l.b16 %v466
    %v2920 = vunpack.c.h.b16 %v466
    %v2921 = vunpack.c.l.b16 %v467
    %v2922 = vunpack.c.h.b16 %v467
    %v2923 = vunpack.c.l.b16 %v468
    %v2924 = vunpack.c.h.b16 %v468
    %v2925 = vunpack.c.l.b16 %v469
    %v2926 = vunpack.c.h.b16 %v469
    %v2927 = vunpack.c.l.b16 %v470
    %v2928 = vunpack.c.h.b16 %v470
    %v2929 = vunpack.c.l.b16 %v471
    %v2930 = vunpack.c.h.b16 %v471
    %v2931 = vunpack.c.l.b16 %v472
    %v2932 = vunpack.c.h.b16 %v472
    %v2933 = vunpack.c.l.b16 %v473
    %v2934 = vunpack.c.h.b16 %v473
    %v2935 = vunpack.c.l.b16 %v474
    %v2936 = vunpack.c.h.b16 %v474
    %v2937 = vunpack.c.l.b16 %v475
    %v2938 = vunpack.c.h.b16 %v475
    %v2939 = vunpack.c.l.b16 %v476
    %v2940 = vunpack.c.h.b16 %v476
    %v2941 = vunpack.c.l.b16 %v477
    %v2942 = vunpack.c.h.b16 %v477
    %v2943 = vunpack.c.l.b16 %v478
    %v2944 = vunpack.c.h.b16 %v478
    %v2945 = vunpack.c.l.b16 %v479
    %v2946 = vunpack.c.h.b16 %v479
    %v2947 = vunpack.c.l.b16 %v480
    %v2948 = vunpack.c.h.b16 %v480
    %v2949 = vunpack.c.l.b16 %v481
    %v2950 = vunpack.c.h.b16 %v481
    %v2951 = vunpack.c.l.b16 %v482
    %v2952 = vunpack.c.h.b16 %v482
    %v2953 = vunpack.c.l.b16 %v483
    %v2954 = vunpack.c.h.b16 %v483
    %v2955 = vunpack.c.l.b16 %v484
    %v2956 = vunpack.c.h.b16 %v484
    %v2957 = vunpack.c.l.b16 %v485
    %v2958 = vunpack.c.h.b16 %v485
    %v2959 = vunpack.c.l.b16 %v486
    %v2960 = vunpack.c.h.b16 %v486
    %v2961 = vunpack.c.l.b16 %v487
    %v2962 = vunpack.c.h.b16 %v487
    %v2963 = vunpack.c.l.b16 %v488
    %v2964 = vunpack.c.h.b16 %v488
    %v2965 = vunpack.c.l.b16 %v489
    %v2966 = vunpack.c.h.b16 %v489
    %v2967 = vunpack.c.l.b16 %v490
    %v2968 = vunpack.c.h.b16 %v490
    %v2969 = vunpack.c.l.b16 %v491
    %v2970 = vunpack.c.h.b16 %v491
    %v2971 = vunpack.c.l.b16 %v492
    %v2972 = vunpack.c.h.b16 %v492
    %v2973 = vunpack.c.l.b16 %v493
    %v2974 = vunpack.c.h.b16 %v493
    %v2975 = vunpack.c.l.b16 %v494
    %v2976 = vunpack.c.h.b16 %v494
    %v2977 = vunpack.c.l.b16 %v495
    %v2978 = vunpack.c.h.b16 %v495
    %v2979 = vunpack.c.l.b16 %v496
    %v2980 = vunpack.c.h.b16 %v496
    %v2981 = vunpack.c.l.b16 %v497
    %v2982 = vunpack.c.h.b16 %v497
    %v2983 = vunpack.c.l.b16 %v498
    %v2984 = vunpack.c.h.b16 %v498
    %v2985 = vunpack.c.l.b16 %v499
    %v2986 = vunpack.c.h.b16 %v499
    %v2987 = vunpack.c.l.b16 %v500
    %v2988 = vunpack.c.h.b16 %v500
    %v2989 = vunpack.c.l.b16 %v501
    %v2990 = vunpack.c.h.b16 %v501
    %v2991 = vunpack.c.l.b16 %v502
    %v2992 = vunpack.c.h.b16 %v502
    %v2993 = vunpack.c.l.b16 %v503
    %v2994 = vunpack.c.h.b16 %v503
    %v2995 = vunpack.c.l.b16 %v504
    %v2996 = vunpack.c.h.b16 %v504
    %v2997 = vunpack.c.l.b16 %v505
    %v2998 = vunpack.c.h.b16 %v505
    %v2999 = vunpack.c.l.b16 %v506
    %v3000 = vunpack.c.h.b16 %v506
    %v3001 = vunpack.c.l.b16 %v507
    %v3002 = vunpack.c.h.b16 %v507
    %v3003 = vunpack.c.l.b16 %v508
    %v3004 = vunpack.c.h.b16 %v508
    %v3005 = vunpack.c.l.b16 %v509
    %v3006 = vunpack.c.h.b16 %v509
    %v3007 = vunpack.c.l.b16 %v510
    %v3008 = vunpack.c.h.b16 %v510
    %v3009 = vunpack.c.l.b16 %v511
    %v3010 = vunpack.c.h.b16 %v511
    %v3011 = vunpack.c.l.b16 %v512
    %v3012 = vunpack.c.h.b16 %v512
    %v3013 = vunpack.c.l.b16 %v513
    %v3014 = vunpack.c.h.b16 %v513
    %v3015 = vunpack.c.l.b16 %v514
    %v3016 = vunpack.c.h.b16 %v514
    %v3017 = vunpack.c.l.b16 %v515
    %v3018 = vunpack.c.h.b16 %v515
    %v3019 = vunpack.c.l.b16 %v516
    %v3020 = vunpack.c.h.b16 %v516
    %v3021 = vunpack.c.l.b16 %v517
    %v3022 = vunpack.c.h.b16 %v517
    %v3023 = vunpack.c.l.b16 %v518
    %v3024 = vunpack.c.h.b16 %v518
    %v3025 = vunpack.c.l.b16 %v519
    %v3026 = vunpack.c.h.b16 %v519
    %v3027 = vunpack.c.l.b16 %v520
    %v3028 = vunpack.c.h.b16 %v520
    %v3029 = vunpack.c.l.b16 %v521
    %v3030 = vunpack.c.h.b16 %v521
    %v3031 = vunpack.c.l.b16 %v522
    %v3032 = vunpack.c.h.b16 %v522
    %v3033 = vunpack.c.l.b16 %v523
    %v3034 = vunpack.c.h.b16 %v523
    %v3035 = vunpack.c.l.b16 %v524
    %v3036 = vunpack.c.h.b16 %v524
    %v3037 = vunpack.c.l.b16 %v525
    %v3038 = vunpack.c.h.b16 %v525
    %v3039 = vunpack.c.l.b16 %v526
    %v3040 = vunpack.c.h.b16 %v526
    %v3041 = vunpack.c.l.b16 %v527
    %v3042 = vunpack.c.h.b16 %v527
    %v3043 = vunpack.c.l.b16 %v528
    %v3044 = vunpack.c.h.b16 %v528
    %v3045 = vunpack.c.l.b16 %v529
    %v3046 = vunpack.c.h.b16 %v529
    %v3047 = vunpack.c.l.b16 %v530
    %v3048 = vunpack.c.h.b16 %v530
    %v3049 = vunpack.c.l.b16 %v531
    %v3050 = vunpack.c.h.b16 %v531
    %v3051 = vunpack.c.l.b16 %v532
    %v3052 = vunpack.c.h.b16 %v532
    %v3053 = vunpack.c.l.b16 %v533
    %v3054 = vunpack.c.h.b16 %v533
    %v3055 = vunpack.c.l.b16 %v534
    %v3056 = vunpack.c.h.b16 %v534
    %v3057 = vunpack.c.l.b16 %v535
    %v3058 = vunpack.c.h.b16 %v535
    %v3059 = vunpack.c.l.b16 %v536
    %v3060 = vunpack.c.h.b16 %v536
    %v3061 = vunpack.c.l.b16 %v537
    %v3062 = vunpack.c.h.b16 %v537
    %v3063 = vunpack.c.l.b16 %v538
    %v3064 = vunpack.c.h.b16 %v538
    %v3065 = vunpack.c.l.b16 %v539
    %v3066 = vunpack.c.h.b16 %v539
    %v3067 = vunpack.c.l.b16 %v540
    %v3068 = vunpack.c.h.b16 %v540
    %v3069 = vunpack.c.l.b16 %v541
    %v3070 = vunpack.c.h.b16 %v541
    %v3071 = vunpack.c.l.b16 %v542
    %v3072 = vunpack.c.h.b16 %v542
    %v3073 = vunpack.c.l.b16 %v543
    %v3074 = vunpack.c.h.b16 %v543
    %v3075 = vunpack.c.l.b16 %v544
    %v3076 = vunpack.c.h.b16 %v544
    %v3077 = vunpack.c.l.b16 %v545
    %v3078 = vunpack.c.h.b16 %v545
    %v3079 = vunpack.c.l.b16 %v546
    %v3080 = vunpack.c.h.b16 %v546
    %v3081 = vunpack.c.l.b16 %v547
    %v3082 = vunpack.c.h.b16 %v547
    %v3083 = vunpack.c.l.b16 %v548
    %v3084 = vunpack.c.h.b16 %v548
    %v3085 = vunpack.c.l.b16 %v549
    %v3086 = vunpack.c.h.b16 %v549
    %v3087 = vunpack.c.l.b16 %v550
    %v3088 = vunpack.c.h.b16 %v550
    %v3089 = vunpack.c.l.b16 %v551
    %v3090 = vunpack.c.h.b16 %v551
    %v3091 = vunpack.c.l.b16 %v552
    %v3092 = vunpack.c.h.b16 %v552
    %v3093 = vunpack.c.l.b16 %v553
    %v3094 = vunpack.c.h.b16 %v553
    %v3095 = vunpack.c.l.b16 %v554
    %v3096 = vunpack.c.h.b16 %v554
    %v3097 = vunpack.c.l.b16 %v555
    %v3098 = vunpack.c.h.b16 %v555
    %v3099 = vunpack.c.l.b16 %v556
    %v3100 = vunpack.c.h.b16 %v556
    %v3101 = vunpack.c.l.b16 %v557
    %v3102 = vunpack.c.h.b16 %v557
    %v3103 = vunpack.c.l.b16 %v558
    %v3104 = vunpack.c.h.b16 %v558
    %v3105 = vunpack.c.l.b16 %v559
    %v3106 = vunpack.c.h.b16 %v559
    %v3107 = vunpack.c.l.b16 %v560
    %v3108 = vunpack.c.h.b16 %v560
    %v3109 = vunpack.c.l.b16 %v561
    %v3110 = vunpack.c.h.b16 %v561
    %v3111 = vunpack.c.l.b16 %v562
    %v3112 = vunpack.c.h.b16 %v562
    %v3113 = vunpack.c.l.b16 %v563
    %v3114 = vunpack.c.h.b16 %v563
    %v3115 = vunpack.c.l.b16 %v564
    %v3116 = vunpack.c.h.b16 %v564
    %v3117 = vunpack.c.l.b16 %v565
    %v3118 = vunpack.c.h.b16 %v565
    %v3119 = vunpack.c.l.b16 %v566
    %v3120 = vunpack.c.h.b16 %v566
    %v3121 = vunpack.c.l.b16 %v567
    %v3122 = vunpack.c.h.b16 %v567
    %v3123 = vunpack.c.l.b16 %v568
    %v3124 = vunpack.c.h.b16 %v568
    %v3125 = vunpack.c.l.b16 %v569
    %v3126 = vunpack.c.h.b16 %v569
    %v3127 = vunpack.c.l.b16 %v570
    %v3128 = vunpack.c.h.b16 %v570
    %v3129 = vunpack.c.l.b16 %v571
    %v3130 = vunpack.c.h.b16 %v571
    %v3131 = vunpack.c.l.b16 %v572
    %v3132 = vunpack.c.h.b16 %v572
    %v3133 = vunpack.c.l.b16 %v573
    %v3134 = vunpack.c.h.b16 %v573
    %v3135 = vunpack.c.l.b16 %v574
    %v3136 = vunpack.c.h.b16 %v574
    %v3137 = vunpack.c.l.b16 %v575
    %v3138 = vunpack.c.h.b16 %v575
    %v3139 = vunpack.c.l.b16 %v576
    %v3140 = vunpack.c.h.b16 %v576
    %v3141 = vunpack.c.l.b16 %v577
    %v3142 = vunpack.c.h.b16 %v577
    %v3143 = vunpack.c.l.b16 %v578
    %v3144 = vunpack.c.h.b16 %v578
    %v3145 = vunpack.c.l.b16 %v579
    %v3146 = vunpack.c.h.b16 %v579
    %v3147 = vunpack.c.l.b16 %v580
    %v3148 = vunpack.c.h.b16 %v580
    %v3149 = vunpack.c.l.b16 %v581
    %v3150 = vunpack.c.h.b16 %v581
    %v3151 = vunpack.c.l.b16 %v582
    %v3152 = vunpack.c.h.b16 %v582
    %v3153 = vunpack.c.l.b16 %v583
    %v3154 = vunpack.c.h.b16 %v583
    %v3155 = vunpack.c.l.b16 %v584
    %v3156 = vunpack.c.h.b16 %v584
    %v3157 = vunpack.c.l.b16 %v585
    %v3158 = vunpack.c.h.b16 %v585
    %v3159 = vunpack.c.l.b16 %v586
    %v3160 = vunpack.c.h.b16 %v586
    %v3161 = vunpack.c.l.b16 %v587
    %v3162 = vunpack.c.h.b16 %v587
    %v3163 = vunpack.c.l.b16 %v588
    %v3164 = vunpack.c.h.b16 %v588
    %v3165 = vunpack.c.l.b16 %v589
    %v3166 = vunpack.c.h.b16 %v589
    %v3167 = vunpack.c.l.b16 %v590
    %v3168 = vunpack.c.h.b16 %v590
    %v3169 = vunpack.c.l.b16 %v591
    %v3170 = vunpack.c.h.b16 %v591
    %v3171 = vunpack.c.l.b16 %v592
    %v3172 = vunpack.c.h.b16 %v592
    %v3173 = vunpack.c.l.b16 %v593
    %v3174 = vunpack.c.h.b16 %v593
    %v3175 = vunpack.c.l.b16 %v594
    %v3176 = vunpack.c.h.b16 %v594
    %v3177 = vunpack.c.l.b16 %v595
    %v3178 = vunpack.c.h.b16 %v595
    %v3179 = vunpack.c.l.b16 %v596
    %v3180 = vunpack.c.h.b16 %v596
    %v3181 = vunpack.c.l.b16 %v597
    %v3182 = vunpack.c.h.b16 %v597
    %v3183 = vunpack.c.l.b16 %v598
    %v3184 = vunpack.c.h.b16 %v598
    %v3185 = vunpack.c.l.b16 %v599
    %v3186 = vunpack.c.h.b16 %v599
    %v3187 = vunpack.c.l.b16 %v600
    %v3188 = vunpack.c.h.b16 %v600
    %v3189 = vunpack.c.l.b16 %v601
    %v3190 = vunpack.c.h.b16 %v601
    %v3191 = vunpack.c.l.b16 %v602
    %v3192 = vunpack.c.h.b16 %v602
    %v3193 = vunpack.c.l.b16 %v603
    %v3194 = vunpack.c.h.b16 %v603
    %v3195 = vunpack.c.l.b16 %v604
    %v3196 = vunpack.c.h.b16 %v604
    %v3197 = vunpack.c.l.b16 %v605
    %v3198 = vunpack.c.h.b16 %v605
    %v3199 = vunpack.c.l.b16 %v606
    %v3200 = vunpack.c.h.b16 %v606
    %v3201 = vunpack.c.l.b16 %v607
    %v3202 = vunpack.c.h.b16 %v607
    %v3203 = vunpack.c.l.b16 %v608
    %v3204 = vunpack.c.h.b16 %v608
    %v3205 = vunpack.c.l.b16 %v609
    %v3206 = vunpack.c.h.b16 %v609
    %v3207 = vunpack.c.l.b16 %v610
    %v3208 = vunpack.c.h.b16 %v610
    %v3209 = vunpack.c.l.b16 %v611
    %v3210 = vunpack.c.h.b16 %v611
    %v3211 = vunpack.c.l.b16 %v612
    %v3212 = vunpack.c.h.b16 %v612
    %v3213 = vunpack.c.l.b16 %v613
    %v3214 = vunpack.c.h.b16 %v613
    %v3215 = vunpack.c.l.b16 %v614
    %v3216 = vunpack.c.h.b16 %v614
    %v3217 = vunpack.c.l.b16 %v615
    %v3218 = vunpack.c.h.b16 %v615
    %v3219 = vunpack.c.l.b16 %v616
    %v3220 = vunpack.c.h.b16 %v616
    %v3221 = vunpack.c.l.b16 %v617
    %v3222 = vunpack.c.h.b16 %v617
    %v3223 = vunpack.c.l.b16 %v618
    %v3224 = vunpack.c.h.b16 %v618
    %v3225 = vunpack.c.l.b16 %v619
    %v3226 = vunpack.c.h.b16 %v619
    %v3227 = vunpack.c.l.b16 %v620
    %v3228 = vunpack.c.h.b16 %v620
    %v3229 = vunpack.c.l.b16 %v621
    %v3230 = vunpack.c.h.b16 %v621
    %v3231 = vunpack.c.l.b16 %v622
    %v3232 = vunpack.c.h.b16 %v622
    %v3233 = vunpack.c.l.b16 %v623
    %v3234 = vunpack.c.h.b16 %v623
    %v3235 = vunpack.c.l.b16 %v624
    %v3236 = vunpack.c.h.b16 %v624
    %v3237 = vunpack.c.l.b16 %v625
    %v3238 = vunpack.c.h.b16 %v625
    %v3239 = vunpack.c.l.b16 %v626
    %v3240 = vunpack.c.h.b16 %v626
    %v3241 = vunpack.c.l.b16 %v627
    %v3242 = vunpack.c.h.b16 %v627
    %v3243 = vunpack.c.l.b16 %v628
    %v3244 = vunpack.c.h.b16 %v628
    %v3245 = vunpack.c.l.b16 %v629
    %v3246 = vunpack.c.h.b16 %v629
    %v3247 = vunpack.c.l.b16 %v630
    %v3248 = vunpack.c.h.b16 %v630
    %v3249 = vunpack.c.l.b16 %v631
    %v3250 = vunpack.c.h.b16 %v631
    %v3251 = vunpack.c.l.b16 %v632
    %v3252 = vunpack.c.h.b16 %v632
    %v3253 = vunpack.c.l.b16 %v633
    %v3254 = vunpack.c.h.b16 %v633
    %v3255 = vunpack.c.l.b16 %v634
    %v3256 = vunpack.c.h.b16 %v634
    %v3257 = vunpack.c.l.b16 %v635
    %v3258 = vunpack.c.h.b16 %v635
    %v3259 = vunpack.c.l.b16 %v636
    %v3260 = vunpack.c.h.b16 %v636
    %v3261 = vunpack.c.l.b16 %v637
    %v3262 = vunpack.c.h.b16 %v637
    %v3263 = vunpack.c.l.b16 %v638
    %v3264 = vunpack.c.h.b16 %v638
    %v3265 = vunpack.c.l.b16 %v639
    %v3266 = vunpack.c.h.b16 %v639
    %v3267 = vunpack.c.l.b16 %v640
    %v3268 = vunpack.c.h.b16 %v640
    %v3269 = vunpack.c.l.b16 %v641
    %v3270 = vunpack.c.h.b16 %v641
    %v3271 = vunpack.c.l.b16 %v642
    %v3272 = vunpack.c.h.b16 %v642
    %v3273 = vunpack.c.l.b16 %v643
    %v3274 = vunpack.c.h.b16 %v643
    %v3275 = vunpack.c.l.b16 %v644
    %v3276 = vunpack.c.h.b16 %v644
    %v3277 = vunpack.c.l.b16 %v645
    %v3278 = vunpack.c.h.b16 %v645
    %v3279 = vunpack.c.l.b16 %v646
    %v3280 = vunpack.c.h.b16 %v646
    %v3281 = vunpack.c.l.b16 %v647
    %v3282 = vunpack.c.h.b16 %v647
    %v3283 = vunpack.c.l.b16 %v648
    %v3284 = vunpack.c.h.b16 %v648
    %v3285 = vunpack.c.l.b16 %v649
    %v3286 = vunpack.c.h.b16 %v649
    %v3287 = vunpack.c.l.b16 %v650
    %v3288 = vunpack.c.h.b16 %v650
    %v3289 = vunpack.c.l.b16 %v651
    %v3290 = vunpack.c.h.b16 %v651
    %v3291 = vunpack.c.l.b16 %v652
    %v3292 = vunpack.c.h.b16 %v652
    %v3293 = vunpack.c.l.b16 %v653
    %v3294 = vunpack.c.h.b16 %v653
    %v3295 = vunpack.c.l.b16 %v654
    %v3296 = vunpack.c.h.b16 %v654
    %v3297 = vunpack.c.l.b16 %v655
    %v3298 = vunpack.c.h.b16 %v655
    %v3299 = vunpack.c.l.b16 %v656
    %v3300 = vunpack.c.h.b16 %v656
    %v3301 = vunpack.c.l.b16 %v657
    %v3302 = vunpack.c.h.b16 %v657
    %v3303 = vunpack.c.l.b16 %v658
    %v3304 = vunpack.c.h.b16 %v658
    %v3305 = vunpack.c.l.b16 %v659
    %v3306 = vunpack.c.h.b16 %v659
    %v3307 = vunpack.c.l.b16 %v660
    %v3308 = vunpack.c.h.b16 %v660
    %v3309 = vunpack.c.l.b16 %v661
    %v3310 = vunpack.c.h.b16 %v661
    %v3311 = vunpack.c.l.b16 %v662
    %v3312 = vunpack.c.h.b16 %v662
    %v3313 = vunpack.c.l.b16 %v663
    %v3314 = vunpack.c.h.b16 %v663
    %v3315 = vunpack.c.l.b16 %v664
    %v3316 = vunpack.c.h.b16 %v664
    %v3317 = vunpack.c.l.b16 %v665
    %v3318 = vunpack.c.h.b16 %v665
    %v3319 = vunpack.c.l.b16 %v666
    %v3320 = vunpack.c.h.b16 %v666
    %v3321 = vunpack.c.l.b16 %v667
    %v3322 = vunpack.c.h.b16 %v667
    %v3323 = vunpack.c.l.b16 %v668
    %v3324 = vunpack.c.h.b16 %v668
    %v3325 = vunpack.c.l.b16 %v669
    %v3326 = vunpack.c.h.b16 %v669
    %v3327 = vunpack.c.l.b16 %v670
    %v3328 = vunpack.c.h.b16 %v670
    %v3329 = vunpack.c.l.b16 %v671
    %v3330 = vunpack.c.h.b16 %v671
    %v3331 = vunpack.c.l.b16 %v672
    %v3332 = vunpack.c.h.b16 %v672
    %v3333 = vunpack.c.l.b16 %v673
    %v3334 = vunpack.c.h.b16 %v673
    %v3335 = vunpack.c.l.b16 %v674
    %v3336 = vunpack.c.h.b16 %v674
    %v3337 = vunpack.c.l.b16 %v675
    %v3338 = vunpack.c.h.b16 %v675
    %v3339 = vunpack.c.l.b16 %v676
    %v3340 = vunpack.c.h.b16 %v676
    %v3341 = vunpack.c.l.b16 %v677
    %v3342 = vunpack.c.h.b16 %v677
    %v3343 = vunpack.c.l.b16 %v678
    %v3344 = vunpack.c.h.b16 %v678
    %v3345 = vunpack.c.l.b16 %v679
    %v3346 = vunpack.c.h.b16 %v679
    %v3347 = vunpack.c.l.b16 %v680
    %v3348 = vunpack.c.h.b16 %v680
    %v3349 = vunpack.c.l.b16 %v681
    %v3350 = vunpack.c.h.b16 %v681
    %v3351 = vunpack.c.l.b16 %v682
    %v3352 = vunpack.c.h.b16 %v682
    %v3353 = vunpack.c.l.b16 %v683
    %v3354 = vunpack.c.h.b16 %v683
    %v3355 = vunpack.c.l.b16 %v684
    %v3356 = vunpack.c.h.b16 %v684
    %v3357 = vunpack.c.l.b16 %v685
    %v3358 = vunpack.c.h.b16 %v685
    %v3359 = vunpack.c.l.b16 %v686
    %v3360 = vunpack.c.h.b16 %v686
    %v3361 = vunpack.c.l.b16 %v687
    %v3362 = vunpack.c.h.b16 %v687
    %v3363 = vunpack.c.l.b16 %v688
    %v3364 = vunpack.c.h.b16 %v688
    %v3365 = vunpack.c.l.b16 %v689
    %v3366 = vunpack.c.h.b16 %v689
    %v3367 = vunpack.c.l.b16 %v690
    %v3368 = vunpack.c.h.b16 %v690
    %v3369 = vunpack.c.l.b16 %v691
    %v3370 = vunpack.c.h.b16 %v691
    %v3371 = vunpack.c.l.b16 %v692
    %v3372 = vunpack.c.h.b16 %v692
    %v3373 = vunpack.c.l.b16 %v693
    %v3374 = vunpack.c.h.b16 %v693
    %v3375 = vunpack.c.l.b16 %v694
    %v3376 = vunpack.c.h.b16 %v694
    %v3377 = vunpack.c.l.b16 %v695
    %v3378 = vunpack.c.h.b16 %v695
    %v3379 = vunpack.c.l.b16 %v696
    %v3380 = vunpack.c.h.b16 %v696
    %v3381 = vunpack.c.l.b16 %v697
    %v3382 = vunpack.c.h.b16 %v697
    %v3383 = vunpack.c.l.b16 %v698
    %v3384 = vunpack.c.h.b16 %v698
    %v3385 = vunpack.c.l.b16 %v699
    %v3386 = vunpack.c.h.b16 %v699
    %v3387 = vunpack.c.l.b16 %v700
    %v3388 = vunpack.c.h.b16 %v700
    %v3389 = vunpack.c.l.b16 %v701
    %v3390 = vunpack.c.h.b16 %v701
    %v3391 = vunpack.c.l.b16 %v702
    %v3392 = vunpack.c.h.b16 %v702
    %v3393 = vunpack.c.l.b16 %v703
    %v3394 = vunpack.c.h.b16 %v703
    %v3395 = vunpack.c.l.b16 %v704
    %v3396 = vunpack.c.h.b16 %v704
    %v3397 = vunpack.c.l.b16 %v705
    %v3398 = vunpack.c.h.b16 %v705
    %v3399 = vunpack.c.l.b16 %v706
    %v3400 = vunpack.c.h.b16 %v706
    %v3401 = vunpack.c.l.b16 %v707
    %v3402 = vunpack.c.h.b16 %v707
    %v3403 = vunpack.c.l.b16 %v708
    %v3404 = vunpack.c.h.b16 %v708
    %v3405 = vunpack.c.l.b16 %v709
    %v3406 = vunpack.c.h.b16 %v709
    %v3407 = vunpack.c.l.b16 %v710
    %v3408 = vunpack.c.h.b16 %v710
    %v3409 = vunpack.c.l.b16 %v711
    %v3410 = vunpack.c.h.b16 %v711
    %v3411 = vunpack.c.l.b16 %v712
    %v3412 = vunpack.c.h.b16 %v712
    %v3413 = vunpack.c.l.b16 %v713
    %v3414 = vunpack.c.h.b16 %v713
    %v3415 = vunpack.c.l.b16 %v714
    %v3416 = vunpack.c.h.b16 %v714
    %v3417 = vunpack.c.l.b16 %v715
    %v3418 = vunpack.c.h.b16 %v715
    %v3419 = vunpack.c.l.b16 %v716
    %v3420 = vunpack.c.h.b16 %v716
    %v3421 = vunpack.c.l.b16 %v717
    %v3422 = vunpack.c.h.b16 %v717
    %v3423 = vunpack.c.l.b16 %v718
    %v3424 = vunpack.c.h.b16 %v718
    %v3425 = vunpack.c.l.b16 %v719
    %v3426 = vunpack.c.h.b16 %v719
    %v3427 = vunpack.c.l.b16 %v720
    %v3428 = vunpack.c.h.b16 %v720
    %v3429 = vunpack.c.l.b16 %v721
    %v3430 = vunpack.c.h.b16 %v721
    %v3431 = vunpack.c.l.b16 %v722
    %v3432 = vunpack.c.h.b16 %v722
    %v3433 = vunpack.c.l.b16 %v723
    %v3434 = vunpack.c.h.b16 %v723
    %v3435 = vunpack.c.l.b16 %v724
    %v3436 = vunpack.c.h.b16 %v724
    %v3437 = vunpack.c.l.b16 %v725
    %v3438 = vunpack.c.h.b16 %v725
    %v3439 = vunpack.c.l.b16 %v726
    %v3440 = vunpack.c.h.b16 %v726
    %v3441 = vunpack.c.l.b16 %v727
    %v3442 = vunpack.c.h.b16 %v727
    %v3443 = vunpack.c.l.b16 %v728
    %v3444 = vunpack.c.h.b16 %v728
    %v3445 = vunpack.c.l.b16 %v729
    %v3446 = vunpack.c.h.b16 %v729
    %v3447 = vunpack.c.l.b16 %v730
    %v3448 = vunpack.c.h.b16 %v730
    %v3449 = vunpack.c.l.b16 %v731
    %v3450 = vunpack.c.h.b16 %v731
    %v3451 = vunpack.c.l.b16 %v732
    %v3452 = vunpack.c.h.b16 %v732
    %v3453 = vunpack.c.l.b16 %v733
    %v3454 = vunpack.c.h.b16 %v733
    %v3455 = vunpack.c.l.b16 %v734
    %v3456 = vunpack.c.h.b16 %v734
    %v3457 = vunpack.c.l.b16 %v735
    %v3458 = vunpack.c.h.b16 %v735
    %v3459 = vunpack.c.l.b16 %v736
    %v3460 = vunpack.c.h.b16 %v736
    %v3461 = vunpack.c.l.b16 %v737
    %v3462 = vunpack.c.h.b16 %v737
    %v3463 = vunpack.c.l.b16 %v738
    %v3464 = vunpack.c.h.b16 %v738
    %v3465 = vunpack.c.l.b16 %v739
    %v3466 = vunpack.c.h.b16 %v739
    %v3467 = vunpack.c.l.b16 %v740
    %v3468 = vunpack.c.h.b16 %v740
    %v3469 = vunpack.c.l.b16 %v741
    %v3470 = vunpack.c.h.b16 %v741
    %v3471 = vunpack.c.l.b16 %v742
    %v3472 = vunpack.c.h.b16 %v742
    %v3473 = vunpack.c.l.b16 %v743
    %v3474 = vunpack.c.h.b16 %v743
    %v3475 = vunpack.c.l.b16 %v744
    %v3476 = vunpack.c.h.b16 %v744
    %v3477 = vunpack.c.l.b16 %v745
    %v3478 = vunpack.c.h.b16 %v745
    %v3479 = vunpack.c.l.b16 %v746
    %v3480 = vunpack.c.h.b16 %v746
    %v3481 = vunpack.c.l.b16 %v747
    %v3482 = vunpack.c.h.b16 %v747
    %v3483 = vunpack.c.l.b16 %v748
    %v3484 = vunpack.c.h.b16 %v748
    %v3485 = vunpack.c.l.b16 %v749
    %v3486 = vunpack.c.h.b16 %v749
    %v3487 = vunpack.c.l.b16 %v750
    %v3488 = vunpack.c.h.b16 %v750
    %v3489 = vunpack.c.l.b16 %v751
    %v3490 = vunpack.c.h.b16 %v751
    %v3491 = vunpack.c.l.b16 %v752
    %v3492 = vunpack.c.h.b16 %v752
    %v3493 = vunpack.c.l.b16 %v753
    %v3494 = vunpack.c.h.b16 %v753
    %v3495 = vunpack.c.l.b16 %v754
    %v3496 = vunpack.c.h.b16 %v754
    %v3497 = vunpack.c.l.b16 %v755
    %v3498 = vunpack.c.h.b16 %v755
    %v3499 = vunpack.c.l.b16 %v756
    %v3500 = vunpack.c.h.b16 %v756
    %v3501 = vunpack.c.l.b16 %v757
    %v3502 = vunpack.c.h.b16 %v757
    %v3503 = vunpack.c.l.b16 %v758
    %v3504 = vunpack.c.h.b16 %v758
    %v3505 = vunpack.c.l.b16 %v759
    %v3506 = vunpack.c.h.b16 %v759
    %v3507 = vunpack.c.l.b16 %v760
    %v3508 = vunpack.c.h.b16 %v760
    %v3509 = vunpack.c.l.b16 %v761
    %v3510 = vunpack.c.h.b16 %v761
    %v3511 = vunpack.c.l.b16 %v762
    %v3512 = vunpack.c.h.b16 %v762
    %v3513 = vunpack.c.l.b16 %v763
    %v3514 = vunpack.c.h.b16 %v763
    %v3515 = vunpack.c.l.b16 %v764
    %v3516 = vunpack.c.h.b16 %v764
    %v3517 = vunpack.c.l.b16 %v765
    %v3518 = vunpack.c.h.b16 %v765
    %v3519 = vunpack.c.l.b16 %v766
    %v3520 = vunpack.c.h.b16 %v766
    %v3521 = vunpack.c.l.b16 %v767
    %v3522 = vunpack.c.h.b16 %v767
    %v3523 = vunpack.c.l.b16 %v768
    %v3524 = vunpack.c.h.b16 %v768
    %v3525 = vunpack.c.l.b16 %v769
    %v3526 = vunpack.c.h.b16 %v769
    %v3527 = vunpack.c.l.b16 %v770
    %v3528 = vunpack.c.h.b16 %v770
    %v3529 = vunpack.c.l.b16 %v771
    %v3530 = vunpack.c.h.b16 %v771
    %v3531 = vunpack.c.l.b16 %v772
    %v3532 = vunpack.c.h.b16 %v772
    %v3533 = vunpack.c.l.b16 %v773
    %v3534 = vunpack.c.h.b16 %v773
    %v3535 = vunpack.c.l.b16 %v774
    %v3536 = vunpack.c.h.b16 %v774
    %v3537 = vunpack.c.l.b16 %v775
    %v3538 = vunpack.c.h.b16 %v775
    %v3539 = vunpack.c.l.b16 %v776
    %v3540 = vunpack.c.h.b16 %v776
    %v3541 = vunpack.c.l.b16 %v777
    %v3542 = vunpack.c.h.b16 %v777
    %v3543 = vunpack.c.l.b16 %v778
    %v3544 = vunpack.c.h.b16 %v778
    %v3545 = vunpack.c.l.b16 %v779
    %v3546 = vunpack.c.h.b16 %v779
    %v3547 = vunpack.c.l.b16 %v780
    %v3548 = vunpack.c.h.b16 %v780
    %v3549 = vunpack.c.l.b16 %v781
    %v3550 = vunpack.c.h.b16 %v781
    %v3551 = vunpack.c.l.b16 %v782
    %v3552 = vunpack.c.h.b16 %v782
    %v3553 = vunpack.c.l.b16 %v783
    %v3554 = vunpack.c.h.b16 %v783
    %v3555 = vunpack.c.l.b16 %v784
    %v3556 = vunpack.c.h.b16 %v784
    %v3557 = vunpack.c.l.b16 %v785
    %v3558 = vunpack.c.h.b16 %v785
    %v3559 = vunpack.c.l.b16 %v786
    %v3560 = vunpack.c.h.b16 %v786
    %v3561 = vunpack.c.l.b16 %v787
    %v3562 = vunpack.c.h.b16 %v787
    %v3563 = vunpack.c.l.b16 %v788
    %v3564 = vunpack.c.h.b16 %v788
    %v3565 = vunpack.c.l.b16 %v789
    %v3566 = vunpack.c.h.b16 %v789
    %v3567 = vunpack.c.l.b16 %v790
    %v3568 = vunpack.c.h.b16 %v790
    %v3569 = vunpack.c.l.b16 %v791
    %v3570 = vunpack.c.h.b16 %v791
    %v3571 = vunpack.c.l.b16 %v792
    %v3572 = vunpack.c.h.b16 %v792
    %v3573 = vunpack.c.l.b16 %v793
    %v3574 = vunpack.c.h.b16 %v793
    %v3575 = vunpack.c.l.b16 %v794
    %v3576 = vunpack.c.h.b16 %v794
    %v3577 = vunpack.c.l.b16 %v795
    %v3578 = vunpack.c.h.b16 %v795
    %v3579 = vunpack.c.l.b16 %v796
    %v3580 = vunpack.c.h.b16 %v796
    %v3581 = vunpack.c.l.b16 %v797
    %v3582 = vunpack.c.h.b16 %v797
    %v3583 = vunpack.c.l.b16 %v798
    %v3584 = vunpack.c.h.b16 %v798
    %v3585 = vunpack.c.l.b16 %v799
    %v3586 = vunpack.c.h.b16 %v799
    %v3587 = vunpack.c.l.b16 %v800
    %v3588 = vunpack.c.h.b16 %v800
    %v3589 = vunpack.c.l.b16 %v801
    %v3590 = vunpack.c.h.b16 %v801
    %v3591 = vunpack.c.l.b16 %v802
    %v3592 = vunpack.c.h.b16 %v802
    %v3593 = vunpack.c.l.b16 %v803
    %v3594 = vunpack.c.h.b16 %v803
    %v3595 = vunpack.c.l.b16 %v804
    %v3596 = vunpack.c.h.b16 %v804
    %v3597 = vunpack.c.l.b16 %v805
    %v3598 = vunpack.c.h.b16 %v805
    %v3599 = vunpack.c.l.b16 %v806
    %v3600 = vunpack.c.h.b16 %v806
    %v3601 = vunpack.c.l.b16 %v807
    %v3602 = vunpack.c.h.b16 %v807
    %v3603 = vunpack.c.l.b16 %v808
    %v3604 = vunpack.c.h.b16 %v808
    %v3605 = vunpack.c.l.b16 %v809
    %v3606 = vunpack.c.h.b16 %v809
    %v3607 = vunpack.c.l.b16 %v810
    %v3608 = vunpack.c.h.b16 %v810
    %v3609 = vunpack.c.l.b16 %v811
    %v3610 = vunpack.c.h.b16 %v811
    %v3611 = vunpack.c.l.b16 %v812
    %v3612 = vunpack.c.h.b16 %v812
    %v3613 = vunpack.c.l.b16 %v813
    %v3614 = vunpack.c.h.b16 %v813
    %v3615 = vunpack.c.l.b16 %v814
    %v3616 = vunpack.c.h.b16 %v814
    %v3617 = vunpack.c.l.b16 %v815
    %v3618 = vunpack.c.h.b16 %v815
    %v3619 = vunpack.c.l.b16 %v816
    %v3620 = vunpack.c.h.b16 %v816
    %v3621 = vunpack.c.l.b16 %v817
    %v3622 = vunpack.c.h.b16 %v817
    %v3623 = vunpack.c.l.b16 %v818
    %v3624 = vunpack.c.h.b16 %v818
    %v3625 = vunpack.c.l.b16 %v819
    %v3626 = vunpack.c.h.b16 %v819
    %v3627 = vunpack.c.l.b16 %v820
    %v3628 = vunpack.c.h.b16 %v820
    %v3629 = vunpack.c.l.b16 %v821
    %v3630 = vunpack.c.h.b16 %v821
    %v3631 = vunpack.c.l.b16 %v822
    %v3632 = vunpack.c.h.b16 %v822
    %v3633 = vunpack.c.l.b16 %v823
    %v3634 = vunpack.c.h.b16 %v823
    %v3635 = vunpack.c.l.b16 %v824
    %v3636 = vunpack.c.h.b16 %v824
    %v3637 = vunpack.c.l.b16 %v825
    %v3638 = vunpack.c.h.b16 %v825
    %v3639 = vunpack.c.l.b16 %v826
    %v3640 = vunpack.c.h.b16 %v826
    %v3641 = vunpack.c.l.b16 %v827
    %v3642 = vunpack.c.h.b16 %v827
    %v3643 = vunpack.c.l.b16 %v828
    %v3644 = vunpack.c.h.b16 %v828
    %v3645 = vunpack.c.l.b16 %v829
    %v3646 = vunpack.c.h.b16 %v829
    %v3647 = vunpack.c.l.b16 %v830
    %v3648 = vunpack.c.h.b16 %v830
    %v3649 = vunpack.c.l.b16 %v831
    %v3650 = vunpack.c.h.b16 %v831
    %v3651 = vunpack.c.l.b16 %v832
    %v3652 = vunpack.c.h.b16 %v832
    %v3653 = vunpack.c.l.b16 %v833
    %v3654 = vunpack.c.h.b16 %v833
    %v3655 = vunpack.c.l.b16 %v834
    %v3656 = vunpack.c.h.b16 %v834
    %v3657 = vunpack.c.l.b16 %v835
    %v3658 = vunpack.c.h.b16 %v835
    %v3659 = vunpack.c.l.b16 %v836
    %v3660 = vunpack.c.h.b16 %v836
    %v3661 = vunpack.c.l.b16 %v837
    %v3662 = vunpack.c.h.b16 %v837
    %v3663 = vunpack.c.l.b16 %v838
    %v3664 = vunpack.c.h.b16 %v838
    %v3665 = vunpack.c.l.b16 %v839
    %v3666 = vunpack.c.h.b16 %v839
    %v3667 = vunpack.c.l.b16 %v840
    %v3668 = vunpack.c.h.b16 %v840
    %v3669 = vunpack.c.l.b16 %v841
    %v3670 = vunpack.c.h.b16 %v841
    %v3671 = vunpack.c.l.b16 %v842
    %v3672 = vunpack.c.h.b16 %v842
    %v3673 = vunpack.c.l.b16 %v843
    %v3674 = vunpack.c.h.b16 %v843
    %v3675 = vunpack.c.l.b16 %v844
    %v3676 = vunpack.c.h.b16 %v844
    %v3677 = vunpack.c.l.b16 %v845
    %v3678 = vunpack.c.h.b16 %v845
    %v3679 = vunpack.c.l.b16 %v846
    %v3680 = vunpack.c.h.b16 %v846
    %v3681 = vunpack.c.l.b16 %v847
    %v3682 = vunpack.c.h.b16 %v847
    %v3683 = vunpack.c.l.b16 %v848
    %v3684 = vunpack.c.h.b16 %v848
    %v3685 = vunpack.c.l.b16 %v849
    %v3686 = vunpack.c.h.b16 %v849
    %v3687 = vunpack.c.l.b16 %v850
    %v3688 = vunpack.c.h.b16 %v850
    %v3689 = vunpack.c.l.b16 %v851
    %v3690 = vunpack.c.h.b16 %v851
    %v3691 = vunpack.c.l.b16 %v852
    %v3692 = vunpack.c.h.b16 %v852
    %v3693 = vunpack.c.l.b16 %v853
    %v3694 = vunpack.c.h.b16 %v853
    %v3695 = vunpack.c.l.b16 %v854
    %v3696 = vunpack.c.h.b16 %v854
    %v3697 = vunpack.c.l.b16 %v855
    %v3698 = vunpack.c.h.b16 %v855
    %v3699 = vunpack.c.l.b16 %v856
    %v3700 = vunpack.c.h.b16 %v856
    %v3701 = vunpack.c.l.b16 %v857
    %v3702 = vunpack.c.h.b16 %v857
    %v3703 = vunpack.c.l.b16 %v858
    %v3704 = vunpack.c.h.b16 %v858
    %v3705 = vunpack.c.l.b16 %v859
    %v3706 = vunpack.c.h.b16 %v859
    %v3707 = vunpack.c.l.b16 %v860
    %v3708 = vunpack.c.h.b16 %v860
    %v3709 = vunpack.c.l.b16 %v861
    %v3710 = vunpack.c.h.b16 %v861
    %v3711 = vunpack.c.l.b16 %v862
    %v3712 = vunpack.c.h.b16 %v862
    %v3713 = vunpack.c.l.b16 %v863
    %v3714 = vunpack.c.h.b16 %v863
    %v3715 = vunpack.c.l.b16 %v864
    %v3716 = vunpack.c.h.b16 %v864
    %v3717 = vunpack.c.l.b16 %v865
    %v3718 = vunpack.c.h.b16 %v865
    %v3719 = vunpack.c.l.b16 %v866
    %v3720 = vunpack.c.h.b16 %v866
    %v3721 = vunpack.c.l.b16 %v867
    %v3722 = vunpack.c.h.b16 %v867
    %v3723 = vunpack.c.l.b16 %v868
    %v3724 = vunpack.c.h.b16 %v868
    %v3725 = vunpack.c.l.b16 %v869
    %v3726 = vunpack.c.h.b16 %v869
    %v3727 = vunpack.c.l.b16 %v870
    %v3728 = vunpack.c.h.b16 %v870
    %v3729 = vunpack.c.l.b16 %v871
    %v3730 = vunpack.c.h.b16 %v871
    %v3731 = vunpack.c.l.b16 %v872
    %v3732 = vunpack.c.h.b16 %v872
    %v3733 = vunpack.c.l.b16 %v873
    %v3734 = vunpack.c.h.b16 %v873
    %v3735 = vunpack.c.l.b16 %v874
    %v3736 = vunpack.c.h.b16 %v874
    %v3737 = vunpack.c.l.b16 %v875
    %v3738 = vunpack.c.h.b16 %v875
    %v3739 = vunpack.c.l.b16 %v876
    %v3740 = vunpack.c.h.b16 %v876
    %v3741 = vunpack.c.l.b16 %v877
    %v3742 = vunpack.c.h.b16 %v877
    %v3743 = vunpack.c.l.b16 %v878
    %v3744 = vunpack.c.h.b16 %v878
    %v3745 = vunpack.c.l.b16 %v879
    %v3746 = vunpack.c.h.b16 %v879
    %v3747 = vunpack.c.l.b16 %v880
    %v3748 = vunpack.c.h.b16 %v880
    %v3749 = vunpack.c.l.b16 %v881
    %v3750 = vunpack.c.h.b16 %v881
    %v3751 = vunpack.c.l.b16 %v882
    %v3752 = vunpack.c.h.b16 %v882
    %v3753 = vunpack.c.l.b16 %v883
    %v3754 = vunpack.c.h.b16 %v883
    %v3755 = vunpack.c.l.b16 %v884
    %v3756 = vunpack.c.h.b16 %v884
    %v3757 = vunpack.c.l.b16 %v885
    %v3758 = vunpack.c.h.b16 %v885
    %v3759 = vunpack.c.l.b16 %v886
    %v3760 = vunpack.c.h.b16 %v886
    %v3761 = vunpack.c.l.b16 %v887
    %v3762 = vunpack.c.h.b16 %v887
    %v3763 = vunpack.c.l.b16 %v888
    %v3764 = vunpack.c.h.b16 %v888
    %v3765 = vunpack.c.l.b16 %v889
    %v3766 = vunpack.c.h.b16 %v889
    %v3767 = vunpack.c.l.b16 %v890
    %v3768 = vunpack.c.h.b16 %v890
    %v3769 = vunpack.c.l.b16 %v891
    %v3770 = vunpack.c.h.b16 %v891
    %v3771 = vunpack.c.l.b16 %v892
    %v3772 = vunpack.c.h.b16 %v892
    %v3773 = vunpack.c.l.b16 %v893
    %v3774 = vunpack.c.h.b16 %v893
    %v3775 = vunpack.c.l.b16 %v894
    %v3776 = vunpack.c.h.b16 %v894
    %v3777 = vunpack.c.l.b16 %v895
    %v3778 = vunpack.c.h.b16 %v895
    %v3779 = vunpack.c.l.b16 %v896
    %v3780 = vunpack.c.h.b16 %v896
    %v3781 = vunpack.c.l.b16 %v897
    %v3782 = vunpack.c.h.b16 %v897
    %v3783 = vunpack.c.l.b16 %v898
    %v3784 = vunpack.c.h.b16 %v898
    %v3785 = vunpack.c.l.b16 %v899
    %v3786 = vunpack.c.h.b16 %v899
    %v3787 = vunpack.c.l.b16 %v900
    %v3788 = vunpack.c.h.b16 %v900
    %v3789 = vunpack.c.l.b16 %v901
    %v3790 = vunpack.c.h.b16 %v901
    %v3791 = vunpack.c.l.b16 %v902
    %v3792 = vunpack.c.h.b16 %v902
    %v3793 = vunpack.c.l.b16 %v903
    %v3794 = vunpack.c.h.b16 %v903
    %v3795 = vunpack.c.l.b16 %v904
    %v3796 = vunpack.c.h.b16 %v904
    %v3797 = vunpack.c.l.b16 %v905
    %v3798 = vunpack.c.h.b16 %v905
    %v3799 = vunpack.c.l.b16 %v906
    %v3800 = vunpack.c.h.b16 %v906
    %v3801 = vunpack.c.l.b16 %v907
    %v3802 = vunpack.c.h.b16 %v907
    %v3803 = vunpack.c.l.b16 %v908
    %v3804 = vunpack.c.h.b16 %v908
    %v3805 = vunpack.c.l.b16 %v909
    %v3806 = vunpack.c.h.b16 %v909
    %v3807 = vunpack.c.l.b16 %v910
    %v3808 = vunpack.c.h.b16 %v910
    %v3809 = vunpack.c.l.b16 %v911
    %v3810 = vunpack.c.h.b16 %v911
    %v3811 = vunpack.c.l.b16 %v912
    %v3812 = vunpack.c.h.b16 %v912
    %v3813 = vunpack.c.l.b16 %v913
    %v3814 = vunpack.c.h.b16 %v913
    %v3815 = vunpack.c.l.b16 %v914
    %v3816 = vunpack.c.h.b16 %v914
    %v3817 = vunpack.c.l.b16 %v915
    %v3818 = vunpack.c.h.b16 %v915
    %v3819 = vunpack.c.l.b16 %v916
    %v3820 = vunpack.c.h.b16 %v916
    %v3821 = vunpack.c.l.b16 %v917
    %v3822 = vunpack.c.h.b16 %v917
    %v3823 = vunpack.c.l.b16 %v918
    %v3824 = vunpack.c.h.b16 %v918
    %v3825 = vunpack.c.l.b16 %v919
    %v3826 = vunpack.c.h.b16 %v919
    %v3827 = vunpack.c.l.b16 %v920
    %v3828 = vunpack.c.h.b16 %v920
    %v3829 = vunpack.c.l.b16 %v921
    %v3830 = vunpack.c.h.b16 %v921
    %v3831 = vunpack.c.l.b16 %v922
    %v3832 = vunpack.c.h.b16 %v922
    %v3833 = vunpack.c.l.b16 %v923
    %v3834 = vunpack.c.h.b16 %v923
    %v3835 = vunpack.c.l.b16 %v924
    %v3836 = vunpack.c.h.b16 %v924
    %v3837 = vunpack.c.l.b16 %v925
    %v3838 = vunpack.c.h.b16 %v925
    %v3839 = vunpack.c.l.b16 %v926
    %v3840 = vunpack.c.h.b16 %v926
    %v3841 = vunpack.c.l.b16 %v927
    %v3842 = vunpack.c.h.b16 %v927
    %v3843 = vunpack.c.l.b16 %v928
    %v3844 = vunpack.c.h.b16 %v928
    %v3845 = vunpack.c.l.b16 %v929
    %v3846 = vunpack.c.h.b16 %v929
    %v3847 = vunpack.c.l.b16 %v930
    %v3848 = vunpack.c.h.b16 %v930
    %v3849 = vunpack.c.l.b16 %v931
    %v3850 = vunpack.c.h.b16 %v931
    %v3851 = vunpack.c.l.b16 %v932
    %v3852 = vunpack.c.h.b16 %v932
    %v3853 = vunpack.c.l.b16 %v933
    %v3854 = vunpack.c.h.b16 %v933
    %v3855 = vunpack.c.l.b16 %v934
    %v3856 = vunpack.c.h.b16 %v934
    %v3857 = vunpack.c.l.b16 %v935
    %v3858 = vunpack.c.h.b16 %v935
    %v3859 = vunpack.c.l.b16 %v936
    %v3860 = vunpack.c.h.b16 %v936
    %v3861 = vunpack.c.l.b16 %v937
    %v3862 = vunpack.c.h.b16 %v937
    %v3863 = vunpack.c.l.b16 %v938
    %v3864 = vunpack.c.h.b16 %v938
    %v3865 = vunpack.c.l.b16 %v939
    %v3866 = vunpack.c.h.b16 %v939
    %v3867 = vunpack.c.l.b16 %v940
    %v3868 = vunpack.c.h.b16 %v940
    %v3869 = vunpack.c.l.b16 %v941
    %v3870 = vunpack.c.h.b16 %v941
    %v3871 = vunpack.c.l.b16 %v942
    %v3872 = vunpack.c.h.b16 %v942
    %v3873 = vunpack.c.l.b16 %v943
    %v3874 = vunpack.c.h.b16 %v943
    %v3875 = vunpack.c.l.b16 %v944
    %v3876 = vunpack.c.h.b16 %v944
    %v3877 = vunpack.c.l.b16 %v945
    %v3878 = vunpack.c.h.b16 %v945
    %v3879 = vunpack.c.l.b16 %v946
    %v3880 = vunpack.c.h.b16 %v946
    %v3881 = vunpack.c.l.b16 %v947
    %v3882 = vunpack.c.h.b16 %v947
    %v3883 = vunpack.c.l.b16 %v948
    %v3884 = vunpack.c.h.b16 %v948
    %v3885 = vunpack.c.l.b16 %v949
    %v3886 = vunpack.c.h.b16 %v949
    %v3887 = vunpack.c.l.b16 %v950
    %v3888 = vunpack.c.h.b16 %v950
    %v3889 = vunpack.c.l.b16 %v951
    %v3890 = vunpack.c.h.b16 %v951
    %v3891 = vunpack.c.l.b16 %v952
    %v3892 = vunpack.c.h.b16 %v952
    %v3893 = vunpack.c.l.b16 %v953
    %v3894 = vunpack.c.h.b16 %v953
    %v3895 = vunpack.c.l.b16 %v954
    %v3896 = vunpack.c.h.b16 %v954
    %v3897 = vunpack.c.l.b16 %v955
    %v3898 = vunpack.c.h.b16 %v955
    %v3899 = vunpack.c.l.b16 %v956
    %v3900 = vunpack.c.h.b16 %v956
    %v3901 = vunpack.c.l.b16 %v957
    %v3902 = vunpack.c.h.b16 %v957
    %v3903 = vunpack.c.l.b16 %v958
    %v3904 = vunpack.c.h.b16 %v958
    %v3905 = vunpack.c.l.b16 %v959
    %v3906 = vunpack.c.h.b16 %v959
    %v3907 = vunpack.c.l.b16 %v960
    %v3908 = vunpack.c.h.b16 %v960
    %v3909 = vunpack.c.l.b16 %v961
    %v3910 = vunpack.c.h.b16 %v961
    %v3911 = vunpack.c.l.b16 %v962
    %v3912 = vunpack.c.h.b16 %v962
    %v3913 = vunpack.c.l.b16 %v963
    %v3914 = vunpack.c.h.b16 %v963
    %v3915 = vunpack.c.l.b16 %v964
    %v3916 = vunpack.c.h.b16 %v964
    %v3917 = vunpack.c.l.b16 %v965
    %v3918 = vunpack.c.h.b16 %v965
    %v3919 = vunpack.c.l.b16 %v966
    %v3920 = vunpack.c.h.b16 %v966
    %v3921 = vunpack.c.l.b16 %v967
    %v3922 = vunpack.c.h.b16 %v967
    %v3923 = vunpack.c.l.b16 %v968
    %v3924 = vunpack.c.h.b16 %v968
    %v3925 = vunpack.c.l.b16 %v969
    %v3926 = vunpack.c.h.b16 %v969
    %v3927 = vunpack.c.l.b16 %v970
    %v3928 = vunpack.c.h.b16 %v970
    %v3929 = vunpack.c.l.b16 %v971
    %v3930 = vunpack.c.h.b16 %v971
    %v3931 = vunpack.c.l.b16 %v972
    %v3932 = vunpack.c.h.b16 %v972
    %v3933 = vunpack.c.l.b16 %v973
    %v3934 = vunpack.c.h.b16 %v973
    %v3935 = vunpack.c.l.b16 %v974
    %v3936 = vunpack.c.h.b16 %v974
    %v3937 = vunpack.c.l.b16 %v975
    %v3938 = vunpack.c.h.b16 %v975
    %v3939 = vunpack.c.l.b16 %v976
    %v3940 = vunpack.c.h.b16 %v976
    %v3941 = vunpack.c.l.b16 %v977
    %v3942 = vunpack.c.h.b16 %v977
    %v3943 = vunpack.c.l.b16 %v978
    %v3944 = vunpack.c.h.b16 %v978
    %v3945 = vunpack.c.l.b16 %v979
    %v3946 = vunpack.c.h.b16 %v979
    %v3947 = vunpack.c.l.b16 %v980
    %v3948 = vunpack.c.h.b16 %v980
    %v3949 = vunpack.c.l.b16 %v981
    %v3950 = vunpack.c.h.b16 %v981
    %v3951 = vunpack.c.l.b16 %v982
    %v3952 = vunpack.c.h.b16 %v982
    %v3953 = vunpack.c.l.b16 %v983
    %v3954 = vunpack.c.h.b16 %v983
    %v3955 = vunpack.c.l.b16 %v984
    %v3956 = vunpack.c.h.b16 %v984
    %v3957 = vunpack.c.l.b16 %v985
    %v3958 = vunpack.c.h.b16 %v985
    %v3959 = vunpack.c.l.b16 %v986
    %v3960 = vunpack.c.h.b16 %v986
    %v3961 = vunpack.c.l.b16 %v987
    %v3962 = vunpack.c.h.b16 %v987
    %v3963 = vunpack.c.l.b16 %v988
    %v3964 = vunpack.c.h.b16 %v988
    %v3965 = vunpack.c.l.b16 %v989
    %v3966 = vunpack.c.h.b16 %v989
    %v3967 = vunpack.c.l.b16 %v990
    %v3968 = vunpack.c.h.b16 %v990
    %v3969 = vunpack.c.l.b16 %v991
    %v3970 = vunpack.c.h.b16 %v991
    %v3971 = vunpack.c.l.b16 %v992
    %v3972 = vunpack.c.h.b16 %v992
    %v3973 = vunpack.c.l.b16 %v993
    %v3974 = vunpack.c.h.b16 %v993
    %v3975 = vunpack.c.l.b16 %v994
    %v3976 = vunpack.c.h.b16 %v994
    %v3977 = vunpack.c.l.b16 %v995
    %v3978 = vunpack.c.h.b16 %v995
    %v3979 = vunpack.c.l.b16 %v996
    %v3980 = vunpack.c.h.b16 %v996
    %v3981 = vunpack.c.l.b16 %v997
    %v3982 = vunpack.c.h.b16 %v997
    %v3983 = vunpack.c.l.b16 %v998
    %v3984 = vunpack.c.h.b16 %v998
    %v3985 = vunpack.c.l.b16 %v999
    %v3986 = vunpack.c.h.b16 %v999
    %v3987 = vunpack.c.l.b16 %v1000
    %v3988 = vunpack.c.h.b16 %v1000
    %v3989 = vunpack.c.l.b16 %v1001
    %v3990 = vunpack.c.h.b16 %v1001
    %v3991 = vunpack.c.l.b16 %v1002
    %v3992 = vunpack.c.h.b16 %v1002
    %v3993 = vunpack.c.l.b16 %v1003
    %v3994 = vunpack.c.h.b16 %v1003
    %v3995 = vunpack.c.l.b16 %v1004
    %v3996 = vunpack.c.h.b16 %v1004
    %v3997 = vunpack.c.l.b16 %v1005
    %v3998 = vunpack.c.h.b16 %v1005
    %v3999 = vunpack.c.l.b16 %v1006
    %v4000 = vunpack.c.h.b16 %v1006
    %v4001 = vunpack.c.l.b16 %v1007
    %v4002 = vunpack.c.h.b16 %v1007
    %v4003 = vunpack.c.l.b16 %v1008
    %v4004 = vunpack.c.h.b16 %v1008
    %v4005 = vunpack.c.l.b16 %v1009
    %v4006 = vunpack.c.h.b16 %v1009
    %v4007 = vunpack.c.l.b16 %v1010
    %v4008 = vunpack.c.h.b16 %v1010
    %v4009 = vunpack.c.l.b16 %v1011
    %v4010 = vunpack.c.h.b16 %v1011
    %v4011 = vunpack.c.l.b16 %v1012
    %v4012 = vunpack.c.h.b16 %v1012
    %v4013 = vunpack.c.l.b16 %v1013
    %v4014 = vunpack.c.h.b16 %v1013
    %v4015 = vunpack.c.l.b16 %v1014
    %v4016 = vunpack.c.h.b16 %v1014
    %v4017 = vunpack.c.l.b16 %v1015
    %v4018 = vunpack.c.h.b16 %v1015
    %v4019 = vunpack.c.l.b16 %v1016
    %v4020 = vunpack.c.h.b16 %v1016
    %v4021 = vunpack.c.l.b16 %v1017
    %v4022 = vunpack.c.h.b16 %v1017
    %v4023 = vunpack.c.l.b16 %v1018
    %v4024 = vunpack.c.h.b16 %v1018
    %v4025 = vunpack.c.l.b16 %v1019
    %v4026 = vunpack.c.h.b16 %v1019
    %v4027 = vunpack.c.l.b16 %v1020
    %v4028 = vunpack.c.h.b16 %v1020
    %v4029 = vunpack.c.l.b16 %v1021
    %v4030 = vunpack.c.h.b16 %v1021
    %v4031 = vunpack.c.l.b16 %v1022
    %v4032 = vunpack.c.h.b16 %v1022
    %v4033 = vunpack.c.l.b16 %v1023
    %v4034 = vunpack.c.h.b16 %v1023
    %v4035 = vunpack.c.l.b16 %v1024
    %v4036 = vunpack.c.h.b16 %v1024
    %v4037 = vunpack.c.l.b16 %v1025
    %v4038 = vunpack.c.h.b16 %v1025
    %v4039 = vunpack.c.l.b16 %v1026
    %v4040 = vunpack.c.h.b16 %v1026
    %v4041 = vunpack.c.l.b16 %v1027
    %v4042 = vunpack.c.h.b16 %v1027
    %v4043 = vunpack.c.l.b16 %v1028
    %v4044 = vunpack.c.h.b16 %v1028
    %v4045 = vunpack.c.l.b16 %v1029
    %v4046 = vunpack.c.h.b16 %v1029
    %v4047 = vunpack.c.l.b16 %v1030
    %v4048 = vunpack.c.h.b16 %v1030
    %v4049 = vunpack.c.l.b16 %v1031
    %v4050 = vunpack.c.h.b16 %v1031
    %v4051 = vunpack.c.l.b16 %v1032
    %v4052 = vunpack.c.h.b16 %v1032
    %v4053 = vunpack.c.l.b16 %v1033
    %v4054 = vunpack.c.h.b16 %v1033
    %v4055 = vunpack.c.l.b16 %v1034
    %v4056 = vunpack.c.h.b16 %v1034
    %v4057 = vunpack.c.l.b16 %v1035
    %v4058 = vunpack.c.h.b16 %v1035
    %v4059 = vunpack.c.l.b16 %v1036
    %v4060 = vunpack.c.h.b16 %v1036
    %v4061 = vunpack.c.l.b16 %v1037
    %v4062 = vunpack.c.h.b16 %v1037
    %v4063 = vunpack.c.l.b16 %v1038
    %v4064 = vunpack.c.h.b16 %v1038
    %v4065 = vunpack.c.l.b16 %v1039
    %v4066 = vunpack.c.h.b16 %v1039
    %v4067 = vunpack.c.l.b16 %v1040
    %v4068 = vunpack.c.h.b16 %v1040
    %v4069 = vunpack.c.l.b16 %v1041
    %v4070 = vunpack.c.h.b16 %v1041
    %v4071 = vunpack.c.l.b16 %v1042
    %v4072 = vunpack.c.h.b16 %v1042
    %v4073 = vunpack.c.l.b16 %v1043
    %v4074 = vunpack.c.h.b16 %v1043
    %v4075 = vunpack.c.l.b16 %v1044
    %v4076 = vunpack.c.h.b16 %v1044
    %v4077 = vunpack.c.l.b16 %v1045
    %v4078 = vunpack.c.h.b16 %v1045
    %v4079 = vunpack.c.l.b16 %v1046
    %v4080 = vunpack.c.h.b16 %v1046
    %v4081 = vunpack.c.l.b16 %v1047
    %v4082 = vunpack.c.h.b16 %v1047
    %v4083 = vunpack.c.l.b16 %v1048
    %v4084 = vunpack.c.h.b16 %v1048
    %v4085 = vunpack.c.l.b16 %v1049
    %v4086 = vunpack.c.h.b16 %v1049
    %v4087 = vunpack.c.l.b16 %v1050
    %v4088 = vunpack.c.h.b16 %v1050
    %v4089 = vunpack.c.l.b16 %v1051
    %v4090 = vunpack.c.h.b16 %v1051
    %v4091 = vunpack.c.l.b16 %v1052
    %v4092 = vunpack.c.h.b16 %v1052
    %v4093 = vunpack.c.l.b16 %v1053
    %v4094 = vunpack.c.h.b16 %v1053
    %v4095 = vunpack.c.l.b16 %v1054
    %v4096 = vunpack.c.h.b16 %v1054
    %v4097 = vunpack.c.l.b16 %v1055
    %v4098 = vunpack.c.h.b16 %v1055
    %v4099 = vunpack.c.l.b16 %v1056
    %v4100 = vunpack.c.h.b16 %v1056
    %v4101 = vunpack.c.l.b16 %v1057
    %v4102 = vunpack.c.h.b16 %v1057
    %v4103 = vunpack.c.l.b16 %v1058
    %v4104 = vunpack.c.h.b16 %v1058
    %v4105 = vunpack.c.l.b16 %v1059
    %v4106 = vunpack.c.h.b16 %v1059
    %v4107 = vunpack.c.l.b16 %v1060
    %v4108 = vunpack.c.h.b16 %v1060
    %v4109 = vunpack.c.l.b16 %v1061
    %v4110 = vunpack.c.h.b16 %v1061
    %v4111 = vunpack.c.l.b16 %v1062
    %v4112 = vunpack.c.h.b16 %v1062
    %v4113 = vunpack.c.l.b16 %v1063
    %v4114 = vunpack.c.h.b16 %v1063
    %v4115 = vunpack.c.l.b16 %v1064
    %v4116 = vunpack.c.h.b16 %v1064
    %v4117 = vunpack.c.l.b16 %v1065
    %v4118 = vunpack.c.h.b16 %v1065
    %v4119 = vunpack.c.l.b16 %v1066
    %v4120 = vunpack.c.h.b16 %v1066
    %v4121 = vunpack.c.l.b16 %v1067
    %v4122 = vunpack.c.h.b16 %v1067
    %v4123 = vunpack.c.l.b16 %v1068
    %v4124 = vunpack.c.h.b16 %v1068
    %v4125 = vunpack.c.l.b16 %v1069
    %v4126 = vunpack.c.h.b16 %v1069
    %v4127 = vunpack.c.l.b16 %v1070
    %v4128 = vunpack.c.h.b16 %v1070
    %v4129 = vunpack.c.l.b16 %v1071
    %v4130 = vunpack.c.h.b16 %v1071
    %v4131 = vunpack.c.l.b16 %v1072
    %v4132 = vunpack.c.h.b16 %v1072
    %v4133 = vunpack.c.l.b16 %v1073
    %v4134 = vunpack.c.h.b16 %v1073
    %v4135 = vunpack.c.l.b16 %v1074
    %v4136 = vunpack.c.h.b16 %v1074
    %v4137 = vunpack.c.l.b16 %v1075
    %v4138 = vunpack.c.h.b16 %v1075
    %v4139 = vunpack.c.l.b16 %v1076
    %v4140 = vunpack.c.h.b16 %v1076
    %v4141 = vunpack.c.l.b16 %v1077
    %v4142 = vunpack.c.h.b16 %v1077
    %v4143 = vunpack.c.l.b16 %v1078
    %v4144 = vunpack.c.h.b16 %v1078
    %v4145 = vunpack.c.l.b16 %v1079
    %v4146 = vunpack.c.h.b16 %v1079
    %v4147 = vunpack.c.l.b16 %v1080
    %v4148 = vunpack.c.h.b16 %v1080
    %v4149 = vunpack.c.l.b16 %v1081
    %v4150 = vunpack.c.h.b16 %v1081
    %v4151 = vunpack.c.l.b16 %v1082
    %v4152 = vunpack.c.h.b16 %v1082
    %v4153 = vunpack.c.l.b16 %v1083
    %v4154 = vunpack.c.h.b16 %v1083
    %v4155 = vunpack.c.l.b16 %v1084
    %v4156 = vunpack.c.h.b16 %v1084
    %v4157 = vunpack.c.l.b16 %v1085
    %v4158 = vunpack.c.h.b16 %v1085
    %v4159 = vunpack.c.l.b16 %v1086
    %v4160 = vunpack.c.h.b16 %v1086
    %v4161 = vunpack.c.l.b16 %v1087
    %v4162 = vunpack.c.h.b16 %v1087
    %v4163 = vunpack.c.l.b16 %v1088
    %v4164 = vunpack.c.h.b16 %v1088
    %v4165 = vunpack.c.l.b16 %v1089
    %v4166 = vunpack.c.h.b16 %v1089
    %v4167 = vunpack.c.l.b16 %v1090
    %v4168 = vunpack.c.h.b16 %v1090
    %v4169 = vunpack.c.l.b16 %v1091
    %v4170 = vunpack.c.h.b16 %v1091
    %v4171 = vunpack.c.l.b16 %v1092
    %v4172 = vunpack.c.h.b16 %v1092
    %v4173 = vunpack.c.l.b16 %v1093
    %v4174 = vunpack.c.h.b16 %v1093
    %v4175 = vunpack.c.l.b16 %v1094
    %v4176 = vunpack.c.h.b16 %v1094
    %v4177 = vunpack.c.l.b16 %v1095
    %v4178 = vunpack.c.h.b16 %v1095
    %v4179 = vunpack.c.l.b16 %v1096
    %v4180 = vunpack.c.h.b16 %v1096
    %v4181 = vunpack.c.l.b16 %v1097
    %v4182 = vunpack.c.h.b16 %v1097
    %v4183 = vunpack.c.l.b16 %v1098
    %v4184 = vunpack.c.h.b16 %v1098
    %v4185 = vunpack.c.l.b16 %v1099
    %v4186 = vunpack.c.h.b16 %v1099
    %v4187 = vunpack.c.l.b16 %v1100
    %v4188 = vunpack.c.h.b16 %v1100
    %v4189 = vunpack.c.l.b16 %v1101
    %v4190 = vunpack.c.h.b16 %v1101
    %v4191 = vunpack.c.l.b16 %v1102
    %v4192 = vunpack.c.h.b16 %v1102
    %v4193 = vunpack.c.l.b16 %v1103
    %v4194 = vunpack.c.h.b16 %v1103
    %v4195 = vunpack.c.l.b16 %v1104
    %v4196 = vunpack.c.h.b16 %v1104
    %v4197 = vunpack.c.l.b16 %v1105
    %v4198 = vunpack.c.h.b16 %v1105
    %v4199 = vunpack.c.l.b16 %v1106
    %v4200 = vunpack.c.h.b16 %v1106
    %v4201 = vunpack.c.l.b16 %v1107
    %v4202 = vunpack.c.h.b16 %v1107
    %v4203 = vunpack.c.l.b16 %v1108
    %v4204 = vunpack.c.h.b16 %v1108
    %v4205 = vunpack.c.l.b16 %v1109
    %v4206 = vunpack.c.h.b16 %v1109
    %v4207 = vunpack.c.l.b16 %v1110
    %v4208 = vunpack.c.h.b16 %v1110
    %v4209 = vunpack.c.l.b16 %v1111
    %v4210 = vunpack.c.h.b16 %v1111
    %v4211 = vunpack.c.l.b16 %v1112
    %v4212 = vunpack.c.h.b16 %v1112
    %v4213 = vunpack.c.l.b16 %v1113
    %v4214 = vunpack.c.h.b16 %v1113
    %v4215 = vunpack.c.l.b16 %v1114
    %v4216 = vunpack.c.h.b16 %v1114
    %v4217 = vunpack.c.l.b16 %v1115
    %v4218 = vunpack.c.h.b16 %v1115
    %v4219 = vunpack.c.l.b16 %v1116
    %v4220 = vunpack.c.h.b16 %v1116
    %v4221 = vunpack.c.l.b16 %v1117
    %v4222 = vunpack.c.h.b16 %v1117
    %v4223 = vunpack.c.l.b16 %v1118
    %v4224 = vunpack.c.h.b16 %v1118
    %v4225 = vunpack.c.l.b16 %v1119
    %v4226 = vunpack.c.h.b16 %v1119
    %v4227 = vunpack.c.l.b16 %v1120
    %v4228 = vunpack.c.h.b16 %v1120
    %v4229 = vunpack.c.l.b16 %v1121
    %v4230 = vunpack.c.h.b16 %v1121
    %v4231 = vunpack.c.l.b16 %v1122
    %v4232 = vunpack.c.h.b16 %v1122
    %v4233 = vunpack.c.l.b16 %v1123
    %v4234 = vunpack.c.h.b16 %v1123
    %v4235 = vunpack.c.l.b16 %v1124
    %v4236 = vunpack.c.h.b16 %v1124
    %v4237 = vunpack.c.l.b16 %v1125
    %v4238 = vunpack.c.h.b16 %v1125
    %v4239 = vunpack.c.l.b16 %v1126
    %v4240 = vunpack.c.h.b16 %v1126
    %v4241 = vunpack.c.l.b16 %v1127
    %v4242 = vunpack.c.h.b16 %v1127
    %v4243 = vunpack.c.l.b16 %v1128
    %v4244 = vunpack.c.h.b16 %v1128
    %v4245 = vunpack.c.l.b16 %v1129
    %v4246 = vunpack.c.h.b16 %v1129
    %v4247 = vunpack.c.l.b16 %v1130
    %v4248 = vunpack.c.h.b16 %v1130
    %v4249 = vunpack.c.l.b16 %v1131
    %v4250 = vunpack.c.h.b16 %v1131
    %v4251 = vunpack.c.l.b16 %v1132
    %v4252 = vunpack.c.h.b16 %v1132
    %v4253 = vunpack.c.l.b16 %v1133
    %v4254 = vunpack.c.h.b16 %v1133
    %v4255 = vunpack.c.l.b16 %v1134
    %v4256 = vunpack.c.h.b16 %v1134
    %v4257 = vunpack.c.l.b16 %v1135
    %v4258 = vunpack.c.h.b16 %v1135
    %v4259 = vunpack.c.l.b16 %v1136
    %v4260 = vunpack.c.h.b16 %v1136
    %v4261 = vunpack.c.l.b16 %v1137
    %v4262 = vunpack.c.h.b16 %v1137
    %v4263 = vunpack.c.l.b16 %v1138
    %v4264 = vunpack.c.h.b16 %v1138
    %v4265 = vpack.c.b16 %v2225, %v2217
    %v4266 = vpack.c.b16 %v2226, %v2218
    %v4267 = vpack.c.b16 %v2227, %v2219
    %v4268 = vpack.c.b16 %v2228, %v2220
    %v4269 = vpack.c.b16 %v2229, %v2221
    %v4270 = vpack.c.b16 %v2230, %v2222
    %v4271 = vpack.c.b16 %v2231, %v2223
    %v4272 = vpack.c.b16 %v2232, %v2224
    %v4273 = vpack.c.b16 %v2241, %v2233
    %v4274 = vpack.c.b16 %v2242, %v2234
    %v4275 = vpack.c.b16 %v2243, %v2235
    %v4276 = vpack.c.b16 %v2244, %v2236
    %v4277 = vpack.c.b16 %v2245, %v2237
    %v4278 = vpack.c.b16 %v2246, %v2238
    %v4279 = vpack.c.b16 %v2247, %v2239
    %v4280 = vpack.c.b16 %v2248, %v2240
    %v4281 = vpack.c.b16 %v2257, %v2249
    %v4282 = vpack.c.b16 %v2258, %v2250
    %v4283 = vpack.c.b16 %v2259, %v2251
    %v4284 = vpack.c.b16 %v2260, %v2252
    %v4285 = vpack.c.b16 %v2261, %v2253
    %v4286 = vpack.c.b16 %v2262, %v2254
    %v4287 = vpack.c.b16 %v2263, %v2255
    %v4288 = vpack.c.b16 %v2264, %v2256
    %v4289 = vpack.c.b16 %v2273, %v2265
    %v4290 = vpack.c.b16 %v2274, %v2266
    %v4291 = vpack.c.b16 %v2275, %v2267
    %v4292 = vpack.c.b16 %v2276, %v2268
    %v4293 = vpack.c.b16 %v2277, %v2269
    %v4294 = vpack.c.b16 %v2278, %v2270
    %v4295 = vpack.c.b16 %v2279, %v2271
    %v4296 = vpack.c.b16 %v2280, %v2272
    %v4297 = vpack.c.b16 %v2289, %v2281
    %v4298 = vpack.c.b16 %v2290, %v2282
    %v4299 = vpack.c.b16 %v2291, %v2283
    %v4300 = vpack.c.b16 %v2292, %v2284
    %v4301 = vpack.c.b16 %v2293, %v2285
    %v4302 = vpack.c.b16 %v2294, %v2286
    %v4303 = vpack.c.b16 %v2295, %v2287
    %v4304 = vpack.c.b16 %v2296, %v2288
    %v4305 = vpack.c.b16 %v2305, %v2297
    %v4306 = vpack.c.b16 %v2306, %v2298
    %v4307 = vpack.c.b16 %v2307, %v2299
    %v4308 = vpack.c.b16 %v2308, %v2300
    %v4309 = vpack.c.b16 %v2309, %v2301
    %v4310 = vpack.c.b16 %v2310, %v2302
    %v4311 = vpack.c.b16 %v2311, %v2303
    %v4312 = vpack.c.b16 %v2312, %v2304
    %v4313 = vpack.c.b16 %v2321, %v2313
    %v4314 = vpack.c.b16 %v2322, %v2314
    %v4315 = vpack.c.b16 %v2323, %v2315
    %v4316 = vpack.c.b16 %v2324, %v2316
    %v4317 = vpack.c.b16 %v2325, %v2317
    %v4318 = vpack.c.b16 %v2326, %v2318
    %v4319 = vpack.c.b16 %v2327, %v2319
    %v4320 = vpack.c.b16 %v2328, %v2320
    %v4321 = vpack.c.b16 %v2337, %v2329
    %v4322 = vpack.c.b16 %v2338, %v2330
    %v4323 = vpack.c.b16 %v2339, %v2331
    %v4324 = vpack.c.b16 %v2340, %v2332
    %v4325 = vpack.c.b16 %v2341, %v2333
    %v4326 = vpack.c.b16 %v2342, %v2334
    %v4327 = vpack.c.b16 %v2343, %v2335
    %v4328 = vpack.c.b16 %v2344, %v2336
    %v4329 = vpack.c.b16 %v2353, %v2345
    %v4330 = vpack.c.b16 %v2354, %v2346
    %v4331 = vpack.c.b16 %v2355, %v2347
    %v4332 = vpack.c.b16 %v2356, %v2348
    %v4333 = vpack.c.b16 %v2357, %v2349
    %v4334 = vpack.c.b16 %v2358, %v2350
    %v4335 = vpack.c.b16 %v2359, %v2351
    %v4336 = vpack.c.b16 %v2360, %v2352
    %v4337 = vpack.c.b16 %v2369, %v2361
    %v4338 = vpack.c.b16 %v2370, %v2362
    %v4339 = vpack.c.b16 %v2371, %v2363
    %v4340 = vpack.c.b16 %v2372, %v2364
    %v4341 = vpack.c.b16 %v2373, %v2365
    %v4342 = vpack.c.b16 %v2374, %v2366
    %v4343 = vpack.c.b16 %v2375, %v2367
    %v4344 = vpack.c.b16 %v2376, %v2368
    %v4345 = vpack.c.b16 %v2385, %v2377
    %v4346 = vpack.c.b16 %v2386, %v2378
    %v4347 = vpack.c.b16 %v2387, %v2379
    %v4348 = vpack.c.b16 %v2388, %v2380
    %v4349 = vpack.c.b16 %v2389, %v2381
    %v4350 = vpack.c.b16 %v2390, %v2382
    %v4351 = vpack.c.b16 %v2391, %v2383
    %v4352 = vpack.c.b16 %v2392, %v2384
    %v4353 = vpack.c.b16 %v2401, %v2393
    %v4354 = vpack.c.b16 %v2402, %v2394
    %v4355 = vpack.c.b16 %v2403, %v2395
    %v4356 = vpack.c.b16 %v2404, %v2396
    %v4357 = vpack.c.b16 %v2405, %v2397
    %v4358 = vpack.c.b16 %v2406, %v2398
    %v4359 = vpack.c.b16 %v2407, %v2399
    %v4360 = vpack.c.b16 %v2408, %v2400
    %v4361 = vpack.c.b16 %v2417, %v2409
    %v4362 = vpack.c.b16 %v2418, %v2410
    %v4363 = vpack.c.b16 %v2419, %v2411
    %v4364 = vpack.c.b16 %v2420, %v2412
    %v4365 = vpack.c.b16 %v2421, %v2413
    %v4366 = vpack.c.b16 %v2422, %v2414
    %v4367 = vpack.c.b16 %v2423, %v2415
    %v4368 = vpack.c.b16 %v2424, %v2416
    %v4369 = vpack.c.b16 %v2433, %v2425
    %v4370 = vpack.c.b16 %v2434, %v2426
    %v4371 = vpack.c.b16 %v2435, %v2427
    %v4372 = vpack.c.b16 %v2436, %v2428
    %v4373 = vpack.c.b16 %v2437, %v2429
    %v4374 = vpack.c.b16 %v2438, %v2430
    %v4375 = vpack.c.b16 %v2439, %v2431
    %v4376 = vpack.c.b16 %v2440, %v2432
    %v4377 = vpack.c.b16 %v2449, %v2441
    %v4378 = vpack.c.b16 %v2450, %v2442
    %v4379 = vpack.c.b16 %v2451, %v2443
    %v4380 = vpack.c.b16 %v2452, %v2444
    %v4381 = vpack.c.b16 %v2453, %v2445
    %v4382 = vpack.c.b16 %v2454, %v2446
    %v4383 = vpack.c.b16 %v2455, %v2447
    %v4384 = vpack.c.b16 %v2456, %v2448
    %v4385 = vpack.c.b16 %v2465, %v2457
    %v4386 = vpack.c.b16 %v2466, %v2458
    %v4387 = vpack.c.b16 %v2467, %v2459
    %v4388 = vpack.c.b16 %v2468, %v2460
    %v4389 = vpack.c.b16 %v2469, %v2461
    %v4390 = vpack.c.b16 %v2470, %v2462
    %v4391 = vpack.c.b16 %v2471, %v2463
    %v4392 = vpack.c.b16 %v2472, %v2464
    %v4393 = vpack.c.b16 %v2481, %v2473
    %v4394 = vpack.c.b16 %v2482, %v2474
    %v4395 = vpack.c.b16 %v2483, %v2475
    %v4396 = vpack.c.b16 %v2484, %v2476
    %v4397 = vpack.c.b16 %v2485, %v2477
    %v4398 = vpack.c.b16 %v2486, %v2478
    %v4399 = vpack.c.b16 %v2487, %v2479
    %v4400 = vpack.c.b16 %v2488, %v2480
    %v4401 = vpack.c.b16 %v2497, %v2489
    %v4402 = vpack.c.b16 %v2498, %v2490
    %v4403 = vpack.c.b16 %v2499, %v2491
    %v4404 = vpack.c.b16 %v2500, %v2492
    %v4405 = vpack.c.b16 %v2501, %v2493
    %v4406 = vpack.c.b16 %v2502, %v2494
    %v4407 = vpack.c.b16 %v2503, %v2495
    %v4408 = vpack.c.b16 %v2504, %v2496
    %v4409 = vpack.c.b16 %v2513, %v2505
    %v4410 = vpack.c.b16 %v2514, %v2506
    %v4411 = vpack.c.b16 %v2515, %v2507
    %v4412 = vpack.c.b16 %v2516, %v2508
    %v4413 = vpack.c.b16 %v2517, %v2509
    %v4414 = vpack.c.b16 %v2518, %v2510
    %v4415 = vpack.c.b16 %v2519, %v2511
    %v4416 = vpack.c.b16 %v2520, %v2512
    %v4417 = vpack.c.b16 %v2529, %v2521
    %v4418 = vpack.c.b16 %v2530, %v2522
    %v4419 = vpack.c.b16 %v2531, %v2523
    %v4420 = vpack.c.b16 %v2532, %v2524
    %v4421 = vpack.c.b16 %v2533, %v2525
    %v4422 = vpack.c.b16 %v2534, %v2526
    %v4423 = vpack.c.b16 %v2535, %v2527
    %v4424 = vpack.c.b16 %v2536, %v2528
    %v4425 = vpack.c.b16 %v2545, %v2537
    %v4426 = vpack.c.b16 %v2546, %v2538
    %v4427 = vpack.c.b16 %v2547, %v2539
    %v4428 = vpack.c.b16 %v2548, %v2540
    %v4429 = vpack.c.b16 %v2549, %v2541
    %v4430 = vpack.c.b16 %v2550, %v2542
    %v4431 = vpack.c.b16 %v2551, %v2543
    %v4432 = vpack.c.b16 %v2552, %v2544
    %v4433 = vpack.c.b16 %v2561, %v2553
    %v4434 = vpack.c.b16 %v2562, %v2554
    %v4435 = vpack.c.b16 %v2563, %v2555
    %v4436 = vpack.c.b16 %v2564, %v2556
    %v4437 = vpack.c.b16 %v2565, %v2557
    %v4438 = vpack.c.b16 %v2566, %v2558
    %v4439 = vpack.c.b16 %v2567, %v2559
    %v4440 = vpack.c.b16 %v2568, %v2560
    %v4441 = vpack.c.b16 %v2577, %v2569
    %v4442 = vpack.c.b16 %v2578, %v2570
    %v4443 = vpack.c.b16 %v2579, %v2571
    %v4444 = vpack.c.b16 %v2580, %v2572
    %v4445 = vpack.c.b16 %v2581, %v2573
    %v4446 = vpack.c.b16 %v2582, %v2574
    %v4447 = vpack.c.b16 %v2583, %v2575
    %v4448 = vpack.c.b16 %v2584, %v2576
    %v4449 = vpack.c.b16 %v2593, %v2585
    %v4450 = vpack.c.b16 %v2594, %v2586
    %v4451 = vpack.c.b16 %v2595, %v2587
    %v4452 = vpack.c.b16 %v2596, %v2588
    %v4453 = vpack.c.b16 %v2597, %v2589
    %v4454 = vpack.c.b16 %v2598, %v2590
    %v4455 = vpack.c.b16 %v2599, %v2591
    %v4456 = vpack.c.b16 %v2600, %v2592
    %v4457 = vpack.c.b16 %v2609, %v2601
    %v4458 = vpack.c.b16 %v2610, %v2602
    %v4459 = vpack.c.b16 %v2611, %v2603
    %v4460 = vpack.c.b16 %v2612, %v2604
    %v4461 = vpack.c.b16 %v2613, %v2605
    %v4462 = vpack.c.b16 %v2614, %v2606
    %v4463 = vpack.c.b16 %v2615, %v2607
    %v4464 = vpack.c.b16 %v2616, %v2608
    %v4465 = vpack.c.b16 %v2625, %v2617
    %v4466 = vpack.c.b16 %v2626, %v2618
    %v4467 = vpack.c.b16 %v2627, %v2619
    %v4468 = vpack.c.b16 %v2628, %v2620
    %v4469 = vpack.c.b16 %v2629, %v2621
    %v4470 = vpack.c.b16 %v2630, %v2622
    %v4471 = vpack.c.b16 %v2631, %v2623
    %v4472 = vpack.c.b16 %v2632, %v2624
    %v4473 = vpack.c.b16 %v2641, %v2633
    %v4474 = vpack.c.b16 %v2642, %v2634
    %v4475 = vpack.c.b16 %v2643, %v2635
    %v4476 = vpack.c.b16 %v2644, %v2636
    %v4477 = vpack.c.b16 %v2645, %v2637
    %v4478 = vpack.c.b16 %v2646, %v2638
    %v4479 = vpack.c.b16 %v2647, %v2639
    %v4480 = vpack.c.b16 %v2648, %v2640
    %v4481 = vpack.c.b16 %v2657, %v2649
    %v4482 = vpack.c.b16 %v2658, %v2650
    %v4483 = vpack.c.b16 %v2659, %v2651
    %v4484 = vpack.c.b16 %v2660, %v2652
    %v4485 = vpack.c.b16 %v2661, %v2653
    %v4486 = vpack.c.b16 %v2662, %v2654
    %v4487 = vpack.c.b16 %v2663, %v2655
    %v4488 = vpack.c.b16 %v2664, %v2656
    %v4489 = vpack.c.b16 %v2673, %v2665
    %v4490 = vpack.c.b16 %v2674, %v2666
    %v4491 = vpack.c.b16 %v2675, %v2667
    %v4492 = vpack.c.b16 %v2676, %v2668
    %v4493 = vpack.c.b16 %v2677, %v2669
    %v4494 = vpack.c.b16 %v2678, %v2670
    %v4495 = vpack.c.b16 %v2679, %v2671
    %v4496 = vpack.c.b16 %v2680, %v2672
    %v4497 = vpack.c.b16 %v2689, %v2681
    %v4498 = vpack.c.b16 %v2690, %v2682
    %v4499 = vpack.c.b16 %v2691, %v2683
    %v4500 = vpack.c.b16 %v2692, %v2684
    %v4501 = vpack.c.b16 %v2693, %v2685
    %v4502 = vpack.c.b16 %v2694, %v2686
    %v4503 = vpack.c.b16 %v2695, %v2687
    %v4504 = vpack.c.b16 %v2696, %v2688
    %v4505 = vpack.c.b16 %v2705, %v2697
    %v4506 = vpack.c.b16 %v2706, %v2698
    %v4507 = vpack.c.b16 %v2707, %v2699
    %v4508 = vpack.c.b16 %v2708, %v2700
    %v4509 = vpack.c.b16 %v2709, %v2701
    %v4510 = vpack.c.b16 %v2710, %v2702
    %v4511 = vpack.c.b16 %v2711, %v2703
    %v4512 = vpack.c.b16 %v2712, %v2704
    %v4513 = vpack.c.b16 %v2721, %v2713
    %v4514 = vpack.c.b16 %v2722, %v2714
    %v4515 = vpack.c.b16 %v2723, %v2715
    %v4516 = vpack.c.b16 %v2724, %v2716
    %v4517 = vpack.c.b16 %v2725, %v2717
    %v4518 = vpack.c.b16 %v2726, %v2718
    %v4519 = vpack.c.b16 %v2727, %v2719
    %v4520 = vpack.c.b16 %v2728, %v2720
    %v4521 = vpack.c.b16 %v2737, %v2729
    %v4522 = vpack.c.b16 %v2738, %v2730
    %v4523 = vpack.c.b16 %v2739, %v2731
    %v4524 = vpack.c.b16 %v2740, %v2732
    %v4525 = vpack.c.b16 %v2741, %v2733
    %v4526 = vpack.c.b16 %v2742, %v2734
    %v4527 = vpack.c.b16 %v2743, %v2735
    %v4528 = vpack.c.b16 %v2744, %v2736
    %v4529 = vpack.c.b16 %v2753, %v2745
    %v4530 = vpack.c.b16 %v2754, %v2746
    %v4531 = vpack.c.b16 %v2755, %v2747
    %v4532 = vpack.c.b16 %v2756, %v2748
    %v4533 = vpack.c.b16 %v2757, %v2749
    %v4534 = vpack.c.b16 %v2758, %v2750
    %v4535 = vpack.c.b16 %v2759, %v2751
    %v4536 = vpack.c.b16 %v2760, %v2752
    %v4537 = vpack.c.b16 %v2769, %v2761
    %v4538 = vpack.c.b16 %v2770, %v2762
    %v4539 = vpack.c.b16 %v2771, %v2763
    %v4540 = vpack.c.b16 %v2772, %v2764
    %v4541 = vpack.c.b16 %v2773, %v2765
    %v4542 = vpack.c.b16 %v2774, %v2766
    %v4543 = vpack.c.b16 %v2775, %v2767
    %v4544 = vpack.c.b16 %v2776, %v2768
    %v4545 = vpack.c.b16 %v2785, %v2777
    %v4546 = vpack.c.b16 %v2786, %v2778
    %v4547 = vpack.c.b16 %v2787, %v2779
    %v4548 = vpack.c.b16 %v2788, %v2780
    %v4549 = vpack.c.b16 %v2789, %v2781
    %v4550 = vpack.c.b16 %v2790, %v2782
    %v4551 = vpack.c.b16 %v2791, %v2783
    %v4552 = vpack.c.b16 %v2792, %v2784
    %v4553 = vpack.c.b16 %v2801, %v2793
    %v4554 = vpack.c.b16 %v2802, %v2794
    %v4555 = vpack.c.b16 %v2803, %v2795
    %v4556 = vpack.c.b16 %v2804, %v2796
    %v4557 = vpack.c.b16 %v2805, %v2797
    %v4558 = vpack.c.b16 %v2806, %v2798
    %v4559 = vpack.c.b16 %v2807, %v2799
    %v4560 = vpack.c.b16 %v2808, %v2800
    %v4561 = vpack.c.b16 %v2817, %v2809
    %v4562 = vpack.c.b16 %v2818, %v2810
    %v4563 = vpack.c.b16 %v2819, %v2811
    %v4564 = vpack.c.b16 %v2820, %v2812
    %v4565 = vpack.c.b16 %v2821, %v2813
    %v4566 = vpack.c.b16 %v2822, %v2814
    %v4567 = vpack.c.b16 %v2823, %v2815
    %v4568 = vpack.c.b16 %v2824, %v2816
    %v4569 = vpack.c.b16 %v2833, %v2825
    %v4570 = vpack.c.b16 %v2834, %v2826
    %v4571 = vpack.c.b16 %v2835, %v2827
    %v4572 = vpack.c.b16 %v2836, %v2828
    %v4573 = vpack.c.b16 %v2837, %v2829
    %v4574 = vpack.c.b16 %v2838, %v2830
    %v4575 = vpack.c.b16 %v2839, %v2831
    %v4576 = vpack.c.b16 %v2840, %v2832
    %v4577 = vpack.c.b16 %v2849, %v2841
    %v4578 = vpack.c.b16 %v2850, %v2842
    %v4579 = vpack.c.b16 %v2851, %v2843
    %v4580 = vpack.c.b16 %v2852, %v2844
    %v4581 = vpack.c.b16 %v2853, %v2845
    %v4582 = vpack.c.b16 %v2854, %v2846
    %v4583 = vpack.c.b16 %v2855, %v2847
    %v4584 = vpack.c.b16 %v2856, %v2848
    %v4585 = vpack.c.b16 %v2865, %v2857
    %v4586 = vpack.c.b16 %v2866, %v2858
    %v4587 = vpack.c.b16 %v2867, %v2859
    %v4588 = vpack.c.b16 %v2868, %v2860
    %v4589 = vpack.c.b16 %v2869, %v2861
    %v4590 = vpack.c.b16 %v2870, %v2862
    %v4591 = vpack.c.b16 %v2871, %v2863
    %v4592 = vpack.c.b16 %v2872, %v2864
    %v4593 = vpack.c.b16 %v2881, %v2873
    %v4594 = vpack.c.b16 %v2882, %v2874
    %v4595 = vpack.c.b16 %v2883, %v2875
    %v4596 = vpack.c.b16 %v2884, %v2876
    %v4597 = vpack.c.b16 %v2885, %v2877
    %v4598 = vpack.c.b16 %v2886, %v2878
    %v4599 = vpack.c.b16 %v2887, %v2879
    %v4600 = vpack.c.b16 %v2888, %v2880
    %v4601 = vpack.c.b16 %v2897, %v2889
    %v4602 = vpack.c.b16 %v2898, %v2890
    %v4603 = vpack.c.b16 %v2899, %v2891
    %v4604 = vpack.c.b16 %v2900, %v2892
    %v4605 = vpack.c.b16 %v2901, %v2893
    %v4606 = vpack.c.b16 %v2902, %v2894
    %v4607 = vpack.c.b16 %v2903, %v2895
    %v4608 = vpack.c.b16 %v2904, %v2896
    %v4609 = vpack.c.b16 %v2913, %v2905
    %v4610 = vpack.c.b16 %v2914, %v2906
    %v4611 = vpack.c.b16 %v2915, %v2907
    %v4612 = vpack.c.b16 %v2916, %v2908
    %v4613 = vpack.c.b16 %v2917, %v2909
    %v4614 = vpack.c.b16 %v2918, %v2910
    %v4615 = vpack.c.b16 %v2919, %v2911
    %v4616 = vpack.c.b16 %v2920, %v2912
    %v4617 = vpack.c.b16 %v2929, %v2921
    %v4618 = vpack.c.b16 %v2930, %v2922
    %v4619 = vpack.c.b16 %v2931, %v2923
    %v4620 = vpack.c.b16 %v2932, %v2924
    %v4621 = vpack.c.b16 %v2933, %v2925
    %v4622 = vpack.c.b16 %v2934, %v2926
    %v4623 = vpack.c.b16 %v2935, %v2927
    %v4624 = vpack.c.b16 %v2936, %v2928
    %v4625 = vpack.c.b16 %v2945, %v2937
    %v4626 = vpack.c.b16 %v2946, %v2938
    %v4627 = vpack.c.b16 %v2947, %v2939
    %v4628 = vpack.c.b16 %v2948, %v2940
    %v4629 = vpack.c.b16 %v2949, %v2941
    %v4630 = vpack.c.b16 %v2950, %v2942
    %v4631 = vpack.c.b16 %v2951, %v2943
    %v4632 = vpack.c.b16 %v2952, %v2944
    %v4633 = vpack.c.b16 %v2961, %v2953
    %v4634 = vpack.c.b16 %v2962, %v2954
    %v4635 = vpack.c.b16 %v2963, %v2955
    %v4636 = vpack.c.b16 %v2964, %v2956
    %v4637 = vpack.c.b16 %v2965, %v2957
    %v4638 = vpack.c.b16 %v2966, %v2958
    %v4639 = vpack.c.b16 %v2967, %v2959
    %v4640 = vpack.c.b16 %v2968, %v2960
    %v4641 = vpack.c.b16 %v2977, %v2969
    %v4642 = vpack.c.b16 %v2978, %v2970
    %v4643 = vpack.c.b16 %v2979, %v2971
    %v4644 = vpack.c.b16 %v2980, %v2972
    %v4645 = vpack.c.b16 %v2981, %v2973
    %v4646 = vpack.c.b16 %v2982, %v2974
    %v4647 = vpack.c.b16 %v2983, %v2975
    %v4648 = vpack.c.b16 %v2984, %v2976
    %v4649 = vpack.c.b16 %v2993, %v2985
    %v4650 = vpack.c.b16 %v2994, %v2986
    %v4651 = vpack.c.b16 %v2995, %v2987
    %v4652 = vpack.c.b16 %v2996, %v2988
    %v4653 = vpack.c.b16 %v2997, %v2989
    %v4654 = vpack.c.b16 %v2998, %v2990
    %v4655 = vpack.c.b16 %v2999, %v2991
    %v4656 = vpack.c.b16 %v3000, %v2992
    %v4657 = vpack.c.b16 %v3009, %v3001
    %v4658 = vpack.c.b16 %v3010, %v3002
    %v4659 = vpack.c.b16 %v3011, %v3003
    %v4660 = vpack.c.b16 %v3012, %v3004
    %v4661 = vpack.c.b16 %v3013, %v3005
    %v4662 = vpack.c.b16 %v3014, %v3006
    %v4663 = vpack.c.b16 %v3015, %v3007
    %v4664 = vpack.c.b16 %v3016, %v3008
    %v4665 = vpack.c.b16 %v3025, %v3017
    %v4666 = vpack.c.b16 %v3026, %v3018
    %v4667 = vpack.c.b16 %v3027, %v3019
    %v4668 = vpack.c.b16 %v3028, %v3020
    %v4669 = vpack.c.b16 %v3029, %v3021
    %v4670 = vpack.c.b16 %v3030, %v3022
    %v4671 = vpack.c.b16 %v3031, %v3023
    %v4672 = vpack.c.b16 %v3032, %v3024
    %v4673 = vpack.c.b16 %v3041, %v3033
    %v4674 = vpack.c.b16 %v3042, %v3034
    %v4675 = vpack.c.b16 %v3043, %v3035
    %v4676 = vpack.c.b16 %v3044, %v3036
    %v4677 = vpack.c.b16 %v3045, %v3037
    %v4678 = vpack.c.b16 %v3046, %v3038
    %v4679 = vpack.c.b16 %v3047, %v3039
    %v4680 = vpack.c.b16 %v3048, %v3040
    %v4681 = vpack.c.b16 %v3057, %v3049
    %v4682 = vpack.c.b16 %v3058, %v3050
    %v4683 = vpack.c.b16 %v3059, %v3051
    %v4684 = vpack.c.b16 %v3060, %v3052
    %v4685 = vpack.c.b16 %v3061, %v3053
    %v4686 = vpack.c.b16 %v3062, %v3054
    %v4687 = vpack.c.b16 %v3063, %v3055
    %v4688 = vpack.c.b16 %v3064, %v3056
    %v4689 = vpack.c.b16 %v3073, %v3065
    %v4690 = vpack.c.b16 %v3074, %v3066
    %v4691 = vpack.c.b16 %v3075, %v3067
    %v4692 = vpack.c.b16 %v3076, %v3068
    %v4693 = vpack.c.b16 %v3077, %v3069
    %v4694 = vpack.c.b16 %v3078, %v3070
    %v4695 = vpack.c.b16 %v3079, %v3071
    %v4696 = vpack.c.b16 %v3080, %v3072
    %v4697 = vpack.c.b16 %v3089, %v3081
    %v4698 = vpack.c.b16 %v3090, %v3082
    %v4699 = vpack.c.b16 %v3091, %v3083
    %v4700 = vpack.c.b16 %v3092, %v3084
    %v4701 = vpack.c.b16 %v3093, %v3085
    %v4702 = vpack.c.b16 %v3094, %v3086
    %v4703 = vpack.c.b16 %v3095, %v3087
    %v4704 = vpack.c.b16 %v3096, %v3088
    %v4705 = vpack.c.b16 %v3105, %v3097
    %v4706 = vpack.c.b16 %v3106, %v3098
    %v4707 = vpack.c.b16 %v3107, %v3099
    %v4708 = vpack.c.b16 %v3108, %v3100
    %v4709 = vpack.c.b16 %v3109, %v3101
    %v4710 = vpack.c.b16 %v3110, %v3102
    %v4711 = vpack.c.b16 %v3111, %v3103
    %v4712 = vpack.c.b16 %v3112, %v3104
    %v4713 = vpack.c.b16 %v3121, %v3113
    %v4714 = vpack.c.b16 %v3122, %v3114
    %v4715 = vpack.c.b16 %v3123, %v3115
    %v4716 = vpack.c.b16 %v3124, %v3116
    %v4717 = vpack.c.b16 %v3125, %v3117
    %v4718 = vpack.c.b16 %v3126, %v3118
    %v4719 = vpack.c.b16 %v3127, %v3119
    %v4720 = vpack.c.b16 %v3128, %v3120
    %v4721 = vpack.c.b16 %v3137, %v3129
    %v4722 = vpack.c.b16 %v3138, %v3130
    %v4723 = vpack.c.b16 %v3139, %v3131
    %v4724 = vpack.c.b16 %v3140, %v3132
    %v4725 = vpack.c.b16 %v3141, %v3133
    %v4726 = vpack.c.b16 %v3142, %v3134
    %v4727 = vpack.c.b16 %v3143, %v3135
    %v4728 = vpack.c.b16 %v3144, %v3136
    %v4729 = vpack.c.b16 %v3153, %v3145
    %v4730 = vpack.c.b16 %v3154, %v3146
    %v4731 = vpack.c.b16 %v3155, %v3147
    %v4732 = vpack.c.b16 %v3156, %v3148
    %v4733 = vpack.c.b16 %v3157, %v3149
    %v4734 = vpack.c.b16 %v3158, %v3150
    %v4735 = vpack.c.b16 %v3159, %v3151
    %v4736 = vpack.c.b16 %v3160, %v3152
    %v4737 = vpack.c.b16 %v3169, %v3161
    %v4738 = vpack.c.b16 %v3170, %v3162
    %v4739 = vpack.c.b16 %v3171, %v3163
    %v4740 = vpack.c.b16 %v3172, %v3164
    %v4741 = vpack.c.b16 %v3173, %v3165
    %v4742 = vpack.c.b16 %v3174, %v3166
    %v4743 = vpack.c.b16 %v3175, %v3167
    %v4744 = vpack.c.b16 %v3176, %v3168
    %v4745 = vpack.c.b16 %v3185, %v3177
    %v4746 = vpack.c.b16 %v3186, %v3178
    %v4747 = vpack.c.b16 %v3187, %v3179
    %v4748 = vpack.c.b16 %v3188, %v3180
    %v4749 = vpack.c.b16 %v3189, %v3181
    %v4750 = vpack.c.b16 %v3190, %v3182
    %v4751 = vpack.c.b16 %v3191, %v3183
    %v4752 = vpack.c.b16 %v3192, %v3184
    %v4753 = vpack.c.b16 %v3201, %v3193
    %v4754 = vpack.c.b16 %v3202, %v3194
    %v4755 = vpack.c.b16 %v3203, %v3195
    %v4756 = vpack.c.b16 %v3204, %v3196
    %v4757 = vpack.c.b16 %v3205, %v3197
    %v4758 = vpack.c.b16 %v3206, %v3198
    %v4759 = vpack.c.b16 %v3207, %v3199
    %v4760 = vpack.c.b16 %v3208, %v3200
    %v4761 = vpack.c.b16 %v3217, %v3209
    %v4762 = vpack.c.b16 %v3218, %v3210
    %v4763 = vpack.c.b16 %v3219, %v3211
    %v4764 = vpack.c.b16 %v3220, %v3212
    %v4765 = vpack.c.b16 %v3221, %v3213
    %v4766 = vpack.c.b16 %v3222, %v3214
    %v4767 = vpack.c.b16 %v3223, %v3215
    %v4768 = vpack.c.b16 %v3224, %v3216
    %v4769 = vpack.c.b16 %v3233, %v3225
    %v4770 = vpack.c.b16 %v3234, %v3226
    %v4771 = vpack.c.b16 %v3235, %v3227
    %v4772 = vpack.c.b16 %v3236, %v3228
    %v4773 = vpack.c.b16 %v3237, %v3229
    %v4774 = vpack.c.b16 %v3238, %v3230
    %v4775 = vpack.c.b16 %v3239, %v3231
    %v4776 = vpack.c.b16 %v3240, %v3232
    %v4777 = vpack.c.b16 %v3249, %v3241
    %v4778 = vpack.c.b16 %v3250, %v3242
    %v4779 = vpack.c.b16 %v3251, %v3243
    %v4780 = vpack.c.b16 %v3252, %v3244
    %v4781 = vpack.c.b16 %v3253, %v3245
    %v4782 = vpack.c.b16 %v3254, %v3246
    %v4783 = vpack.c.b16 %v3255, %v3247
    %v4784 = vpack.c.b16 %v3256, %v3248
    %v4785 = vpack.c.b16 %v3265, %v3257
    %v4786 = vpack.c.b16 %v3266, %v3258
    %v4787 = vpack.c.b16 %v3267, %v3259
    %v4788 = vpack.c.b16 %v3268, %v3260
    %v4789 = vpack.c.b16 %v3269, %v3261
    %v4790 = vpack.c.b16 %v3270, %v3262
    %v4791 = vpack.c.b16 %v3271, %v3263
    %v4792 = vpack.c.b16 %v3272, %v3264
    %v4793 = vpack.c.b16 %v3281, %v3273
    %v4794 = vpack.c.b16 %v3282, %v3274
    %v4795 = vpack.c.b16 %v3283, %v3275
    %v4796 = vpack.c.b16 %v3284, %v3276
    %v4797 = vpack.c.b16 %v3285, %v3277
    %v4798 = vpack.c.b16 %v3286, %v3278
    %v4799 = vpack.c.b16 %v3287, %v3279
    %v4800 = vpack.c.b16 %v3288, %v3280
    %v4801 = vpack.c.b16 %v3297, %v3289
    %v4802 = vpack.c.b16 %v3298, %v3290
    %v4803 = vpack.c.b16 %v3299, %v3291
    %v4804 = vpack.c.b16 %v3300, %v3292
    %v4805 = vpack.c.b16 %v3301, %v3293
    %v4806 = vpack.c.b16 %v3302, %v3294
    %v4807 = vpack.c.b16 %v3303, %v3295
    %v4808 = vpack.c.b16 %v3304, %v3296
    %v4809 = vpack.c.b16 %v3313, %v3305
    %v4810 = vpack.c.b16 %v3314, %v3306
    %v4811 = vpack.c.b16 %v3315, %v3307
    %v4812 = vpack.c.b16 %v3316, %v3308
    %v4813 = vpack.c.b16 %v3317, %v3309
    %v4814 = vpack.c.b16 %v3318, %v3310
    %v4815 = vpack.c.b16 %v3319, %v3311
    %v4816 = vpack.c.b16 %v3320, %v3312
    %v4817 = vpack.c.b16 %v3329, %v3321
    %v4818 = vpack.c.b16 %v3330, %v3322
    %v4819 = vpack.c.b16 %v3331, %v3323
    %v4820 = vpack.c.b16 %v3332, %v3324
    %v4821 = vpack.c.b16 %v3333, %v3325
    %v4822 = vpack.c.b16 %v3334, %v3326
    %v4823 = vpack.c.b16 %v3335, %v3327
    %v4824 = vpack.c.b16 %v3336, %v3328
    %v4825 = vpack.c.b16 %v3345, %v3337
    %v4826 = vpack.c.b16 %v3346, %v3338
    %v4827 = vpack.c.b16 %v3347, %v3339
    %v4828 = vpack.c.b16 %v3348, %v3340
    %v4829 = vpack.c.b16 %v3349, %v3341
    %v4830 = vpack.c.b16 %v3350, %v3342
    %v4831 = vpack.c.b16 %v3351, %v3343
    %v4832 = vpack.c.b16 %v3352, %v3344
    %v4833 = vpack.c.b16 %v3361, %v3353
    %v4834 = vpack.c.b16 %v3362, %v3354
    %v4835 = vpack.c.b16 %v3363, %v3355
    %v4836 = vpack.c.b16 %v3364, %v3356
    %v4837 = vpack.c.b16 %v3365, %v3357
    %v4838 = vpack.c.b16 %v3366, %v3358
    %v4839 = vpack.c.b16 %v3367, %v3359
    %v4840 = vpack.c.b16 %v3368, %v3360
    %v4841 = vpack.c.b16 %v3377, %v3369
    %v4842 = vpack.c.b16 %v3378, %v3370
    %v4843 = vpack.c.b16 %v3379, %v3371
    %v4844 = vpack.c.b16 %v3380, %v3372
    %v4845 = vpack.c.b16 %v3381, %v3373
    %v4846 = vpack.c.b16 %v3382, %v3374
    %v4847 = vpack.c.b16 %v3383, %v3375
    %v4848 = vpack.c.b16 %v3384, %v3376
    %v4849 = vpack.c.b16 %v3393, %v3385
    %v4850 = vpack.c.b16 %v3394, %v3386
    %v4851 = vpack.c.b16 %v3395, %v3387
    %v4852 = vpack.c.b16 %v3396, %v3388
    %v4853 = vpack.c.b16 %v3397, %v3389
    %v4854 = vpack.c.b16 %v3398, %v3390
    %v4855 = vpack.c.b16 %v3399, %v3391
    %v4856 = vpack.c.b16 %v3400, %v3392
    %v4857 = vpack.c.b16 %v3409, %v3401
    %v4858 = vpack.c.b16 %v3410, %v3402
    %v4859 = vpack.c.b16 %v3411, %v3403
    %v4860 = vpack.c.b16 %v3412, %v3404
    %v4861 = vpack.c.b16 %v3413, %v3405
    %v4862 = vpack.c.b16 %v3414, %v3406
    %v4863 = vpack.c.b16 %v3415, %v3407
    %v4864 = vpack.c.b16 %v3416, %v3408
    %v4865 = vpack.c.b16 %v3425, %v3417
    %v4866 = vpack.c.b16 %v3426, %v3418
    %v4867 = vpack.c.b16 %v3427, %v3419
    %v4868 = vpack.c.b16 %v3428, %v3420
    %v4869 = vpack.c.b16 %v3429, %v3421
    %v4870 = vpack.c.b16 %v3430, %v3422
    %v4871 = vpack.c.b16 %v3431, %v3423
    %v4872 = vpack.c.b16 %v3432, %v3424
    %v4873 = vpack.c.b16 %v3441, %v3433
    %v4874 = vpack.c.b16 %v3442, %v3434
    %v4875 = vpack.c.b16 %v3443, %v3435
    %v4876 = vpack.c.b16 %v3444, %v3436
    %v4877 = vpack.c.b16 %v3445, %v3437
    %v4878 = vpack.c.b16 %v3446, %v3438
    %v4879 = vpack.c.b16 %v3447, %v3439
    %v4880 = vpack.c.b16 %v3448, %v3440
    %v4881 = vpack.c.b16 %v3457, %v3449
    %v4882 = vpack.c.b16 %v3458, %v3450
    %v4883 = vpack.c.b16 %v3459, %v3451
    %v4884 = vpack.c.b16 %v3460, %v3452
    %v4885 = vpack.c.b16 %v3461, %v3453
    %v4886 = vpack.c.b16 %v3462, %v3454
    %v4887 = vpack.c.b16 %v3463, %v3455
    %v4888 = vpack.c.b16 %v3464, %v3456
    %v4889 = vpack.c.b16 %v3473, %v3465
    %v4890 = vpack.c.b16 %v3474, %v3466
    %v4891 = vpack.c.b16 %v3475, %v3467
    %v4892 = vpack.c.b16 %v3476, %v3468
    %v4893 = vpack.c.b16 %v3477, %v3469
    %v4894 = vpack.c.b16 %v3478, %v3470
    %v4895 = vpack.c.b16 %v3479, %v3471
    %v4896 = vpack.c.b16 %v3480, %v3472
    %v4897 = vpack.c.b16 %v3489, %v3481
    %v4898 = vpack.c.b16 %v3490, %v3482
    %v4899 = vpack.c.b16 %v3491, %v3483
    %v4900 = vpack.c.b16 %v3492, %v3484
    %v4901 = vpack.c.b16 %v3493, %v3485
    %v4902 = vpack.c.b16 %v3494, %v3486
    %v4903 = vpack.c.b16 %v3495, %v3487
    %v4904 = vpack.c.b16 %v3496, %v3488
    %v4905 = vpack.c.b16 %v3505, %v3497
    %v4906 = vpack.c.b16 %v3506, %v3498
    %v4907 = vpack.c.b16 %v3507, %v3499
    %v4908 = vpack.c.b16 %v3508, %v3500
    %v4909 = vpack.c.b16 %v3509, %v3501
    %v4910 = vpack.c.b16 %v3510, %v3502
    %v4911 = vpack.c.b16 %v3511, %v3503
    %v4912 = vpack.c.b16 %v3512, %v3504
    %v4913 = vpack.c.b16 %v3521, %v3513
    %v4914 = vpack.c.b16 %v3522, %v3514
    %v4915 = vpack.c.b16 %v3523, %v3515
    %v4916 = vpack.c.b16 %v3524, %v3516
    %v4917 = vpack.c.b16 %v3525, %v3517
    %v4918 = vpack.c.b16 %v3526, %v3518
    %v4919 = vpack.c.b16 %v3527, %v3519
    %v4920 = vpack.c.b16 %v3528, %v3520
    %v4921 = vpack.c.b16 %v3537, %v3529
    %v4922 = vpack.c.b16 %v3538, %v3530
    %v4923 = vpack.c.b16 %v3539, %v3531
    %v4924 = vpack.c.b16 %v3540, %v3532
    %v4925 = vpack.c.b16 %v3541, %v3533
    %v4926 = vpack.c.b16 %v3542, %v3534
    %v4927 = vpack.c.b16 %v3543, %v3535
    %v4928 = vpack.c.b16 %v3544, %v3536
    %v4929 = vpack.c.b16 %v3553, %v3545
    %v4930 = vpack.c.b16 %v3554, %v3546
    %v4931 = vpack.c.b16 %v3555, %v3547
    %v4932 = vpack.c.b16 %v3556, %v3548
    %v4933 = vpack.c.b16 %v3557, %v3549
    %v4934 = vpack.c.b16 %v3558, %v3550
    %v4935 = vpack.c.b16 %v3559, %v3551
    %v4936 = vpack.c.b16 %v3560, %v3552
    %v4937 = vpack.c.b16 %v3569, %v3561
    %v4938 = vpack.c.b16 %v3570, %v3562
    %v4939 = vpack.c.b16 %v3571, %v3563
    %v4940 = vpack.c.b16 %v3572, %v3564
    %v4941 = vpack.c.b16 %v3573, %v3565
    %v4942 = vpack.c.b16 %v3574, %v3566
    %v4943 = vpack.c.b16 %v3575, %v3567
    %v4944 = vpack.c.b16 %v3576, %v3568
    %v4945 = vpack.c.b16 %v3585, %v3577
    %v4946 = vpack.c.b16 %v3586, %v3578
    %v4947 = vpack.c.b16 %v3587, %v3579
    %v4948 = vpack.c.b16 %v3588, %v3580
    %v4949 = vpack.c.b16 %v3589, %v3581
    %v4950 = vpack.c.b16 %v3590, %v3582
    %v4951 = vpack.c.b16 %v3591, %v3583
    %v4952 = vpack.c.b16 %v3592, %v3584
    %v4953 = vpack.c.b16 %v3601, %v3593
    %v4954 = vpack.c.b16 %v3602, %v3594
    %v4955 = vpack.c.b16 %v3603, %v3595
    %v4956 = vpack.c.b16 %v3604, %v3596
    %v4957 = vpack.c.b16 %v3605, %v3597
    %v4958 = vpack.c.b16 %v3606, %v3598
    %v4959 = vpack.c.b16 %v3607, %v3599
    %v4960 = vpack.c.b16 %v3608, %v3600
    %v4961 = vpack.c.b16 %v3617, %v3609
    %v4962 = vpack.c.b16 %v3618, %v3610
    %v4963 = vpack.c.b16 %v3619, %v3611
    %v4964 = vpack.c.b16 %v3620, %v3612
    %v4965 = vpack.c.b16 %v3621, %v3613
    %v4966 = vpack.c.b16 %v3622, %v3614
    %v4967 = vpack.c.b16 %v3623, %v3615
    %v4968 = vpack.c.b16 %v3624, %v3616
    %v4969 = vpack.c.b16 %v3633, %v3625
    %v4970 = vpack.c.b16 %v3634, %v3626
    %v4971 = vpack.c.b16 %v3635, %v3627
    %v4972 = vpack.c.b16 %v3636, %v3628
    %v4973 = vpack.c.b16 %v3637, %v3629
    %v4974 = vpack.c.b16 %v3638, %v3630
    %v4975 = vpack.c.b16 %v3639, %v3631
    %v4976 = vpack.c.b16 %v3640, %v3632
    %v4977 = vpack.c.b16 %v3649, %v3641
    %v4978 = vpack.c.b16 %v3650, %v3642
    %v4979 = vpack.c.b16 %v3651, %v3643
    %v4980 = vpack.c.b16 %v3652, %v3644
    %v4981 = vpack.c.b16 %v3653, %v3645
    %v4982 = vpack.c.b16 %v3654, %v3646
    %v4983 = vpack.c.b16 %v3655, %v3647
    %v4984 = vpack.c.b16 %v3656, %v3648
    %v4985 = vpack.c.b16 %v3665, %v3657
    %v4986 = vpack.c.b16 %v3666, %v3658
    %v4987 = vpack.c.b16 %v3667, %v3659
    %v4988 = vpack.c.b16 %v3668, %v3660
    %v4989 = vpack.c.b16 %v3669, %v3661
    %v4990 = vpack.c.b16 %v3670, %v3662
    %v4991 = vpack.c.b16 %v3671, %v3663
    %v4992 = vpack.c.b16 %v3672, %v3664
    %v4993 = vpack.c.b16 %v3681, %v3673
    %v4994 = vpack.c.b16 %v3682, %v3674
    %v4995 = vpack.c.b16 %v3683, %v3675
    %v4996 = vpack.c.b16 %v3684, %v3676
    %v4997 = vpack.c.b16 %v3685, %v3677
    %v4998 = vpack.c.b16 %v3686, %v3678
    %v4999 = vpack.c.b16 %v3687, %v3679
    %v5000 = vpack.c.b16 %v3688, %v3680
    %v5001 = vpack.c.b16 %v3697, %v3689
    %v5002 = vpack.c.b16 %v3698, %v3690
    %v5003 = vpack.c.b16 %v3699, %v3691
    %v5004 = vpack.c.b16 %v3700, %v3692
    %v5005 = vpack.c.b16 %v3701, %v3693
    %v5006 = vpack.c.b16 %v3702, %v3694
    %v5007 = vpack.c.b16 %v3703, %v3695
    %v5008 = vpack.c.b16 %v3704, %v3696
    %v5009 = vpack.c.b16 %v3713, %v3705
    %v5010 = vpack.c.b16 %v3714, %v3706
    %v5011 = vpack.c.b16 %v3715, %v3707
    %v5012 = vpack.c.b16 %v3716, %v3708
    %v5013 = vpack.c.b16 %v3717, %v3709
    %v5014 = vpack.c.b16 %v3718, %v3710
    %v5015 = vpack.c.b16 %v3719, %v3711
    %v5016 = vpack.c.b16 %v3720, %v3712
    %v5017 = vpack.c.b16 %v3729, %v3721
    %v5018 = vpack.c.b16 %v3730, %v3722
    %v5019 = vpack.c.b16 %v3731, %v3723
    %v5020 = vpack.c.b16 %v3732, %v3724
    %v5021 = vpack.c.b16 %v3733, %v3725
    %v5022 = vpack.c.b16 %v3734, %v3726
    %v5023 = vpack.c.b16 %v3735, %v3727
    %v5024 = vpack.c.b16 %v3736, %v3728
    %v5025 = vpack.c.b16 %v3745, %v3737
    %v5026 = vpack.c.b16 %v3746, %v3738
    %v5027 = vpack.c.b16 %v3747, %v3739
    %v5028 = vpack.c.b16 %v3748, %v3740
    %v5029 = vpack.c.b16 %v3749, %v3741
    %v5030 = vpack.c.b16 %v3750, %v3742
    %v5031 = vpack.c.b16 %v3751, %v3743
    %v5032 = vpack.c.b16 %v3752, %v3744
    %v5033 = vpack.c.b16 %v3761, %v3753
    %v5034 = vpack.c.b16 %v3762, %v3754
    %v5035 = vpack.c.b16 %v3763, %v3755
    %v5036 = vpack.c.b16 %v3764, %v3756
    %v5037 = vpack.c.b16 %v3765, %v3757
    %v5038 = vpack.c.b16 %v3766, %v3758
    %v5039 = vpack.c.b16 %v3767, %v3759
    %v5040 = vpack.c.b16 %v3768, %v3760
    %v5041 = vpack.c.b16 %v3777, %v3769
    %v5042 = vpack.c.b16 %v3778, %v3770
    %v5043 = vpack.c.b16 %v3779, %v3771
    %v5044 = vpack.c.b16 %v3780, %v3772
    %v5045 = vpack.c.b16 %v3781, %v3773
    %v5046 = vpack.c.b16 %v3782, %v3774
    %v5047 = vpack.c.b16 %v3783, %v3775
    %v5048 = vpack.c.b16 %v3784, %v3776
    %v5049 = vpack.c.b16 %v3793, %v3785
    %v5050 = vpack.c.b16 %v3794, %v3786
    %v5051 = vpack.c.b16 %v3795, %v3787
    %v5052 = vpack.c.b16 %v3796, %v3788
    %v5053 = vpack.c.b16 %v3797, %v3789
    %v5054 = vpack.c.b16 %v3798, %v3790
    %v5055 = vpack.c.b16 %v3799, %v3791
    %v5056 = vpack.c.b16 %v3800, %v3792
    %v5057 = vpack.c.b16 %v3809, %v3801
    %v5058 = vpack.c.b16 %v3810, %v3802
    %v5059 = vpack.c.b16 %v3811, %v3803
    %v5060 = vpack.c.b16 %v3812, %v3804
    %v5061 = vpack.c.b16 %v3813, %v3805
    %v5062 = vpack.c.b16 %v3814, %v3806
    %v5063 = vpack.c.b16 %v3815, %v3807
    %v5064 = vpack.c.b16 %v3816, %v3808
    %v5065 = vpack.c.b16 %v3825, %v3817
    %v5066 = vpack.c.b16 %v3826, %v3818
    %v5067 = vpack.c.b16 %v3827, %v3819
    %v5068 = vpack.c.b16 %v3828, %v3820
    %v5069 = vpack.c.b16 %v3829, %v3821
    %v5070 = vpack.c.b16 %v3830, %v3822
    %v5071 = vpack.c.b16 %v3831, %v3823
    %v5072 = vpack.c.b16 %v3832, %v3824
    %v5073 = vpack.c.b16 %v3841, %v3833
    %v5074 = vpack.c.b16 %v3842, %v3834
    %v5075 = vpack.c.b16 %v3843, %v3835
    %v5076 = vpack.c.b16 %v3844, %v3836
    %v5077 = vpack.c.b16 %v3845, %v3837
    %v5078 = vpack.c.b16 %v3846, %v3838
    %v5079 = vpack.c.b16 %v3847, %v3839
    %v5080 = vpack.c.b16 %v3848, %v3840
    %v5081 = vpack.c.b16 %v3857, %v3849
    %v5082 = vpack.c.b16 %v3858, %v3850
    %v5083 = vpack.c.b16 %v3859, %v3851
    %v5084 = vpack.c.b16 %v3860, %v3852
    %v5085 = vpack.c.b16 %v3861, %v3853
    %v5086 = vpack.c.b16 %v3862, %v3854
    %v5087 = vpack.c.b16 %v3863, %v3855
    %v5088 = vpack.c.b16 %v3864, %v3856
    %v5089 = vpack.c.b16 %v3873, %v3865
    %v5090 = vpack.c.b16 %v3874, %v3866
    %v5091 = vpack.c.b16 %v3875, %v3867
    %v5092 = vpack.c.b16 %v3876, %v3868
    %v5093 = vpack.c.b16 %v3877, %v3869
    %v5094 = vpack.c.b16 %v3878, %v3870
    %v5095 = vpack.c.b16 %v3879, %v3871
    %v5096 = vpack.c.b16 %v3880, %v3872
    %v5097 = vpack.c.b16 %v3889, %v3881
    %v5098 = vpack.c.b16 %v3890, %v3882
    %v5099 = vpack.c.b16 %v3891, %v3883
    %v5100 = vpack.c.b16 %v3892, %v3884
    %v5101 = vpack.c.b16 %v3893, %v3885
    %v5102 = vpack.c.b16 %v3894, %v3886
    %v5103 = vpack.c.b16 %v3895, %v3887
    %v5104 = vpack.c.b16 %v3896, %v3888
    %v5105 = vpack.c.b16 %v3905, %v3897
    %v5106 = vpack.c.b16 %v3906, %v3898
    %v5107 = vpack.c.b16 %v3907, %v3899
    %v5108 = vpack.c.b16 %v3908, %v3900
    %v5109 = vpack.c.b16 %v3909, %v3901
    %v5110 = vpack.c.b16 %v3910, %v3902
    %v5111 = vpack.c.b16 %v3911, %v3903
    %v5112 = vpack.c.b16 %v3912, %v3904
    %v5113 = vpack.c.b16 %v3921, %v3913
    %v5114 = vpack.c.b16 %v3922, %v3914
    %v5115 = vpack.c.b16 %v3923, %v3915
    %v5116 = vpack.c.b16 %v3924, %v3916
    %v5117 = vpack.c.b16 %v3925, %v3917
    %v5118 = vpack.c.b16 %v3926, %v3918
    %v5119 = vpack.c.b16 %v3927, %v3919
    %v5120 = vpack.c.b16 %v3928, %v3920
    %v5121 = vpack.c.b16 %v3937, %v3929
    %v5122 = vpack.c.b16 %v3938, %v3930
    %v5123 = vpack.c.b16 %v3939, %v3931
    %v5124 = vpack.c.b16 %v3940, %v3932
    %v5125 = vpack.c.b16 %v3941, %v3933
    %v5126 = vpack.c.b16 %v3942, %v3934
    %v5127 = vpack.c.b16 %v3943, %v3935
    %v5128 = vpack.c.b16 %v3944, %v3936
    %v5129 = vpack.c.b16 %v3953, %v3945
    %v5130 = vpack.c.b16 %v3954, %v3946
    %v5131 = vpack.c.b16 %v3955, %v3947
    %v5132 = vpack.c.b16 %v3956, %v3948
    %v5133 = vpack.c.b16 %v3957, %v3949
    %v5134 = vpack.c.b16 %v3958, %v3950
    %v5135 = vpack.c.b16 %v3959, %v3951
    %v5136 = vpack.c.b16 %v3960, %v3952
    %v5137 = vpack.c.b16 %v3969, %v3961
    %v5138 = vpack.c.b16 %v3970, %v3962
    %v5139 = vpack.c.b16 %v3971, %v3963
    %v5140 = vpack.c.b16 %v3972, %v3964
    %v5141 = vpack.c.b16 %v3973, %v3965
    %v5142 = vpack.c.b16 %v3974, %v3966
    %v5143 = vpack.c.b16 %v3975, %v3967
    %v5144 = vpack.c.b16 %v3976, %v3968
    %v5145 = vpack.c.b16 %v3985, %v3977
    %v5146 = vpack.c.b16 %v3986, %v3978
    %v5147 = vpack.c.b16 %v3987, %v3979
    %v5148 = vpack.c.b16 %v3988, %v3980
    %v5149 = vpack.c.b16 %v3989, %v3981
    %v5150 = vpack.c.b16 %v3990, %v3982
    %v5151 = vpack.c.b16 %v3991, %v3983
    %v5152 = vpack.c.b16 %v3992, %v3984
    %v5153 = vpack.c.b16 %v4001, %v3993
    %v5154 = vpack.c.b16 %v4002, %v3994
    %v5155 = vpack.c.b16 %v4003, %v3995
    %v5156 = vpack.c.b16 %v4004, %v3996
    %v5157 = vpack.c.b16 %v4005, %v3997
    %v5158 = vpack.c.b16 %v4006, %v3998
    %v5159 = vpack.c.b16 %v4007, %v3999
    %v5160 = vpack.c.b16 %v4008, %v4000
    %v5161 = vpack.c.b16 %v4017, %v4009
    %v5162 = vpack.c.b16 %v4018, %v4010
    %v5163 = vpack.c.b16 %v4019, %v4011
    %v5164 = vpack.c.b16 %v4020, %v4012
    %v5165 = vpack.c.b16 %v4021, %v4013
    %v5166 = vpack.c.b16 %v4022, %v4014
    %v5167 = vpack.c.b16 %v4023, %v4015
    %v5168 = vpack.c.b16 %v4024, %v4016
    %v5169 = vpack.c.b16 %v4033, %v4025
    %v5170 = vpack.c.b16 %v4034, %v4026
    %v5171 = vpack.c.b16 %v4035, %v4027
    %v5172 = vpack.c.b16 %v4036, %v4028
    %v5173 = vpack.c.b16 %v4037, %v4029
    %v5174 = vpack.c.b16 %v4038, %v4030
    %v5175 = vpack.c.b16 %v4039, %v4031
    %v5176 = vpack.c.b16 %v4040, %v4032
    %v5177 = vpack.c.b16 %v4049, %v4041
    %v5178 = vpack.c.b16 %v4050, %v4042
    %v5179 = vpack.c.b16 %v4051, %v4043
    %v5180 = vpack.c.b16 %v4052, %v4044
    %v5181 = vpack.c.b16 %v4053, %v4045
    %v5182 = vpack.c.b16 %v4054, %v4046
    %v5183 = vpack.c.b16 %v4055, %v4047
    %v5184 = vpack.c.b16 %v4056, %v4048
    %v5185 = vpack.c.b16 %v4065, %v4057
    %v5186 = vpack.c.b16 %v4066, %v4058
    %v5187 = vpack.c.b16 %v4067, %v4059
    %v5188 = vpack.c.b16 %v4068, %v4060
    %v5189 = vpack.c.b16 %v4069, %v4061
    %v5190 = vpack.c.b16 %v4070, %v4062
    %v5191 = vpack.c.b16 %v4071, %v4063
    %v5192 = vpack.c.b16 %v4072, %v4064
    %v5193 = vpack.c.b16 %v4081, %v4073
    %v5194 = vpack.c.b16 %v4082, %v4074
    %v5195 = vpack.c.b16 %v4083, %v4075
    %v5196 = vpack.c.b16 %v4084, %v4076
    %v5197 = vpack.c.b16 %v4085, %v4077
    %v5198 = vpack.c.b16 %v4086, %v4078
    %v5199 = vpack.c.b16 %v4087, %v4079
    %v5200 = vpack.c.b16 %v4088, %v4080
    %v5201 = vpack.c.b16 %v4097, %v4089
    %v5202 = vpack.c.b16 %v4098, %v4090
    %v5203 = vpack.c.b16 %v4099, %v4091
    %v5204 = vpack.c.b16 %v4100, %v4092
    %v5205 = vpack.c.b16 %v4101, %v4093
    %v5206 = vpack.c.b16 %v4102, %v4094
    %v5207 = vpack.c.b16 %v4103, %v4095
    %v5208 = vpack.c.b16 %v4104, %v4096
    %v5209 = vpack.c.b16 %v4113, %v4105
    %v5210 = vpack.c.b16 %v4114, %v4106
    %v5211 = vpack.c.b16 %v4115, %v4107
    %v5212 = vpack.c.b16 %v4116, %v4108
    %v5213 = vpack.c.b16 %v4117, %v4109
    %v5214 = vpack.c.b16 %v4118, %v4110
    %v5215 = vpack.c.b16 %v4119, %v4111
    %v5216 = vpack.c.b16 %v4120, %v4112
    %v5217 = vpack.c.b16 %v4129, %v4121
    %v5218 = vpack.c.b16 %v4130, %v4122
    %v5219 = vpack.c.b16 %v4131, %v4123
    %v5220 = vpack.c.b16 %v4132, %v4124
    %v5221 = vpack.c.b16 %v4133, %v4125
    %v5222 = vpack.c.b16 %v4134, %v4126
    %v5223 = vpack.c.b16 %v4135, %v4127
    %v5224 = vpack.c.b16 %v4136, %v4128
    %v5225 = vpack.c.b16 %v4145, %v4137
    %v5226 = vpack.c.b16 %v4146, %v4138
    %v5227 = vpack.c.b16 %v4147, %v4139
    %v5228 = vpack.c.b16 %v4148, %v4140
    %v5229 = vpack.c.b16 %v4149, %v4141
    %v5230 = vpack.c.b16 %v4150, %v4142
    %v5231 = vpack.c.b16 %v4151, %v4143
    %v5232 = vpack.c.b16 %v4152, %v4144
    %v5233 = vpack.c.b16 %v4161, %v4153
    %v5234 = vpack.c.b16 %v4162, %v4154
    %v5235 = vpack.c.b16 %v4163, %v4155
    %v5236 = vpack.c.b16 %v4164, %v4156
    %v5237 = vpack.c.b16 %v4165, %v4157
    %v5238 = vpack.c.b16 %v4166, %v4158
    %v5239 = vpack.c.b16 %v4167, %v4159
    %v5240 = vpack.c.b16 %v4168, %v4160
    %v5241 = vpack.c.b16 %v4177, %v4169
    %v5242 = vpack.c.b16 %v4178, %v4170
    %v5243 = vpack.c.b16 %v4179, %v4171
    %v5244 = vpack.c.b16 %v4180, %v4172
    %v5245 = vpack.c.b16 %v4181, %v4173
    %v5246 = vpack.c.b16 %v4182, %v4174
    %v5247 = vpack.c.b16 %v4183, %v4175
    %v5248 = vpack.c.b16 %v4184, %v4176
    %v5249 = vpack.c.b16 %v4193, %v4185
    %v5250 = vpack.c.b16 %v4194, %v4186
    %v5251 = vpack.c.b16 %v4195, %v4187
    %v5252 = vpack.c.b16 %v4196, %v4188
    %v5253 = vpack.c.b16 %v4197, %v4189
    %v5254 = vpack.c.b16 %v4198, %v4190
    %v5255 = vpack.c.b16 %v4199, %v4191
    %v5256 = vpack.c.b16 %v4200, %v4192
    %v5257 = vpack.c.b16 %v4209, %v4201
    %v5258 = vpack.c.b16 %v4210, %v4202
    %v5259 = vpack.c.b16 %v4211, %v4203
    %v5260 = vpack.c.b16 %v4212, %v4204
    %v5261 = vpack.c.b16 %v4213, %v4205
    %v5262 = vpack.c.b16 %v4214, %v4206
    %v5263 = vpack.c.b16 %v4215, %v4207
    %v5264 = vpack.c.b16 %v4216, %v4208
    %v5265 = vpack.c.b16 %v4225, %v4217
    %v5266 = vpack.c.b16 %v4226, %v4218
    %v5267 = vpack.c.b16 %v4227, %v4219
    %v5268 = vpack.c.b16 %v4228, %v4220
    %v5269 = vpack.c.b16 %v4229, %v4221
    %v5270 = vpack.c.b16 %v4230, %v4222
    %v5271 = vpack.c.b16 %v4231, %v4223
    %v5272 = vpack.c.b16 %v4232, %v4224
    %v5273 = vpack.c.b16 %v4241, %v4233
    %v5274 = vpack.c.b16 %v4242, %v4234
    %v5275 = vpack.c.b16 %v4243, %v4235
    %v5276 = vpack.c.b16 %v4244, %v4236
    %v5277 = vpack.c.b16 %v4245, %v4237
    %v5278 = vpack.c.b16 %v4246, %v4238
    %v5279 = vpack.c.b16 %v4247, %v4239
    %v5280 = vpack.c.b16 %v4248, %v4240
    %v5281 = vpack.c.b16 %v4257, %v4249
    %v5282 = vpack.c.b16 %v4258, %v4250
    %v5283 = vpack.c.b16 %v4259, %v4251
    %v5284 = vpack.c.b16 %v4260, %v4252
    %v5285 = vpack.c.b16 %v4261, %v4253
    %v5286 = vpack.c.b16 %v4262, %v4254
    %v5287 = vpack.c.b16 %v4263, %v4255
    %v5288 = vpack.c.b16 %v4264, %v4256
    %6313 = vmatpush.bf16.msra.mxu0 %v4321
    %6314 = vmatpush.bf16.msra.mxu0 %v4313
    %6315 = vmatpush.bf16.msra.mxu0 %v4305
    %6316 = vmatpush.bf16.msra.mxu0 %v4297
    %6317 = vmatpush.bf16.msra.mxu0 %v4289
    %6318 = vmatpush.bf16.msra.mxu0 %v4281
    %6319 = vmatpush.bf16.msra.mxu0 %v4273
    %6320 = vmatpush.bf16.msra.mxu0 %v4265
    %6321 = vmatmul.bf16.gmra.mxu0 %v1159
    %v6322 = vpop.f32.mrf.mxu0
    %v6323 = vadd.f32 %v1141, %v6322
    %v6324 = vpop.f32.mrf.mxu0
    %6325 = vdwg.mxu0
    %6326 = vmatpush.bf16.msra.mxu0 %v4385
    %6327 = vmatpush.bf16.msra.mxu0 %v4377
    %6328 = vmatpush.bf16.msra.mxu0 %v4369
    %6329 = vmatpush.bf16.msra.mxu0 %v4361
    %6330 = vmatpush.bf16.msra.mxu0 %v4353
    %6331 = vmatpush.bf16.msra.mxu0 %v4345
    %6332 = vmatpush.bf16.msra.mxu0 %v4337
    %6333 = vmatpush.bf16.msra.mxu0 %v4329
    %6334 = vmatmul.bf16.gmra.mxu0 %v1160
    %v6335 = vpop.f32.mrf.mxu0
    %v6336 = vadd.f32 %v6323, %v6335
    %v6337 = vpop.f32.mrf.mxu0
    %6338 = vdwg.mxu0
    %6339 = vmatpush.bf16.msra.mxu0 %v4449
    %6340 = vmatpush.bf16.msra.mxu0 %v4441
    %6341 = vmatpush.bf16.msra.mxu0 %v4433
    %6342 = vmatpush.bf16.msra.mxu0 %v4425
    %6343 = vmatpush.bf16.msra.mxu0 %v4417
    %6344 = vmatpush.bf16.msra.mxu0 %v4409
    %6345 = vmatpush.bf16.msra.mxu0 %v4401
    %6346 = vmatpush.bf16.msra.mxu0 %v4393
    %6347 = vmatmul.bf16.gmra.mxu0 %v1161
    %v6348 = vpop.f32.mrf.mxu0
    %v6349 = vadd.f32 %v6336, %v6348
    %v6350 = vpop.f32.mrf.mxu0
    %6351 = vdwg.mxu0
    %6352 = vmatpush.bf16.msra.mxu0 %v4513
    %6353 = vmatpush.bf16.msra.mxu0 %v4505
    %6354 = vmatpush.bf16.msra.mxu0 %v4497
    %6355 = vmatpush.bf16.msra.mxu0 %v4489
    %6356 = vmatpush.bf16.msra.mxu0 %v4481
    %6357 = vmatpush.bf16.msra.mxu0 %v4473
    %6358 = vmatpush.bf16.msra.mxu0 %v4465
    %6359 = vmatpush.bf16.msra.mxu0 %v4457
    %6360 = vmatmul.bf16.gmra.mxu0 %v1162
    %v6361 = vpop.f32.mrf.mxu0
    %v6362 = vadd.f32 %v6349, %v6361
    %v6363 = vpop.f32.mrf.mxu0
    %6364 = vdwg.mxu0
    %6365 = vmatpush.bf16.msra.mxu0 %v4577
    %6366 = vmatpush.bf16.msra.mxu0 %v4569
    %6367 = vmatpush.bf16.msra.mxu0 %v4561
    %6368 = vmatpush.bf16.msra.mxu0 %v4553
    %6369 = vmatpush.bf16.msra.mxu0 %v4545
    %6370 = vmatpush.bf16.msra.mxu0 %v4537
    %6371 = vmatpush.bf16.msra.mxu0 %v4529
    %6372 = vmatpush.bf16.msra.mxu0 %v4521
    %6373 = vmatmul.bf16.gmra.mxu0 %v1163
    %v6374 = vpop.f32.mrf.mxu0
    %v6375 = vadd.f32 %v6362, %v6374
    %v6376 = vpop.f32.mrf.mxu0
    %6377 = vdwg.mxu0
    %6378 = vmatpush.bf16.msra.mxu0 %v4641
    %6379 = vmatpush.bf16.msra.mxu0 %v4633
    %6380 = vmatpush.bf16.msra.mxu0 %v4625
    %6381 = vmatpush.bf16.msra.mxu0 %v4617
    %6382 = vmatpush.bf16.msra.mxu0 %v4609
    %6383 = vmatpush.bf16.msra.mxu0 %v4601
    %6384 = vmatpush.bf16.msra.mxu0 %v4593
    %6385 = vmatpush.bf16.msra.mxu0 %v4585
    %6386 = vmatmul.bf16.gmra.mxu0 %v1164
    %v6387 = vpop.f32.mrf.mxu0
    %v6388 = vadd.f32 %v6375, %v6387
    %v6389 = vpop.f32.mrf.mxu0
    %6390 = vdwg.mxu0
    %6391 = vmatpush.bf16.msra.mxu0 %v4705
    %6392 = vmatpush.bf16.msra.mxu0 %v4697
    %6393 = vmatpush.bf16.msra.mxu0 %v4689
    %6394 = vmatpush.bf16.msra.mxu0 %v4681
    %6395 = vmatpush.bf16.msra.mxu0 %v4673
    %6396 = vmatpush.bf16.msra.mxu0 %v4665
    %6397 = vmatpush.bf16.msra.mxu0 %v4657
    %6398 = vmatpush.bf16.msra.mxu0 %v4649
    %6399 = vmatmul.bf16.gmra.mxu0 %v1165
    %v6400 = vpop.f32.mrf.mxu0
    %v6401 = vadd.f32 %v6388, %v6400
    %v6402 = vpop.f32.mrf.mxu0
    %6403 = vdwg.mxu0
    %6404 = vmatpush.bf16.msra.mxu0 %v4769
    %6405 = vmatpush.bf16.msra.mxu0 %v4761
    %6406 = vmatpush.bf16.msra.mxu0 %v4753
    %6407 = vmatpush.bf16.msra.mxu0 %v4745
    %6408 = vmatpush.bf16.msra.mxu0 %v4737
    %6409 = vmatpush.bf16.msra.mxu0 %v4729
    %6410 = vmatpush.bf16.msra.mxu0 %v4721
    %6411 = vmatpush.bf16.msra.mxu0 %v4713
    %6412 = vmatmul.bf16.gmra.mxu0 %v1166
    %v6413 = vpop.f32.mrf.mxu0
    %v6414 = vadd.f32 %v6401, %v6413
    %v6415 = vpop.f32.mrf.mxu0
    %6416 = vdwg.mxu0
    %6417 = vmatpush.bf16.msra.mxu0 %v4833
    %6418 = vmatpush.bf16.msra.mxu0 %v4825
    %6419 = vmatpush.bf16.msra.mxu0 %v4817
    %6420 = vmatpush.bf16.msra.mxu0 %v4809
    %6421 = vmatpush.bf16.msra.mxu0 %v4801
    %6422 = vmatpush.bf16.msra.mxu0 %v4793
    %6423 = vmatpush.bf16.msra.mxu0 %v4785
    %6424 = vmatpush.bf16.msra.mxu0 %v4777
    %6425 = vmatmul.bf16.gmra.mxu0 %v1169
    %v6426 = vpop.f32.mrf.mxu0
    %v6427 = vadd.f32 %v6414, %v6426
    %v6428 = vpop.f32.mrf.mxu0
    %6429 = vdwg.mxu0
    %6430 = vmatpush.bf16.msra.mxu0 %v4897
    %6431 = vmatpush.bf16.msra.mxu0 %v4889
    %6432 = vmatpush.bf16.msra.mxu0 %v4881
    %6433 = vmatpush.bf16.msra.mxu0 %v4873
    %6434 = vmatpush.bf16.msra.mxu0 %v4865
    %6435 = vmatpush.bf16.msra.mxu0 %v4857
    %6436 = vmatpush.bf16.msra.mxu0 %v4849
    %6437 = vmatpush.bf16.msra.mxu0 %v4841
    %6438 = vmatmul.bf16.gmra.mxu0 %v1170
    %v6439 = vpop.f32.mrf.mxu0
    %v6440 = vadd.f32 %v6427, %v6439
    %v6441 = vpop.f32.mrf.mxu0
    %6442 = vdwg.mxu0
    %6443 = vmatpush.bf16.msra.mxu0 %v4961
    %6444 = vmatpush.bf16.msra.mxu0 %v4953
    %6445 = vmatpush.bf16.msra.mxu0 %v4945
    %6446 = vmatpush.bf16.msra.mxu0 %v4937
    %6447 = vmatpush.bf16.msra.mxu0 %v4929
    %6448 = vmatpush.bf16.msra.mxu0 %v4921
    %6449 = vmatpush.bf16.msra.mxu0 %v4913
    %6450 = vmatpush.bf16.msra.mxu0 %v4905
    %6451 = vmatmul.bf16.gmra.mxu0 %v1171
    %v6452 = vpop.f32.mrf.mxu0
    %v6453 = vadd.f32 %v6440, %v6452
    %v6454 = vpop.f32.mrf.mxu0
    %6455 = vdwg.mxu0
    %6456 = vmatpush.bf16.msra.mxu0 %v5025
    %6457 = vmatpush.bf16.msra.mxu0 %v5017
    %6458 = vmatpush.bf16.msra.mxu0 %v5009
    %6459 = vmatpush.bf16.msra.mxu0 %v5001
    %6460 = vmatpush.bf16.msra.mxu0 %v4993
    %6461 = vmatpush.bf16.msra.mxu0 %v4985
    %6462 = vmatpush.bf16.msra.mxu0 %v4977
    %6463 = vmatpush.bf16.msra.mxu0 %v4969
    %6464 = vmatmul.bf16.gmra.mxu0 %v1172
    %v6465 = vpop.f32.mrf.mxu0
    %v6466 = vadd.f32 %v6453, %v6465
    %v6467 = vpop.f32.mrf.mxu0
    %6468 = vdwg.mxu0
    %6469 = vmatpush.bf16.msra.mxu0 %v5089
    %6470 = vmatpush.bf16.msra.mxu0 %v5081
    %6471 = vmatpush.bf16.msra.mxu0 %v5073
    %6472 = vmatpush.bf16.msra.mxu0 %v5065
    %6473 = vmatpush.bf16.msra.mxu0 %v5057
    %6474 = vmatpush.bf16.msra.mxu0 %v5049
    %6475 = vmatpush.bf16.msra.mxu0 %v5041
    %6476 = vmatpush.bf16.msra.mxu0 %v5033
    %6477 = vmatmul.bf16.gmra.mxu0 %v1173
    %v6478 = vpop.f32.mrf.mxu0
    %v6479 = vadd.f32 %v6466, %v6478
    %v6480 = vpop.f32.mrf.mxu0
    %6481 = vdwg.mxu0
    %6482 = vmatpush.bf16.msra.mxu0 %v5153
    %6483 = vmatpush.bf16.msra.mxu0 %v5145
    %6484 = vmatpush.bf16.msra.mxu0 %v5137
    %6485 = vmatpush.bf16.msra.mxu0 %v5129
    %6486 = vmatpush.bf16.msra.mxu0 %v5121
    %6487 = vmatpush.bf16.msra.mxu0 %v5113
    %6488 = vmatpush.bf16.msra.mxu0 %v5105
    %6489 = vmatpush.bf16.msra.mxu0 %v5097
    %6490 = vmatmul.bf16.gmra.mxu0 %v1174
    %v6491 = vpop.f32.mrf.mxu0
    %v6492 = vadd.f32 %v6479, %v6491
    %v6493 = vpop.f32.mrf.mxu0
    %6494 = vdwg.mxu0
    %6495 = vmatpush.bf16.msra.mxu0 %v5217
    %6496 = vmatpush.bf16.msra.mxu0 %v5209
    %6497 = vmatpush.bf16.msra.mxu0 %v5201
    %6498 = vmatpush.bf16.msra.mxu0 %v5193
    %6499 = vmatpush.bf16.msra.mxu0 %v5185
    %6500 = vmatpush.bf16.msra.mxu0 %v5177
    %6501 = vmatpush.bf16.msra.mxu0 %v5169
    %6502 = vmatpush.bf16.msra.mxu0 %v5161
    %6503 = vmatmul.bf16.gmra.mxu0 %v1175
    %v6504 = vpop.f32.mrf.mxu0
    %v6505 = vadd.f32 %v6492, %v6504
    %v6506 = vpop.f32.mrf.mxu0
    %6507 = vdwg.mxu0
    %6508 = vmatpush.bf16.msra.mxu0 %v5281
    %6509 = vmatpush.bf16.msra.mxu0 %v5273
    %6510 = vmatpush.bf16.msra.mxu0 %v5265
    %6511 = vmatpush.bf16.msra.mxu0 %v5257
    %6512 = vmatpush.bf16.msra.mxu0 %v5249
    %6513 = vmatpush.bf16.msra.mxu0 %v5241
    %6514 = vmatpush.bf16.msra.mxu0 %v5233
    %6515 = vmatpush.bf16.msra.mxu0 %v5225
    %6516 = vmatmul.bf16.gmra.mxu0 %v1176
    %v6517 = vpop.f32.mrf.mxu0
    %v6518 = vadd.f32 %v6505, %v6517
    %v6519 = vpop.f32.mrf.mxu0
    %6520 = vdwg.mxu0
    %6521 = vmatpush.bf16.msra.mxu0 %v4322
    %6522 = vmatpush.bf16.msra.mxu0 %v4314
    %6523 = vmatpush.bf16.msra.mxu0 %v4306
    %6524 = vmatpush.bf16.msra.mxu0 %v4298
    %6525 = vmatpush.bf16.msra.mxu0 %v4290
    %6526 = vmatpush.bf16.msra.mxu0 %v4282
    %6527 = vmatpush.bf16.msra.mxu0 %v4274
    %6528 = vmatpush.bf16.msra.mxu0 %v4266
    %6529 = vmatmul.bf16.gmra.mxu0 %v1159
    %v6530 = vpop.f32.mrf.mxu0
    %v6531 = vadd.f32 %v1142, %v6530
    %v6532 = vpop.f32.mrf.mxu0
    %6533 = vdwg.mxu0
    %6534 = vmatpush.bf16.msra.mxu0 %v4386
    %6535 = vmatpush.bf16.msra.mxu0 %v4378
    %6536 = vmatpush.bf16.msra.mxu0 %v4370
    %6537 = vmatpush.bf16.msra.mxu0 %v4362
    %6538 = vmatpush.bf16.msra.mxu0 %v4354
    %6539 = vmatpush.bf16.msra.mxu0 %v4346
    %6540 = vmatpush.bf16.msra.mxu0 %v4338
    %6541 = vmatpush.bf16.msra.mxu0 %v4330
    %6542 = vmatmul.bf16.gmra.mxu0 %v1160
    %v6543 = vpop.f32.mrf.mxu0
    %v6544 = vadd.f32 %v6531, %v6543
    %v6545 = vpop.f32.mrf.mxu0
    %6546 = vdwg.mxu0
    %6547 = vmatpush.bf16.msra.mxu0 %v4450
    %6548 = vmatpush.bf16.msra.mxu0 %v4442
    %6549 = vmatpush.bf16.msra.mxu0 %v4434
    %6550 = vmatpush.bf16.msra.mxu0 %v4426
    %6551 = vmatpush.bf16.msra.mxu0 %v4418
    %6552 = vmatpush.bf16.msra.mxu0 %v4410
    %6553 = vmatpush.bf16.msra.mxu0 %v4402
    %6554 = vmatpush.bf16.msra.mxu0 %v4394
    %6555 = vmatmul.bf16.gmra.mxu0 %v1161
    %v6556 = vpop.f32.mrf.mxu0
    %v6557 = vadd.f32 %v6544, %v6556
    %v6558 = vpop.f32.mrf.mxu0
    %6559 = vdwg.mxu0
    %6560 = vmatpush.bf16.msra.mxu0 %v4514
    %6561 = vmatpush.bf16.msra.mxu0 %v4506
    %6562 = vmatpush.bf16.msra.mxu0 %v4498
    %6563 = vmatpush.bf16.msra.mxu0 %v4490
    %6564 = vmatpush.bf16.msra.mxu0 %v4482
    %6565 = vmatpush.bf16.msra.mxu0 %v4474
    %6566 = vmatpush.bf16.msra.mxu0 %v4466
    %6567 = vmatpush.bf16.msra.mxu0 %v4458
    %6568 = vmatmul.bf16.gmra.mxu0 %v1162
    %v6569 = vpop.f32.mrf.mxu0
    %v6570 = vadd.f32 %v6557, %v6569
    %v6571 = vpop.f32.mrf.mxu0
    %6572 = vdwg.mxu0
    %6573 = vmatpush.bf16.msra.mxu0 %v4578
    %6574 = vmatpush.bf16.msra.mxu0 %v4570
    %6575 = vmatpush.bf16.msra.mxu0 %v4562
    %6576 = vmatpush.bf16.msra.mxu0 %v4554
    %6577 = vmatpush.bf16.msra.mxu0 %v4546
    %6578 = vmatpush.bf16.msra.mxu0 %v4538
    %6579 = vmatpush.bf16.msra.mxu0 %v4530
    %6580 = vmatpush.bf16.msra.mxu0 %v4522
    %6581 = vmatmul.bf16.gmra.mxu0 %v1163
    %v6582 = vpop.f32.mrf.mxu0
    %v6583 = vadd.f32 %v6570, %v6582
    %v6584 = vpop.f32.mrf.mxu0
    %6585 = vdwg.mxu0
    %6586 = vmatpush.bf16.msra.mxu0 %v4642
    %6587 = vmatpush.bf16.msra.mxu0 %v4634
    %6588 = vmatpush.bf16.msra.mxu0 %v4626
    %6589 = vmatpush.bf16.msra.mxu0 %v4618
    %6590 = vmatpush.bf16.msra.mxu0 %v4610
    %6591 = vmatpush.bf16.msra.mxu0 %v4602
    %6592 = vmatpush.bf16.msra.mxu0 %v4594
    %6593 = vmatpush.bf16.msra.mxu0 %v4586
    %6594 = vmatmul.bf16.gmra.mxu0 %v1164
    %v6595 = vpop.f32.mrf.mxu0
    %v6596 = vadd.f32 %v6583, %v6595
    %v6597 = vpop.f32.mrf.mxu0
    %6598 = vdwg.mxu0
    %6599 = vmatpush.bf16.msra.mxu0 %v4706
    %6600 = vmatpush.bf16.msra.mxu0 %v4698
    %6601 = vmatpush.bf16.msra.mxu0 %v4690
    %6602 = vmatpush.bf16.msra.mxu0 %v4682
    %6603 = vmatpush.bf16.msra.mxu0 %v4674
    %6604 = vmatpush.bf16.msra.mxu0 %v4666
    %6605 = vmatpush.bf16.msra.mxu0 %v4658
    %6606 = vmatpush.bf16.msra.mxu0 %v4650
    %6607 = vmatmul.bf16.gmra.mxu0 %v1165
    %v6608 = vpop.f32.mrf.mxu0
    %v6609 = vadd.f32 %v6596, %v6608
    %v6610 = vpop.f32.mrf.mxu0
    %6611 = vdwg.mxu0
    %6612 = vmatpush.bf16.msra.mxu0 %v4770
    %6613 = vmatpush.bf16.msra.mxu0 %v4762
    %6614 = vmatpush.bf16.msra.mxu0 %v4754
    %6615 = vmatpush.bf16.msra.mxu0 %v4746
    %6616 = vmatpush.bf16.msra.mxu0 %v4738
    %6617 = vmatpush.bf16.msra.mxu0 %v4730
    %6618 = vmatpush.bf16.msra.mxu0 %v4722
    %6619 = vmatpush.bf16.msra.mxu0 %v4714
    %6620 = vmatmul.bf16.gmra.mxu0 %v1166
    %v6621 = vpop.f32.mrf.mxu0
    %v6622 = vadd.f32 %v6609, %v6621
    %v6623 = vpop.f32.mrf.mxu0
    %6624 = vdwg.mxu0
    %6625 = vmatpush.bf16.msra.mxu0 %v4834
    %6626 = vmatpush.bf16.msra.mxu0 %v4826
    %6627 = vmatpush.bf16.msra.mxu0 %v4818
    %6628 = vmatpush.bf16.msra.mxu0 %v4810
    %6629 = vmatpush.bf16.msra.mxu0 %v4802
    %6630 = vmatpush.bf16.msra.mxu0 %v4794
    %6631 = vmatpush.bf16.msra.mxu0 %v4786
    %6632 = vmatpush.bf16.msra.mxu0 %v4778
    %6633 = vmatmul.bf16.gmra.mxu0 %v1169
    %v6634 = vpop.f32.mrf.mxu0
    %v6635 = vadd.f32 %v6622, %v6634
    %v6636 = vpop.f32.mrf.mxu0
    %6637 = vdwg.mxu0
    %6638 = vmatpush.bf16.msra.mxu0 %v4898
    %6639 = vmatpush.bf16.msra.mxu0 %v4890
    %6640 = vmatpush.bf16.msra.mxu0 %v4882
    %6641 = vmatpush.bf16.msra.mxu0 %v4874
    %6642 = vmatpush.bf16.msra.mxu0 %v4866
    %6643 = vmatpush.bf16.msra.mxu0 %v4858
    %6644 = vmatpush.bf16.msra.mxu0 %v4850
    %6645 = vmatpush.bf16.msra.mxu0 %v4842
    %6646 = vmatmul.bf16.gmra.mxu0 %v1170
    %v6647 = vpop.f32.mrf.mxu0
    %v6648 = vadd.f32 %v6635, %v6647
    %v6649 = vpop.f32.mrf.mxu0
    %6650 = vdwg.mxu0
    %6651 = vmatpush.bf16.msra.mxu0 %v4962
    %6652 = vmatpush.bf16.msra.mxu0 %v4954
    %6653 = vmatpush.bf16.msra.mxu0 %v4946
    %6654 = vmatpush.bf16.msra.mxu0 %v4938
    %6655 = vmatpush.bf16.msra.mxu0 %v4930
    %6656 = vmatpush.bf16.msra.mxu0 %v4922
    %6657 = vmatpush.bf16.msra.mxu0 %v4914
    %6658 = vmatpush.bf16.msra.mxu0 %v4906
    %6659 = vmatmul.bf16.gmra.mxu0 %v1171
    %v6660 = vpop.f32.mrf.mxu0
    %v6661 = vadd.f32 %v6648, %v6660
    %v6662 = vpop.f32.mrf.mxu0
    %6663 = vdwg.mxu0
    %6664 = vmatpush.bf16.msra.mxu0 %v5026
    %6665 = vmatpush.bf16.msra.mxu0 %v5018
    %6666 = vmatpush.bf16.msra.mxu0 %v5010
    %6667 = vmatpush.bf16.msra.mxu0 %v5002
    %6668 = vmatpush.bf16.msra.mxu0 %v4994
    %6669 = vmatpush.bf16.msra.mxu0 %v4986
    %6670 = vmatpush.bf16.msra.mxu0 %v4978
    %6671 = vmatpush.bf16.msra.mxu0 %v4970
    %6672 = vmatmul.bf16.gmra.mxu0 %v1172
    %v6673 = vpop.f32.mrf.mxu0
    %v6674 = vadd.f32 %v6661, %v6673
    %v6675 = vpop.f32.mrf.mxu0
    %6676 = vdwg.mxu0
    %6677 = vmatpush.bf16.msra.mxu0 %v5090
    %6678 = vmatpush.bf16.msra.mxu0 %v5082
    %6679 = vmatpush.bf16.msra.mxu0 %v5074
    %6680 = vmatpush.bf16.msra.mxu0 %v5066
    %6681 = vmatpush.bf16.msra.mxu0 %v5058
    %6682 = vmatpush.bf16.msra.mxu0 %v5050
    %6683 = vmatpush.bf16.msra.mxu0 %v5042
    %6684 = vmatpush.bf16.msra.mxu0 %v5034
    %6685 = vmatmul.bf16.gmra.mxu0 %v1173
    %v6686 = vpop.f32.mrf.mxu0
    %v6687 = vadd.f32 %v6674, %v6686
    %v6688 = vpop.f32.mrf.mxu0
    %6689 = vdwg.mxu0
    %6690 = vmatpush.bf16.msra.mxu0 %v5154
    %6691 = vmatpush.bf16.msra.mxu0 %v5146
    %6692 = vmatpush.bf16.msra.mxu0 %v5138
    %6693 = vmatpush.bf16.msra.mxu0 %v5130
    %6694 = vmatpush.bf16.msra.mxu0 %v5122
    %6695 = vmatpush.bf16.msra.mxu0 %v5114
    %6696 = vmatpush.bf16.msra.mxu0 %v5106
    %6697 = vmatpush.bf16.msra.mxu0 %v5098
    %6698 = vmatmul.bf16.gmra.mxu0 %v1174
    %v6699 = vpop.f32.mrf.mxu0
    %v6700 = vadd.f32 %v6687, %v6699
    %v6701 = vpop.f32.mrf.mxu0
    %6702 = vdwg.mxu0
    %6703 = vmatpush.bf16.msra.mxu0 %v5218
    %6704 = vmatpush.bf16.msra.mxu0 %v5210
    %6705 = vmatpush.bf16.msra.mxu0 %v5202
    %6706 = vmatpush.bf16.msra.mxu0 %v5194
    %6707 = vmatpush.bf16.msra.mxu0 %v5186
    %6708 = vmatpush.bf16.msra.mxu0 %v5178
    %6709 = vmatpush.bf16.msra.mxu0 %v5170
    %6710 = vmatpush.bf16.msra.mxu0 %v5162
    %6711 = vmatmul.bf16.gmra.mxu0 %v1175
    %v6712 = vpop.f32.mrf.mxu0
    %v6713 = vadd.f32 %v6700, %v6712
    %v6714 = vpop.f32.mrf.mxu0
    %6715 = vdwg.mxu0
    %6716 = vmatpush.bf16.msra.mxu0 %v5282
    %6717 = vmatpush.bf16.msra.mxu0 %v5274
    %6718 = vmatpush.bf16.msra.mxu0 %v5266
    %6719 = vmatpush.bf16.msra.mxu0 %v5258
    %6720 = vmatpush.bf16.msra.mxu0 %v5250
    %6721 = vmatpush.bf16.msra.mxu0 %v5242
    %6722 = vmatpush.bf16.msra.mxu0 %v5234
    %6723 = vmatpush.bf16.msra.mxu0 %v5226
    %6724 = vmatmul.bf16.gmra.mxu0 %v1176
    %v6725 = vpop.f32.mrf.mxu0
    %v6726 = vadd.f32 %v6713, %v6725
    %v6727 = vpop.f32.mrf.mxu0
    %6728 = vdwg.mxu0
    %6729 = vmatpush.bf16.msra.mxu0 %v4323
    %6730 = vmatpush.bf16.msra.mxu0 %v4315
    %6731 = vmatpush.bf16.msra.mxu0 %v4307
    %6732 = vmatpush.bf16.msra.mxu0 %v4299
    %6733 = vmatpush.bf16.msra.mxu0 %v4291
    %6734 = vmatpush.bf16.msra.mxu0 %v4283
    %6735 = vmatpush.bf16.msra.mxu0 %v4275
    %6736 = vmatpush.bf16.msra.mxu0 %v4267
    %6737 = vmatmul.bf16.gmra.mxu0 %v1159
    %v6738 = vpop.f32.mrf.mxu0
    %v6739 = vadd.f32 %v1143, %v6738
    %v6740 = vpop.f32.mrf.mxu0
    %6741 = vdwg.mxu0
    %6742 = vmatpush.bf16.msra.mxu0 %v4387
    %6743 = vmatpush.bf16.msra.mxu0 %v4379
    %6744 = vmatpush.bf16.msra.mxu0 %v4371
    %6745 = vmatpush.bf16.msra.mxu0 %v4363
    %6746 = vmatpush.bf16.msra.mxu0 %v4355
    %6747 = vmatpush.bf16.msra.mxu0 %v4347
    %6748 = vmatpush.bf16.msra.mxu0 %v4339
    %6749 = vmatpush.bf16.msra.mxu0 %v4331
    %6750 = vmatmul.bf16.gmra.mxu0 %v1160
    %v6751 = vpop.f32.mrf.mxu0
    %v6752 = vadd.f32 %v6739, %v6751
    %v6753 = vpop.f32.mrf.mxu0
    %6754 = vdwg.mxu0
    %6755 = vmatpush.bf16.msra.mxu0 %v4451
    %6756 = vmatpush.bf16.msra.mxu0 %v4443
    %6757 = vmatpush.bf16.msra.mxu0 %v4435
    %6758 = vmatpush.bf16.msra.mxu0 %v4427
    %6759 = vmatpush.bf16.msra.mxu0 %v4419
    %6760 = vmatpush.bf16.msra.mxu0 %v4411
    %6761 = vmatpush.bf16.msra.mxu0 %v4403
    %6762 = vmatpush.bf16.msra.mxu0 %v4395
    %6763 = vmatmul.bf16.gmra.mxu0 %v1161
    %v6764 = vpop.f32.mrf.mxu0
    %v6765 = vadd.f32 %v6752, %v6764
    %v6766 = vpop.f32.mrf.mxu0
    %6767 = vdwg.mxu0
    %6768 = vmatpush.bf16.msra.mxu0 %v4515
    %6769 = vmatpush.bf16.msra.mxu0 %v4507
    %6770 = vmatpush.bf16.msra.mxu0 %v4499
    %6771 = vmatpush.bf16.msra.mxu0 %v4491
    %6772 = vmatpush.bf16.msra.mxu0 %v4483
    %6773 = vmatpush.bf16.msra.mxu0 %v4475
    %6774 = vmatpush.bf16.msra.mxu0 %v4467
    %6775 = vmatpush.bf16.msra.mxu0 %v4459
    %6776 = vmatmul.bf16.gmra.mxu0 %v1162
    %v6777 = vpop.f32.mrf.mxu0
    %v6778 = vadd.f32 %v6765, %v6777
    %v6779 = vpop.f32.mrf.mxu0
    %6780 = vdwg.mxu0
    %6781 = vmatpush.bf16.msra.mxu0 %v4579
    %6782 = vmatpush.bf16.msra.mxu0 %v4571
    %6783 = vmatpush.bf16.msra.mxu0 %v4563
    %6784 = vmatpush.bf16.msra.mxu0 %v4555
    %6785 = vmatpush.bf16.msra.mxu0 %v4547
    %6786 = vmatpush.bf16.msra.mxu0 %v4539
    %6787 = vmatpush.bf16.msra.mxu0 %v4531
    %6788 = vmatpush.bf16.msra.mxu0 %v4523
    %6789 = vmatmul.bf16.gmra.mxu0 %v1163
    %v6790 = vpop.f32.mrf.mxu0
    %v6791 = vadd.f32 %v6778, %v6790
    %v6792 = vpop.f32.mrf.mxu0
    %6793 = vdwg.mxu0
    %6794 = vmatpush.bf16.msra.mxu0 %v4643
    %6795 = vmatpush.bf16.msra.mxu0 %v4635
    %6796 = vmatpush.bf16.msra.mxu0 %v4627
    %6797 = vmatpush.bf16.msra.mxu0 %v4619
    %6798 = vmatpush.bf16.msra.mxu0 %v4611
    %6799 = vmatpush.bf16.msra.mxu0 %v4603
    %6800 = vmatpush.bf16.msra.mxu0 %v4595
    %6801 = vmatpush.bf16.msra.mxu0 %v4587
    %6802 = vmatmul.bf16.gmra.mxu0 %v1164
    %v6803 = vpop.f32.mrf.mxu0
    %v6804 = vadd.f32 %v6791, %v6803
    %v6805 = vpop.f32.mrf.mxu0
    %6806 = vdwg.mxu0
    %6807 = vmatpush.bf16.msra.mxu0 %v4707
    %6808 = vmatpush.bf16.msra.mxu0 %v4699
    %6809 = vmatpush.bf16.msra.mxu0 %v4691
    %6810 = vmatpush.bf16.msra.mxu0 %v4683
    %6811 = vmatpush.bf16.msra.mxu0 %v4675
    %6812 = vmatpush.bf16.msra.mxu0 %v4667
    %6813 = vmatpush.bf16.msra.mxu0 %v4659
    %6814 = vmatpush.bf16.msra.mxu0 %v4651
    %6815 = vmatmul.bf16.gmra.mxu0 %v1165
    %v6816 = vpop.f32.mrf.mxu0
    %v6817 = vadd.f32 %v6804, %v6816
    %v6818 = vpop.f32.mrf.mxu0
    %6819 = vdwg.mxu0
    %6820 = vmatpush.bf16.msra.mxu0 %v4771
    %6821 = vmatpush.bf16.msra.mxu0 %v4763
    %6822 = vmatpush.bf16.msra.mxu0 %v4755
    %6823 = vmatpush.bf16.msra.mxu0 %v4747
    %6824 = vmatpush.bf16.msra.mxu0 %v4739
    %6825 = vmatpush.bf16.msra.mxu0 %v4731
    %6826 = vmatpush.bf16.msra.mxu0 %v4723
    %6827 = vmatpush.bf16.msra.mxu0 %v4715
    %6828 = vmatmul.bf16.gmra.mxu0 %v1166
    %v6829 = vpop.f32.mrf.mxu0
    %v6830 = vadd.f32 %v6817, %v6829
    %v6831 = vpop.f32.mrf.mxu0
    %6832 = vdwg.mxu0
    %6833 = vmatpush.bf16.msra.mxu0 %v4835
    %6834 = vmatpush.bf16.msra.mxu0 %v4827
    %6835 = vmatpush.bf16.msra.mxu0 %v4819
    %6836 = vmatpush.bf16.msra.mxu0 %v4811
    %6837 = vmatpush.bf16.msra.mxu0 %v4803
    %6838 = vmatpush.bf16.msra.mxu0 %v4795
    %6839 = vmatpush.bf16.msra.mxu0 %v4787
    %6840 = vmatpush.bf16.msra.mxu0 %v4779
    %6841 = vmatmul.bf16.gmra.mxu0 %v1169
    %v6842 = vpop.f32.mrf.mxu0
    %v6843 = vadd.f32 %v6830, %v6842
    %v6844 = vpop.f32.mrf.mxu0
    %6845 = vdwg.mxu0
    %6846 = vmatpush.bf16.msra.mxu0 %v4899
    %6847 = vmatpush.bf16.msra.mxu0 %v4891
    %6848 = vmatpush.bf16.msra.mxu0 %v4883
    %6849 = vmatpush.bf16.msra.mxu0 %v4875
    %6850 = vmatpush.bf16.msra.mxu0 %v4867
    %6851 = vmatpush.bf16.msra.mxu0 %v4859
    %6852 = vmatpush.bf16.msra.mxu0 %v4851
    %6853 = vmatpush.bf16.msra.mxu0 %v4843
    %6854 = vmatmul.bf16.gmra.mxu0 %v1170
    %v6855 = vpop.f32.mrf.mxu0
    %v6856 = vadd.f32 %v6843, %v6855
    %v6857 = vpop.f32.mrf.mxu0
    %6858 = vdwg.mxu0
    %6859 = vmatpush.bf16.msra.mxu0 %v4963
    %6860 = vmatpush.bf16.msra.mxu0 %v4955
    %6861 = vmatpush.bf16.msra.mxu0 %v4947
    %6862 = vmatpush.bf16.msra.mxu0 %v4939
    %6863 = vmatpush.bf16.msra.mxu0 %v4931
    %6864 = vmatpush.bf16.msra.mxu0 %v4923
    %6865 = vmatpush.bf16.msra.mxu0 %v4915
    %6866 = vmatpush.bf16.msra.mxu0 %v4907
    %6867 = vmatmul.bf16.gmra.mxu0 %v1171
    %v6868 = vpop.f32.mrf.mxu0
    %v6869 = vadd.f32 %v6856, %v6868
    %v6870 = vpop.f32.mrf.mxu0
    %6871 = vdwg.mxu0
    %6872 = vmatpush.bf16.msra.mxu0 %v5027
    %6873 = vmatpush.bf16.msra.mxu0 %v5019
    %6874 = vmatpush.bf16.msra.mxu0 %v5011
    %6875 = vmatpush.bf16.msra.mxu0 %v5003
    %6876 = vmatpush.bf16.msra.mxu0 %v4995
    %6877 = vmatpush.bf16.msra.mxu0 %v4987
    %6878 = vmatpush.bf16.msra.mxu0 %v4979
    %6879 = vmatpush.bf16.msra.mxu0 %v4971
    %6880 = vmatmul.bf16.gmra.mxu0 %v1172
    %v6881 = vpop.f32.mrf.mxu0
    %v6882 = vadd.f32 %v6869, %v6881
    %v6883 = vpop.f32.mrf.mxu0
    %6884 = vdwg.mxu0
    %6885 = vmatpush.bf16.msra.mxu0 %v5091
    %6886 = vmatpush.bf16.msra.mxu0 %v5083
    %6887 = vmatpush.bf16.msra.mxu0 %v5075
    %6888 = vmatpush.bf16.msra.mxu0 %v5067
    %6889 = vmatpush.bf16.msra.mxu0 %v5059
    %6890 = vmatpush.bf16.msra.mxu0 %v5051
    %6891 = vmatpush.bf16.msra.mxu0 %v5043
    %6892 = vmatpush.bf16.msra.mxu0 %v5035
    %6893 = vmatmul.bf16.gmra.mxu0 %v1173
    %v6894 = vpop.f32.mrf.mxu0
    %v6895 = vadd.f32 %v6882, %v6894
    %v6896 = vpop.f32.mrf.mxu0
    %6897 = vdwg.mxu0
    %6898 = vmatpush.bf16.msra.mxu0 %v5155
    %6899 = vmatpush.bf16.msra.mxu0 %v5147
    %6900 = vmatpush.bf16.msra.mxu0 %v5139
    %6901 = vmatpush.bf16.msra.mxu0 %v5131
    %6902 = vmatpush.bf16.msra.mxu0 %v5123
    %6903 = vmatpush.bf16.msra.mxu0 %v5115
    %6904 = vmatpush.bf16.msra.mxu0 %v5107
    %6905 = vmatpush.bf16.msra.mxu0 %v5099
    %6906 = vmatmul.bf16.gmra.mxu0 %v1174
    %v6907 = vpop.f32.mrf.mxu0
    %v6908 = vadd.f32 %v6895, %v6907
    %v6909 = vpop.f32.mrf.mxu0
    %6910 = vdwg.mxu0
    %6911 = vmatpush.bf16.msra.mxu0 %v5219
    %6912 = vmatpush.bf16.msra.mxu0 %v5211
    %6913 = vmatpush.bf16.msra.mxu0 %v5203
    %6914 = vmatpush.bf16.msra.mxu0 %v5195
    %6915 = vmatpush.bf16.msra.mxu0 %v5187
    %6916 = vmatpush.bf16.msra.mxu0 %v5179
    %6917 = vmatpush.bf16.msra.mxu0 %v5171
    %6918 = vmatpush.bf16.msra.mxu0 %v5163
    %6919 = vmatmul.bf16.gmra.mxu0 %v1175
    %v6920 = vpop.f32.mrf.mxu0
    %v6921 = vadd.f32 %v6908, %v6920
    %v6922 = vpop.f32.mrf.mxu0
    %6923 = vdwg.mxu0
    %6924 = vmatpush.bf16.msra.mxu0 %v5283
    %6925 = vmatpush.bf16.msra.mxu0 %v5275
    %6926 = vmatpush.bf16.msra.mxu0 %v5267
    %6927 = vmatpush.bf16.msra.mxu0 %v5259
    %6928 = vmatpush.bf16.msra.mxu0 %v5251
    %6929 = vmatpush.bf16.msra.mxu0 %v5243
    %6930 = vmatpush.bf16.msra.mxu0 %v5235
    %6931 = vmatpush.bf16.msra.mxu0 %v5227
    %6932 = vmatmul.bf16.gmra.mxu0 %v1176
    %v6933 = vpop.f32.mrf.mxu0
    %v6934 = vadd.f32 %v6921, %v6933
    %v6935 = vpop.f32.mrf.mxu0
    %6936 = vdwg.mxu0
    %6937 = vmatpush.bf16.msra.mxu0 %v4324
    %6938 = vmatpush.bf16.msra.mxu0 %v4316
    %6939 = vmatpush.bf16.msra.mxu0 %v4308
    %6940 = vmatpush.bf16.msra.mxu0 %v4300
    %6941 = vmatpush.bf16.msra.mxu0 %v4292
    %6942 = vmatpush.bf16.msra.mxu0 %v4284
    %6943 = vmatpush.bf16.msra.mxu0 %v4276
    %6944 = vmatpush.bf16.msra.mxu0 %v4268
    %6945 = vmatmul.bf16.gmra.mxu0 %v1159
    %v6946 = vpop.f32.mrf.mxu0
    %v6947 = vadd.f32 %v1144, %v6946
    %v6948 = vpop.f32.mrf.mxu0
    %6949 = vdwg.mxu0
    %6950 = vmatpush.bf16.msra.mxu0 %v4388
    %6951 = vmatpush.bf16.msra.mxu0 %v4380
    %6952 = vmatpush.bf16.msra.mxu0 %v4372
    %6953 = vmatpush.bf16.msra.mxu0 %v4364
    %6954 = vmatpush.bf16.msra.mxu0 %v4356
    %6955 = vmatpush.bf16.msra.mxu0 %v4348
    %6956 = vmatpush.bf16.msra.mxu0 %v4340
    %6957 = vmatpush.bf16.msra.mxu0 %v4332
    %6958 = vmatmul.bf16.gmra.mxu0 %v1160
    %v6959 = vpop.f32.mrf.mxu0
    %v6960 = vadd.f32 %v6947, %v6959
    %v6961 = vpop.f32.mrf.mxu0
    %6962 = vdwg.mxu0
    %6963 = vmatpush.bf16.msra.mxu0 %v4452
    %6964 = vmatpush.bf16.msra.mxu0 %v4444
    %6965 = vmatpush.bf16.msra.mxu0 %v4436
    %6966 = vmatpush.bf16.msra.mxu0 %v4428
    %6967 = vmatpush.bf16.msra.mxu0 %v4420
    %6968 = vmatpush.bf16.msra.mxu0 %v4412
    %6969 = vmatpush.bf16.msra.mxu0 %v4404
    %6970 = vmatpush.bf16.msra.mxu0 %v4396
    %6971 = vmatmul.bf16.gmra.mxu0 %v1161
    %v6972 = vpop.f32.mrf.mxu0
    %v6973 = vadd.f32 %v6960, %v6972
    %v6974 = vpop.f32.mrf.mxu0
    %6975 = vdwg.mxu0
    %6976 = vmatpush.bf16.msra.mxu0 %v4516
    %6977 = vmatpush.bf16.msra.mxu0 %v4508
    %6978 = vmatpush.bf16.msra.mxu0 %v4500
    %6979 = vmatpush.bf16.msra.mxu0 %v4492
    %6980 = vmatpush.bf16.msra.mxu0 %v4484
    %6981 = vmatpush.bf16.msra.mxu0 %v4476
    %6982 = vmatpush.bf16.msra.mxu0 %v4468
    %6983 = vmatpush.bf16.msra.mxu0 %v4460
    %6984 = vmatmul.bf16.gmra.mxu0 %v1162
    %v6985 = vpop.f32.mrf.mxu0
    %v6986 = vadd.f32 %v6973, %v6985
    %v6987 = vpop.f32.mrf.mxu0
    %6988 = vdwg.mxu0
    %6989 = vmatpush.bf16.msra.mxu0 %v4580
    %6990 = vmatpush.bf16.msra.mxu0 %v4572
    %6991 = vmatpush.bf16.msra.mxu0 %v4564
    %6992 = vmatpush.bf16.msra.mxu0 %v4556
    %6993 = vmatpush.bf16.msra.mxu0 %v4548
    %6994 = vmatpush.bf16.msra.mxu0 %v4540
    %6995 = vmatpush.bf16.msra.mxu0 %v4532
    %6996 = vmatpush.bf16.msra.mxu0 %v4524
    %6997 = vmatmul.bf16.gmra.mxu0 %v1163
    %v6998 = vpop.f32.mrf.mxu0
    %v6999 = vadd.f32 %v6986, %v6998
    %v7000 = vpop.f32.mrf.mxu0
    %7001 = vdwg.mxu0
    %7002 = vmatpush.bf16.msra.mxu0 %v4644
    %7003 = vmatpush.bf16.msra.mxu0 %v4636
    %7004 = vmatpush.bf16.msra.mxu0 %v4628
    %7005 = vmatpush.bf16.msra.mxu0 %v4620
    %7006 = vmatpush.bf16.msra.mxu0 %v4612
    %7007 = vmatpush.bf16.msra.mxu0 %v4604
    %7008 = vmatpush.bf16.msra.mxu0 %v4596
    %7009 = vmatpush.bf16.msra.mxu0 %v4588
    %7010 = vmatmul.bf16.gmra.mxu0 %v1164
    %v7011 = vpop.f32.mrf.mxu0
    %v7012 = vadd.f32 %v6999, %v7011
    %v7013 = vpop.f32.mrf.mxu0
    %7014 = vdwg.mxu0
    %7015 = vmatpush.bf16.msra.mxu0 %v4708
    %7016 = vmatpush.bf16.msra.mxu0 %v4700
    %7017 = vmatpush.bf16.msra.mxu0 %v4692
    %7018 = vmatpush.bf16.msra.mxu0 %v4684
    %7019 = vmatpush.bf16.msra.mxu0 %v4676
    %7020 = vmatpush.bf16.msra.mxu0 %v4668
    %7021 = vmatpush.bf16.msra.mxu0 %v4660
    %7022 = vmatpush.bf16.msra.mxu0 %v4652
    %7023 = vmatmul.bf16.gmra.mxu0 %v1165
    %v7024 = vpop.f32.mrf.mxu0
    %v7025 = vadd.f32 %v7012, %v7024
    %v7026 = vpop.f32.mrf.mxu0
    %7027 = vdwg.mxu0
    %7028 = vmatpush.bf16.msra.mxu0 %v4772
    %7029 = vmatpush.bf16.msra.mxu0 %v4764
    %7030 = vmatpush.bf16.msra.mxu0 %v4756
    %7031 = vmatpush.bf16.msra.mxu0 %v4748
    %7032 = vmatpush.bf16.msra.mxu0 %v4740
    %7033 = vmatpush.bf16.msra.mxu0 %v4732
    %7034 = vmatpush.bf16.msra.mxu0 %v4724
    %7035 = vmatpush.bf16.msra.mxu0 %v4716
    %7036 = vmatmul.bf16.gmra.mxu0 %v1166
    %v7037 = vpop.f32.mrf.mxu0
    %v7038 = vadd.f32 %v7025, %v7037
    %v7039 = vpop.f32.mrf.mxu0
    %7040 = vdwg.mxu0
    %7041 = vmatpush.bf16.msra.mxu0 %v4836
    %7042 = vmatpush.bf16.msra.mxu0 %v4828
    %7043 = vmatpush.bf16.msra.mxu0 %v4820
    %7044 = vmatpush.bf16.msra.mxu0 %v4812
    %7045 = vmatpush.bf16.msra.mxu0 %v4804
    %7046 = vmatpush.bf16.msra.mxu0 %v4796
    %7047 = vmatpush.bf16.msra.mxu0 %v4788
    %7048 = vmatpush.bf16.msra.mxu0 %v4780
    %7049 = vmatmul.bf16.gmra.mxu0 %v1169
    %v7050 = vpop.f32.mrf.mxu0
    %v7051 = vadd.f32 %v7038, %v7050
    %v7052 = vpop.f32.mrf.mxu0
    %7053 = vdwg.mxu0
    %7054 = vmatpush.bf16.msra.mxu0 %v4900
    %7055 = vmatpush.bf16.msra.mxu0 %v4892
    %7056 = vmatpush.bf16.msra.mxu0 %v4884
    %7057 = vmatpush.bf16.msra.mxu0 %v4876
    %7058 = vmatpush.bf16.msra.mxu0 %v4868
    %7059 = vmatpush.bf16.msra.mxu0 %v4860
    %7060 = vmatpush.bf16.msra.mxu0 %v4852
    %7061 = vmatpush.bf16.msra.mxu0 %v4844
    %7062 = vmatmul.bf16.gmra.mxu0 %v1170
    %v7063 = vpop.f32.mrf.mxu0
    %v7064 = vadd.f32 %v7051, %v7063
    %v7065 = vpop.f32.mrf.mxu0
    %7066 = vdwg.mxu0
    %7067 = vmatpush.bf16.msra.mxu0 %v4964
    %7068 = vmatpush.bf16.msra.mxu0 %v4956
    %7069 = vmatpush.bf16.msra.mxu0 %v4948
    %7070 = vmatpush.bf16.msra.mxu0 %v4940
    %7071 = vmatpush.bf16.msra.mxu0 %v4932
    %7072 = vmatpush.bf16.msra.mxu0 %v4924
    %7073 = vmatpush.bf16.msra.mxu0 %v4916
    %7074 = vmatpush.bf16.msra.mxu0 %v4908
    %7075 = vmatmul.bf16.gmra.mxu0 %v1171
    %v7076 = vpop.f32.mrf.mxu0
    %v7077 = vadd.f32 %v7064, %v7076
    %v7078 = vpop.f32.mrf.mxu0
    %7079 = vdwg.mxu0
    %7080 = vmatpush.bf16.msra.mxu0 %v5028
    %7081 = vmatpush.bf16.msra.mxu0 %v5020
    %7082 = vmatpush.bf16.msra.mxu0 %v5012
    %7083 = vmatpush.bf16.msra.mxu0 %v5004
    %7084 = vmatpush.bf16.msra.mxu0 %v4996
    %7085 = vmatpush.bf16.msra.mxu0 %v4988
    %7086 = vmatpush.bf16.msra.mxu0 %v4980
    %7087 = vmatpush.bf16.msra.mxu0 %v4972
    %7088 = vmatmul.bf16.gmra.mxu0 %v1172
    %v7089 = vpop.f32.mrf.mxu0
    %v7090 = vadd.f32 %v7077, %v7089
    %v7091 = vpop.f32.mrf.mxu0
    %7092 = vdwg.mxu0
    %7093 = vmatpush.bf16.msra.mxu0 %v5092
    %7094 = vmatpush.bf16.msra.mxu0 %v5084
    %7095 = vmatpush.bf16.msra.mxu0 %v5076
    %7096 = vmatpush.bf16.msra.mxu0 %v5068
    %7097 = vmatpush.bf16.msra.mxu0 %v5060
    %7098 = vmatpush.bf16.msra.mxu0 %v5052
    %7099 = vmatpush.bf16.msra.mxu0 %v5044
    %7100 = vmatpush.bf16.msra.mxu0 %v5036
    %7101 = vmatmul.bf16.gmra.mxu0 %v1173
    %v7102 = vpop.f32.mrf.mxu0
    %v7103 = vadd.f32 %v7090, %v7102
    %v7104 = vpop.f32.mrf.mxu0
    %7105 = vdwg.mxu0
    %7106 = vmatpush.bf16.msra.mxu0 %v5156
    %7107 = vmatpush.bf16.msra.mxu0 %v5148
    %7108 = vmatpush.bf16.msra.mxu0 %v5140
    %7109 = vmatpush.bf16.msra.mxu0 %v5132
    %7110 = vmatpush.bf16.msra.mxu0 %v5124
    %7111 = vmatpush.bf16.msra.mxu0 %v5116
    %7112 = vmatpush.bf16.msra.mxu0 %v5108
    %7113 = vmatpush.bf16.msra.mxu0 %v5100
    %7114 = vmatmul.bf16.gmra.mxu0 %v1174
    %v7115 = vpop.f32.mrf.mxu0
    %v7116 = vadd.f32 %v7103, %v7115
    %v7117 = vpop.f32.mrf.mxu0
    %7118 = vdwg.mxu0
    %7119 = vmatpush.bf16.msra.mxu0 %v5220
    %7120 = vmatpush.bf16.msra.mxu0 %v5212
    %7121 = vmatpush.bf16.msra.mxu0 %v5204
    %7122 = vmatpush.bf16.msra.mxu0 %v5196
    %7123 = vmatpush.bf16.msra.mxu0 %v5188
    %7124 = vmatpush.bf16.msra.mxu0 %v5180
    %7125 = vmatpush.bf16.msra.mxu0 %v5172
    %7126 = vmatpush.bf16.msra.mxu0 %v5164
    %7127 = vmatmul.bf16.gmra.mxu0 %v1175
    %v7128 = vpop.f32.mrf.mxu0
    %v7129 = vadd.f32 %v7116, %v7128
    %v7130 = vpop.f32.mrf.mxu0
    %7131 = vdwg.mxu0
    %7132 = vmatpush.bf16.msra.mxu0 %v5284
    %7133 = vmatpush.bf16.msra.mxu0 %v5276
    %7134 = vmatpush.bf16.msra.mxu0 %v5268
    %7135 = vmatpush.bf16.msra.mxu0 %v5260
    %7136 = vmatpush.bf16.msra.mxu0 %v5252
    %7137 = vmatpush.bf16.msra.mxu0 %v5244
    %7138 = vmatpush.bf16.msra.mxu0 %v5236
    %7139 = vmatpush.bf16.msra.mxu0 %v5228
    %7140 = vmatmul.bf16.gmra.mxu0 %v1176
    %v7141 = vpop.f32.mrf.mxu0
    %v7142 = vadd.f32 %v7129, %v7141
    %v7143 = vpop.f32.mrf.mxu0
    %7144 = vdwg.mxu0
    %7145 = vmatpush.bf16.msra.mxu0 %v4325
    %7146 = vmatpush.bf16.msra.mxu0 %v4317
    %7147 = vmatpush.bf16.msra.mxu0 %v4309
    %7148 = vmatpush.bf16.msra.mxu0 %v4301
    %7149 = vmatpush.bf16.msra.mxu0 %v4293
    %7150 = vmatpush.bf16.msra.mxu0 %v4285
    %7151 = vmatpush.bf16.msra.mxu0 %v4277
    %7152 = vmatpush.bf16.msra.mxu0 %v4269
    %7153 = vmatmul.bf16.gmra.mxu0 %v1159
    %v7154 = vpop.f32.mrf.mxu0
    %v7155 = vadd.f32 %v1145, %v7154
    %v7156 = vpop.f32.mrf.mxu0
    %7157 = vdwg.mxu0
    %7158 = vmatpush.bf16.msra.mxu0 %v4389
    %7159 = vmatpush.bf16.msra.mxu0 %v4381
    %7160 = vmatpush.bf16.msra.mxu0 %v4373
    %7161 = vmatpush.bf16.msra.mxu0 %v4365
    %7162 = vmatpush.bf16.msra.mxu0 %v4357
    %7163 = vmatpush.bf16.msra.mxu0 %v4349
    %7164 = vmatpush.bf16.msra.mxu0 %v4341
    %7165 = vmatpush.bf16.msra.mxu0 %v4333
    %7166 = vmatmul.bf16.gmra.mxu0 %v1160
    %v7167 = vpop.f32.mrf.mxu0
    %v7168 = vadd.f32 %v7155, %v7167
    %v7169 = vpop.f32.mrf.mxu0
    %7170 = vdwg.mxu0
    %7171 = vmatpush.bf16.msra.mxu0 %v4453
    %7172 = vmatpush.bf16.msra.mxu0 %v4445
    %7173 = vmatpush.bf16.msra.mxu0 %v4437
    %7174 = vmatpush.bf16.msra.mxu0 %v4429
    %7175 = vmatpush.bf16.msra.mxu0 %v4421
    %7176 = vmatpush.bf16.msra.mxu0 %v4413
    %7177 = vmatpush.bf16.msra.mxu0 %v4405
    %7178 = vmatpush.bf16.msra.mxu0 %v4397
    %7179 = vmatmul.bf16.gmra.mxu0 %v1161
    %v7180 = vpop.f32.mrf.mxu0
    %v7181 = vadd.f32 %v7168, %v7180
    %v7182 = vpop.f32.mrf.mxu0
    %7183 = vdwg.mxu0
    %7184 = vmatpush.bf16.msra.mxu0 %v4517
    %7185 = vmatpush.bf16.msra.mxu0 %v4509
    %7186 = vmatpush.bf16.msra.mxu0 %v4501
    %7187 = vmatpush.bf16.msra.mxu0 %v4493
    %7188 = vmatpush.bf16.msra.mxu0 %v4485
    %7189 = vmatpush.bf16.msra.mxu0 %v4477
    %7190 = vmatpush.bf16.msra.mxu0 %v4469
    %7191 = vmatpush.bf16.msra.mxu0 %v4461
    %7192 = vmatmul.bf16.gmra.mxu0 %v1162
    %v7193 = vpop.f32.mrf.mxu0
    %v7194 = vadd.f32 %v7181, %v7193
    %v7195 = vpop.f32.mrf.mxu0
    %7196 = vdwg.mxu0
    %7197 = vmatpush.bf16.msra.mxu0 %v4581
    %7198 = vmatpush.bf16.msra.mxu0 %v4573
    %7199 = vmatpush.bf16.msra.mxu0 %v4565
    %7200 = vmatpush.bf16.msra.mxu0 %v4557
    %7201 = vmatpush.bf16.msra.mxu0 %v4549
    %7202 = vmatpush.bf16.msra.mxu0 %v4541
    %7203 = vmatpush.bf16.msra.mxu0 %v4533
    %7204 = vmatpush.bf16.msra.mxu0 %v4525
    %7205 = vmatmul.bf16.gmra.mxu0 %v1163
    %v7206 = vpop.f32.mrf.mxu0
    %v7207 = vadd.f32 %v7194, %v7206
    %v7208 = vpop.f32.mrf.mxu0
    %7209 = vdwg.mxu0
    %7210 = vmatpush.bf16.msra.mxu0 %v4645
    %7211 = vmatpush.bf16.msra.mxu0 %v4637
    %7212 = vmatpush.bf16.msra.mxu0 %v4629
    %7213 = vmatpush.bf16.msra.mxu0 %v4621
    %7214 = vmatpush.bf16.msra.mxu0 %v4613
    %7215 = vmatpush.bf16.msra.mxu0 %v4605
    %7216 = vmatpush.bf16.msra.mxu0 %v4597
    %7217 = vmatpush.bf16.msra.mxu0 %v4589
    %7218 = vmatmul.bf16.gmra.mxu0 %v1164
    %v7219 = vpop.f32.mrf.mxu0
    %v7220 = vadd.f32 %v7207, %v7219
    %v7221 = vpop.f32.mrf.mxu0
    %7222 = vdwg.mxu0
    %7223 = vmatpush.bf16.msra.mxu0 %v4709
    %7224 = vmatpush.bf16.msra.mxu0 %v4701
    %7225 = vmatpush.bf16.msra.mxu0 %v4693
    %7226 = vmatpush.bf16.msra.mxu0 %v4685
    %7227 = vmatpush.bf16.msra.mxu0 %v4677
    %7228 = vmatpush.bf16.msra.mxu0 %v4669
    %7229 = vmatpush.bf16.msra.mxu0 %v4661
    %7230 = vmatpush.bf16.msra.mxu0 %v4653
    %7231 = vmatmul.bf16.gmra.mxu0 %v1165
    %v7232 = vpop.f32.mrf.mxu0
    %v7233 = vadd.f32 %v7220, %v7232
    %v7234 = vpop.f32.mrf.mxu0
    %7235 = vdwg.mxu0
    %7236 = vmatpush.bf16.msra.mxu0 %v4773
    %7237 = vmatpush.bf16.msra.mxu0 %v4765
    %7238 = vmatpush.bf16.msra.mxu0 %v4757
    %7239 = vmatpush.bf16.msra.mxu0 %v4749
    %7240 = vmatpush.bf16.msra.mxu0 %v4741
    %7241 = vmatpush.bf16.msra.mxu0 %v4733
    %7242 = vmatpush.bf16.msra.mxu0 %v4725
    %7243 = vmatpush.bf16.msra.mxu0 %v4717
    %7244 = vmatmul.bf16.gmra.mxu0 %v1166
    %v7245 = vpop.f32.mrf.mxu0
    %v7246 = vadd.f32 %v7233, %v7245
    %v7247 = vpop.f32.mrf.mxu0
    %7248 = vdwg.mxu0
    %7249 = vmatpush.bf16.msra.mxu0 %v4837
    %7250 = vmatpush.bf16.msra.mxu0 %v4829
    %7251 = vmatpush.bf16.msra.mxu0 %v4821
    %7252 = vmatpush.bf16.msra.mxu0 %v4813
    %7253 = vmatpush.bf16.msra.mxu0 %v4805
    %7254 = vmatpush.bf16.msra.mxu0 %v4797
    %7255 = vmatpush.bf16.msra.mxu0 %v4789
    %7256 = vmatpush.bf16.msra.mxu0 %v4781
    %7257 = vmatmul.bf16.gmra.mxu0 %v1169
    %v7258 = vpop.f32.mrf.mxu0
    %v7259 = vadd.f32 %v7246, %v7258
    %v7260 = vpop.f32.mrf.mxu0
    %7261 = vdwg.mxu0
    %7262 = vmatpush.bf16.msra.mxu0 %v4901
    %7263 = vmatpush.bf16.msra.mxu0 %v4893
    %7264 = vmatpush.bf16.msra.mxu0 %v4885
    %7265 = vmatpush.bf16.msra.mxu0 %v4877
    %7266 = vmatpush.bf16.msra.mxu0 %v4869
    %7267 = vmatpush.bf16.msra.mxu0 %v4861
    %7268 = vmatpush.bf16.msra.mxu0 %v4853
    %7269 = vmatpush.bf16.msra.mxu0 %v4845
    %7270 = vmatmul.bf16.gmra.mxu0 %v1170
    %v7271 = vpop.f32.mrf.mxu0
    %v7272 = vadd.f32 %v7259, %v7271
    %v7273 = vpop.f32.mrf.mxu0
    %7274 = vdwg.mxu0
    %7275 = vmatpush.bf16.msra.mxu0 %v4965
    %7276 = vmatpush.bf16.msra.mxu0 %v4957
    %7277 = vmatpush.bf16.msra.mxu0 %v4949
    %7278 = vmatpush.bf16.msra.mxu0 %v4941
    %7279 = vmatpush.bf16.msra.mxu0 %v4933
    %7280 = vmatpush.bf16.msra.mxu0 %v4925
    %7281 = vmatpush.bf16.msra.mxu0 %v4917
    %7282 = vmatpush.bf16.msra.mxu0 %v4909
    %7283 = vmatmul.bf16.gmra.mxu0 %v1171
    %v7284 = vpop.f32.mrf.mxu0
    %v7285 = vadd.f32 %v7272, %v7284
    %v7286 = vpop.f32.mrf.mxu0
    %7287 = vdwg.mxu0
    %7288 = vmatpush.bf16.msra.mxu0 %v5029
    %7289 = vmatpush.bf16.msra.mxu0 %v5021
    %7290 = vmatpush.bf16.msra.mxu0 %v5013
    %7291 = vmatpush.bf16.msra.mxu0 %v5005
    %7292 = vmatpush.bf16.msra.mxu0 %v4997
    %7293 = vmatpush.bf16.msra.mxu0 %v4989
    %7294 = vmatpush.bf16.msra.mxu0 %v4981
    %7295 = vmatpush.bf16.msra.mxu0 %v4973
    %7296 = vmatmul.bf16.gmra.mxu0 %v1172
    %v7297 = vpop.f32.mrf.mxu0
    %v7298 = vadd.f32 %v7285, %v7297
    %v7299 = vpop.f32.mrf.mxu0
    %7300 = vdwg.mxu0
    %7301 = vmatpush.bf16.msra.mxu0 %v5093
    %7302 = vmatpush.bf16.msra.mxu0 %v5085
    %7303 = vmatpush.bf16.msra.mxu0 %v5077
    %7304 = vmatpush.bf16.msra.mxu0 %v5069
    %7305 = vmatpush.bf16.msra.mxu0 %v5061
    %7306 = vmatpush.bf16.msra.mxu0 %v5053
    %7307 = vmatpush.bf16.msra.mxu0 %v5045
    %7308 = vmatpush.bf16.msra.mxu0 %v5037
    %7309 = vmatmul.bf16.gmra.mxu0 %v1173
    %v7310 = vpop.f32.mrf.mxu0
    %v7311 = vadd.f32 %v7298, %v7310
    %v7312 = vpop.f32.mrf.mxu0
    %7313 = vdwg.mxu0
    %7314 = vmatpush.bf16.msra.mxu0 %v5157
    %7315 = vmatpush.bf16.msra.mxu0 %v5149
    %7316 = vmatpush.bf16.msra.mxu0 %v5141
    %7317 = vmatpush.bf16.msra.mxu0 %v5133
    %7318 = vmatpush.bf16.msra.mxu0 %v5125
    %7319 = vmatpush.bf16.msra.mxu0 %v5117
    %7320 = vmatpush.bf16.msra.mxu0 %v5109
    %7321 = vmatpush.bf16.msra.mxu0 %v5101
    %7322 = vmatmul.bf16.gmra.mxu0 %v1174
    %v7323 = vpop.f32.mrf.mxu0
    %v7324 = vadd.f32 %v7311, %v7323
    %v7325 = vpop.f32.mrf.mxu0
    %7326 = vdwg.mxu0
    %7327 = vmatpush.bf16.msra.mxu0 %v5221
    %7328 = vmatpush.bf16.msra.mxu0 %v5213
    %7329 = vmatpush.bf16.msra.mxu0 %v5205
    %7330 = vmatpush.bf16.msra.mxu0 %v5197
    %7331 = vmatpush.bf16.msra.mxu0 %v5189
    %7332 = vmatpush.bf16.msra.mxu0 %v5181
    %7333 = vmatpush.bf16.msra.mxu0 %v5173
    %7334 = vmatpush.bf16.msra.mxu0 %v5165
    %7335 = vmatmul.bf16.gmra.mxu0 %v1175
    %v7336 = vpop.f32.mrf.mxu0
    %v7337 = vadd.f32 %v7324, %v7336
    %v7338 = vpop.f32.mrf.mxu0
    %7339 = vdwg.mxu0
    %7340 = vmatpush.bf16.msra.mxu0 %v5285
    %7341 = vmatpush.bf16.msra.mxu0 %v5277
    %7342 = vmatpush.bf16.msra.mxu0 %v5269
    %7343 = vmatpush.bf16.msra.mxu0 %v5261
    %7344 = vmatpush.bf16.msra.mxu0 %v5253
    %7345 = vmatpush.bf16.msra.mxu0 %v5245
    %7346 = vmatpush.bf16.msra.mxu0 %v5237
    %7347 = vmatpush.bf16.msra.mxu0 %v5229
    %7348 = vmatmul.bf16.gmra.mxu0 %v1176
    %v7349 = vpop.f32.mrf.mxu0
    %v7350 = vadd.f32 %v7337, %v7349
    %v7351 = vpop.f32.mrf.mxu0
    %7352 = vdwg.mxu0
    %7353 = vmatpush.bf16.msra.mxu0 %v4326
    %7354 = vmatpush.bf16.msra.mxu0 %v4318
    %7355 = vmatpush.bf16.msra.mxu0 %v4310
    %7356 = vmatpush.bf16.msra.mxu0 %v4302
    %7357 = vmatpush.bf16.msra.mxu0 %v4294
    %7358 = vmatpush.bf16.msra.mxu0 %v4286
    %7359 = vmatpush.bf16.msra.mxu0 %v4278
    %7360 = vmatpush.bf16.msra.mxu0 %v4270
    %7361 = vmatmul.bf16.gmra.mxu0 %v1159
    %v7362 = vpop.f32.mrf.mxu0
    %v7363 = vadd.f32 %v1146, %v7362
    %v7364 = vpop.f32.mrf.mxu0
    %7365 = vdwg.mxu0
    %7366 = vmatpush.bf16.msra.mxu0 %v4390
    %7367 = vmatpush.bf16.msra.mxu0 %v4382
    %7368 = vmatpush.bf16.msra.mxu0 %v4374
    %7369 = vmatpush.bf16.msra.mxu0 %v4366
    %7370 = vmatpush.bf16.msra.mxu0 %v4358
    %7371 = vmatpush.bf16.msra.mxu0 %v4350
    %7372 = vmatpush.bf16.msra.mxu0 %v4342
    %7373 = vmatpush.bf16.msra.mxu0 %v4334
    %7374 = vmatmul.bf16.gmra.mxu0 %v1160
    %v7375 = vpop.f32.mrf.mxu0
    %v7376 = vadd.f32 %v7363, %v7375
    %v7377 = vpop.f32.mrf.mxu0
    %7378 = vdwg.mxu0
    %7379 = vmatpush.bf16.msra.mxu0 %v4454
    %7380 = vmatpush.bf16.msra.mxu0 %v4446
    %7381 = vmatpush.bf16.msra.mxu0 %v4438
    %7382 = vmatpush.bf16.msra.mxu0 %v4430
    %7383 = vmatpush.bf16.msra.mxu0 %v4422
    %7384 = vmatpush.bf16.msra.mxu0 %v4414
    %7385 = vmatpush.bf16.msra.mxu0 %v4406
    %7386 = vmatpush.bf16.msra.mxu0 %v4398
    %7387 = vmatmul.bf16.gmra.mxu0 %v1161
    %v7388 = vpop.f32.mrf.mxu0
    %v7389 = vadd.f32 %v7376, %v7388
    %v7390 = vpop.f32.mrf.mxu0
    %7391 = vdwg.mxu0
    %7392 = vmatpush.bf16.msra.mxu0 %v4518
    %7393 = vmatpush.bf16.msra.mxu0 %v4510
    %7394 = vmatpush.bf16.msra.mxu0 %v4502
    %7395 = vmatpush.bf16.msra.mxu0 %v4494
    %7396 = vmatpush.bf16.msra.mxu0 %v4486
    %7397 = vmatpush.bf16.msra.mxu0 %v4478
    %7398 = vmatpush.bf16.msra.mxu0 %v4470
    %7399 = vmatpush.bf16.msra.mxu0 %v4462
    %7400 = vmatmul.bf16.gmra.mxu0 %v1162
    %v7401 = vpop.f32.mrf.mxu0
    %v7402 = vadd.f32 %v7389, %v7401
    %v7403 = vpop.f32.mrf.mxu0
    %7404 = vdwg.mxu0
    %7405 = vmatpush.bf16.msra.mxu0 %v4582
    %7406 = vmatpush.bf16.msra.mxu0 %v4574
    %7407 = vmatpush.bf16.msra.mxu0 %v4566
    %7408 = vmatpush.bf16.msra.mxu0 %v4558
    %7409 = vmatpush.bf16.msra.mxu0 %v4550
    %7410 = vmatpush.bf16.msra.mxu0 %v4542
    %7411 = vmatpush.bf16.msra.mxu0 %v4534
    %7412 = vmatpush.bf16.msra.mxu0 %v4526
    %7413 = vmatmul.bf16.gmra.mxu0 %v1163
    %v7414 = vpop.f32.mrf.mxu0
    %v7415 = vadd.f32 %v7402, %v7414
    %v7416 = vpop.f32.mrf.mxu0
    %7417 = vdwg.mxu0
    %7418 = vmatpush.bf16.msra.mxu0 %v4646
    %7419 = vmatpush.bf16.msra.mxu0 %v4638
    %7420 = vmatpush.bf16.msra.mxu0 %v4630
    %7421 = vmatpush.bf16.msra.mxu0 %v4622
    %7422 = vmatpush.bf16.msra.mxu0 %v4614
    %7423 = vmatpush.bf16.msra.mxu0 %v4606
    %7424 = vmatpush.bf16.msra.mxu0 %v4598
    %7425 = vmatpush.bf16.msra.mxu0 %v4590
    %7426 = vmatmul.bf16.gmra.mxu0 %v1164
    %v7427 = vpop.f32.mrf.mxu0
    %v7428 = vadd.f32 %v7415, %v7427
    %v7429 = vpop.f32.mrf.mxu0
    %7430 = vdwg.mxu0
    %7431 = vmatpush.bf16.msra.mxu0 %v4710
    %7432 = vmatpush.bf16.msra.mxu0 %v4702
    %7433 = vmatpush.bf16.msra.mxu0 %v4694
    %7434 = vmatpush.bf16.msra.mxu0 %v4686
    %7435 = vmatpush.bf16.msra.mxu0 %v4678
    %7436 = vmatpush.bf16.msra.mxu0 %v4670
    %7437 = vmatpush.bf16.msra.mxu0 %v4662
    %7438 = vmatpush.bf16.msra.mxu0 %v4654
    %7439 = vmatmul.bf16.gmra.mxu0 %v1165
    %v7440 = vpop.f32.mrf.mxu0
    %v7441 = vadd.f32 %v7428, %v7440
    %v7442 = vpop.f32.mrf.mxu0
    %7443 = vdwg.mxu0
    %7444 = vmatpush.bf16.msra.mxu0 %v4774
    %7445 = vmatpush.bf16.msra.mxu0 %v4766
    %7446 = vmatpush.bf16.msra.mxu0 %v4758
    %7447 = vmatpush.bf16.msra.mxu0 %v4750
    %7448 = vmatpush.bf16.msra.mxu0 %v4742
    %7449 = vmatpush.bf16.msra.mxu0 %v4734
    %7450 = vmatpush.bf16.msra.mxu0 %v4726
    %7451 = vmatpush.bf16.msra.mxu0 %v4718
    %7452 = vmatmul.bf16.gmra.mxu0 %v1166
    %v7453 = vpop.f32.mrf.mxu0
    %v7454 = vadd.f32 %v7441, %v7453
    %v7455 = vpop.f32.mrf.mxu0
    %7456 = vdwg.mxu0
    %7457 = vmatpush.bf16.msra.mxu0 %v4838
    %7458 = vmatpush.bf16.msra.mxu0 %v4830
    %7459 = vmatpush.bf16.msra.mxu0 %v4822
    %7460 = vmatpush.bf16.msra.mxu0 %v4814
    %7461 = vmatpush.bf16.msra.mxu0 %v4806
    %7462 = vmatpush.bf16.msra.mxu0 %v4798
    %7463 = vmatpush.bf16.msra.mxu0 %v4790
    %7464 = vmatpush.bf16.msra.mxu0 %v4782
    %7465 = vmatmul.bf16.gmra.mxu0 %v1169
    %v7466 = vpop.f32.mrf.mxu0
    %v7467 = vadd.f32 %v7454, %v7466
    %v7468 = vpop.f32.mrf.mxu0
    %7469 = vdwg.mxu0
    %7470 = vmatpush.bf16.msra.mxu0 %v4902
    %7471 = vmatpush.bf16.msra.mxu0 %v4894
    %7472 = vmatpush.bf16.msra.mxu0 %v4886
    %7473 = vmatpush.bf16.msra.mxu0 %v4878
    %7474 = vmatpush.bf16.msra.mxu0 %v4870
    %7475 = vmatpush.bf16.msra.mxu0 %v4862
    %7476 = vmatpush.bf16.msra.mxu0 %v4854
    %7477 = vmatpush.bf16.msra.mxu0 %v4846
    %7478 = vmatmul.bf16.gmra.mxu0 %v1170
    %v7479 = vpop.f32.mrf.mxu0
    %v7480 = vadd.f32 %v7467, %v7479
    %v7481 = vpop.f32.mrf.mxu0
    %7482 = vdwg.mxu0
    %7483 = vmatpush.bf16.msra.mxu0 %v4966
    %7484 = vmatpush.bf16.msra.mxu0 %v4958
    %7485 = vmatpush.bf16.msra.mxu0 %v4950
    %7486 = vmatpush.bf16.msra.mxu0 %v4942
    %7487 = vmatpush.bf16.msra.mxu0 %v4934
    %7488 = vmatpush.bf16.msra.mxu0 %v4926
    %7489 = vmatpush.bf16.msra.mxu0 %v4918
    %7490 = vmatpush.bf16.msra.mxu0 %v4910
    %7491 = vmatmul.bf16.gmra.mxu0 %v1171
    %v7492 = vpop.f32.mrf.mxu0
    %v7493 = vadd.f32 %v7480, %v7492
    %v7494 = vpop.f32.mrf.mxu0
    %7495 = vdwg.mxu0
    %7496 = vmatpush.bf16.msra.mxu0 %v5030
    %7497 = vmatpush.bf16.msra.mxu0 %v5022
    %7498 = vmatpush.bf16.msra.mxu0 %v5014
    %7499 = vmatpush.bf16.msra.mxu0 %v5006
    %7500 = vmatpush.bf16.msra.mxu0 %v4998
    %7501 = vmatpush.bf16.msra.mxu0 %v4990
    %7502 = vmatpush.bf16.msra.mxu0 %v4982
    %7503 = vmatpush.bf16.msra.mxu0 %v4974
    %7504 = vmatmul.bf16.gmra.mxu0 %v1172
    %v7505 = vpop.f32.mrf.mxu0
    %v7506 = vadd.f32 %v7493, %v7505
    %v7507 = vpop.f32.mrf.mxu0
    %7508 = vdwg.mxu0
    %7509 = vmatpush.bf16.msra.mxu0 %v5094
    %7510 = vmatpush.bf16.msra.mxu0 %v5086
    %7511 = vmatpush.bf16.msra.mxu0 %v5078
    %7512 = vmatpush.bf16.msra.mxu0 %v5070
    %7513 = vmatpush.bf16.msra.mxu0 %v5062
    %7514 = vmatpush.bf16.msra.mxu0 %v5054
    %7515 = vmatpush.bf16.msra.mxu0 %v5046
    %7516 = vmatpush.bf16.msra.mxu0 %v5038
    %7517 = vmatmul.bf16.gmra.mxu0 %v1173
    %v7518 = vpop.f32.mrf.mxu0
    %v7519 = vadd.f32 %v7506, %v7518
    %v7520 = vpop.f32.mrf.mxu0
    %7521 = vdwg.mxu0
    %7522 = vmatpush.bf16.msra.mxu0 %v5158
    %7523 = vmatpush.bf16.msra.mxu0 %v5150
    %7524 = vmatpush.bf16.msra.mxu0 %v5142
    %7525 = vmatpush.bf16.msra.mxu0 %v5134
    %7526 = vmatpush.bf16.msra.mxu0 %v5126
    %7527 = vmatpush.bf16.msra.mxu0 %v5118
    %7528 = vmatpush.bf16.msra.mxu0 %v5110
    %7529 = vmatpush.bf16.msra.mxu0 %v5102
    %7530 = vmatmul.bf16.gmra.mxu0 %v1174
    %v7531 = vpop.f32.mrf.mxu0
    %v7532 = vadd.f32 %v7519, %v7531
    %v7533 = vpop.f32.mrf.mxu0
    %7534 = vdwg.mxu0
    %7535 = vmatpush.bf16.msra.mxu0 %v5222
    %7536 = vmatpush.bf16.msra.mxu0 %v5214
    %7537 = vmatpush.bf16.msra.mxu0 %v5206
    %7538 = vmatpush.bf16.msra.mxu0 %v5198
    %7539 = vmatpush.bf16.msra.mxu0 %v5190
    %7540 = vmatpush.bf16.msra.mxu0 %v5182
    %7541 = vmatpush.bf16.msra.mxu0 %v5174
    %7542 = vmatpush.bf16.msra.mxu0 %v5166
    %7543 = vmatmul.bf16.gmra.mxu0 %v1175
    %v7544 = vpop.f32.mrf.mxu0
    %v7545 = vadd.f32 %v7532, %v7544
    %v7546 = vpop.f32.mrf.mxu0
    %7547 = vdwg.mxu0
    %7548 = vmatpush.bf16.msra.mxu0 %v5286
    %7549 = vmatpush.bf16.msra.mxu0 %v5278
    %7550 = vmatpush.bf16.msra.mxu0 %v5270
    %7551 = vmatpush.bf16.msra.mxu0 %v5262
    %7552 = vmatpush.bf16.msra.mxu0 %v5254
    %7553 = vmatpush.bf16.msra.mxu0 %v5246
    %7554 = vmatpush.bf16.msra.mxu0 %v5238
    %7555 = vmatpush.bf16.msra.mxu0 %v5230
    %7556 = vmatmul.bf16.gmra.mxu0 %v1176
    %v7557 = vpop.f32.mrf.mxu0
    %v7558 = vadd.f32 %v7545, %v7557
    %v7559 = vpop.f32.mrf.mxu0
    %7560 = vdwg.mxu0
    %7561 = vmatpush.bf16.msra.mxu0 %v4327
    %7562 = vmatpush.bf16.msra.mxu0 %v4319
    %7563 = vmatpush.bf16.msra.mxu0 %v4311
    %7564 = vmatpush.bf16.msra.mxu0 %v4303
    %7565 = vmatpush.bf16.msra.mxu0 %v4295
    %7566 = vmatpush.bf16.msra.mxu0 %v4287
    %7567 = vmatpush.bf16.msra.mxu0 %v4279
    %7568 = vmatpush.bf16.msra.mxu0 %v4271
    %7569 = vmatmul.bf16.gmra.mxu0 %v1159
    %v7570 = vpop.f32.mrf.mxu0
    %v7571 = vadd.f32 %v1147, %v7570
    %v7572 = vpop.f32.mrf.mxu0
    %7573 = vdwg.mxu0
    %7574 = vmatpush.bf16.msra.mxu0 %v4391
    %7575 = vmatpush.bf16.msra.mxu0 %v4383
    %7576 = vmatpush.bf16.msra.mxu0 %v4375
    %7577 = vmatpush.bf16.msra.mxu0 %v4367
    %7578 = vmatpush.bf16.msra.mxu0 %v4359
    %7579 = vmatpush.bf16.msra.mxu0 %v4351
    %7580 = vmatpush.bf16.msra.mxu0 %v4343
    %7581 = vmatpush.bf16.msra.mxu0 %v4335
    %7582 = vmatmul.bf16.gmra.mxu0 %v1160
    %v7583 = vpop.f32.mrf.mxu0
    %v7584 = vadd.f32 %v7571, %v7583
    %v7585 = vpop.f32.mrf.mxu0
    %7586 = vdwg.mxu0
    %7587 = vmatpush.bf16.msra.mxu0 %v4455
    %7588 = vmatpush.bf16.msra.mxu0 %v4447
    %7589 = vmatpush.bf16.msra.mxu0 %v4439
    %7590 = vmatpush.bf16.msra.mxu0 %v4431
    %7591 = vmatpush.bf16.msra.mxu0 %v4423
    %7592 = vmatpush.bf16.msra.mxu0 %v4415
    %7593 = vmatpush.bf16.msra.mxu0 %v4407
    %7594 = vmatpush.bf16.msra.mxu0 %v4399
    %7595 = vmatmul.bf16.gmra.mxu0 %v1161
    %v7596 = vpop.f32.mrf.mxu0
    %v7597 = vadd.f32 %v7584, %v7596
    %v7598 = vpop.f32.mrf.mxu0
    %7599 = vdwg.mxu0
    %7600 = vmatpush.bf16.msra.mxu0 %v4519
    %7601 = vmatpush.bf16.msra.mxu0 %v4511
    %7602 = vmatpush.bf16.msra.mxu0 %v4503
    %7603 = vmatpush.bf16.msra.mxu0 %v4495
    %7604 = vmatpush.bf16.msra.mxu0 %v4487
    %7605 = vmatpush.bf16.msra.mxu0 %v4479
    %7606 = vmatpush.bf16.msra.mxu0 %v4471
    %7607 = vmatpush.bf16.msra.mxu0 %v4463
    %7608 = vmatmul.bf16.gmra.mxu0 %v1162
    %v7609 = vpop.f32.mrf.mxu0
    %v7610 = vadd.f32 %v7597, %v7609
    %v7611 = vpop.f32.mrf.mxu0
    %7612 = vdwg.mxu0
    %7613 = vmatpush.bf16.msra.mxu0 %v4583
    %7614 = vmatpush.bf16.msra.mxu0 %v4575
    %7615 = vmatpush.bf16.msra.mxu0 %v4567
    %7616 = vmatpush.bf16.msra.mxu0 %v4559
    %7617 = vmatpush.bf16.msra.mxu0 %v4551
    %7618 = vmatpush.bf16.msra.mxu0 %v4543
    %7619 = vmatpush.bf16.msra.mxu0 %v4535
    %7620 = vmatpush.bf16.msra.mxu0 %v4527
    %7621 = vmatmul.bf16.gmra.mxu0 %v1163
    %v7622 = vpop.f32.mrf.mxu0
    %v7623 = vadd.f32 %v7610, %v7622
    %v7624 = vpop.f32.mrf.mxu0
    %7625 = vdwg.mxu0
    %7626 = vmatpush.bf16.msra.mxu0 %v4647
    %7627 = vmatpush.bf16.msra.mxu0 %v4639
    %7628 = vmatpush.bf16.msra.mxu0 %v4631
    %7629 = vmatpush.bf16.msra.mxu0 %v4623
    %7630 = vmatpush.bf16.msra.mxu0 %v4615
    %7631 = vmatpush.bf16.msra.mxu0 %v4607
    %7632 = vmatpush.bf16.msra.mxu0 %v4599
    %7633 = vmatpush.bf16.msra.mxu0 %v4591
    %7634 = vmatmul.bf16.gmra.mxu0 %v1164
    %v7635 = vpop.f32.mrf.mxu0
    %v7636 = vadd.f32 %v7623, %v7635
    %v7637 = vpop.f32.mrf.mxu0
    %7638 = vdwg.mxu0
    %7639 = vmatpush.bf16.msra.mxu0 %v4711
    %7640 = vmatpush.bf16.msra.mxu0 %v4703
    %7641 = vmatpush.bf16.msra.mxu0 %v4695
    %7642 = vmatpush.bf16.msra.mxu0 %v4687
    %7643 = vmatpush.bf16.msra.mxu0 %v4679
    %7644 = vmatpush.bf16.msra.mxu0 %v4671
    %7645 = vmatpush.bf16.msra.mxu0 %v4663
    %7646 = vmatpush.bf16.msra.mxu0 %v4655
    %7647 = vmatmul.bf16.gmra.mxu0 %v1165
    %v7648 = vpop.f32.mrf.mxu0
    %v7649 = vadd.f32 %v7636, %v7648
    %v7650 = vpop.f32.mrf.mxu0
    %7651 = vdwg.mxu0
    %7652 = vmatpush.bf16.msra.mxu0 %v4775
    %7653 = vmatpush.bf16.msra.mxu0 %v4767
    %7654 = vmatpush.bf16.msra.mxu0 %v4759
    %7655 = vmatpush.bf16.msra.mxu0 %v4751
    %7656 = vmatpush.bf16.msra.mxu0 %v4743
    %7657 = vmatpush.bf16.msra.mxu0 %v4735
    %7658 = vmatpush.bf16.msra.mxu0 %v4727
    %7659 = vmatpush.bf16.msra.mxu0 %v4719
    %7660 = vmatmul.bf16.gmra.mxu0 %v1166
    %v7661 = vpop.f32.mrf.mxu0
    %v7662 = vadd.f32 %v7649, %v7661
    %v7663 = vpop.f32.mrf.mxu0
    %7664 = vdwg.mxu0
    %7665 = vmatpush.bf16.msra.mxu0 %v4839
    %7666 = vmatpush.bf16.msra.mxu0 %v4831
    %7667 = vmatpush.bf16.msra.mxu0 %v4823
    %7668 = vmatpush.bf16.msra.mxu0 %v4815
    %7669 = vmatpush.bf16.msra.mxu0 %v4807
    %7670 = vmatpush.bf16.msra.mxu0 %v4799
    %7671 = vmatpush.bf16.msra.mxu0 %v4791
    %7672 = vmatpush.bf16.msra.mxu0 %v4783
    %7673 = vmatmul.bf16.gmra.mxu0 %v1169
    %v7674 = vpop.f32.mrf.mxu0
    %v7675 = vadd.f32 %v7662, %v7674
    %v7676 = vpop.f32.mrf.mxu0
    %7677 = vdwg.mxu0
    %7678 = vmatpush.bf16.msra.mxu0 %v4903
    %7679 = vmatpush.bf16.msra.mxu0 %v4895
    %7680 = vmatpush.bf16.msra.mxu0 %v4887
    %7681 = vmatpush.bf16.msra.mxu0 %v4879
    %7682 = vmatpush.bf16.msra.mxu0 %v4871
    %7683 = vmatpush.bf16.msra.mxu0 %v4863
    %7684 = vmatpush.bf16.msra.mxu0 %v4855
    %7685 = vmatpush.bf16.msra.mxu0 %v4847
    %7686 = vmatmul.bf16.gmra.mxu0 %v1170
    %v7687 = vpop.f32.mrf.mxu0
    %v7688 = vadd.f32 %v7675, %v7687
    %v7689 = vpop.f32.mrf.mxu0
    %7690 = vdwg.mxu0
    %7691 = vmatpush.bf16.msra.mxu0 %v4967
    %7692 = vmatpush.bf16.msra.mxu0 %v4959
    %7693 = vmatpush.bf16.msra.mxu0 %v4951
    %7694 = vmatpush.bf16.msra.mxu0 %v4943
    %7695 = vmatpush.bf16.msra.mxu0 %v4935
    %7696 = vmatpush.bf16.msra.mxu0 %v4927
    %7697 = vmatpush.bf16.msra.mxu0 %v4919
    %7698 = vmatpush.bf16.msra.mxu0 %v4911
    %7699 = vmatmul.bf16.gmra.mxu0 %v1171
    %v7700 = vpop.f32.mrf.mxu0
    %v7701 = vadd.f32 %v7688, %v7700
    %v7702 = vpop.f32.mrf.mxu0
    %7703 = vdwg.mxu0
    %7704 = vmatpush.bf16.msra.mxu0 %v5031
    %7705 = vmatpush.bf16.msra.mxu0 %v5023
    %7706 = vmatpush.bf16.msra.mxu0 %v5015
    %7707 = vmatpush.bf16.msra.mxu0 %v5007
    %7708 = vmatpush.bf16.msra.mxu0 %v4999
    %7709 = vmatpush.bf16.msra.mxu0 %v4991
    %7710 = vmatpush.bf16.msra.mxu0 %v4983
    %7711 = vmatpush.bf16.msra.mxu0 %v4975
    %7712 = vmatmul.bf16.gmra.mxu0 %v1172
    %v7713 = vpop.f32.mrf.mxu0
    %v7714 = vadd.f32 %v7701, %v7713
    %v7715 = vpop.f32.mrf.mxu0
    %7716 = vdwg.mxu0
    %7717 = vmatpush.bf16.msra.mxu0 %v5095
    %7718 = vmatpush.bf16.msra.mxu0 %v5087
    %7719 = vmatpush.bf16.msra.mxu0 %v5079
    %7720 = vmatpush.bf16.msra.mxu0 %v5071
    %7721 = vmatpush.bf16.msra.mxu0 %v5063
    %7722 = vmatpush.bf16.msra.mxu0 %v5055
    %7723 = vmatpush.bf16.msra.mxu0 %v5047
    %7724 = vmatpush.bf16.msra.mxu0 %v5039
    %7725 = vmatmul.bf16.gmra.mxu0 %v1173
    %v7726 = vpop.f32.mrf.mxu0
    %v7727 = vadd.f32 %v7714, %v7726
    %v7728 = vpop.f32.mrf.mxu0
    %7729 = vdwg.mxu0
    %7730 = vmatpush.bf16.msra.mxu0 %v5159
    %7731 = vmatpush.bf16.msra.mxu0 %v5151
    %7732 = vmatpush.bf16.msra.mxu0 %v5143
    %7733 = vmatpush.bf16.msra.mxu0 %v5135
    %7734 = vmatpush.bf16.msra.mxu0 %v5127
    %7735 = vmatpush.bf16.msra.mxu0 %v5119
    %7736 = vmatpush.bf16.msra.mxu0 %v5111
    %7737 = vmatpush.bf16.msra.mxu0 %v5103
    %7738 = vmatmul.bf16.gmra.mxu0 %v1174
    %v7739 = vpop.f32.mrf.mxu0
    %v7740 = vadd.f32 %v7727, %v7739
    %v7741 = vpop.f32.mrf.mxu0
    %7742 = vdwg.mxu0
    %7743 = vmatpush.bf16.msra.mxu0 %v5223
    %7744 = vmatpush.bf16.msra.mxu0 %v5215
    %7745 = vmatpush.bf16.msra.mxu0 %v5207
    %7746 = vmatpush.bf16.msra.mxu0 %v5199
    %7747 = vmatpush.bf16.msra.mxu0 %v5191
    %7748 = vmatpush.bf16.msra.mxu0 %v5183
    %7749 = vmatpush.bf16.msra.mxu0 %v5175
    %7750 = vmatpush.bf16.msra.mxu0 %v5167
    %7751 = vmatmul.bf16.gmra.mxu0 %v1175
    %v7752 = vpop.f32.mrf.mxu0
    %v7753 = vadd.f32 %v7740, %v7752
    %v7754 = vpop.f32.mrf.mxu0
    %7755 = vdwg.mxu0
    %7756 = vmatpush.bf16.msra.mxu0 %v5287
    %7757 = vmatpush.bf16.msra.mxu0 %v5279
    %7758 = vmatpush.bf16.msra.mxu0 %v5271
    %7759 = vmatpush.bf16.msra.mxu0 %v5263
    %7760 = vmatpush.bf16.msra.mxu0 %v5255
    %7761 = vmatpush.bf16.msra.mxu0 %v5247
    %7762 = vmatpush.bf16.msra.mxu0 %v5239
    %7763 = vmatpush.bf16.msra.mxu0 %v5231
    %7764 = vmatmul.bf16.gmra.mxu0 %v1176
    %v7765 = vpop.f32.mrf.mxu0
    %v7766 = vadd.f32 %v7753, %v7765
    %v7767 = vpop.f32.mrf.mxu0
    %7768 = vdwg.mxu0
    %7769 = vmatpush.bf16.msra.mxu0 %v4328
    %7770 = vmatpush.bf16.msra.mxu0 %v4320
    %7771 = vmatpush.bf16.msra.mxu0 %v4312
    %7772 = vmatpush.bf16.msra.mxu0 %v4304
    %7773 = vmatpush.bf16.msra.mxu0 %v4296
    %7774 = vmatpush.bf16.msra.mxu0 %v4288
    %7775 = vmatpush.bf16.msra.mxu0 %v4280
    %7776 = vmatpush.bf16.msra.mxu0 %v4272
    %7777 = vmatmul.bf16.gmra.mxu0 %v1159
    %v7778 = vpop.f32.mrf.mxu0
    %v7779 = vadd.f32 %v1148, %v7778
    %v7780 = vpop.f32.mrf.mxu0
    %7781 = vdwg.mxu0
    %7782 = vmatpush.bf16.msra.mxu0 %v4392
    %7783 = vmatpush.bf16.msra.mxu0 %v4384
    %7784 = vmatpush.bf16.msra.mxu0 %v4376
    %7785 = vmatpush.bf16.msra.mxu0 %v4368
    %7786 = vmatpush.bf16.msra.mxu0 %v4360
    %7787 = vmatpush.bf16.msra.mxu0 %v4352
    %7788 = vmatpush.bf16.msra.mxu0 %v4344
    %7789 = vmatpush.bf16.msra.mxu0 %v4336
    %7790 = vmatmul.bf16.gmra.mxu0 %v1160
    %v7791 = vpop.f32.mrf.mxu0
    %v7792 = vadd.f32 %v7779, %v7791
    %v7793 = vpop.f32.mrf.mxu0
    %7794 = vdwg.mxu0
    %7795 = vmatpush.bf16.msra.mxu0 %v4456
    %7796 = vmatpush.bf16.msra.mxu0 %v4448
    %7797 = vmatpush.bf16.msra.mxu0 %v4440
    %7798 = vmatpush.bf16.msra.mxu0 %v4432
    %7799 = vmatpush.bf16.msra.mxu0 %v4424
    %7800 = vmatpush.bf16.msra.mxu0 %v4416
    %7801 = vmatpush.bf16.msra.mxu0 %v4408
    %7802 = vmatpush.bf16.msra.mxu0 %v4400
    %7803 = vmatmul.bf16.gmra.mxu0 %v1161
    %v7804 = vpop.f32.mrf.mxu0
    %v7805 = vadd.f32 %v7792, %v7804
    %v7806 = vpop.f32.mrf.mxu0
    %7807 = vdwg.mxu0
    %7808 = vmatpush.bf16.msra.mxu0 %v4520
    %7809 = vmatpush.bf16.msra.mxu0 %v4512
    %7810 = vmatpush.bf16.msra.mxu0 %v4504
    %7811 = vmatpush.bf16.msra.mxu0 %v4496
    %7812 = vmatpush.bf16.msra.mxu0 %v4488
    %7813 = vmatpush.bf16.msra.mxu0 %v4480
    %7814 = vmatpush.bf16.msra.mxu0 %v4472
    %7815 = vmatpush.bf16.msra.mxu0 %v4464
    %7816 = vmatmul.bf16.gmra.mxu0 %v1162
    %v7817 = vpop.f32.mrf.mxu0
    %v7818 = vadd.f32 %v7805, %v7817
    %v7819 = vpop.f32.mrf.mxu0
    %7820 = vdwg.mxu0
    %7821 = vmatpush.bf16.msra.mxu0 %v4584
    %7822 = vmatpush.bf16.msra.mxu0 %v4576
    %7823 = vmatpush.bf16.msra.mxu0 %v4568
    %7824 = vmatpush.bf16.msra.mxu0 %v4560
    %7825 = vmatpush.bf16.msra.mxu0 %v4552
    %7826 = vmatpush.bf16.msra.mxu0 %v4544
    %7827 = vmatpush.bf16.msra.mxu0 %v4536
    %7828 = vmatpush.bf16.msra.mxu0 %v4528
    %7829 = vmatmul.bf16.gmra.mxu0 %v1163
    %v7830 = vpop.f32.mrf.mxu0
    %v7831 = vadd.f32 %v7818, %v7830
    %v7832 = vpop.f32.mrf.mxu0
    %7833 = vdwg.mxu0
    %7834 = vmatpush.bf16.msra.mxu0 %v4648
    %7835 = vmatpush.bf16.msra.mxu0 %v4640
    %7836 = vmatpush.bf16.msra.mxu0 %v4632
    %7837 = vmatpush.bf16.msra.mxu0 %v4624
    %7838 = vmatpush.bf16.msra.mxu0 %v4616
    %7839 = vmatpush.bf16.msra.mxu0 %v4608
    %7840 = vmatpush.bf16.msra.mxu0 %v4600
    %7841 = vmatpush.bf16.msra.mxu0 %v4592
    %7842 = vmatmul.bf16.gmra.mxu0 %v1164
    %v7843 = vpop.f32.mrf.mxu0
    %v7844 = vadd.f32 %v7831, %v7843
    %v7845 = vpop.f32.mrf.mxu0
    %7846 = vdwg.mxu0
    %7847 = vmatpush.bf16.msra.mxu0 %v4712
    %7848 = vmatpush.bf16.msra.mxu0 %v4704
    %7849 = vmatpush.bf16.msra.mxu0 %v4696
    %7850 = vmatpush.bf16.msra.mxu0 %v4688
    %7851 = vmatpush.bf16.msra.mxu0 %v4680
    %7852 = vmatpush.bf16.msra.mxu0 %v4672
    %7853 = vmatpush.bf16.msra.mxu0 %v4664
    %7854 = vmatpush.bf16.msra.mxu0 %v4656
    %7855 = vmatmul.bf16.gmra.mxu0 %v1165
    %v7856 = vpop.f32.mrf.mxu0
    %v7857 = vadd.f32 %v7844, %v7856
    %v7858 = vpop.f32.mrf.mxu0
    %7859 = vdwg.mxu0
    %7860 = vmatpush.bf16.msra.mxu0 %v4776
    %7861 = vmatpush.bf16.msra.mxu0 %v4768
    %7862 = vmatpush.bf16.msra.mxu0 %v4760
    %7863 = vmatpush.bf16.msra.mxu0 %v4752
    %7864 = vmatpush.bf16.msra.mxu0 %v4744
    %7865 = vmatpush.bf16.msra.mxu0 %v4736
    %7866 = vmatpush.bf16.msra.mxu0 %v4728
    %7867 = vmatpush.bf16.msra.mxu0 %v4720
    %7868 = vmatmul.bf16.gmra.mxu0 %v1166
    %v7869 = vpop.f32.mrf.mxu0
    %v7870 = vadd.f32 %v7857, %v7869
    %v7871 = vpop.f32.mrf.mxu0
    %7872 = vdwg.mxu0
    %7873 = vmatpush.bf16.msra.mxu0 %v4840
    %7874 = vmatpush.bf16.msra.mxu0 %v4832
    %7875 = vmatpush.bf16.msra.mxu0 %v4824
    %7876 = vmatpush.bf16.msra.mxu0 %v4816
    %7877 = vmatpush.bf16.msra.mxu0 %v4808
    %7878 = vmatpush.bf16.msra.mxu0 %v4800
    %7879 = vmatpush.bf16.msra.mxu0 %v4792
    %7880 = vmatpush.bf16.msra.mxu0 %v4784
    %7881 = vmatmul.bf16.gmra.mxu0 %v1169
    %v7882 = vpop.f32.mrf.mxu0
    %v7883 = vadd.f32 %v7870, %v7882
    %v7884 = vpop.f32.mrf.mxu0
    %7885 = vdwg.mxu0
    %7886 = vmatpush.bf16.msra.mxu0 %v4904
    %7887 = vmatpush.bf16.msra.mxu0 %v4896
    %7888 = vmatpush.bf16.msra.mxu0 %v4888
    %7889 = vmatpush.bf16.msra.mxu0 %v4880
    %7890 = vmatpush.bf16.msra.mxu0 %v4872
    %7891 = vmatpush.bf16.msra.mxu0 %v4864
    %7892 = vmatpush.bf16.msra.mxu0 %v4856
    %7893 = vmatpush.bf16.msra.mxu0 %v4848
    %7894 = vmatmul.bf16.gmra.mxu0 %v1170
    %v7895 = vpop.f32.mrf.mxu0
    %v7896 = vadd.f32 %v7883, %v7895
    %v7897 = vpop.f32.mrf.mxu0
    %7898 = vdwg.mxu0
    %7899 = vmatpush.bf16.msra.mxu0 %v4968
    %7900 = vmatpush.bf16.msra.mxu0 %v4960
    %7901 = vmatpush.bf16.msra.mxu0 %v4952
    %7902 = vmatpush.bf16.msra.mxu0 %v4944
    %7903 = vmatpush.bf16.msra.mxu0 %v4936
    %7904 = vmatpush.bf16.msra.mxu0 %v4928
    %7905 = vmatpush.bf16.msra.mxu0 %v4920
    %7906 = vmatpush.bf16.msra.mxu0 %v4912
    %7907 = vmatmul.bf16.gmra.mxu0 %v1171
    %v7908 = vpop.f32.mrf.mxu0
    %v7909 = vadd.f32 %v7896, %v7908
    %v7910 = vpop.f32.mrf.mxu0
    %7911 = vdwg.mxu0
    %7912 = vmatpush.bf16.msra.mxu0 %v5032
    %7913 = vmatpush.bf16.msra.mxu0 %v5024
    %7914 = vmatpush.bf16.msra.mxu0 %v5016
    %7915 = vmatpush.bf16.msra.mxu0 %v5008
    %7916 = vmatpush.bf16.msra.mxu0 %v5000
    %7917 = vmatpush.bf16.msra.mxu0 %v4992
    %7918 = vmatpush.bf16.msra.mxu0 %v4984
    %7919 = vmatpush.bf16.msra.mxu0 %v4976
    %7920 = vmatmul.bf16.gmra.mxu0 %v1172
    %v7921 = vpop.f32.mrf.mxu0
    %v7922 = vadd.f32 %v7909, %v7921
    %v7923 = vpop.f32.mrf.mxu0
    %7924 = vdwg.mxu0
    %7925 = vmatpush.bf16.msra.mxu0 %v5096
    %7926 = vmatpush.bf16.msra.mxu0 %v5088
    %7927 = vmatpush.bf16.msra.mxu0 %v5080
    %7928 = vmatpush.bf16.msra.mxu0 %v5072
    %7929 = vmatpush.bf16.msra.mxu0 %v5064
    %7930 = vmatpush.bf16.msra.mxu0 %v5056
    %7931 = vmatpush.bf16.msra.mxu0 %v5048
    %7932 = vmatpush.bf16.msra.mxu0 %v5040
    %7933 = vmatmul.bf16.gmra.mxu0 %v1173
    %v7934 = vpop.f32.mrf.mxu0
    %v7935 = vadd.f32 %v7922, %v7934
    %v7936 = vpop.f32.mrf.mxu0
    %7937 = vdwg.mxu0
    %7938 = vmatpush.bf16.msra.mxu0 %v5160
    %7939 = vmatpush.bf16.msra.mxu0 %v5152
    %7940 = vmatpush.bf16.msra.mxu0 %v5144
    %7941 = vmatpush.bf16.msra.mxu0 %v5136
    %7942 = vmatpush.bf16.msra.mxu0 %v5128
    %7943 = vmatpush.bf16.msra.mxu0 %v5120
    %7944 = vmatpush.bf16.msra.mxu0 %v5112
    %7945 = vmatpush.bf16.msra.mxu0 %v5104
    %7946 = vmatmul.bf16.gmra.mxu0 %v1174
    %v7947 = vpop.f32.mrf.mxu0
    %v7948 = vadd.f32 %v7935, %v7947
    %v7949 = vpop.f32.mrf.mxu0
    %7950 = vdwg.mxu0
    %7951 = vmatpush.bf16.msra.mxu0 %v5224
    %7952 = vmatpush.bf16.msra.mxu0 %v5216
    %7953 = vmatpush.bf16.msra.mxu0 %v5208
    %7954 = vmatpush.bf16.msra.mxu0 %v5200
    %7955 = vmatpush.bf16.msra.mxu0 %v5192
    %7956 = vmatpush.bf16.msra.mxu0 %v5184
    %7957 = vmatpush.bf16.msra.mxu0 %v5176
    %7958 = vmatpush.bf16.msra.mxu0 %v5168
    %7959 = vmatmul.bf16.gmra.mxu0 %v1175
    %v7960 = vpop.f32.mrf.mxu0
    %v7961 = vadd.f32 %v7948, %v7960
    %v7962 = vpop.f32.mrf.mxu0
    %7963 = vdwg.mxu0
    %7964 = vmatpush.bf16.msra.mxu0 %v5288
    %7965 = vmatpush.bf16.msra.mxu0 %v5280
    %7966 = vmatpush.bf16.msra.mxu0 %v5272
    %7967 = vmatpush.bf16.msra.mxu0 %v5264
    %7968 = vmatpush.bf16.msra.mxu0 %v5256
    %7969 = vmatpush.bf16.msra.mxu0 %v5248
    %7970 = vmatpush.bf16.msra.mxu0 %v5240
    %7971 = vmatpush.bf16.msra.mxu0 %v5232
    %7972 = vmatmul.bf16.gmra.mxu0 %v1176
    %v7973 = vpop.f32.mrf.mxu0
    %v7974 = vadd.f32 %v7961, %v7973
    %v7975 = vpop.f32.mrf.mxu0
    %7976 = vdwg.mxu0
    %vm7977 = vcmask 1041408
    %v7978 = vsel %vm7977, %v6518, 0.0
    %v7979 = vrot.slane %v7978, 4
    %v7980 = vadd.f32 %v7978, %v7979
    %v7981 = vrot.slane %v7980, 2
    %v7982 = vadd.f32 %v7980, %v7981
    %v7983 = vrot.slane %v7982, 1
    %v7984 = vadd.f32 %v7982, %v7983
    %v7985 = vsel %vm7977, %v6726, 0.0
    %v7986 = vrot.slane %v7985, 4
    %v7987 = vadd.f32 %v7985, %v7986
    %v7988 = vrot.slane %v7987, 2
    %v7989 = vadd.f32 %v7987, %v7988
    %v7990 = vrot.slane %v7989, 1
    %v7991 = vadd.f32 %v7989, %v7990
    %v7992 = vsel %vm7977, %v6934, 0.0
    %v7993 = vrot.slane %v7992, 4
    %v7994 = vadd.f32 %v7992, %v7993
    %v7995 = vrot.slane %v7994, 2
    %v7996 = vadd.f32 %v7994, %v7995
    %v7997 = vrot.slane %v7996, 1
    %v7998 = vadd.f32 %v7996, %v7997
    %v7999 = vsel %vm7977, %v7142, 0.0
    %v8000 = vrot.slane %v7999, 4
    %v8001 = vadd.f32 %v7999, %v8000
    %v8002 = vrot.slane %v8001, 2
    %v8003 = vadd.f32 %v8001, %v8002
    %v8004 = vrot.slane %v8003, 1
    %v8005 = vadd.f32 %v8003, %v8004
    %v8006 = vsel %vm7977, %v7350, 0.0
    %v8007 = vrot.slane %v8006, 4
    %v8008 = vadd.f32 %v8006, %v8007
    %v8009 = vrot.slane %v8008, 2
    %v8010 = vadd.f32 %v8008, %v8009
    %v8011 = vrot.slane %v8010, 1
    %v8012 = vadd.f32 %v8010, %v8011
    %v8013 = vsel %vm7977, %v7558, 0.0
    %v8014 = vrot.slane %v8013, 4
    %v8015 = vadd.f32 %v8013, %v8014
    %v8016 = vrot.slane %v8015, 2
    %v8017 = vadd.f32 %v8015, %v8016
    %v8018 = vrot.slane %v8017, 1
    %v8019 = vadd.f32 %v8017, %v8018
    %v8020 = vsel %vm7977, %v7766, 0.0
    %v8021 = vrot.slane %v8020, 4
    %v8022 = vadd.f32 %v8020, %v8021
    %v8023 = vrot.slane %v8022, 2
    %v8024 = vadd.f32 %v8022, %v8023
    %v8025 = vrot.slane %v8024, 1
    %v8026 = vadd.f32 %v8024, %v8025
    %v8027 = vsel %vm7977, %v7974, 0.0
    %v8028 = vrot.slane %v8027, 4
    %v8029 = vadd.f32 %v8027, %v8028
    %v8030 = vrot.slane %v8029, 2
    %v8031 = vadd.f32 %v8029, %v8030
    %v8032 = vrot.slane %v8031, 1
    %v8033 = vadd.f32 %v8031, %v8032
    %v8034 = vrcp.pop 2.0
    %v8035 = vmul.f32 2.0, %v8034
    %v8036 = vsub.f32 1.0, %v8035
    %v8037 = vmul.f32 %v8034, %v8036
    %v8038 = vadd.f32 %v8034, %v8037
    %vm8039 = vweird.f32 %v8034
    %v8040 = vsel %vm8039, %v8034, %v8038
    %v8041 = vmul.f32 %v7984, %v8040
    %v8042 = vmul.f32 %v7991, %v8040
    %v8043 = vmul.f32 %v7998, %v8040
    %v8044 = vmul.f32 %v8005, %v8040
    %v8045 = vmul.f32 %v8012, %v8040
    %v8046 = vmul.f32 %v8019, %v8040
    %v8047 = vmul.f32 %v8026, %v8040
    %v8048 = vmul.f32 %v8033, %v8040
    %v8049 = vsub.f32 %v6518, %v8041
    %v8050 = vsub.f32 %v6726, %v8042
    %v8051 = vsub.f32 %v6934, %v8043
    %v8052 = vsub.f32 %v7142, %v8044
    %v8053 = vsub.f32 %v7350, %v8045
    %v8054 = vsub.f32 %v7558, %v8046
    %v8055 = vsub.f32 %v7766, %v8047
    %v8056 = vsub.f32 %v7974, %v8048
    %v8057 = vmul.f32 %v8049, %v8049
    %v8058 = vmul.f32 %v8050, %v8050
    %v8059 = vmul.f32 %v8051, %v8051
    %v8060 = vmul.f32 %v8052, %v8052
    %v8061 = vmul.f32 %v8053, %v8053
    %v8062 = vmul.f32 %v8054, %v8054
    %v8063 = vmul.f32 %v8055, %v8055
    %v8064 = vmul.f32 %v8056, %v8056
    %v8065 = vsel %vm7977, %v8057, 0.0
    %v8066 = vrot.slane %v8065, 4
    %v8067 = vadd.f32 %v8065, %v8066
    %v8068 = vrot.slane %v8067, 2
    %v8069 = vadd.f32 %v8067, %v8068
    %v8070 = vrot.slane %v8069, 1
    %v8071 = vadd.f32 %v8069, %v8070
    %v8072 = vsel %vm7977, %v8058, 0.0
    %v8073 = vrot.slane %v8072, 4
    %v8074 = vadd.f32 %v8072, %v8073
    %v8075 = vrot.slane %v8074, 2
    %v8076 = vadd.f32 %v8074, %v8075
    %v8077 = vrot.slane %v8076, 1
    %v8078 = vadd.f32 %v8076, %v8077
    %v8079 = vsel %vm7977, %v8059, 0.0
    %v8080 = vrot.slane %v8079, 4
    %v8081 = vadd.f32 %v8079, %v8080
    %v8082 = vrot.slane %v8081, 2
    %v8083 = vadd.f32 %v8081, %v8082
    %v8084 = vrot.slane %v8083, 1
    %v8085 = vadd.f32 %v8083, %v8084
    %v8086 = vsel %vm7977, %v8060, 0.0
    %v8087 = vrot.slane %v8086, 4
    %v8088 = vadd.f32 %v8086, %v8087
    %v8089 = vrot.slane %v8088, 2
    %v8090 = vadd.f32 %v8088, %v8089
    %v8091 = vrot.slane %v8090, 1
    %v8092 = vadd.f32 %v8090, %v8091
    %v8093 = vsel %vm7977, %v8061, 0.0
    %v8094 = vrot.slane %v8093, 4
    %v8095 = vadd.f32 %v8093, %v8094
    %v8096 = vrot.slane %v8095, 2
    %v8097 = vadd.f32 %v8095, %v8096
    %v8098 = vrot.slane %v8097, 1
    %v8099 = vadd.f32 %v8097, %v8098
    %v8100 = vsel %vm7977, %v8062, 0.0
    %v8101 = vrot.slane %v8100, 4
    %v8102 = vadd.f32 %v8100, %v8101
    %v8103 = vrot.slane %v8102, 2
    %v8104 = vadd.f32 %v8102, %v8103
    %v8105 = vrot.slane %v8104, 1
    %v8106 = vadd.f32 %v8104, %v8105
    %v8107 = vsel %vm7977, %v8063, 0.0
    %v8108 = vrot.slane %v8107, 4
    %v8109 = vadd.f32 %v8107, %v8108
    %v8110 = vrot.slane %v8109, 2
    %v8111 = vadd.f32 %v8109, %v8110
    %v8112 = vrot.slane %v8111, 1
    %v8113 = vadd.f32 %v8111, %v8112
    %v8114 = vsel %vm7977, %v8064, 0.0
    %v8115 = vrot.slane %v8114, 4
    %v8116 = vadd.f32 %v8114, %v8115
    %v8117 = vrot.slane %v8116, 2
    %v8118 = vadd.f32 %v8116, %v8117
    %v8119 = vrot.slane %v8118, 1
    %v8120 = vadd.f32 %v8118, %v8119
    %v8121 = vmul.f32 %v8071, %v8040
    %v8122 = vmul.f32 %v8078, %v8040
    %v8123 = vmul.f32 %v8085, %v8040
    %v8124 = vmul.f32 %v8092, %v8040
    %v8125 = vmul.f32 %v8099, %v8040
    %v8126 = vmul.f32 %v8106, %v8040
    %v8127 = vmul.f32 %v8113, %v8040
    %v8128 = vmul.f32 %v8120, %v8040
    %v8129 = vld [vmem:[#allocation7] sm:$0xff]
    %v8131 = vperm.slane %v8129, 0
    %v8132 = vperm.slane %v8129, 1
    %v8133 = vperm.slane %v8129, 2
    %v8134 = vperm.slane %v8129, 3
    %v8135 = vperm.slane %v8129, 4
    %v8136 = vperm.slane %v8129, 5
    %v8137 = vperm.slane %v8129, 6
    %v8138 = vperm.slane %v8129, 7
    %v8147 = vmul.f32 %v8131, %v8049
    %v8148 = vmul.f32 %v8132, %v8050
    %v8149 = vmul.f32 %v8133, %v8051
    %v8150 = vmul.f32 %v8134, %v8052
    %v8151 = vmul.f32 %v8135, %v8053
    %v8152 = vmul.f32 %v8136, %v8054
    %v8153 = vmul.f32 %v8137, %v8055
    %v8154 = vmul.f32 %v8138, %v8056
    %v8155 = vadd.f32 %v8121, 1e-05
    %v8156 = vadd.f32 %v8122, 1e-05
    %v8157 = vadd.f32 %v8123, 1e-05
    %v8158 = vadd.f32 %v8124, 1e-05
    %v8159 = vadd.f32 %v8125, 1e-05
    %v8160 = vadd.f32 %v8126, 1e-05
    %v8161 = vadd.f32 %v8127, 1e-05
    %v8162 = vadd.f32 %v8128, 1e-05
    %v8163 = vrsqrt.pop %v8155
    %v8164 = vmul.f32 %v8163, %v8155
    %v8165 = vmul.f32 %v8164, %v8163
    %v8166 = vmul.f32 0.5, %v8165
    %v8167 = vsub.f32 1.5, %v8166
    %v8168 = vmul.f32 %v8163, %v8167
    %vm8169 = vweird.f32 %v8155
    %vm8170 = vweird.f32 %v8163
    %vm8171 = vmor %vm8169, %vm8170
    %v8172 = vsel %vm8171, %v8163, %v8168
    %v8173 = vrsqrt.pop %v8156
    %v8174 = vmul.f32 %v8173, %v8156
    %v8175 = vmul.f32 %v8174, %v8173
    %v8176 = vmul.f32 0.5, %v8175
    %v8177 = vsub.f32 1.5, %v8176
    %v8178 = vmul.f32 %v8173, %v8177
    %vm8179 = vweird.f32 %v8156
    %vm8180 = vweird.f32 %v8173
    %vm8181 = vmor %vm8179, %vm8180
    %v8182 = vsel %vm8181, %v8173, %v8178
    %v8183 = vrsqrt.pop %v8157
    %v8184 = vmul.f32 %v8183, %v8157
    %v8185 = vmul.f32 %v8184, %v8183
    %v8186 = vmul.f32 0.5, %v8185
    %v8187 = vsub.f32 1.5, %v8186
    %v8188 = vmul.f32 %v8183, %v8187
    %vm8189 = vweird.f32 %v8157
    %vm8190 = vweird.f32 %v8183
    %vm8191 = vmor %vm8189, %vm8190
    %v8192 = vsel %vm8191, %v8183, %v8188
    %v8193 = vrsqrt.pop %v8158
    %v8194 = vmul.f32 %v8193, %v8158
    %v8195 = vmul.f32 %v8194, %v8193
    %v8196 = vmul.f32 0.5, %v8195
    %v8197 = vsub.f32 1.5, %v8196
    %v8198 = vmul.f32 %v8193, %v8197
    %vm8199 = vweird.f32 %v8158
    %vm8200 = vweird.f32 %v8193
    %vm8201 = vmor %vm8199, %vm8200
    %v8202 = vsel %vm8201, %v8193, %v8198
    %v8203 = vrsqrt.pop %v8159
    %v8204 = vmul.f32 %v8203, %v8159
    %v8205 = vmul.f32 %v8204, %v8203
    %v8206 = vmul.f32 0.5, %v8205
    %v8207 = vsub.f32 1.5, %v8206
    %v8208 = vmul.f32 %v8203, %v8207
    %vm8209 = vweird.f32 %v8159
    %vm8210 = vweird.f32 %v8203
    %vm8211 = vmor %vm8209, %vm8210
    %v8212 = vsel %vm8211, %v8203, %v8208
    %v8213 = vrsqrt.pop %v8160
    %v8214 = vmul.f32 %v8213, %v8160
    %v8215 = vmul.f32 %v8214, %v8213
    %v8216 = vmul.f32 0.5, %v8215
    %v8217 = vsub.f32 1.5, %v8216
    %v8218 = vmul.f32 %v8213, %v8217
    %vm8219 = vweird.f32 %v8160
    %vm8220 = vweird.f32 %v8213
    %vm8221 = vmor %vm8219, %vm8220
    %v8222 = vsel %vm8221, %v8213, %v8218
    %v8223 = vrsqrt.pop %v8161
    %v8224 = vmul.f32 %v8223, %v8161
    %v8225 = vmul.f32 %v8224, %v8223
    %v8226 = vmul.f32 0.5, %v8225
    %v8227 = vsub.f32 1.5, %v8226
    %v8228 = vmul.f32 %v8223, %v8227
    %vm8229 = vweird.f32 %v8161
    %vm8230 = vweird.f32 %v8223
    %vm8231 = vmor %vm8229, %vm8230
    %v8232 = vsel %vm8231, %v8223, %v8228
    %v8233 = vrsqrt.pop %v8162
    %v8234 = vmul.f32 %v8233, %v8162
    %v8235 = vmul.f32 %v8234, %v8233
    %v8236 = vmul.f32 0.5, %v8235
    %v8237 = vsub.f32 1.5, %v8236
    %v8238 = vmul.f32 %v8233, %v8237
    %vm8239 = vweird.f32 %v8162
    %vm8240 = vweird.f32 %v8233
    %vm8241 = vmor %vm8239, %vm8240
    %v8242 = vsel %vm8241, %v8233, %v8238
    %v8243 = vmul.f32 %v8147, %v8172
    %v8244 = vmul.f32 %v8148, %v8182
    %v8245 = vmul.f32 %v8149, %v8192
    %v8246 = vmul.f32 %v8150, %v8202
    %v8247 = vmul.f32 %v8151, %v8212
    %v8248 = vmul.f32 %v8152, %v8222
    %v8249 = vmul.f32 %v8153, %v8232
    %v8250 = vmul.f32 %v8154, %v8242
    %v8251 = vld [vmem:[#allocation8] sm:$0xff]
    %v8253 = vperm.slane %v8251, 0
    %v8254 = vperm.slane %v8251, 1
    %v8255 = vperm.slane %v8251, 2
    %v8256 = vperm.slane %v8251, 3
    %v8257 = vperm.slane %v8251, 4
    %v8258 = vperm.slane %v8251, 5
    %v8259 = vperm.slane %v8251, 6
    %v8260 = vperm.slane %v8251, 7
    %v8269 = vadd.f32 %v8243, %v8253
    %v8270 = vadd.f32 %v8244, %v8254
    %v8271 = vadd.f32 %v8245, %v8255
    %v8272 = vadd.f32 %v8246, %v8256
    %v8273 = vadd.f32 %v8247, %v8257
    %v8274 = vadd.f32 %v8248, %v8258
    %v8275 = vadd.f32 %v8249, %v8259
    %v8276 = vadd.f32 %v8250, %v8260
    %v8277 = vpack.c.bf16 %v8269, %v8269
    %v8278 = vpack.c.bf16 %v8270, %v8270
    %v8279 = vpack.c.bf16 %v8271, %v8271
    %v8280 = vpack.c.bf16 %v8272, %v8272
    %v8281 = vpack.c.bf16 %v8273, %v8273
    %v8282 = vpack.c.bf16 %v8274, %v8274
    %v8283 = vpack.c.bf16 %v8275, %v8275
    %v8284 = vpack.c.bf16 %v8276, %v8276
    %v8285 = vld [vmem:[#allocation10] sm:$0xf]
    %v8286 = vld [vmem:[#allocation10 + $0x4] sm:$0xf]
    %v8287 = vld [vmem:[#allocation10 + $0x8] sm:$0xf]
    %v8288 = vld [vmem:[#allocation10 + $0xc] sm:$0xf]
    %v8289 = vld [vmem:[#allocation10 + $0x10] sm:$0xf]
    %v8290 = vld [vmem:[#allocation10 + $0x14] sm:$0xf]
    %v8291 = vld [vmem:[#allocation10 + $0x18] sm:$0xf]
    %v8292 = vld [vmem:[#allocation10 + $0x1c] sm:$0xf]
    %v8293 = vld [vmem:[#allocation10 + $0x20] sm:$0xf]
    %v8294 = vld [vmem:[#allocation10 + $0x24] sm:$0xf]
    %v8295 = vld [vmem:[#allocation10 + $0x28] sm:$0xf]
    %v8296 = vld [vmem:[#allocation10 + $0x2c] sm:$0xf]
    %v8297 = vld [vmem:[#allocation10 + $0x30] sm:$0xf]
    %v8298 = vld [vmem:[#allocation10 + $0x34] sm:$0xf]
    %v8299 = vld [vmem:[#allocation10 + $0x38] sm:$0xf]
    %v8300 = vld [vmem:[#allocation10 + $0x3c] sm:$0xf]
    %v8301 = vld [vmem:[#allocation10 + $0x40] sm:$0xf]
    %v8302 = vld [vmem:[#allocation10 + $0x44] sm:$0xf]
    %v8303 = vld [vmem:[#allocation10 + $0x48] sm:$0xf]
    %v8304 = vld [vmem:[#allocation10 + $0x4c] sm:$0xf]
    %v8305 = vld [vmem:[#allocation10 + $0x50] sm:$0xf]
    %v8306 = vld [vmem:[#allocation10 + $0x54] sm:$0xf]
    %v8307 = vld [vmem:[#allocation10 + $0x58] sm:$0xf]
    %v8308 = vld [vmem:[#allocation10 + $0x5c] sm:$0xf]
    %v8309 = vld [vmem:[#allocation10 + $0x60] sm:$0xf]
    %v8310 = vld [vmem:[#allocation10 + $0x64] sm:$0xf]
    %v8311 = vld [vmem:[#allocation10 + $0x68] sm:$0xf]
    %v8312 = vld [vmem:[#allocation10 + $0x6c] sm:$0xf]
    %v8313 = vld [vmem:[#allocation10 + $0x70] sm:$0xf]
    %v8314 = vld [vmem:[#allocation10 + $0x74] sm:$0xf]
    %v8315 = vld [vmem:[#allocation10 + $0x78] sm:$0xf]
    %v8316 = vld [vmem:[#allocation10 + $0x7c] sm:$0xf]
    %v8317 = vld [vmem:[#allocation10 + $0x80] sm:$0xf]
    %v8318 = vld [vmem:[#allocation10 + $0x84] sm:$0xf]
    %v8319 = vld [vmem:[#allocation10 + $0x88] sm:$0xf]
    %v8320 = vld [vmem:[#allocation10 + $0x8c] sm:$0xf]
    %v8321 = vld [vmem:[#allocation10 + $0x90] sm:$0xf]
    %v8322 = vld [vmem:[#allocation10 + $0x94] sm:$0xf]
    %v8323 = vld [vmem:[#allocation10 + $0x98] sm:$0xf]
    %v8324 = vld [vmem:[#allocation10 + $0x9c] sm:$0xf]
    %v8325 = vld [vmem:[#allocation10 + $0xa0] sm:$0xf]
    %v8326 = vld [vmem:[#allocation10 + $0xa4] sm:$0xf]
    %v8327 = vld [vmem:[#allocation10 + $0xa8] sm:$0xf]
    %v8328 = vld [vmem:[#allocation10 + $0xac] sm:$0xf]
    %v8329 = vld [vmem:[#allocation10 + $0xb0] sm:$0xf]
    %v8330 = vld [vmem:[#allocation10 + $0xb4] sm:$0xf]
    %v8331 = vld [vmem:[#allocation10 + $0xb8] sm:$0xf]
    %v8332 = vld [vmem:[#allocation10 + $0xbc] sm:$0xf]
    %v8333 = vld [vmem:[#allocation10 + $0xc0] sm:$0xf]
    %v8334 = vld [vmem:[#allocation10 + $0xc4] sm:$0xf]
    %v8335 = vld [vmem:[#allocation10 + $0xc8] sm:$0xf]
    %v8336 = vld [vmem:[#allocation10 + $0xcc] sm:$0xf]
    %v8337 = vld [vmem:[#allocation10 + $0xd0] sm:$0xf]
    %v8338 = vld [vmem:[#allocation10 + $0xd4] sm:$0xf]
    %v8339 = vld [vmem:[#allocation10 + $0xd8] sm:$0xf]
    %v8340 = vld [vmem:[#allocation10 + $0xdc] sm:$0xf]
    %v8341 = vld [vmem:[#allocation10 + $0xe0] sm:$0xf]
    %v8342 = vld [vmem:[#allocation10 + $0xe4] sm:$0xf]
    %v8343 = vld [vmem:[#allocation10 + $0xe8] sm:$0xf]
    %v8344 = vld [vmem:[#allocation10 + $0xec] sm:$0xf]
    %v8345 = vld [vmem:[#allocation10 + $0xf0] sm:$0xf]
    %v8346 = vld [vmem:[#allocation10 + $0xf4] sm:$0xf]
    %v8347 = vld [vmem:[#allocation10 + $0xf8] sm:$0xf]
    %v8348 = vld [vmem:[#allocation10 + $0xfc] sm:$0xf]
    %v8349 = vld [vmem:[#allocation10 + $0x100] sm:$0xf]
    %v8350 = vld [vmem:[#allocation10 + $0x104] sm:$0xf]
    %v8351 = vld [vmem:[#allocation10 + $0x108] sm:$0xf]
    %v8352 = vld [vmem:[#allocation10 + $0x10c] sm:$0xf]
    %v8353 = vld [vmem:[#allocation10 + $0x110] sm:$0xf]
    %v8354 = vld [vmem:[#allocation10 + $0x114] sm:$0xf]
    %v8355 = vld [vmem:[#allocation10 + $0x118] sm:$0xf]
    %v8356 = vld [vmem:[#allocation10 + $0x11c] sm:$0xf]
    %v8357 = vld [vmem:[#allocation10 + $0x120] sm:$0xf]
    %v8358 = vld [vmem:[#allocation10 + $0x124] sm:$0xf]
    %v8359 = vld [vmem:[#allocation10 + $0x128] sm:$0xf]
    %v8360 = vld [vmem:[#allocation10 + $0x12c] sm:$0xf]
    %v8361 = vld [vmem:[#allocation10 + $0x130] sm:$0xf]
    %v8362 = vld [vmem:[#allocation10 + $0x134] sm:$0xf]
    %v8363 = vld [vmem:[#allocation10 + $0x138] sm:$0xf]
    %v8364 = vld [vmem:[#allocation10 + $0x13c] sm:$0xf]
    %v8365 = vld [vmem:[#allocation10 + $0x140] sm:$0xf]
    %v8366 = vld [vmem:[#allocation10 + $0x144] sm:$0xf]
    %v8367 = vld [vmem:[#allocation10 + $0x148] sm:$0xf]
    %v8368 = vld [vmem:[#allocation10 + $0x14c] sm:$0xf]
    %v8369 = vld [vmem:[#allocation10 + $0x150] sm:$0xf]
    %v8370 = vld [vmem:[#allocation10 + $0x154] sm:$0xf]
    %v8371 = vld [vmem:[#allocation10 + $0x158] sm:$0xf]
    %v8372 = vld [vmem:[#allocation10 + $0x15c] sm:$0xf]
    %v8373 = vld [vmem:[#allocation10 + $0x160] sm:$0xf]
    %v8374 = vld [vmem:[#allocation10 + $0x164] sm:$0xf]
    %v8375 = vld [vmem:[#allocation10 + $0x168] sm:$0xf]
    %v8376 = vld [vmem:[#allocation10 + $0x16c] sm:$0xf]
    %v8377 = vld [vmem:[#allocation10 + $0x170] sm:$0xf]
    %v8378 = vld [vmem:[#allocation10 + $0x174] sm:$0xf]
    %v8379 = vld [vmem:[#allocation10 + $0x178] sm:$0xf]
    %v8380 = vld [vmem:[#allocation10 + $0x17c] sm:$0xf]
    %v8381 = vld [vmem:[#allocation10 + $0x180] sm:$0xf]
    %v8382 = vld [vmem:[#allocation10 + $0x184] sm:$0xf]
    %v8383 = vld [vmem:[#allocation10 + $0x188] sm:$0xf]
    %v8384 = vld [vmem:[#allocation10 + $0x18c] sm:$0xf]
    %v8385 = vld [vmem:[#allocation10 + $0x190] sm:$0xf]
    %v8386 = vld [vmem:[#allocation10 + $0x194] sm:$0xf]
    %v8387 = vld [vmem:[#allocation10 + $0x198] sm:$0xf]
    %v8388 = vld [vmem:[#allocation10 + $0x19c] sm:$0xf]
    %v8389 = vld [vmem:[#allocation10 + $0x1a0] sm:$0xf]
    %v8390 = vld [vmem:[#allocation10 + $0x1a4] sm:$0xf]
    %v8391 = vld [vmem:[#allocation10 + $0x1a8] sm:$0xf]
    %v8392 = vld [vmem:[#allocation10 + $0x1ac] sm:$0xf]
    %v8393 = vld [vmem:[#allocation10 + $0x1b0] sm:$0xf]
    %v8394 = vld [vmem:[#allocation10 + $0x1b4] sm:$0xf]
    %v8395 = vld [vmem:[#allocation10 + $0x1b8] sm:$0xf]
    %v8396 = vld [vmem:[#allocation10 + $0x1bc] sm:$0xf]
    %v8397 = vld [vmem:[#allocation10 + $0x1c0] sm:$0xf]
    %v8398 = vld [vmem:[#allocation10 + $0x1c4] sm:$0xf]
    %v8399 = vld [vmem:[#allocation10 + $0x1c8] sm:$0xf]
    %v8400 = vld [vmem:[#allocation10 + $0x1cc] sm:$0xf]
    %v8401 = vld [vmem:[#allocation10 + $0x1d0] sm:$0xf]
    %v8402 = vld [vmem:[#allocation10 + $0x1d4] sm:$0xf]
    %v8403 = vld [vmem:[#allocation10 + $0x1d8] sm:$0xf]
    %v8404 = vld [vmem:[#allocation10 + $0x1dc] sm:$0xf]
    %v8405 = vld [vmem:[#allocation10 + $0x1e0] sm:$0xf]
    %v8406 = vld [vmem:[#allocation10 + $0x1e4] sm:$0xf]
    %v8407 = vld [vmem:[#allocation10 + $0x1e8] sm:$0xf]
    %v8408 = vld [vmem:[#allocation10 + $0x1ec] sm:$0xf]
    %v8409 = vld [vmem:[#allocation10 + $0x1f0] sm:$0xf]
    %v8410 = vld [vmem:[#allocation10 + $0x1f4] sm:$0xf]
    %v8411 = vld [vmem:[#allocation10 + $0x1f8] sm:$0xf]
    %v8412 = vld [vmem:[#allocation10 + $0x1fc] sm:$0xf]
    %v8413 = vld [vmem:[#allocation11] sm:$0x1]
    %v8415 = vperm.slane %v8413, 0
    %v8545 = vunpack.c.l.b16 %v8285
    %v8546 = vunpack.c.l.b16 %v8286
    %v8547 = vunpack.c.l.b16 %v8287
    %v8548 = vunpack.c.l.b16 %v8288
    %v8549 = vunpack.c.l.b16 %v8289
    %v8550 = vunpack.c.l.b16 %v8290
    %v8551 = vunpack.c.l.b16 %v8291
    %v8552 = vunpack.c.l.b16 %v8292
    %v8553 = vunpack.c.l.b16 %v8293
    %v8554 = vunpack.c.l.b16 %v8294
    %v8555 = vunpack.c.l.b16 %v8295
    %v8556 = vunpack.c.l.b16 %v8296
    %v8557 = vunpack.c.l.b16 %v8297
    %v8558 = vunpack.c.l.b16 %v8298
    %v8559 = vunpack.c.l.b16 %v8299
    %v8560 = vunpack.c.l.b16 %v8300
    %v8561 = vunpack.c.l.b16 %v8301
    %v8562 = vunpack.c.l.b16 %v8302
    %v8563 = vunpack.c.l.b16 %v8303
    %v8564 = vunpack.c.l.b16 %v8304
    %v8565 = vunpack.c.l.b16 %v8305
    %v8566 = vunpack.c.l.b16 %v8306
    %v8567 = vunpack.c.l.b16 %v8307
    %v8568 = vunpack.c.l.b16 %v8308
    %v8569 = vunpack.c.l.b16 %v8309
    %v8570 = vunpack.c.l.b16 %v8310
    %v8571 = vunpack.c.l.b16 %v8311
    %v8572 = vunpack.c.l.b16 %v8312
    %v8573 = vunpack.c.l.b16 %v8313
    %v8574 = vunpack.c.l.b16 %v8314
    %v8575 = vunpack.c.l.b16 %v8315
    %v8576 = vunpack.c.l.b16 %v8316
    %v8577 = vunpack.c.l.b16 %v8317
    %v8578 = vunpack.c.l.b16 %v8318
    %v8579 = vunpack.c.l.b16 %v8319
    %v8580 = vunpack.c.l.b16 %v8320
    %v8581 = vunpack.c.l.b16 %v8321
    %v8582 = vunpack.c.l.b16 %v8322
    %v8583 = vunpack.c.l.b16 %v8323
    %v8584 = vunpack.c.l.b16 %v8324
    %v8585 = vunpack.c.l.b16 %v8325
    %v8586 = vunpack.c.l.b16 %v8326
    %v8587 = vunpack.c.l.b16 %v8327
    %v8588 = vunpack.c.l.b16 %v8328
    %v8589 = vunpack.c.l.b16 %v8329
    %v8590 = vunpack.c.l.b16 %v8330
    %v8591 = vunpack.c.l.b16 %v8331
    %v8592 = vunpack.c.l.b16 %v8332
    %v8593 = vunpack.c.l.b16 %v8333
    %v8594 = vunpack.c.l.b16 %v8334
    %v8595 = vunpack.c.l.b16 %v8335
    %v8596 = vunpack.c.l.b16 %v8336
    %v8597 = vunpack.c.l.b16 %v8337
    %v8598 = vunpack.c.l.b16 %v8338
    %v8599 = vunpack.c.l.b16 %v8339
    %v8600 = vunpack.c.l.b16 %v8340
    %v8601 = vunpack.c.l.b16 %v8341
    %v8602 = vunpack.c.l.b16 %v8342
    %v8603 = vunpack.c.l.b16 %v8343
    %v8604 = vunpack.c.l.b16 %v8344
    %v8605 = vunpack.c.l.b16 %v8345
    %v8606 = vunpack.c.l.b16 %v8346
    %v8607 = vunpack.c.l.b16 %v8347
    %v8608 = vunpack.c.l.b16 %v8348
    %v8609 = vunpack.c.l.b16 %v8349
    %v8610 = vunpack.c.l.b16 %v8350
    %v8611 = vunpack.c.l.b16 %v8351
    %v8612 = vunpack.c.l.b16 %v8352
    %v8613 = vunpack.c.l.b16 %v8353
    %v8614 = vunpack.c.l.b16 %v8354
    %v8615 = vunpack.c.l.b16 %v8355
    %v8616 = vunpack.c.l.b16 %v8356
    %v8617 = vunpack.c.l.b16 %v8357
    %v8618 = vunpack.c.l.b16 %v8358
    %v8619 = vunpack.c.l.b16 %v8359
    %v8620 = vunpack.c.l.b16 %v8360
    %v8621 = vunpack.c.l.b16 %v8361
    %v8622 = vunpack.c.l.b16 %v8362
    %v8623 = vunpack.c.l.b16 %v8363
    %v8624 = vunpack.c.l.b16 %v8364
    %v8625 = vunpack.c.l.b16 %v8365
    %v8626 = vunpack.c.l.b16 %v8366
    %v8627 = vunpack.c.l.b16 %v8367
    %v8628 = vunpack.c.l.b16 %v8368
    %v8629 = vunpack.c.l.b16 %v8369
    %v8630 = vunpack.c.l.b16 %v8370
    %v8631 = vunpack.c.l.b16 %v8371
    %v8632 = vunpack.c.l.b16 %v8372
    %v8633 = vunpack.c.l.b16 %v8373
    %v8634 = vunpack.c.l.b16 %v8374
    %v8635 = vunpack.c.l.b16 %v8375
    %v8636 = vunpack.c.l.b16 %v8376
    %v8637 = vunpack.c.l.b16 %v8377
    %v8638 = vunpack.c.l.b16 %v8378
    %v8639 = vunpack.c.l.b16 %v8379
    %v8640 = vunpack.c.l.b16 %v8380
    %v8641 = vunpack.c.l.b16 %v8381
    %v8642 = vunpack.c.l.b16 %v8382
    %v8643 = vunpack.c.l.b16 %v8383
    %v8644 = vunpack.c.l.b16 %v8384
    %v8645 = vunpack.c.l.b16 %v8385
    %v8646 = vunpack.c.l.b16 %v8386
    %v8647 = vunpack.c.l.b16 %v8387
    %v8648 = vunpack.c.l.b16 %v8388
    %v8649 = vunpack.c.l.b16 %v8389
    %v8650 = vunpack.c.l.b16 %v8390
    %v8651 = vunpack.c.l.b16 %v8391
    %v8652 = vunpack.c.l.b16 %v8392
    %v8653 = vunpack.c.l.b16 %v8393
    %v8654 = vunpack.c.l.b16 %v8394
    %v8655 = vunpack.c.l.b16 %v8395
    %v8656 = vunpack.c.l.b16 %v8396
    %v8657 = vunpack.c.l.b16 %v8397
    %v8658 = vunpack.c.l.b16 %v8398
    %v8659 = vunpack.c.l.b16 %v8399
    %v8660 = vunpack.c.l.b16 %v8400
    %v8661 = vunpack.c.l.b16 %v8401
    %v8662 = vunpack.c.l.b16 %v8402
    %v8663 = vunpack.c.l.b16 %v8403
    %v8664 = vunpack.c.l.b16 %v8404
    %v8665 = vunpack.c.l.b16 %v8405
    %v8666 = vunpack.c.l.b16 %v8406
    %v8667 = vunpack.c.l.b16 %v8407
    %v8668 = vunpack.c.l.b16 %v8408
    %v8669 = vunpack.c.l.b16 %v8409
    %v8670 = vunpack.c.l.b16 %v8410
    %v8671 = vunpack.c.l.b16 %v8411
    %v8672 = vunpack.c.l.b16 %v8412
    %v8673 = vpack.c.b16 %v8546, %v8545
    %v8674 = vpack.c.b16 %v8548, %v8547
    %v8675 = vpack.c.b16 %v8550, %v8549
    %v8676 = vpack.c.b16 %v8552, %v8551
    %v8677 = vpack.c.b16 %v8554, %v8553
    %v8678 = vpack.c.b16 %v8556, %v8555
    %v8679 = vpack.c.b16 %v8558, %v8557
    %v8680 = vpack.c.b16 %v8560, %v8559
    %v8681 = vpack.c.b16 %v8562, %v8561
    %v8682 = vpack.c.b16 %v8564, %v8563
    %v8683 = vpack.c.b16 %v8566, %v8565
    %v8684 = vpack.c.b16 %v8568, %v8567
    %v8685 = vpack.c.b16 %v8570, %v8569
    %v8686 = vpack.c.b16 %v8572, %v8571
    %v8687 = vpack.c.b16 %v8574, %v8573
    %v8688 = vpack.c.b16 %v8576, %v8575
    %v8689 = vpack.c.b16 %v8578, %v8577
    %v8690 = vpack.c.b16 %v8580, %v8579
    %v8691 = vpack.c.b16 %v8582, %v8581
    %v8692 = vpack.c.b16 %v8584, %v8583
    %v8693 = vpack.c.b16 %v8586, %v8585
    %v8694 = vpack.c.b16 %v8588, %v8587
    %v8695 = vpack.c.b16 %v8590, %v8589
    %v8696 = vpack.c.b16 %v8592, %v8591
    %v8697 = vpack.c.b16 %v8594, %v8593
    %v8698 = vpack.c.b16 %v8596, %v8595
    %v8699 = vpack.c.b16 %v8598, %v8597
    %v8700 = vpack.c.b16 %v8600, %v8599
    %v8701 = vpack.c.b16 %v8602, %v8601
    %v8702 = vpack.c.b16 %v8604, %v8603
    %v8703 = vpack.c.b16 %v8606, %v8605
    %v8704 = vpack.c.b16 %v8608, %v8607
    %v8705 = vpack.c.b16 %v8610, %v8609
    %v8706 = vpack.c.b16 %v8612, %v8611
    %v8707 = vpack.c.b16 %v8614, %v8613
    %v8708 = vpack.c.b16 %v8616, %v8615
    %v8709 = vpack.c.b16 %v8618, %v8617
    %v8710 = vpack.c.b16 %v8620, %v8619
    %v8711 = vpack.c.b16 %v8622, %v8621
    %v8712 = vpack.c.b16 %v8624, %v8623
    %v8713 = vpack.c.b16 %v8626, %v8625
    %v8714 = vpack.c.b16 %v8628, %v8627
    %v8715 = vpack.c.b16 %v8630, %v8629
    %v8716 = vpack.c.b16 %v8632, %v8631
    %v8717 = vpack.c.b16 %v8634, %v8633
    %v8718 = vpack.c.b16 %v8636, %v8635
    %v8719 = vpack.c.b16 %v8638, %v8637
    %v8720 = vpack.c.b16 %v8640, %v8639
    %v8721 = vpack.c.b16 %v8642, %v8641
    %v8722 = vpack.c.b16 %v8644, %v8643
    %v8723 = vpack.c.b16 %v8646, %v8645
    %v8724 = vpack.c.b16 %v8648, %v8647
    %v8725 = vpack.c.b16 %v8650, %v8649
    %v8726 = vpack.c.b16 %v8652, %v8651
    %v8727 = vpack.c.b16 %v8654, %v8653
    %v8728 = vpack.c.b16 %v8656, %v8655
    %v8729 = vpack.c.b16 %v8658, %v8657
    %v8730 = vpack.c.b16 %v8660, %v8659
    %v8731 = vpack.c.b16 %v8662, %v8661
    %v8732 = vpack.c.b16 %v8664, %v8663
    %v8733 = vpack.c.b16 %v8666, %v8665
    %v8734 = vpack.c.b16 %v8668, %v8667
    %v8735 = vpack.c.b16 %v8670, %v8669
    %v8736 = vpack.c.b16 %v8672, %v8671
    %8801 = vmatpush.bf16.msra.mxu0 %v8680
    %8802 = vmatpush.bf16.msra.mxu0 %v8679
    %8803 = vmatpush.bf16.msra.mxu0 %v8678
    %8804 = vmatpush.bf16.msra.mxu0 %v8677
    %8805 = vmatpush.bf16.msra.mxu0 %v8676
    %8806 = vmatpush.bf16.msra.mxu0 %v8675
    %8807 = vmatpush.bf16.msra.mxu0 %v8674
    %8808 = vmatpush.bf16.msra.mxu0 %v8673
    %8809 = vmatmul.bf16.gmra.mxu0 %v8277
    %v8810 = vpop.f32.mrf.mxu0
    %v8811 = vadd.f32 %v8415, %v8810
    %v8812 = vpop.f32.mrf.mxu0
    %8813 = vdwg.mxu0
    %8814 = vmatpush.bf16.msra.mxu0 %v8688
    %8815 = vmatpush.bf16.msra.mxu0 %v8687
    %8816 = vmatpush.bf16.msra.mxu0 %v8686
    %8817 = vmatpush.bf16.msra.mxu0 %v8685
    %8818 = vmatpush.bf16.msra.mxu0 %v8684
    %8819 = vmatpush.bf16.msra.mxu0 %v8683
    %8820 = vmatpush.bf16.msra.mxu0 %v8682
    %8821 = vmatpush.bf16.msra.mxu0 %v8681
    %8822 = vmatmul.bf16.gmra.mxu0 %v8278
    %v8823 = vpop.f32.mrf.mxu0
    %v8824 = vadd.f32 %v8811, %v8823
    %v8825 = vpop.f32.mrf.mxu0
    %8826 = vdwg.mxu0
    %8827 = vmatpush.bf16.msra.mxu0 %v8696
    %8828 = vmatpush.bf16.msra.mxu0 %v8695
    %8829 = vmatpush.bf16.msra.mxu0 %v8694
    %8830 = vmatpush.bf16.msra.mxu0 %v8693
    %8831 = vmatpush.bf16.msra.mxu0 %v8692
    %8832 = vmatpush.bf16.msra.mxu0 %v8691
    %8833 = vmatpush.bf16.msra.mxu0 %v8690
    %8834 = vmatpush.bf16.msra.mxu0 %v8689
    %8835 = vmatmul.bf16.gmra.mxu0 %v8279
    %v8836 = vpop.f32.mrf.mxu0
    %v8837 = vadd.f32 %v8824, %v8836
    %v8838 = vpop.f32.mrf.mxu0
    %8839 = vdwg.mxu0
    %8840 = vmatpush.bf16.msra.mxu0 %v8704
    %8841 = vmatpush.bf16.msra.mxu0 %v8703
    %8842 = vmatpush.bf16.msra.mxu0 %v8702
    %8843 = vmatpush.bf16.msra.mxu0 %v8701
    %8844 = vmatpush.bf16.msra.mxu0 %v8700
    %8845 = vmatpush.bf16.msra.mxu0 %v8699
    %8846 = vmatpush.bf16.msra.mxu0 %v8698
    %8847 = vmatpush.bf16.msra.mxu0 %v8697
    %8848 = vmatmul.bf16.gmra.mxu0 %v8280
    %v8849 = vpop.f32.mrf.mxu0
    %v8850 = vadd.f32 %v8837, %v8849
    %v8851 = vpop.f32.mrf.mxu0
    %8852 = vdwg.mxu0
    %8853 = vmatpush.bf16.msra.mxu0 %v8712
    %8854 = vmatpush.bf16.msra.mxu0 %v8711
    %8855 = vmatpush.bf16.msra.mxu0 %v8710
    %8856 = vmatpush.bf16.msra.mxu0 %v8709
    %8857 = vmatpush.bf16.msra.mxu0 %v8708
    %8858 = vmatpush.bf16.msra.mxu0 %v8707
    %8859 = vmatpush.bf16.msra.mxu0 %v8706
    %8860 = vmatpush.bf16.msra.mxu0 %v8705
    %8861 = vmatmul.bf16.gmra.mxu0 %v8281
    %v8862 = vpop.f32.mrf.mxu0
    %v8863 = vadd.f32 %v8850, %v8862
    %v8864 = vpop.f32.mrf.mxu0
    %8865 = vdwg.mxu0
    %8866 = vmatpush.bf16.msra.mxu0 %v8720
    %8867 = vmatpush.bf16.msra.mxu0 %v8719
    %8868 = vmatpush.bf16.msra.mxu0 %v8718
    %8869 = vmatpush.bf16.msra.mxu0 %v8717
    %8870 = vmatpush.bf16.msra.mxu0 %v8716
    %8871 = vmatpush.bf16.msra.mxu0 %v8715
    %8872 = vmatpush.bf16.msra.mxu0 %v8714
    %8873 = vmatpush.bf16.msra.mxu0 %v8713
    %8874 = vmatmul.bf16.gmra.mxu0 %v8282
    %v8875 = vpop.f32.mrf.mxu0
    %v8876 = vadd.f32 %v8863, %v8875
    %v8877 = vpop.f32.mrf.mxu0
    %8878 = vdwg.mxu0
    %8879 = vmatpush.bf16.msra.mxu0 %v8728
    %8880 = vmatpush.bf16.msra.mxu0 %v8727
    %8881 = vmatpush.bf16.msra.mxu0 %v8726
    %8882 = vmatpush.bf16.msra.mxu0 %v8725
    %8883 = vmatpush.bf16.msra.mxu0 %v8724
    %8884 = vmatpush.bf16.msra.mxu0 %v8723
    %8885 = vmatpush.bf16.msra.mxu0 %v8722
    %8886 = vmatpush.bf16.msra.mxu0 %v8721
    %8887 = vmatmul.bf16.gmra.mxu0 %v8283
    %v8888 = vpop.f32.mrf.mxu0
    %v8889 = vadd.f32 %v8876, %v8888
    %v8890 = vpop.f32.mrf.mxu0
    %8891 = vdwg.mxu0
    %8892 = vmatpush.bf16.msra.mxu0 %v8736
    %8893 = vmatpush.bf16.msra.mxu0 %v8735
    %8894 = vmatpush.bf16.msra.mxu0 %v8734
    %8895 = vmatpush.bf16.msra.mxu0 %v8733
    %8896 = vmatpush.bf16.msra.mxu0 %v8732
    %8897 = vmatpush.bf16.msra.mxu0 %v8731
    %8898 = vmatpush.bf16.msra.mxu0 %v8730
    %8899 = vmatpush.bf16.msra.mxu0 %v8729
    %8900 = vmatmul.bf16.gmra.mxu0 %v8284
    %v8901 = vpop.f32.mrf.mxu0
    %v8902 = vadd.f32 %v8889, %v8901
    %v8903 = vpop.f32.mrf.mxu0
    %8904 = vdwg.mxu0
    %v8905 = vsub.f32 0.0, %v8902
    %v8906 = vmul.f32 %v8905, 1.442695
    %v8907 = vpow.pop %v8906
    %v8908 = vadd.f32 %v8907, 1.0
    %v8909 = vrcp.pop %v8908
    %v8910 = vmul.f32 %v8908, %v8909
    %v8911 = vsub.f32 1.0, %v8910
    %v8912 = vmul.f32 %v8909, %v8911
    %v8913 = vadd.f32 %v8909, %v8912
    %vm8914 = vweird.f32 %v8908
    %vm8915 = vweird.f32 %v8909
    %vm8916 = vmor %vm8914, %vm8915
    %v8917 = vsel %vm8916, %v8909, %v8913
    %v8918 = vand.u32 2147483647, %v8908
    %vm8919 = vcmp.eq.f32.partialorder %v8918, 8.507059e+37
    %v8920 = vand.u32 %v8908, 2147483648
    %v8921 = vor.u32 1.1754944e-38, %v8920
    %v8922 = vsel %vm8919, %v8921, %v8917
    %v8923 = vmul.f32 1.0, %v8922
    %8924 = vst [vmem:[#allocation13] sm:$0x3] %v8923
    // Predicated region
    $region54: #{discriminator_forward.5} parent=1 // pred_check
      _
    $region55: #{discriminator_forward.5} parent=1 // pred_check_branch
      %8926 = sbr.rel (0) target = $region57
    $region56: #{discriminator_forward.5} parent=1 // pred_region
      %8928 = vsyncadd [#allocation4], 0
      %s8930 = sshll.u32 [#allocation13], 4
      %s8931 = int_to_ptr.vmem [resolvable:$true] %s8930
      %s8932 = sshll.u32 %s7, 4
      %s8933 = int_to_ptr.hbm [resolvable:$true] %s8932
      %8935 = dma.vmem_to_hbm [thread:$0]  %s8931, 32, %s8933, [#allocation4]
    $region57: #{discriminator_forward.5} parent=1 // pred_fallthru
      _
    // Predicated region
    $region58: #{discriminator_forward.5} parent=1 // pred_check
      _
    $region59: #{discriminator_forward.5} parent=1 // pred_check_branch
      %8937 = sbr.rel (0) target = $region61
    $region60: #{discriminator_forward.5} parent=1 // pred_region
      %8939 = dma.done [#allocation4], 32
    $region61: #{discriminator_forward.5} parent=1 // pred_fallthru
      _
    %8940 = vsyncpa [#allocation3], 1
    %8941 = vsyncpa [#allocation6], 1
    %8942 = vsyncpa [#allocation9], 1
    %8943 = vsyncpa [#allocation12], 1
    %8944 = vsyncpa [#allocation4], 1

</llo_original>
